<compile_context>
chip_gen: v7x
topology: tpu7x:2x2x1
jax: 0.10.0
libtpu: 0.0.40
codegen_flags: <defaults>
</compile_context>

<pallas_src>
import functools

import numpy as np
import jax
import jax.numpy as jnp
from jax import lax
from jax.experimental import pallas as pl
from jax.experimental.pallas import tpu as pltpu


# ------------------------------- fused kernel --------------------------------

def _conv3x3_bn_relu(xw_pairs, scale, shift, mask9, W):
    """3x3 conv (padding=1, bias=False) + folded eval-mode BN + ReLU.

    xw_pairs: list of (x, w_ref), x of shape (Cin_i, HW) in the matmul dtype,
              w_ref a (9, Cout_p, Cin_i) tap-major weight Ref.
    Per-tap accumulation (9 small-K matmuls into one f32 accumulator) avoids a
    (9*Cin, HW) im2col buffer; tap shifts are pltpu.roll + a combined boundary
    mask, so nothing in the copy path is lane-unaligned.
    """
    HW = mask9.shape[1]
    cout = xw_pairs[0][1].shape[1]
    acc = jnp.zeros((cout, HW), jnp.float32)
    for tap in range(9):
        dy, dx = tap // 3 - 1, tap % 3 - 1
        sh = (-(dy * W + dx)) % HW                # static lane rotation amount
        m = mask9[tap:tap + 1, :]                 # (1, HW) validity of this tap
        for x, w_ref in xw_pairs:
            if dy == 0 and dx == 0:
                t = x                             # center tap: no shift, no mask
            else:
                # TODO(synk): on v5e apply this mask multiply in f32 (no bf16 VPU).
                t = pltpu.roll(x, sh, axis=1) * m
            acc = acc + jnp.dot(w_ref[tap], t, preferred_element_type=jnp.float32)
    return jnp.maximum(acc * scale + shift, 0.0)  # folded BN (eval mode) + ReLU


def fused_up_kernel(x1_ref, x2_ref, uT_ref, mask_ref,
                    w1a_ref, w1b_ref, s1_ref, b1_ref,
                    w2_ref, s2_ref, b2_ref, o_ref, *, W):
    # x1_ref: (1, C1, H1*W1) low-res features (flattened NCHW)
    # x2_ref: (1, C2, H2*W2) skip connection  (flattened NCHW)
    # uT_ref: (H1*W1, H2*W2) (center-pad o bilinear-upsample) operator, transposed
    # o_ref : (1, Cout_p, H2*W2)
    mdt = uT_ref.dtype                            # matmul operand dtype (f32/bf16)

    # 1) bilinear 2x upsample + UNet center pad == ONE kron(uh, uw)^T matmul.
    up = jnp.dot(x1_ref[0].astype(mdt), uT_ref[...],
                 preferred_element_type=jnp.float32)          # (C1, H2*W2) f32

    # Cast activations to the matmul dtype ONCE, before any tap is built.
    mask = mask_ref[...]
    pairs1 = [(x2_ref[0].astype(mdt), w1a_ref),   # skip-connection half of conv1
              (up.astype(mdt), w1b_ref)]          # upsampled half of conv1

    # 2+3) torch.cat([x2, up], dim=1) folded into split conv1 weights;
    #      DoubleConv = (3x3 conv -> BN -> ReLU) x 2, per-tap accumulation.
    y = _conv3x3_bn_relu(pairs1, s1_ref[...], b1_ref[...], mask, W)
    y = _conv3x3_bn_relu([(y.astype(mdt), w2_ref)],
                         s2_ref[...], b2_ref[...], mask, W)

    o_ref[0] = y.astype(o_ref.dtype)              # lane-dense, Cout padded to 8


# ----------------------------- parameter folding -----------------------------

def prepare_params(raw, c_skip, out_hw, matmul_dtype=jnp.bfloat16):
    """Fold/reshape Up-block parameters into the kernel layout (done once).

    bf16 operands (with f32 accumulation in-kernel) are the right default on
    ALL TPU generations (v5e's MXU is also native bf16); pass jnp.float32 for
    bit-tight verification.
    """
    H2, W2 = out_hw
    uh = np.asarray(raw["uh"], np.float64)
    uw = np.asarray(raw["uw"], np.float64)
    w1 = np.asarray(raw["w1"], np.float32)        # (3,3,Cin,Cmid) HWIO
    w2 = np.asarray(raw["w2"], np.float32)        # (3,3,Cmid,Cout) HWIO
    eps = float(raw["eps"])

    def fold_bn(g, bt, m, v):                     # eval-mode BN -> scale/shift
        s = np.asarray(g, np.float32) / np.sqrt(np.asarray(v, np.float32) + eps)
        b = np.asarray(bt, np.float32) - np.asarray(m, np.float32) * s
        return s, b

    s1, b1 = fold_bn(raw["g1"], raw["bt1"], raw["m1"], raw["v1"])
    s2, b2 = fold_bn(raw["g2"], raw["bt2"], raw["m2"], raw["v2"])

    cin, cmid, cout = w1.shape[2], w1.shape[3], w2.shape[3]
    c_up = cin - c_skip
    cmid_p = -(-cmid // 8) * 8                    # pad mid/out channels to the
    cout_p = -(-cout // 8) * 8                    # sublane tile (unmasked stores)

    # (center-pad o bilinear-upsample) as a single Kronecker operator, transposed.
    dY, dX = H2 - uh.shape[0], W2 - uw.shape[0]
    uh_p = np.pad(uh, ((dY // 2, dY - dY // 2), (0, 0)))
    uw_p = np.pad(uw, ((dX // 2, dX - dX // 2), (0, 0)))
    u_t = np.kron(uh_p, uw_p).T.astype(np.float32)            # (H1*W1, H2*W2)

    def tap_weights(w, ci_pad, co_pad):
        # HWIO (3,3,ci,co) -> (9, co_pad, ci_pad): one (Cout, Cin) matrix per tap.
        ci, co = w.shape[2], w.shape[3]
        wt = np.transpose(w.reshape(9, ci, co), (0, 2, 1))
        out = np.zeros((9, co_pad, ci_pad), np.float32)
        out[:, :co, :ci] = wt
        return out

    # Split conv1 between the skip (x2) half and the upsampled (x1) half:
    # removes the explicit channel concat at identical total MXU work.
    w1a = tap_weights(w1[:, :, :c_skip, :], c_skip, cmid_p)
    w1b = tap_weights(w1[:, :, c_skip:, :], c_up, cmid_p)
    w2m = tap_weights(w2, cmid_p, cout_p)

    def pad_col(v, n, fill):
        out = np.full((n, 1), fill, np.float32)
        out[:v.shape[0], 0] = v
        return out

    s1p, b1p = pad_col(s1, cmid_p, 1.0), pad_col(b1, cmid_p, 0.0)
    s2p, b2p = pad_col(s2, cout_p, 1.0), pad_col(b2, cout_p, 0.0)

    # Combined dy/dx boundary-validity mask per tap over the flattened image
    # (kills the wrap-around introduced by pltpu.roll, top/bottom AND left/right).
    ys, xs = np.arange(H2 * W2) // W2, np.arange(H2 * W2) % W2
    mask = np.stack([(ys + dy >= 0) & (ys + dy < H2) &
                     (xs + dx >= 0) & (xs + dx < W2)
                     for dy in (-1, 0, 1) for dx in (-1, 0, 1)]).astype(np.float32)

    return dict(
        u_t=jnp.asarray(u_t, matmul_dtype),
        mask=jnp.asarray(mask, matmul_dtype),
        w1a=jnp.asarray(w1a, matmul_dtype), w1b=jnp.asarray(w1b, matmul_dtype),
        s1=jnp.asarray(s1p), b1=jnp.asarray(b1p),
        w2=jnp.asarray(w2m, matmul_dtype),
        s2=jnp.asarray(s2p), b2=jnp.asarray(b2p),
        cout=cout)


# --------------------------------- wrapper ------------------------------------

def _const_spec(arr, single_buffer):
    """BlockSpec for a grid-invariant operand; single-buffered when supported."""
    nd = arr.ndim
    idx = lambda n, _nd=nd: (0,) * _nd
    if single_buffer and hasattr(pl, "Buffered"):
        try:
            return pl.BlockSpec(arr.shape, idx, pipeline_mode=pl.Buffered(1))
        except TypeError:  # jax build without BlockSpec pipeline_mode kwarg
            pass
    return pl.BlockSpec(arr.shape, idx)


def up_forward(x1, x2, prep):
    """x1: (N, C1, H1, W1), x2: (N, C2, H2, W2) NCHW -> (N, Cout, H2, W2) NCHW."""
    N, C1, H1, W1 = x1.shape
    _, C2, H2, W2 = x2.shape
    HW1, HW2 = H1 * W1, H2 * W2
    cmid_p = prep["w1a"].shape[1]
    cout_p = prep["w2"].shape[1]
    cout = prep["cout"]

    # Flattened NCHW == channels-on-sublanes / pixels-on-lanes; free reshapes.
    x1f = x1.reshape(N, C1, HW1)
    x2f = x2.reshape(N, C2, HW2)

    const_ops = [prep[kk] for kk in
                 ("u_t", "mask", "w1a", "w1b", "s1", "b1", "w2", "s2", "b2")]

    flops = 2 * N * HW2 * (C1 * HW1                     # upsample kron matmul
                           + 9 * (C1 + C2) * cmid_p     # conv1 (split halves)
                           + 9 * cmid_p * cout_p)       # conv2
    bytes_accessed = int(x1f.size * 4 + x2f.size * 4 + N * cout_p * HW2 * 4
                         + sum(a.size * a.dtype.itemsize for a in const_ops))
    ce = pl.CostEstimate(flops=int(flops), transcendentals=0,
                         bytes_accessed=bytes_accessed)

    def run(single_buffer):
        in_specs = [pl.BlockSpec((1, C1, HW1), lambda n: (n, 0, 0)),
                    pl.BlockSpec((1, C2, HW2), lambda n: (n, 0, 0))]
        in_specs += [_const_spec(a, single_buffer) for a in const_ops]
        return pl.pallas_call(
            functools.partial(fused_up_kernel, W=W2),
            out_shape=jax.ShapeDtypeStruct((N, cout_p, HW2), x1.dtype),
            grid=(N,),
            in_specs=in_specs,
            out_specs=pl.BlockSpec((1, cout_p, HW2), lambda n: (n, 0, 0)),
            compiler_params=pltpu.CompilerParams(
                dimension_semantics=("parallel",),      # batch across v7x's 2 TCs
                vmem_limit_bytes=48 * 1024 * 1024),     # ~half v6e budget -> fits v7x
            cost_estimate=ce,
        )(x1f, x2f, *const_ops)

    try:
        out = run(single_buffer=True)
    except Exception:   # fall back if Buffered(1) is unsupported by this jax build
        out = run(single_buffer=False)

    # Drop the Cout sublane padding and restore NCHW.
    return out[:, :cout, :].reshape(N, cout, H2, W2)


# ----------------------------- reference (JAX) --------------------------------

def ref_forward(x1, x2, raw):
    up = jnp.einsum("oh,nchw->ncow", raw["uh"], x1)
    up = jnp.einsum("pw,ncow->ncop", raw["uw"], up)
    dY = x2.shape[2] - up.shape[2]
    dX = x2.shape[3] - up.shape[3]
    up = jnp.pad(up, ((0, 0), (0, 0),
                      (dY // 2, dY - dY // 2), (dX // 2, dX - dX // 2)))
    x = jnp.concatenate([x2, up], axis=1)
    xh = jnp.transpose(x, (0, 2, 3, 1))
    dn = ("NHWC", "HWIO", "NHWC")
    y = lax.conv_general_dilated(xh, raw["w1"], (1, 1), "SAME", dimension_numbers=dn)
    y = (y - raw["m1"]) / jnp.sqrt(raw["v1"] + raw["eps"]) * raw["g1"] + raw["bt1"]
    y = jnp.maximum(y, 0.0)
    y = lax.conv_general_dilated(y, raw["w2"], (1, 1), "SAME", dimension_numbers=dn)
    y = (y - raw["m2"]) / jnp.sqrt(raw["v2"] + raw["eps"]) * raw["g2"] + raw["bt2"]
    y = jnp.maximum(y, 0.0)
    return jnp.transpose(y, (0, 3, 1, 2))


def bilinear_matrix(n_out, n_in):
    """Interpolation matrix for nn.Upsample(scale_factor=2, bilinear, align_corners=True),
    matching the Up() module's explicit align_corners=True."""
    src = np.arange(n_out, dtype=np.float64) * (n_in - 1) / (n_out - 1)
    lo = np.clip(np.floor(src).astype(np.int64), 0, n_in - 2)
    frac = src - lo
    M = np.zeros((n_out, n_in), dtype=np.float32)
    M[np.arange(n_out), lo] = (1.0 - frac).astype(np.float32)
    M[np.arange(n_out), lo + 1] = frac.astype(np.float32)
    return M


# ----------------------------------- main --------------------------------------

if __name__ == "__main__":
    key = jax.random.PRNGKey(0)
    k = jax.random.split(key, 12)

    # Up(in_channels=8, out_channels=4, bilinear=True): x1/x2 carry 4 channels each,
    # DoubleConv(8, 4, mid_channels=4).
    N, in_channels, out_channels = 2, 8, 4
    C1 = C2 = in_channels // 2
    Cmid = in_channels // 2
    H1 = W1 = 8
    H2 = W2 = 16

    x1 = jax.random.normal(k[0], (N, C1, H1, W1), jnp.float32)
    x2 = jax.random.normal(k[1], (N, C2, H2, W2), jnp.float32)

    # DoubleConv weights (HWIO) + eval-mode BN with non-trivial running stats.
    w1 = 0.1 * jax.random.normal(k[2], (3, 3, in_channels, Cmid), jnp.float32)
    w2 = 0.1 * jax.random.normal(k[3], (3, 3, Cmid, out_channels), jnp.float32)
    g1 = 1.0 + 0.1 * jax.random.normal(k[4], (Cmid,), jnp.float32)
    bt1 = 0.1 * jax.random.normal(k[5], (Cmid,), jnp.float32)
    g2 = 1.0 + 0.1 * jax.random.normal(k[6], (out_channels,), jnp.float32)
    bt2 = 0.1 * jax.random.normal(k[7], (out_channels,), jnp.float32)
    m1 = 0.1 * jax.random.normal(k[8], (Cmid,), jnp.float32)
    v1 = 0.5 + jax.random.uniform(k[9], (Cmid,), jnp.float32)
    m2 = 0.1 * jax.random.normal(k[10], (out_channels,), jnp.float32)
    v2 = 0.5 + jax.random.uniform(k[11], (out_channels,), jnp.float32)

    uh = jnp.asarray(bilinear_matrix(2 * H1, H1))
    uw = jnp.asarray(bilinear_matrix(2 * W1, W1))
    raw = dict(uh=uh, uw=uw, w1=w1, w2=w2, eps=1e-5,
               g1=g1, bt1=bt1, m1=m1, v1=v1,
               g2=g2, bt2=bt2, m2=m2, v2=v2)

    ref = jax.block_until_ready(ref_forward(x1, x2, raw))

    # f32 MXU operands: tight check against the reference.
    prep_f32 = prepare_params(raw, C2, (H2, W2), jnp.float32)
    out = jax.block_until_ready(up_forward(x1, x2, prep_f32))
    assert out.shape == (N, out_channels, H2, W2)
    np.testing.assert_allclose(np.asarray(out), np.asarray(ref), rtol=1e-4, atol=1e-4)

    # bf16 operands (native MXU rate on v5e/v6e/v7x), f32 accumulation: sanity check.
    prep_bf16 = prepare_params(raw, C2, (H2, W2), jnp.bfloat16)
    out16 = jax.block_until_ready(up_forward(x1, x2, prep_bf16))
    np.testing.assert_allclose(np.asarray(out16), np.asarray(ref), rtol=0.1, atol=0.25)

    print("KERNEL_OK")
</pallas_src>

<mosaic_0001>
module attributes {stable_mosaic.version = 11 : i64} {
  func.func @fused_up_kernel(%arg0: i32, %arg1: memref<1x4x64xf32, #tpu.memory_space<vmem>>, %arg2: memref<1x4x256xf32, #tpu.memory_space<vmem>>, %arg3: memref<64x256xf32, #tpu.memory_space<vmem>>, %arg4: memref<9x256xf32, #tpu.memory_space<vmem>>, %arg5: memref<9x8x4xf32, #tpu.memory_space<vmem>>, %arg6: memref<9x8x4xf32, #tpu.memory_space<vmem>>, %arg7: memref<8x1xf32, #tpu.memory_space<vmem>>, %arg8: memref<8x1xf32, #tpu.memory_space<vmem>>, %arg9: memref<9x8x8xf32, #tpu.memory_space<vmem>>, %arg10: memref<8x1xf32, #tpu.memory_space<vmem>>, %arg11: memref<8x1xf32, #tpu.memory_space<vmem>>, %arg12: memref<1x8x256xf32, #tpu.memory_space<vmem>>) attributes {dimension_semantics = [#tpu.dimension_semantics<parallel>], iteration_bounds = array<i64: 2>, scalar_prefetch = 0 : i64, scratch_operands = 0 : i64, tpu.core_type = #tpu.core_type<tc>, window_params = [{transform_indices = @transform_0, window_bounds = array<i64: 1, 4, 64>}, {transform_indices = @transform_1, window_bounds = array<i64: 1, 4, 256>}, {pipeline_mode = #tpu.pipeline_mode<synchronous>, transform_indices = @transform_2, window_bounds = array<i64: 64, 256>}, {pipeline_mode = #tpu.pipeline_mode<synchronous>, transform_indices = @transform_3, window_bounds = array<i64: 9, 256>}, {pipeline_mode = #tpu.pipeline_mode<synchronous>, transform_indices = @transform_4, window_bounds = array<i64: 9, 8, 4>}, {pipeline_mode = #tpu.pipeline_mode<synchronous>, transform_indices = @transform_5, window_bounds = array<i64: 9, 8, 4>}, {pipeline_mode = #tpu.pipeline_mode<synchronous>, transform_indices = @transform_6, window_bounds = array<i64: 8, 1>}, {pipeline_mode = #tpu.pipeline_mode<synchronous>, transform_indices = @transform_7, window_bounds = array<i64: 8, 1>}, {pipeline_mode = #tpu.pipeline_mode<synchronous>, transform_indices = @transform_8, window_bounds = array<i64: 9, 8, 8>}, {pipeline_mode = #tpu.pipeline_mode<synchronous>, transform_indices = @transform_9, window_bounds = array<i64: 8, 1>}, {pipeline_mode = #tpu.pipeline_mode<synchronous>, transform_indices = @transform_10, window_bounds = array<i64: 8, 1>}, {transform_indices = @transform_11, window_bounds = array<i64: 1, 8, 256>}]} {
    %c0 = arith.constant 0 : index
    %c0_0 = arith.constant 0 : index
    %c0_1 = arith.constant 0 : index
    %0 = vector.load %arg1[%c0, %c0_0, %c0_1] : memref<1x4x64xf32, #tpu.memory_space<vmem>>, vector<1x4x64xf32>
    %1 = vector.shape_cast %0 : vector<1x4x64xf32> to vector<4x64xf32>
    %c0_2 = arith.constant 0 : index
    %c0_3 = arith.constant 0 : index
    %2 = vector.load %arg3[%c0_2, %c0_3] : memref<64x256xf32, #tpu.memory_space<vmem>>, vector<64x256xf32>
    %cst = arith.constant dense<0.000000e+00> : vector<4x256xf32>
    %3 = tpu.matmul %1, %2, %cst {dimension_numbers = #tpu.dot_dimension_numbers<[1], [0], [0], [1], [0, 0, 1, 1], [], []>} : vector<4x64xf32>, vector<64x256xf32>, vector<4x256xf32> -> vector<4x256xf32>
    %c0_4 = arith.constant 0 : index
    %c0_5 = arith.constant 0 : index
    %4 = vector.load %arg4[%c0_4, %c0_5] : memref<9x256xf32, #tpu.memory_space<vmem>>, vector<9x256xf32>
    %c0_6 = arith.constant 0 : index
    %c0_7 = arith.constant 0 : index
    %c0_8 = arith.constant 0 : index
    %5 = vector.load %arg2[%c0_6, %c0_7, %c0_8] : memref<1x4x256xf32, #tpu.memory_space<vmem>>, vector<1x4x256xf32>
    %6 = vector.shape_cast %5 : vector<1x4x256xf32> to vector<4x256xf32>
    %c0_9 = arith.constant 0 : index
    %c0_10 = arith.constant 0 : index
    %7 = vector.load %arg7[%c0_9, %c0_10] : memref<8x1xf32, #tpu.memory_space<vmem>>, vector<8x1xf32>
    %c0_11 = arith.constant 0 : index
    %c0_12 = arith.constant 0 : index
    %8 = vector.load %arg8[%c0_11, %c0_12] : memref<8x1xf32, #tpu.memory_space<vmem>>, vector<8x1xf32>
    %cst_13 = arith.constant 0.000000e+00 : f32
    %9 = vector.broadcast %cst_13 : f32 to vector<8x256xf32>
    %10 = vector.extract_strided_slice %4 {offsets = [0, 0], sizes = [1, 256], strides = [1, 1]} : vector<9x256xf32> to vector<1x256xf32>
    %c17_i32 = arith.constant 17 : i32
    %11 = tpu.dynamic_rotate %6 by %c17_i32 dim 1 : vector<4x256xf32>, i32 -> vector<4x256xf32>
    %12 = vector.broadcast %10 : vector<1x256xf32> to vector<4x256xf32>
    %13 = arith.mulf %11, %12 : vector<4x256xf32>
    %c0_14 = arith.constant 0 : index
    %c0_15 = arith.constant 0 : index
    %c0_16 = arith.constant 0 : index
    %14 = vector.load %arg5[%c0_14, %c0_15, %c0_16] : memref<9x8x4xf32, #tpu.memory_space<vmem>>, vector<1x8x4xf32>
    %15 = vector.shape_cast %14 : vector<1x8x4xf32> to vector<8x4xf32>
    %cst_17 = arith.constant dense<0.000000e+00> : vector<8x256xf32>
    %16 = tpu.matmul %15, %13, %cst_17 {dimension_numbers = #tpu.dot_dimension_numbers<[1], [0], [0], [1], [0, 0, 1, 1], [], []>} : vector<8x4xf32>, vector<4x256xf32>, vector<8x256xf32> -> vector<8x256xf32>
    %17 = arith.addf %9, %16 : vector<8x256xf32>
    %c17_i32_18 = arith.constant 17 : i32
    %18 = tpu.dynamic_rotate %3 by %c17_i32_18 dim 1 : vector<4x256xf32>, i32 -> vector<4x256xf32>
    %19 = vector.broadcast %10 : vector<1x256xf32> to vector<4x256xf32>
    %20 = arith.mulf %18, %19 : vector<4x256xf32>
    %c0_19 = arith.constant 0 : index
    %c0_20 = arith.constant 0 : index
    %c0_21 = arith.constant 0 : index
    %21 = vector.load %arg6[%c0_19, %c0_20, %c0_21] : memref<9x8x4xf32, #tpu.memory_space<vmem>>, vector<1x8x4xf32>
    %22 = vector.shape_cast %21 : vector<1x8x4xf32> to vector<8x4xf32>
    %cst_22 = arith.constant dense<0.000000e+00> : vector<8x256xf32>
    %23 = tpu.matmul %22, %20, %cst_22 {dimension_numbers = #tpu.dot_dimension_numbers<[1], [0], [0], [1], [0, 0, 1, 1], [], []>} : vector<8x4xf32>, vector<4x256xf32>, vector<8x256xf32> -> vector<8x256xf32>
    %24 = arith.addf %17, %23 : vector<8x256xf32>
    %25 = vector.extract_strided_slice %4 {offsets = [1, 0], sizes = [1, 256], strides = [1, 1]} : vector<9x256xf32> to vector<1x256xf32>
    %c16_i32 = arith.constant 16 : i32
    %26 = tpu.dynamic_rotate %6 by %c16_i32 dim 1 : vector<4x256xf32>, i32 -> vector<4x256xf32>
    %27 = vector.broadcast %25 : vector<1x256xf32> to vector<4x256xf32>
    %28 = arith.mulf %26, %27 : vector<4x256xf32>
    %c1 = arith.constant 1 : index
    %c0_23 = arith.constant 0 : index
    %c0_24 = arith.constant 0 : index
    %29 = vector.load %arg5[%c1, %c0_23, %c0_24] : memref<9x8x4xf32, #tpu.memory_space<vmem>>, vector<1x8x4xf32>
    %30 = vector.shape_cast %29 : vector<1x8x4xf32> to vector<8x4xf32>
    %cst_25 = arith.constant dense<0.000000e+00> : vector<8x256xf32>
    %31 = tpu.matmul %30, %28, %cst_25 {dimension_numbers = #tpu.dot_dimension_numbers<[1], [0], [0], [1], [0, 0, 1, 1], [], []>} : vector<8x4xf32>, vector<4x256xf32>, vector<8x256xf32> -> vector<8x256xf32>
    %32 = arith.addf %24, %31 : vector<8x256xf32>
    %c16_i32_26 = arith.constant 16 : i32
    %33 = tpu.dynamic_rotate %3 by %c16_i32_26 dim 1 : vector<4x256xf32>, i32 -> vector<4x256xf32>
    %34 = vector.broadcast %25 : vector<1x256xf32> to vector<4x256xf32>
    %35 = arith.mulf %33, %34 : vector<4x256xf32>
    %c1_27 = arith.constant 1 : index
    %c0_28 = arith.constant 0 : index
    %c0_29 = arith.constant 0 : index
    %36 = vector.load %arg6[%c1_27, %c0_28, %c0_29] : memref<9x8x4xf32, #tpu.memory_space<vmem>>, vector<1x8x4xf32>
    %37 = vector.shape_cast %36 : vector<1x8x4xf32> to vector<8x4xf32>
    %cst_30 = arith.constant dense<0.000000e+00> : vector<8x256xf32>
    %38 = tpu.matmul %37, %35, %cst_30 {dimension_numbers = #tpu.dot_dimension_numbers<[1], [0], [0], [1], [0, 0, 1, 1], [], []>} : vector<8x4xf32>, vector<4x256xf32>, vector<8x256xf32> -> vector<8x256xf32>
    %39 = arith.addf %32, %38 : vector<8x256xf32>
    %40 = vector.extract_strided_slice %4 {offsets = [2, 0], sizes = [1, 256], strides = [1, 1]} : vector<9x256xf32> to vector<1x256xf32>
    %c15_i32 = arith.constant 15 : i32
    %41 = tpu.dynamic_rotate %6 by %c15_i32 dim 1 : vector<4x256xf32>, i32 -> vector<4x256xf32>
    %42 = vector.broadcast %40 : vector<1x256xf32> to vector<4x256xf32>
    %43 = arith.mulf %41, %42 : vector<4x256xf32>
    %c2 = arith.constant 2 : index
    %c0_31 = arith.constant 0 : index
    %c0_32 = arith.constant 0 : index
    %44 = vector.load %arg5[%c2, %c0_31, %c0_32] : memref<9x8x4xf32, #tpu.memory_space<vmem>>, vector<1x8x4xf32>
    %45 = vector.shape_cast %44 : vector<1x8x4xf32> to vector<8x4xf32>
    %cst_33 = arith.constant dense<0.000000e+00> : vector<8x256xf32>
    %46 = tpu.matmul %45, %43, %cst_33 {dimension_numbers = #tpu.dot_dimension_numbers<[1], [0], [0], [1], [0, 0, 1, 1], [], []>} : vector<8x4xf32>, vector<4x256xf32>, vector<8x256xf32> -> vector<8x256xf32>
    %47 = arith.addf %39, %46 : vector<8x256xf32>
    %c15_i32_34 = arith.constant 15 : i32
    %48 = tpu.dynamic_rotate %3 by %c15_i32_34 dim 1 : vector<4x256xf32>, i32 -> vector<4x256xf32>
    %49 = vector.broadcast %40 : vector<1x256xf32> to vector<4x256xf32>
    %50 = arith.mulf %48, %49 : vector<4x256xf32>
    %c2_35 = arith.constant 2 : index
    %c0_36 = arith.constant 0 : index
    %c0_37 = arith.constant 0 : index
    %51 = vector.load %arg6[%c2_35, %c0_36, %c0_37] : memref<9x8x4xf32, #tpu.memory_space<vmem>>, vector<1x8x4xf32>
    %52 = vector.shape_cast %51 : vector<1x8x4xf32> to vector<8x4xf32>
    %cst_38 = arith.constant dense<0.000000e+00> : vector<8x256xf32>
    %53 = tpu.matmul %52, %50, %cst_38 {dimension_numbers = #tpu.dot_dimension_numbers<[1], [0], [0], [1], [0, 0, 1, 1], [], []>} : vector<8x4xf32>, vector<4x256xf32>, vector<8x256xf32> -> vector<8x256xf32>
    %54 = arith.addf %47, %53 : vector<8x256xf32>
    %55 = vector.extract_strided_slice %4 {offsets = [3, 0], sizes = [1, 256], strides = [1, 1]} : vector<9x256xf32> to vector<1x256xf32>
    %c1_i32 = arith.constant 1 : i32
    %56 = tpu.dynamic_rotate %6 by %c1_i32 dim 1 : vector<4x256xf32>, i32 -> vector<4x256xf32>
    %57 = vector.broadcast %55 : vector<1x256xf32> to vector<4x256xf32>
    %58 = arith.mulf %56, %57 : vector<4x256xf32>
    %c3 = arith.constant 3 : index
    %c0_39 = arith.constant 0 : index
    %c0_40 = arith.constant 0 : index
    %59 = vector.load %arg5[%c3, %c0_39, %c0_40] : memref<9x8x4xf32, #tpu.memory_space<vmem>>, vector<1x8x4xf32>
    %60 = vector.shape_cast %59 : vector<1x8x4xf32> to vector<8x4xf32>
    %cst_41 = arith.constant dense<0.000000e+00> : vector<8x256xf32>
    %61 = tpu.matmul %60, %58, %cst_41 {dimension_numbers = #tpu.dot_dimension_numbers<[1], [0], [0], [1], [0, 0, 1, 1], [], []>} : vector<8x4xf32>, vector<4x256xf32>, vector<8x256xf32> -> vector<8x256xf32>
    %62 = arith.addf %54, %61 : vector<8x256xf32>
    %c1_i32_42 = arith.constant 1 : i32
    %63 = tpu.dynamic_rotate %3 by %c1_i32_42 dim 1 : vector<4x256xf32>, i32 -> vector<4x256xf32>
    %64 = vector.broadcast %55 : vector<1x256xf32> to vector<4x256xf32>
    %65 = arith.mulf %63, %64 : vector<4x256xf32>
    %c3_43 = arith.constant 3 : index
    %c0_44 = arith.constant 0 : index
    %c0_45 = arith.constant 0 : index
    %66 = vector.load %arg6[%c3_43, %c0_44, %c0_45] : memref<9x8x4xf32, #tpu.memory_space<vmem>>, vector<1x8x4xf32>
    %67 = vector.shape_cast %66 : vector<1x8x4xf32> to vector<8x4xf32>
    %cst_46 = arith.constant dense<0.000000e+00> : vector<8x256xf32>
    %68 = tpu.matmul %67, %65, %cst_46 {dimension_numbers = #tpu.dot_dimension_numbers<[1], [0], [0], [1], [0, 0, 1, 1], [], []>} : vector<8x4xf32>, vector<4x256xf32>, vector<8x256xf32> -> vector<8x256xf32>
    %69 = arith.addf %62, %68 : vector<8x256xf32>
    %c4 = arith.constant 4 : index
    %c0_47 = arith.constant 0 : index
    %c0_48 = arith.constant 0 : index
    %70 = vector.load %arg5[%c4, %c0_47, %c0_48] : memref<9x8x4xf32, #tpu.memory_space<vmem>>, vector<1x8x4xf32>
    %71 = vector.shape_cast %70 : vector<1x8x4xf32> to vector<8x4xf32>
    %cst_49 = arith.constant dense<0.000000e+00> : vector<8x256xf32>
    %72 = tpu.matmul %71, %6, %cst_49 {dimension_numbers = #tpu.dot_dimension_numbers<[1], [0], [0], [1], [0, 0, 1, 1], [], []>} : vector<8x4xf32>, vector<4x256xf32>, vector<8x256xf32> -> vector<8x256xf32>
    %73 = arith.addf %69, %72 : vector<8x256xf32>
    %c4_50 = arith.constant 4 : index
    %c0_51 = arith.constant 0 : index
    %c0_52 = arith.constant 0 : index
    %74 = vector.load %arg6[%c4_50, %c0_51, %c0_52] : memref<9x8x4xf32, #tpu.memory_space<vmem>>, vector<1x8x4xf32>
    %75 = vector.shape_cast %74 : vector<1x8x4xf32> to vector<8x4xf32>
    %cst_53 = arith.constant dense<0.000000e+00> : vector<8x256xf32>
    %76 = tpu.matmul %75, %3, %cst_53 {dimension_numbers = #tpu.dot_dimension_numbers<[1], [0], [0], [1], [0, 0, 1, 1], [], []>} : vector<8x4xf32>, vector<4x256xf32>, vector<8x256xf32> -> vector<8x256xf32>
    %77 = arith.addf %73, %76 : vector<8x256xf32>
    %78 = vector.extract_strided_slice %4 {offsets = [5, 0], sizes = [1, 256], strides = [1, 1]} : vector<9x256xf32> to vector<1x256xf32>
    %c255_i32 = arith.constant 255 : i32
    %79 = tpu.dynamic_rotate %6 by %c255_i32 dim 1 : vector<4x256xf32>, i32 -> vector<4x256xf32>
    %80 = vector.broadcast %78 : vector<1x256xf32> to vector<4x256xf32>
    %81 = arith.mulf %79, %80 : vector<4x256xf32>
    %c5 = arith.constant 5 : index
    %c0_54 = arith.constant 0 : index
    %c0_55 = arith.constant 0 : index
    %82 = vector.load %arg5[%c5, %c0_54, %c0_55] : memref<9x8x4xf32, #tpu.memory_space<vmem>>, vector<1x8x4xf32>
    %83 = vector.shape_cast %82 : vector<1x8x4xf32> to vector<8x4xf32>
    %cst_56 = arith.constant dense<0.000000e+00> : vector<8x256xf32>
    %84 = tpu.matmul %83, %81, %cst_56 {dimension_numbers = #tpu.dot_dimension_numbers<[1], [0], [0], [1], [0, 0, 1, 1], [], []>} : vector<8x4xf32>, vector<4x256xf32>, vector<8x256xf32> -> vector<8x256xf32>
    %85 = arith.addf %77, %84 : vector<8x256xf32>
    %c255_i32_57 = arith.constant 255 : i32
    %86 = tpu.dynamic_rotate %3 by %c255_i32_57 dim 1 : vector<4x256xf32>, i32 -> vector<4x256xf32>
    %87 = vector.broadcast %78 : vector<1x256xf32> to vector<4x256xf32>
    %88 = arith.mulf %86, %87 : vector<4x256xf32>
    %c5_58 = arith.constant 5 : index
    %c0_59 = arith.constant 0 : index
    %c0_60 = arith.constant 0 : index
    %89 = vector.load %arg6[%c5_58, %c0_59, %c0_60] : memref<9x8x4xf32, #tpu.memory_space<vmem>>, vector<1x8x4xf32>
    %90 = vector.shape_cast %89 : vector<1x8x4xf32> to vector<8x4xf32>
    %cst_61 = arith.constant dense<0.000000e+00> : vector<8x256xf32>
    %91 = tpu.matmul %90, %88, %cst_61 {dimension_numbers = #tpu.dot_dimension_numbers<[1], [0], [0], [1], [0, 0, 1, 1], [], []>} : vector<8x4xf32>, vector<4x256xf32>, vector<8x256xf32> -> vector<8x256xf32>
    %92 = arith.addf %85, %91 : vector<8x256xf32>
    %93 = vector.extract_strided_slice %4 {offsets = [6, 0], sizes = [1, 256], strides = [1, 1]} : vector<9x256xf32> to vector<1x256xf32>
    %c241_i32 = arith.constant 241 : i32
    %94 = tpu.dynamic_rotate %6 by %c241_i32 dim 1 : vector<4x256xf32>, i32 -> vector<4x256xf32>
    %95 = vector.broadcast %93 : vector<1x256xf32> to vector<4x256xf32>
    %96 = arith.mulf %94, %95 : vector<4x256xf32>
    %c6 = arith.constant 6 : index
    %c0_62 = arith.constant 0 : index
    %c0_63 = arith.constant 0 : index
    %97 = vector.load %arg5[%c6, %c0_62, %c0_63] : memref<9x8x4xf32, #tpu.memory_space<vmem>>, vector<1x8x4xf32>
    %98 = vector.shape_cast %97 : vector<1x8x4xf32> to vector<8x4xf32>
    %cst_64 = arith.constant dense<0.000000e+00> : vector<8x256xf32>
    %99 = tpu.matmul %98, %96, %cst_64 {dimension_numbers = #tpu.dot_dimension_numbers<[1], [0], [0], [1], [0, 0, 1, 1], [], []>} : vector<8x4xf32>, vector<4x256xf32>, vector<8x256xf32> -> vector<8x256xf32>
    %100 = arith.addf %92, %99 : vector<8x256xf32>
    %c241_i32_65 = arith.constant 241 : i32
    %101 = tpu.dynamic_rotate %3 by %c241_i32_65 dim 1 : vector<4x256xf32>, i32 -> vector<4x256xf32>
    %102 = vector.broadcast %93 : vector<1x256xf32> to vector<4x256xf32>
    %103 = arith.mulf %101, %102 : vector<4x256xf32>
    %c6_66 = arith.constant 6 : index
    %c0_67 = arith.constant 0 : index
    %c0_68 = arith.constant 0 : index
    %104 = vector.load %arg6[%c6_66, %c0_67, %c0_68] : memref<9x8x4xf32, #tpu.memory_space<vmem>>, vector<1x8x4xf32>
    %105 = vector.shape_cast %104 : vector<1x8x4xf32> to vector<8x4xf32>
    %cst_69 = arith.constant dense<0.000000e+00> : vector<8x256xf32>
    %106 = tpu.matmul %105, %103, %cst_69 {dimension_numbers = #tpu.dot_dimension_numbers<[1], [0], [0], [1], [0, 0, 1, 1], [], []>} : vector<8x4xf32>, vector<4x256xf32>, vector<8x256xf32> -> vector<8x256xf32>
    %107 = arith.addf %100, %106 : vector<8x256xf32>
    %108 = vector.extract_strided_slice %4 {offsets = [7, 0], sizes = [1, 256], strides = [1, 1]} : vector<9x256xf32> to vector<1x256xf32>
    %c240_i32 = arith.constant 240 : i32
    %109 = tpu.dynamic_rotate %6 by %c240_i32 dim 1 : vector<4x256xf32>, i32 -> vector<4x256xf32>
    %110 = vector.broadcast %108 : vector<1x256xf32> to vector<4x256xf32>
    %111 = arith.mulf %109, %110 : vector<4x256xf32>
    %c7 = arith.constant 7 : index
    %c0_70 = arith.constant 0 : index
    %c0_71 = arith.constant 0 : index
    %112 = vector.load %arg5[%c7, %c0_70, %c0_71] : memref<9x8x4xf32, #tpu.memory_space<vmem>>, vector<1x8x4xf32>
    %113 = vector.shape_cast %112 : vector<1x8x4xf32> to vector<8x4xf32>
    %cst_72 = arith.constant dense<0.000000e+00> : vector<8x256xf32>
    %114 = tpu.matmul %113, %111, %cst_72 {dimension_numbers = #tpu.dot_dimension_numbers<[1], [0], [0], [1], [0, 0, 1, 1], [], []>} : vector<8x4xf32>, vector<4x256xf32>, vector<8x256xf32> -> vector<8x256xf32>
    %115 = arith.addf %107, %114 : vector<8x256xf32>
    %c240_i32_73 = arith.constant 240 : i32
    %116 = tpu.dynamic_rotate %3 by %c240_i32_73 dim 1 : vector<4x256xf32>, i32 -> vector<4x256xf32>
    %117 = vector.broadcast %108 : vector<1x256xf32> to vector<4x256xf32>
    %118 = arith.mulf %116, %117 : vector<4x256xf32>
    %c7_74 = arith.constant 7 : index
    %c0_75 = arith.constant 0 : index
    %c0_76 = arith.constant 0 : index
    %119 = vector.load %arg6[%c7_74, %c0_75, %c0_76] : memref<9x8x4xf32, #tpu.memory_space<vmem>>, vector<1x8x4xf32>
    %120 = vector.shape_cast %119 : vector<1x8x4xf32> to vector<8x4xf32>
    %cst_77 = arith.constant dense<0.000000e+00> : vector<8x256xf32>
    %121 = tpu.matmul %120, %118, %cst_77 {dimension_numbers = #tpu.dot_dimension_numbers<[1], [0], [0], [1], [0, 0, 1, 1], [], []>} : vector<8x4xf32>, vector<4x256xf32>, vector<8x256xf32> -> vector<8x256xf32>
    %122 = arith.addf %115, %121 : vector<8x256xf32>
    %123 = vector.extract_strided_slice %4 {offsets = [8, 0], sizes = [1, 256], strides = [1, 1]} : vector<9x256xf32> to vector<1x256xf32>
    %c239_i32 = arith.constant 239 : i32
    %124 = tpu.dynamic_rotate %6 by %c239_i32 dim 1 : vector<4x256xf32>, i32 -> vector<4x256xf32>
    %125 = vector.broadcast %123 : vector<1x256xf32> to vector<4x256xf32>
    %126 = arith.mulf %124, %125 : vector<4x256xf32>
    %c8 = arith.constant 8 : index
    %c0_78 = arith.constant 0 : index
    %c0_79 = arith.constant 0 : index
    %127 = vector.load %arg5[%c8, %c0_78, %c0_79] : memref<9x8x4xf32, #tpu.memory_space<vmem>>, vector<1x8x4xf32>
    %128 = vector.shape_cast %127 : vector<1x8x4xf32> to vector<8x4xf32>
    %cst_80 = arith.constant dense<0.000000e+00> : vector<8x256xf32>
    %129 = tpu.matmul %128, %126, %cst_80 {dimension_numbers = #tpu.dot_dimension_numbers<[1], [0], [0], [1], [0, 0, 1, 1], [], []>} : vector<8x4xf32>, vector<4x256xf32>, vector<8x256xf32> -> vector<8x256xf32>
    %130 = arith.addf %122, %129 : vector<8x256xf32>
    %c239_i32_81 = arith.constant 239 : i32
    %131 = tpu.dynamic_rotate %3 by %c239_i32_81 dim 1 : vector<4x256xf32>, i32 -> vector<4x256xf32>
    %132 = vector.broadcast %123 : vector<1x256xf32> to vector<4x256xf32>
    %133 = arith.mulf %131, %132 : vector<4x256xf32>
    %c8_82 = arith.constant 8 : index
    %c0_83 = arith.constant 0 : index
    %c0_84 = arith.constant 0 : index
    %134 = vector.load %arg6[%c8_82, %c0_83, %c0_84] : memref<9x8x4xf32, #tpu.memory_space<vmem>>, vector<1x8x4xf32>
    %135 = vector.shape_cast %134 : vector<1x8x4xf32> to vector<8x4xf32>
    %cst_85 = arith.constant dense<0.000000e+00> : vector<8x256xf32>
    %136 = tpu.matmul %135, %133, %cst_85 {dimension_numbers = #tpu.dot_dimension_numbers<[1], [0], [0], [1], [0, 0, 1, 1], [], []>} : vector<8x4xf32>, vector<4x256xf32>, vector<8x256xf32> -> vector<8x256xf32>
    %137 = arith.addf %130, %136 : vector<8x256xf32>
    %138 = vector.broadcast %7 : vector<8x1xf32> to vector<8x256xf32>
    %139 = arith.mulf %137, %138 : vector<8x256xf32>
    %140 = vector.broadcast %8 : vector<8x1xf32> to vector<8x256xf32>
    %141 = arith.addf %139, %140 : vector<8x256xf32>
    %cst_86 = arith.constant 0.000000e+00 : f32
    %142 = vector.broadcast %cst_86 : f32 to vector<8x256xf32>
    %143 = arith.maximumf %141, %142 : vector<8x256xf32>
    %c0_87 = arith.constant 0 : index
    %c0_88 = arith.constant 0 : index
    %144 = vector.load %arg10[%c0_87, %c0_88] : memref<8x1xf32, #tpu.memory_space<vmem>>, vector<8x1xf32>
    %c0_89 = arith.constant 0 : index
    %c0_90 = arith.constant 0 : index
    %145 = vector.load %arg11[%c0_89, %c0_90] : memref<8x1xf32, #tpu.memory_space<vmem>>, vector<8x1xf32>
    %cst_91 = arith.constant 0.000000e+00 : f32
    %146 = vector.broadcast %cst_91 : f32 to vector<8x256xf32>
    %147 = vector.extract_strided_slice %4 {offsets = [0, 0], sizes = [1, 256], strides = [1, 1]} : vector<9x256xf32> to vector<1x256xf32>
    %c17_i32_92 = arith.constant 17 : i32
    %148 = tpu.dynamic_rotate %143 by %c17_i32_92 dim 1 : vector<8x256xf32>, i32 -> vector<8x256xf32>
    %149 = vector.broadcast %147 : vector<1x256xf32> to vector<8x256xf32>
    %150 = arith.mulf %148, %149 : vector<8x256xf32>
    %c0_93 = arith.constant 0 : index
    %c0_94 = arith.constant 0 : index
    %c0_95 = arith.constant 0 : index
    %151 = vector.load %arg9[%c0_93, %c0_94, %c0_95] : memref<9x8x8xf32, #tpu.memory_space<vmem>>, vector<1x8x8xf32>
    %152 = vector.shape_cast %151 : vector<1x8x8xf32> to vector<8x8xf32>
    %cst_96 = arith.constant dense<0.000000e+00> : vector<8x256xf32>
    %153 = tpu.matmul %152, %150, %cst_96 {dimension_numbers = #tpu.dot_dimension_numbers<[1], [0], [0], [1], [0, 0, 1, 1], [], []>} : vector<8x8xf32>, vector<8x256xf32>, vector<8x256xf32> -> vector<8x256xf32>
    %154 = arith.addf %146, %153 : vector<8x256xf32>
    %155 = vector.extract_strided_slice %4 {offsets = [1, 0], sizes = [1, 256], strides = [1, 1]} : vector<9x256xf32> to vector<1x256xf32>
    %c16_i32_97 = arith.constant 16 : i32
    %156 = tpu.dynamic_rotate %143 by %c16_i32_97 dim 1 : vector<8x256xf32>, i32 -> vector<8x256xf32>
    %157 = vector.broadcast %155 : vector<1x256xf32> to vector<8x256xf32>
    %158 = arith.mulf %156, %157 : vector<8x256xf32>
    %c1_98 = arith.constant 1 : index
    %c0_99 = arith.constant 0 : index
    %c0_100 = arith.constant 0 : index
    %159 = vector.load %arg9[%c1_98, %c0_99, %c0_100] : memref<9x8x8xf32, #tpu.memory_space<vmem>>, vector<1x8x8xf32>
    %160 = vector.shape_cast %159 : vector<1x8x8xf32> to vector<8x8xf32>
    %cst_101 = arith.constant dense<0.000000e+00> : vector<8x256xf32>
    %161 = tpu.matmul %160, %158, %cst_101 {dimension_numbers = #tpu.dot_dimension_numbers<[1], [0], [0], [1], [0, 0, 1, 1], [], []>} : vector<8x8xf32>, vector<8x256xf32>, vector<8x256xf32> -> vector<8x256xf32>
    %162 = arith.addf %154, %161 : vector<8x256xf32>
    %163 = vector.extract_strided_slice %4 {offsets = [2, 0], sizes = [1, 256], strides = [1, 1]} : vector<9x256xf32> to vector<1x256xf32>
    %c15_i32_102 = arith.constant 15 : i32
    %164 = tpu.dynamic_rotate %143 by %c15_i32_102 dim 1 : vector<8x256xf32>, i32 -> vector<8x256xf32>
    %165 = vector.broadcast %163 : vector<1x256xf32> to vector<8x256xf32>
    %166 = arith.mulf %164, %165 : vector<8x256xf32>
    %c2_103 = arith.constant 2 : index
    %c0_104 = arith.constant 0 : index
    %c0_105 = arith.constant 0 : index
    %167 = vector.load %arg9[%c2_103, %c0_104, %c0_105] : memref<9x8x8xf32, #tpu.memory_space<vmem>>, vector<1x8x8xf32>
    %168 = vector.shape_cast %167 : vector<1x8x8xf32> to vector<8x8xf32>
    %cst_106 = arith.constant dense<0.000000e+00> : vector<8x256xf32>
    %169 = tpu.matmul %168, %166, %cst_106 {dimension_numbers = #tpu.dot_dimension_numbers<[1], [0], [0], [1], [0, 0, 1, 1], [], []>} : vector<8x8xf32>, vector<8x256xf32>, vector<8x256xf32> -> vector<8x256xf32>
    %170 = arith.addf %162, %169 : vector<8x256xf32>
    %171 = vector.extract_strided_slice %4 {offsets = [3, 0], sizes = [1, 256], strides = [1, 1]} : vector<9x256xf32> to vector<1x256xf32>
    %c1_i32_107 = arith.constant 1 : i32
    %172 = tpu.dynamic_rotate %143 by %c1_i32_107 dim 1 : vector<8x256xf32>, i32 -> vector<8x256xf32>
    %173 = vector.broadcast %171 : vector<1x256xf32> to vector<8x256xf32>
    %174 = arith.mulf %172, %173 : vector<8x256xf32>
    %c3_108 = arith.constant 3 : index
    %c0_109 = arith.constant 0 : index
    %c0_110 = arith.constant 0 : index
    %175 = vector.load %arg9[%c3_108, %c0_109, %c0_110] : memref<9x8x8xf32, #tpu.memory_space<vmem>>, vector<1x8x8xf32>
    %176 = vector.shape_cast %175 : vector<1x8x8xf32> to vector<8x8xf32>
    %cst_111 = arith.constant dense<0.000000e+00> : vector<8x256xf32>
    %177 = tpu.matmul %176, %174, %cst_111 {dimension_numbers = #tpu.dot_dimension_numbers<[1], [0], [0], [1], [0, 0, 1, 1], [], []>} : vector<8x8xf32>, vector<8x256xf32>, vector<8x256xf32> -> vector<8x256xf32>
    %178 = arith.addf %170, %177 : vector<8x256xf32>
    %c4_112 = arith.constant 4 : index
    %c0_113 = arith.constant 0 : index
    %c0_114 = arith.constant 0 : index
    %179 = vector.load %arg9[%c4_112, %c0_113, %c0_114] : memref<9x8x8xf32, #tpu.memory_space<vmem>>, vector<1x8x8xf32>
    %180 = vector.shape_cast %179 : vector<1x8x8xf32> to vector<8x8xf32>
    %cst_115 = arith.constant dense<0.000000e+00> : vector<8x256xf32>
    %181 = tpu.matmul %180, %143, %cst_115 {dimension_numbers = #tpu.dot_dimension_numbers<[1], [0], [0], [1], [0, 0, 1, 1], [], []>} : vector<8x8xf32>, vector<8x256xf32>, vector<8x256xf32> -> vector<8x256xf32>
    %182 = arith.addf %178, %181 : vector<8x256xf32>
    %183 = vector.extract_strided_slice %4 {offsets = [5, 0], sizes = [1, 256], strides = [1, 1]} : vector<9x256xf32> to vector<1x256xf32>
    %c255_i32_116 = arith.constant 255 : i32
    %184 = tpu.dynamic_rotate %143 by %c255_i32_116 dim 1 : vector<8x256xf32>, i32 -> vector<8x256xf32>
    %185 = vector.broadcast %183 : vector<1x256xf32> to vector<8x256xf32>
    %186 = arith.mulf %184, %185 : vector<8x256xf32>
    %c5_117 = arith.constant 5 : index
    %c0_118 = arith.constant 0 : index
    %c0_119 = arith.constant 0 : index
    %187 = vector.load %arg9[%c5_117, %c0_118, %c0_119] : memref<9x8x8xf32, #tpu.memory_space<vmem>>, vector<1x8x8xf32>
    %188 = vector.shape_cast %187 : vector<1x8x8xf32> to vector<8x8xf32>
    %cst_120 = arith.constant dense<0.000000e+00> : vector<8x256xf32>
    %189 = tpu.matmul %188, %186, %cst_120 {dimension_numbers = #tpu.dot_dimension_numbers<[1], [0], [0], [1], [0, 0, 1, 1], [], []>} : vector<8x8xf32>, vector<8x256xf32>, vector<8x256xf32> -> vector<8x256xf32>
    %190 = arith.addf %182, %189 : vector<8x256xf32>
    %191 = vector.extract_strided_slice %4 {offsets = [6, 0], sizes = [1, 256], strides = [1, 1]} : vector<9x256xf32> to vector<1x256xf32>
    %c241_i32_121 = arith.constant 241 : i32
    %192 = tpu.dynamic_rotate %143 by %c241_i32_121 dim 1 : vector<8x256xf32>, i32 -> vector<8x256xf32>
    %193 = vector.broadcast %191 : vector<1x256xf32> to vector<8x256xf32>
    %194 = arith.mulf %192, %193 : vector<8x256xf32>
    %c6_122 = arith.constant 6 : index
    %c0_123 = arith.constant 0 : index
    %c0_124 = arith.constant 0 : index
    %195 = vector.load %arg9[%c6_122, %c0_123, %c0_124] : memref<9x8x8xf32, #tpu.memory_space<vmem>>, vector<1x8x8xf32>
    %196 = vector.shape_cast %195 : vector<1x8x8xf32> to vector<8x8xf32>
    %cst_125 = arith.constant dense<0.000000e+00> : vector<8x256xf32>
    %197 = tpu.matmul %196, %194, %cst_125 {dimension_numbers = #tpu.dot_dimension_numbers<[1], [0], [0], [1], [0, 0, 1, 1], [], []>} : vector<8x8xf32>, vector<8x256xf32>, vector<8x256xf32> -> vector<8x256xf32>
    %198 = arith.addf %190, %197 : vector<8x256xf32>
    %199 = vector.extract_strided_slice %4 {offsets = [7, 0], sizes = [1, 256], strides = [1, 1]} : vector<9x256xf32> to vector<1x256xf32>
    %c240_i32_126 = arith.constant 240 : i32
    %200 = tpu.dynamic_rotate %143 by %c240_i32_126 dim 1 : vector<8x256xf32>, i32 -> vector<8x256xf32>
    %201 = vector.broadcast %199 : vector<1x256xf32> to vector<8x256xf32>
    %202 = arith.mulf %200, %201 : vector<8x256xf32>
    %c7_127 = arith.constant 7 : index
    %c0_128 = arith.constant 0 : index
    %c0_129 = arith.constant 0 : index
    %203 = vector.load %arg9[%c7_127, %c0_128, %c0_129] : memref<9x8x8xf32, #tpu.memory_space<vmem>>, vector<1x8x8xf32>
    %204 = vector.shape_cast %203 : vector<1x8x8xf32> to vector<8x8xf32>
    %cst_130 = arith.constant dense<0.000000e+00> : vector<8x256xf32>
    %205 = tpu.matmul %204, %202, %cst_130 {dimension_numbers = #tpu.dot_dimension_numbers<[1], [0], [0], [1], [0, 0, 1, 1], [], []>} : vector<8x8xf32>, vector<8x256xf32>, vector<8x256xf32> -> vector<8x256xf32>
    %206 = arith.addf %198, %205 : vector<8x256xf32>
    %207 = vector.extract_strided_slice %4 {offsets = [8, 0], sizes = [1, 256], strides = [1, 1]} : vector<9x256xf32> to vector<1x256xf32>
    %c239_i32_131 = arith.constant 239 : i32
    %208 = tpu.dynamic_rotate %143 by %c239_i32_131 dim 1 : vector<8x256xf32>, i32 -> vector<8x256xf32>
    %209 = vector.broadcast %207 : vector<1x256xf32> to vector<8x256xf32>
    %210 = arith.mulf %208, %209 : vector<8x256xf32>
    %c8_132 = arith.constant 8 : index
    %c0_133 = arith.constant 0 : index
    %c0_134 = arith.constant 0 : index
    %211 = vector.load %arg9[%c8_132, %c0_133, %c0_134] : memref<9x8x8xf32, #tpu.memory_space<vmem>>, vector<1x8x8xf32>
    %212 = vector.shape_cast %211 : vector<1x8x8xf32> to vector<8x8xf32>
    %cst_135 = arith.constant dense<0.000000e+00> : vector<8x256xf32>
    %213 = tpu.matmul %212, %210, %cst_135 {dimension_numbers = #tpu.dot_dimension_numbers<[1], [0], [0], [1], [0, 0, 1, 1], [], []>} : vector<8x8xf32>, vector<8x256xf32>, vector<8x256xf32> -> vector<8x256xf32>
    %214 = arith.addf %206, %213 : vector<8x256xf32>
    %215 = vector.broadcast %144 : vector<8x1xf32> to vector<8x256xf32>
    %216 = arith.mulf %214, %215 : vector<8x256xf32>
    %217 = vector.broadcast %145 : vector<8x1xf32> to vector<8x256xf32>
    %218 = arith.addf %216, %217 : vector<8x256xf32>
    %cst_136 = arith.constant 0.000000e+00 : f32
    %219 = vector.broadcast %cst_136 : f32 to vector<8x256xf32>
    %220 = arith.maximumf %218, %219 : vector<8x256xf32>
    %c0_137 = arith.constant 0 : index
    %c0_138 = arith.constant 0 : index
    %c0_139 = arith.constant 0 : index
    %221 = vector.load %arg12[%c0_137, %c0_138, %c0_139] : memref<1x8x256xf32, #tpu.memory_space<vmem>>, vector<1x8x256xf32>
    %222 = vector.shape_cast %221 : vector<1x8x256xf32> to vector<8x256xf32>
    %223 = vector.shape_cast %220 : vector<8x256xf32> to vector<1x8x256xf32>
    tpu.vector_store %arg12[%c0_137, %c0_138, %c0_139], %223 {strides = array<i32>} : memref<1x8x256xf32, #tpu.memory_space<vmem>>, vector<1x8x256xf32>,
    return
  }
  func.func @transform_0(%arg0: i32) -> (i32, i32, i32) {
    %c0_i32 = arith.constant 0 : i32
    %c0_i32_0 = arith.constant 0 : i32
    %c0_i32_1 = arith.constant 0 : i32
    return %arg0, %c0_i32, %c0_i32_0 : i32, i32, i32
  }
  func.func @transform_1(%arg0: i32) -> (i32, i32, i32) {
    %c0_i32 = arith.constant 0 : i32
    %c0_i32_0 = arith.constant 0 : i32
    %c0_i32_1 = arith.constant 0 : i32
    return %arg0, %c0_i32, %c0_i32_0 : i32, i32, i32
  }
  func.func @transform_2(%arg0: i32) -> (i32, i32) {
    %c0_i32 = arith.constant 0 : i32
    %c0_i32_0 = arith.constant 0 : i32
    %c0_i32_1 = arith.constant 0 : i32
    return %c0_i32, %c0_i32_0 : i32, i32
  }
  func.func @transform_3(%arg0: i32) -> (i32, i32) {
    %c0_i32 = arith.constant 0 : i32
    %c0_i32_0 = arith.constant 0 : i32
    %c0_i32_1 = arith.constant 0 : i32
    return %c0_i32, %c0_i32_0 : i32, i32
  }
  func.func @transform_4(%arg0: i32) -> (i32, i32, i32) {
    %c0_i32 = arith.constant 0 : i32
    %c0_i32_0 = arith.constant 0 : i32
    %c0_i32_1 = arith.constant 0 : i32
    %c0_i32_2 = arith.constant 0 : i32
    return %c0_i32, %c0_i32_0, %c0_i32_1 : i32, i32, i32
  }
  func.func @transform_5(%arg0: i32) -> (i32, i32, i32) {
    %c0_i32 = arith.constant 0 : i32
    %c0_i32_0 = arith.constant 0 : i32
    %c0_i32_1 = arith.constant 0 : i32
    %c0_i32_2 = arith.constant 0 : i32
    return %c0_i32, %c0_i32_0, %c0_i32_1 : i32, i32, i32
  }
  func.func @transform_6(%arg0: i32) -> (i32, i32) {
    %c0_i32 = arith.constant 0 : i32
    %c0_i32_0 = arith.constant 0 : i32
    %c0_i32_1 = arith.constant 0 : i32
    return %c0_i32, %c0_i32_0 : i32, i32
  }
  func.func @transform_7(%arg0: i32) -> (i32, i32) {
    %c0_i32 = arith.constant 0 : i32
    %c0_i32_0 = arith.constant 0 : i32
    %c0_i32_1 = arith.constant 0 : i32
    return %c0_i32, %c0_i32_0 : i32, i32
  }
  func.func @transform_8(%arg0: i32) -> (i32, i32, i32) {
    %c0_i32 = arith.constant 0 : i32
    %c0_i32_0 = arith.constant 0 : i32
    %c0_i32_1 = arith.constant 0 : i32
    %c0_i32_2 = arith.constant 0 : i32
    return %c0_i32, %c0_i32_0, %c0_i32_1 : i32, i32, i32
  }
  func.func @transform_9(%arg0: i32) -> (i32, i32) {
    %c0_i32 = arith.constant 0 : i32
    %c0_i32_0 = arith.constant 0 : i32
    %c0_i32_1 = arith.constant 0 : i32
    return %c0_i32, %c0_i32_0 : i32, i32
  }
  func.func @transform_10(%arg0: i32) -> (i32, i32) {
    %c0_i32 = arith.constant 0 : i32
    %c0_i32_0 = arith.constant 0 : i32
    %c0_i32_1 = arith.constant 0 : i32
    return %c0_i32, %c0_i32_0 : i32, i32
  }
  func.func @transform_11(%arg0: i32) -> (i32, i32, i32) {
    %c0_i32 = arith.constant 0 : i32
    %c0_i32_0 = arith.constant 0 : i32
    %c0_i32_1 = arith.constant 0 : i32
    return %arg0, %c0_i32, %c0_i32_0 : i32, i32, i32
  }
}

module attributes {stable_mosaic.version = 11 : i64} {
  func.func @fused_up_kernel(%arg0: i32, %arg1: memref<1x4x64xf32, #tpu.memory_space<vmem>>, %arg2: memref<1x4x256xf32, #tpu.memory_space<vmem>>, %arg3: memref<64x256xf32, #tpu.memory_space<vmem>>, %arg4: memref<9x256xf32, #tpu.memory_space<vmem>>, %arg5: memref<9x8x4xf32, #tpu.memory_space<vmem>>, %arg6: memref<9x8x4xf32, #tpu.memory_space<vmem>>, %arg7: memref<8x1xf32, #tpu.memory_space<vmem>>, %arg8: memref<8x1xf32, #tpu.memory_space<vmem>>, %arg9: memref<9x8x8xf32, #tpu.memory_space<vmem>>, %arg10: memref<8x1xf32, #tpu.memory_space<vmem>>, %arg11: memref<8x1xf32, #tpu.memory_space<vmem>>, %arg12: memref<1x8x256xf32, #tpu.memory_space<vmem>>) attributes {dimension_semantics = [#tpu.dimension_semantics<parallel>], iteration_bounds = array<i64: 2>, scalar_prefetch = 0 : i64, scratch_operands = 0 : i64, tpu.core_type = #tpu.core_type<tc>, window_params = [{transform_indices = @transform_0, window_bounds = array<i64: 1, 4, 64>}, {transform_indices = @transform_1, window_bounds = array<i64: 1, 4, 256>}, {pipeline_mode = #tpu.pipeline_mode<synchronous>, transform_indices = @transform_2, window_bounds = array<i64: 64, 256>}, {pipeline_mode = #tpu.pipeline_mode<synchronous>, transform_indices = @transform_3, window_bounds = array<i64: 9, 256>}, {pipeline_mode = #tpu.pipeline_mode<synchronous>, transform_indices = @transform_4, window_bounds = array<i64: 9, 8, 4>}, {pipeline_mode = #tpu.pipeline_mode<synchronous>, transform_indices = @transform_5, window_bounds = array<i64: 9, 8, 4>}, {pipeline_mode = #tpu.pipeline_mode<synchronous>, transform_indices = @transform_6, window_bounds = array<i64: 8, 1>}, {pipeline_mode = #tpu.pipeline_mode<synchronous>, transform_indices = @transform_7, window_bounds = array<i64: 8, 1>}, {pipeline_mode = #tpu.pipeline_mode<synchronous>, transform_indices = @transform_8, window_bounds = array<i64: 9, 8, 8>}, {pipeline_mode = #tpu.pipeline_mode<synchronous>, transform_indices = @transform_9, window_bounds = array<i64: 8, 1>}, {pipeline_mode = #tpu.pipeline_mode<synchronous>, transform_indices = @transform_10, window_bounds = array<i64: 8, 1>}, {transform_indices = @transform_11, window_bounds = array<i64: 1, 8, 256>}]} {
    %c0 = arith.constant 0 : index
    %c0_0 = arith.constant 0 : index
    %c0_1 = arith.constant 0 : index
    %0 = vector.load %arg1[%c0, %c0_0, %c0_1] : memref<1x4x64xf32, #tpu.memory_space<vmem>>, vector<1x4x64xf32>
    %1 = vector.shape_cast %0 : vector<1x4x64xf32> to vector<4x64xf32>
    %c0_2 = arith.constant 0 : index
    %c0_3 = arith.constant 0 : index
    %2 = vector.load %arg3[%c0_2, %c0_3] : memref<64x256xf32, #tpu.memory_space<vmem>>, vector<64x256xf32>
    %cst = arith.constant dense<0.000000e+00> : vector<4x256xf32>
    %3 = tpu.matmul %1, %2, %cst {dimension_numbers = #tpu.dot_dimension_numbers<[1], [0], [0], [1], [0, 0, 1, 1], [], []>} : vector<4x64xf32>, vector<64x256xf32>, vector<4x256xf32> -> vector<4x256xf32>
    %c0_4 = arith.constant 0 : index
    %c0_5 = arith.constant 0 : index
    %4 = vector.load %arg4[%c0_4, %c0_5] : memref<9x256xf32, #tpu.memory_space<vmem>>, vector<9x256xf32>
    %c0_6 = arith.constant 0 : index
    %c0_7 = arith.constant 0 : index
    %c0_8 = arith.constant 0 : index
    %5 = vector.load %arg2[%c0_6, %c0_7, %c0_8] : memref<1x4x256xf32, #tpu.memory_space<vmem>>, vector<1x4x256xf32>
    %6 = vector.shape_cast %5 : vector<1x4x256xf32> to vector<4x256xf32>
    %c0_9 = arith.constant 0 : index
    %c0_10 = arith.constant 0 : index
    %7 = vector.load %arg7[%c0_9, %c0_10] : memref<8x1xf32, #tpu.memory_space<vmem>>, vector<8x1xf32>
    %c0_11 = arith.constant 0 : index
    %c0_12 = arith.constant 0 : index
    %8 = vector.load %arg8[%c0_11, %c0_12] : memref<8x1xf32, #tpu.memory_space<vmem>>, vector<8x1xf32>
    %cst_13 = arith.constant 0.000000e+00 : f32
    %9 = vector.broadcast %cst_13 : f32 to vector<8x256xf32>
    %10 = vector.extract_strided_slice %4 {offsets = [0, 0], sizes = [1, 256], strides = [1, 1]} : vector<9x256xf32> to vector<1x256xf32>
    %c17_i32 = arith.constant 17 : i32
    %11 = tpu.dynamic_rotate %6 by %c17_i32 dim 1 : vector<4x256xf32>, i32 -> vector<4x256xf32>
    %12 = vector.broadcast %10 : vector<1x256xf32> to vector<4x256xf32>
    %13 = arith.mulf %11, %12 : vector<4x256xf32>
    %c0_14 = arith.constant 0 : index
    %c0_15 = arith.constant 0 : index
    %c0_16 = arith.constant 0 : index
    %14 = vector.load %arg5[%c0_14, %c0_15, %c0_16] : memref<9x8x4xf32, #tpu.memory_space<vmem>>, vector<1x8x4xf32>
    %15 = vector.shape_cast %14 : vector<1x8x4xf32> to vector<8x4xf32>
    %cst_17 = arith.constant dense<0.000000e+00> : vector<8x256xf32>
    %16 = tpu.matmul %15, %13, %cst_17 {dimension_numbers = #tpu.dot_dimension_numbers<[1], [0], [0], [1], [0, 0, 1, 1], [], []>} : vector<8x4xf32>, vector<4x256xf32>, vector<8x256xf32> -> vector<8x256xf32>
    %17 = arith.addf %9, %16 : vector<8x256xf32>
    %c17_i32_18 = arith.constant 17 : i32
    %18 = tpu.dynamic_rotate %3 by %c17_i32_18 dim 1 : vector<4x256xf32>, i32 -> vector<4x256xf32>
    %19 = vector.broadcast %10 : vector<1x256xf32> to vector<4x256xf32>
    %20 = arith.mulf %18, %19 : vector<4x256xf32>
    %c0_19 = arith.constant 0 : index
    %c0_20 = arith.constant 0 : index
    %c0_21 = arith.constant 0 : index
    %21 = vector.load %arg6[%c0_19, %c0_20, %c0_21] : memref<9x8x4xf32, #tpu.memory_space<vmem>>, vector<1x8x4xf32>
    %22 = vector.shape_cast %21 : vector<1x8x4xf32> to vector<8x4xf32>
    %cst_22 = arith.constant dense<0.000000e+00> : vector<8x256xf32>
    %23 = tpu.matmul %22, %20, %cst_22 {dimension_numbers = #tpu.dot_dimension_numbers<[1], [0], [0], [1], [0, 0, 1, 1], [], []>} : vector<8x4xf32>, vector<4x256xf32>, vector<8x256xf32> -> vector<8x256xf32>
    %24 = arith.addf %17, %23 : vector<8x256xf32>
    %25 = vector.extract_strided_slice %4 {offsets = [1, 0], sizes = [1, 256], strides = [1, 1]} : vector<9x256xf32> to vector<1x256xf32>
    %c16_i32 = arith.constant 16 : i32
    %26 = tpu.dynamic_rotate %6 by %c16_i32 dim 1 : vector<4x256xf32>, i32 -> vector<4x256xf32>
    %27 = vector.broadcast %25 : vector<1x256xf32> to vector<4x256xf32>
    %28 = arith.mulf %26, %27 : vector<4x256xf32>
    %c1 = arith.constant 1 : index
    %c0_23 = arith.constant 0 : index
    %c0_24 = arith.constant 0 : index
    %29 = vector.load %arg5[%c1, %c0_23, %c0_24] : memref<9x8x4xf32, #tpu.memory_space<vmem>>, vector<1x8x4xf32>
    %30 = vector.shape_cast %29 : vector<1x8x4xf32> to vector<8x4xf32>
    %cst_25 = arith.constant dense<0.000000e+00> : vector<8x256xf32>
    %31 = tpu.matmul %30, %28, %cst_25 {dimension_numbers = #tpu.dot_dimension_numbers<[1], [0], [0], [1], [0, 0, 1, 1], [], []>} : vector<8x4xf32>, vector<4x256xf32>, vector<8x256xf32> -> vector<8x256xf32>
    %32 = arith.addf %24, %31 : vector<8x256xf32>
    %c16_i32_26 = arith.constant 16 : i32
    %33 = tpu.dynamic_rotate %3 by %c16_i32_26 dim 1 : vector<4x256xf32>, i32 -> vector<4x256xf32>
    %34 = vector.broadcast %25 : vector<1x256xf32> to vector<4x256xf32>
    %35 = arith.mulf %33, %34 : vector<4x256xf32>
    %c1_27 = arith.constant 1 : index
    %c0_28 = arith.constant 0 : index
    %c0_29 = arith.constant 0 : index
    %36 = vector.load %arg6[%c1_27, %c0_28, %c0_29] : memref<9x8x4xf32, #tpu.memory_space<vmem>>, vector<1x8x4xf32>
    %37 = vector.shape_cast %36 : vector<1x8x4xf32> to vector<8x4xf32>
    %cst_30 = arith.constant dense<0.000000e+00> : vector<8x256xf32>
    %38 = tpu.matmul %37, %35, %cst_30 {dimension_numbers = #tpu.dot_dimension_numbers<[1], [0], [0], [1], [0, 0, 1, 1], [], []>} : vector<8x4xf32>, vector<4x256xf32>, vector<8x256xf32> -> vector<8x256xf32>
    %39 = arith.addf %32, %38 : vector<8x256xf32>
    %40 = vector.extract_strided_slice %4 {offsets = [2, 0], sizes = [1, 256], strides = [1, 1]} : vector<9x256xf32> to vector<1x256xf32>
    %c15_i32 = arith.constant 15 : i32
    %41 = tpu.dynamic_rotate %6 by %c15_i32 dim 1 : vector<4x256xf32>, i32 -> vector<4x256xf32>
    %42 = vector.broadcast %40 : vector<1x256xf32> to vector<4x256xf32>
    %43 = arith.mulf %41, %42 : vector<4x256xf32>
    %c2 = arith.constant 2 : index
    %c0_31 = arith.constant 0 : index
    %c0_32 = arith.constant 0 : index
    %44 = vector.load %arg5[%c2, %c0_31, %c0_32] : memref<9x8x4xf32, #tpu.memory_space<vmem>>, vector<1x8x4xf32>
    %45 = vector.shape_cast %44 : vector<1x8x4xf32> to vector<8x4xf32>
    %cst_33 = arith.constant dense<0.000000e+00> : vector<8x256xf32>
    %46 = tpu.matmul %45, %43, %cst_33 {dimension_numbers = #tpu.dot_dimension_numbers<[1], [0], [0], [1], [0, 0, 1, 1], [], []>} : vector<8x4xf32>, vector<4x256xf32>, vector<8x256xf32> -> vector<8x256xf32>
    %47 = arith.addf %39, %46 : vector<8x256xf32>
    %c15_i32_34 = arith.constant 15 : i32
    %48 = tpu.dynamic_rotate %3 by %c15_i32_34 dim 1 : vector<4x256xf32>, i32 -> vector<4x256xf32>
    %49 = vector.broadcast %40 : vector<1x256xf32> to vector<4x256xf32>
    %50 = arith.mulf %48, %49 : vector<4x256xf32>
    %c2_35 = arith.constant 2 : index
    %c0_36 = arith.constant 0 : index
    %c0_37 = arith.constant 0 : index
    %51 = vector.load %arg6[%c2_35, %c0_36, %c0_37] : memref<9x8x4xf32, #tpu.memory_space<vmem>>, vector<1x8x4xf32>
    %52 = vector.shape_cast %51 : vector<1x8x4xf32> to vector<8x4xf32>
    %cst_38 = arith.constant dense<0.000000e+00> : vector<8x256xf32>
    %53 = tpu.matmul %52, %50, %cst_38 {dimension_numbers = #tpu.dot_dimension_numbers<[1], [0], [0], [1], [0, 0, 1, 1], [], []>} : vector<8x4xf32>, vector<4x256xf32>, vector<8x256xf32> -> vector<8x256xf32>
    %54 = arith.addf %47, %53 : vector<8x256xf32>
    %55 = vector.extract_strided_slice %4 {offsets = [3, 0], sizes = [1, 256], strides = [1, 1]} : vector<9x256xf32> to vector<1x256xf32>
    %c1_i32 = arith.constant 1 : i32
    %56 = tpu.dynamic_rotate %6 by %c1_i32 dim 1 : vector<4x256xf32>, i32 -> vector<4x256xf32>
    %57 = vector.broadcast %55 : vector<1x256xf32> to vector<4x256xf32>
    %58 = arith.mulf %56, %57 : vector<4x256xf32>
    %c3 = arith.constant 3 : index
    %c0_39 = arith.constant 0 : index
    %c0_40 = arith.constant 0 : index
    %59 = vector.load %arg5[%c3, %c0_39, %c0_40] : memref<9x8x4xf32, #tpu.memory_space<vmem>>, vector<1x8x4xf32>
    %60 = vector.shape_cast %59 : vector<1x8x4xf32> to vector<8x4xf32>
    %cst_41 = arith.constant dense<0.000000e+00> : vector<8x256xf32>
    %61 = tpu.matmul %60, %58, %cst_41 {dimension_numbers = #tpu.dot_dimension_numbers<[1], [0], [0], [1], [0, 0, 1, 1], [], []>} : vector<8x4xf32>, vector<4x256xf32>, vector<8x256xf32> -> vector<8x256xf32>
    %62 = arith.addf %54, %61 : vector<8x256xf32>
    %c1_i32_42 = arith.constant 1 : i32
    %63 = tpu.dynamic_rotate %3 by %c1_i32_42 dim 1 : vector<4x256xf32>, i32 -> vector<4x256xf32>
    %64 = vector.broadcast %55 : vector<1x256xf32> to vector<4x256xf32>
    %65 = arith.mulf %63, %64 : vector<4x256xf32>
    %c3_43 = arith.constant 3 : index
    %c0_44 = arith.constant 0 : index
    %c0_45 = arith.constant 0 : index
    %66 = vector.load %arg6[%c3_43, %c0_44, %c0_45] : memref<9x8x4xf32, #tpu.memory_space<vmem>>, vector<1x8x4xf32>
    %67 = vector.shape_cast %66 : vector<1x8x4xf32> to vector<8x4xf32>
    %cst_46 = arith.constant dense<0.000000e+00> : vector<8x256xf32>
    %68 = tpu.matmul %67, %65, %cst_46 {dimension_numbers = #tpu.dot_dimension_numbers<[1], [0], [0], [1], [0, 0, 1, 1], [], []>} : vector<8x4xf32>, vector<4x256xf32>, vector<8x256xf32> -> vector<8x256xf32>
    %69 = arith.addf %62, %68 : vector<8x256xf32>
    %c4 = arith.constant 4 : index
    %c0_47 = arith.constant 0 : index
    %c0_48 = arith.constant 0 : index
    %70 = vector.load %arg5[%c4, %c0_47, %c0_48] : memref<9x8x4xf32, #tpu.memory_space<vmem>>, vector<1x8x4xf32>
    %71 = vector.shape_cast %70 : vector<1x8x4xf32> to vector<8x4xf32>
    %cst_49 = arith.constant dense<0.000000e+00> : vector<8x256xf32>
    %72 = tpu.matmul %71, %6, %cst_49 {dimension_numbers = #tpu.dot_dimension_numbers<[1], [0], [0], [1], [0, 0, 1, 1], [], []>} : vector<8x4xf32>, vector<4x256xf32>, vector<8x256xf32> -> vector<8x256xf32>
    %73 = arith.addf %69, %72 : vector<8x256xf32>
    %c4_50 = arith.constant 4 : index
    %c0_51 = arith.constant 0 : index
    %c0_52 = arith.constant 0 : index
    %74 = vector.load %arg6[%c4_50, %c0_51, %c0_52] : memref<9x8x4xf32, #tpu.memory_space<vmem>>, vector<1x8x4xf32>
    %75 = vector.shape_cast %74 : vector<1x8x4xf32> to vector<8x4xf32>
    %cst_53 = arith.constant dense<0.000000e+00> : vector<8x256xf32>
    %76 = tpu.matmul %75, %3, %cst_53 {dimension_numbers = #tpu.dot_dimension_numbers<[1], [0], [0], [1], [0, 0, 1, 1], [], []>} : vector<8x4xf32>, vector<4x256xf32>, vector<8x256xf32> -> vector<8x256xf32>
    %77 = arith.addf %73, %76 : vector<8x256xf32>
    %78 = vector.extract_strided_slice %4 {offsets = [5, 0], sizes = [1, 256], strides = [1, 1]} : vector<9x256xf32> to vector<1x256xf32>
    %c255_i32 = arith.constant 255 : i32
    %79 = tpu.dynamic_rotate %6 by %c255_i32 dim 1 : vector<4x256xf32>, i32 -> vector<4x256xf32>
    %80 = vector.broadcast %78 : vector<1x256xf32> to vector<4x256xf32>
    %81 = arith.mulf %79, %80 : vector<4x256xf32>
    %c5 = arith.constant 5 : index
    %c0_54 = arith.constant 0 : index
    %c0_55 = arith.constant 0 : index
    %82 = vector.load %arg5[%c5, %c0_54, %c0_55] : memref<9x8x4xf32, #tpu.memory_space<vmem>>, vector<1x8x4xf32>
    %83 = vector.shape_cast %82 : vector<1x8x4xf32> to vector<8x4xf32>
    %cst_56 = arith.constant dense<0.000000e+00> : vector<8x256xf32>
    %84 = tpu.matmul %83, %81, %cst_56 {dimension_numbers = #tpu.dot_dimension_numbers<[1], [0], [0], [1], [0, 0, 1, 1], [], []>} : vector<8x4xf32>, vector<4x256xf32>, vector<8x256xf32> -> vector<8x256xf32>
    %85 = arith.addf %77, %84 : vector<8x256xf32>
    %c255_i32_57 = arith.constant 255 : i32
    %86 = tpu.dynamic_rotate %3 by %c255_i32_57 dim 1 : vector<4x256xf32>, i32 -> vector<4x256xf32>
    %87 = vector.broadcast %78 : vector<1x256xf32> to vector<4x256xf32>
    %88 = arith.mulf %86, %87 : vector<4x256xf32>
    %c5_58 = arith.constant 5 : index
    %c0_59 = arith.constant 0 : index
    %c0_60 = arith.constant 0 : index
    %89 = vector.load %arg6[%c5_58, %c0_59, %c0_60] : memref<9x8x4xf32, #tpu.memory_space<vmem>>, vector<1x8x4xf32>
    %90 = vector.shape_cast %89 : vector<1x8x4xf32> to vector<8x4xf32>
    %cst_61 = arith.constant dense<0.000000e+00> : vector<8x256xf32>
    %91 = tpu.matmul %90, %88, %cst_61 {dimension_numbers = #tpu.dot_dimension_numbers<[1], [0], [0], [1], [0, 0, 1, 1], [], []>} : vector<8x4xf32>, vector<4x256xf32>, vector<8x256xf32> -> vector<8x256xf32>
    %92 = arith.addf %85, %91 : vector<8x256xf32>
    %93 = vector.extract_strided_slice %4 {offsets = [6, 0], sizes = [1, 256], strides = [1, 1]} : vector<9x256xf32> to vector<1x256xf32>
    %c241_i32 = arith.constant 241 : i32
    %94 = tpu.dynamic_rotate %6 by %c241_i32 dim 1 : vector<4x256xf32>, i32 -> vector<4x256xf32>
    %95 = vector.broadcast %93 : vector<1x256xf32> to vector<4x256xf32>
    %96 = arith.mulf %94, %95 : vector<4x256xf32>
    %c6 = arith.constant 6 : index
    %c0_62 = arith.constant 0 : index
    %c0_63 = arith.constant 0 : index
    %97 = vector.load %arg5[%c6, %c0_62, %c0_63] : memref<9x8x4xf32, #tpu.memory_space<vmem>>, vector<1x8x4xf32>
    %98 = vector.shape_cast %97 : vector<1x8x4xf32> to vector<8x4xf32>
    %cst_64 = arith.constant dense<0.000000e+00> : vector<8x256xf32>
    %99 = tpu.matmul %98, %96, %cst_64 {dimension_numbers = #tpu.dot_dimension_numbers<[1], [0], [0], [1], [0, 0, 1, 1], [], []>} : vector<8x4xf32>, vector<4x256xf32>, vector<8x256xf32> -> vector<8x256xf32>
    %100 = arith.addf %92, %99 : vector<8x256xf32>
    %c241_i32_65 = arith.constant 241 : i32
    %101 = tpu.dynamic_rotate %3 by %c241_i32_65 dim 1 : vector<4x256xf32>, i32 -> vector<4x256xf32>
    %102 = vector.broadcast %93 : vector<1x256xf32> to vector<4x256xf32>
    %103 = arith.mulf %101, %102 : vector<4x256xf32>
    %c6_66 = arith.constant 6 : index
    %c0_67 = arith.constant 0 : index
    %c0_68 = arith.constant 0 : index
    %104 = vector.load %arg6[%c6_66, %c0_67, %c0_68] : memref<9x8x4xf32, #tpu.memory_space<vmem>>, vector<1x8x4xf32>
    %105 = vector.shape_cast %104 : vector<1x8x4xf32> to vector<8x4xf32>
    %cst_69 = arith.constant dense<0.000000e+00> : vector<8x256xf32>
    %106 = tpu.matmul %105, %103, %cst_69 {dimension_numbers = #tpu.dot_dimension_numbers<[1], [0], [0], [1], [0, 0, 1, 1], [], []>} : vector<8x4xf32>, vector<4x256xf32>, vector<8x256xf32> -> vector<8x256xf32>
    %107 = arith.addf %100, %106 : vector<8x256xf32>
    %108 = vector.extract_strided_slice %4 {offsets = [7, 0], sizes = [1, 256], strides = [1, 1]} : vector<9x256xf32> to vector<1x256xf32>
    %c240_i32 = arith.constant 240 : i32
    %109 = tpu.dynamic_rotate %6 by %c240_i32 dim 1 : vector<4x256xf32>, i32 -> vector<4x256xf32>
    %110 = vector.broadcast %108 : vector<1x256xf32> to vector<4x256xf32>
    %111 = arith.mulf %109, %110 : vector<4x256xf32>
    %c7 = arith.constant 7 : index
    %c0_70 = arith.constant 0 : index
    %c0_71 = arith.constant 0 : index
    %112 = vector.load %arg5[%c7, %c0_70, %c0_71] : memref<9x8x4xf32, #tpu.memory_space<vmem>>, vector<1x8x4xf32>
    %113 = vector.shape_cast %112 : vector<1x8x4xf32> to vector<8x4xf32>
    %cst_72 = arith.constant dense<0.000000e+00> : vector<8x256xf32>
    %114 = tpu.matmul %113, %111, %cst_72 {dimension_numbers = #tpu.dot_dimension_numbers<[1], [0], [0], [1], [0, 0, 1, 1], [], []>} : vector<8x4xf32>, vector<4x256xf32>, vector<8x256xf32> -> vector<8x256xf32>
    %115 = arith.addf %107, %114 : vector<8x256xf32>
    %c240_i32_73 = arith.constant 240 : i32
    %116 = tpu.dynamic_rotate %3 by %c240_i32_73 dim 1 : vector<4x256xf32>, i32 -> vector<4x256xf32>
    %117 = vector.broadcast %108 : vector<1x256xf32> to vector<4x256xf32>
    %118 = arith.mulf %116, %117 : vector<4x256xf32>
    %c7_74 = arith.constant 7 : index
    %c0_75 = arith.constant 0 : index
    %c0_76 = arith.constant 0 : index
    %119 = vector.load %arg6[%c7_74, %c0_75, %c0_76] : memref<9x8x4xf32, #tpu.memory_space<vmem>>, vector<1x8x4xf32>
    %120 = vector.shape_cast %119 : vector<1x8x4xf32> to vector<8x4xf32>
    %cst_77 = arith.constant dense<0.000000e+00> : vector<8x256xf32>
    %121 = tpu.matmul %120, %118, %cst_77 {dimension_numbers = #tpu.dot_dimension_numbers<[1], [0], [0], [1], [0, 0, 1, 1], [], []>} : vector<8x4xf32>, vector<4x256xf32>, vector<8x256xf32> -> vector<8x256xf32>
    %122 = arith.addf %115, %121 : vector<8x256xf32>
    %123 = vector.extract_strided_slice %4 {offsets = [8, 0], sizes = [1, 256], strides = [1, 1]} : vector<9x256xf32> to vector<1x256xf32>
    %c239_i32 = arith.constant 239 : i32
    %124 = tpu.dynamic_rotate %6 by %c239_i32 dim 1 : vector<4x256xf32>, i32 -> vector<4x256xf32>
    %125 = vector.broadcast %123 : vector<1x256xf32> to vector<4x256xf32>
    %126 = arith.mulf %124, %125 : vector<4x256xf32>
    %c8 = arith.constant 8 : index
    %c0_78 = arith.constant 0 : index
    %c0_79 = arith.constant 0 : index
    %127 = vector.load %arg5[%c8, %c0_78, %c0_79] : memref<9x8x4xf32, #tpu.memory_space<vmem>>, vector<1x8x4xf32>
    %128 = vector.shape_cast %127 : vector<1x8x4xf32> to vector<8x4xf32>
    %cst_80 = arith.constant dense<0.000000e+00> : vector<8x256xf32>
    %129 = tpu.matmul %128, %126, %cst_80 {dimension_numbers = #tpu.dot_dimension_numbers<[1], [0], [0], [1], [0, 0, 1, 1], [], []>} : vector<8x4xf32>, vector<4x256xf32>, vector<8x256xf32> -> vector<8x256xf32>
    %130 = arith.addf %122, %129 : vector<8x256xf32>
    %c239_i32_81 = arith.constant 239 : i32
    %131 = tpu.dynamic_rotate %3 by %c239_i32_81 dim 1 : vector<4x256xf32>, i32 -> vector<4x256xf32>
    %132 = vector.broadcast %123 : vector<1x256xf32> to vector<4x256xf32>
    %133 = arith.mulf %131, %132 : vector<4x256xf32>
    %c8_82 = arith.constant 8 : index
    %c0_83 = arith.constant 0 : index
    %c0_84 = arith.constant 0 : index
    %134 = vector.load %arg6[%c8_82, %c0_83, %c0_84] : memref<9x8x4xf32, #tpu.memory_space<vmem>>, vector<1x8x4xf32>
    %135 = vector.shape_cast %134 : vector<1x8x4xf32> to vector<8x4xf32>
    %cst_85 = arith.constant dense<0.000000e+00> : vector<8x256xf32>
    %136 = tpu.matmul %135, %133, %cst_85 {dimension_numbers = #tpu.dot_dimension_numbers<[1], [0], [0], [1], [0, 0, 1, 1], [], []>} : vector<8x4xf32>, vector<4x256xf32>, vector<8x256xf32> -> vector<8x256xf32>
    %137 = arith.addf %130, %136 : vector<8x256xf32>
    %138 = vector.broadcast %7 : vector<8x1xf32> to vector<8x256xf32>
    %139 = arith.mulf %137, %138 : vector<8x256xf32>
    %140 = vector.broadcast %8 : vector<8x1xf32> to vector<8x256xf32>
    %141 = arith.addf %139, %140 : vector<8x256xf32>
    %cst_86 = arith.constant 0.000000e+00 : f32
    %142 = vector.broadcast %cst_86 : f32 to vector<8x256xf32>
    %143 = arith.maximumf %141, %142 : vector<8x256xf32>
    %c0_87 = arith.constant 0 : index
    %c0_88 = arith.constant 0 : index
    %144 = vector.load %arg10[%c0_87, %c0_88] : memref<8x1xf32, #tpu.memory_space<vmem>>, vector<8x1xf32>
    %c0_89 = arith.constant 0 : index
    %c0_90 = arith.constant 0 : index
    %145 = vector.load %arg11[%c0_89, %c0_90] : memref<8x1xf32, #tpu.memory_space<vmem>>, vector<8x1xf32>
    %cst_91 = arith.constant 0.000000e+00 : f32
    %146 = vector.broadcast %cst_91 : f32 to vector<8x256xf32>
    %147 = vector.extract_strided_slice %4 {offsets = [0, 0], sizes = [1, 256], strides = [1, 1]} : vector<9x256xf32> to vector<1x256xf32>
    %c17_i32_92 = arith.constant 17 : i32
    %148 = tpu.dynamic_rotate %143 by %c17_i32_92 dim 1 : vector<8x256xf32>, i32 -> vector<8x256xf32>
    %149 = vector.broadcast %147 : vector<1x256xf32> to vector<8x256xf32>
    %150 = arith.mulf %148, %149 : vector<8x256xf32>
    %c0_93 = arith.constant 0 : index
    %c0_94 = arith.constant 0 : index
    %c0_95 = arith.constant 0 : index
    %151 = vector.load %arg9[%c0_93, %c0_94, %c0_95] : memref<9x8x8xf32, #tpu.memory_space<vmem>>, vector<1x8x8xf32>
    %152 = vector.shape_cast %151 : vector<1x8x8xf32> to vector<8x8xf32>
    %cst_96 = arith.constant dense<0.000000e+00> : vector<8x256xf32>
    %153 = tpu.matmul %152, %150, %cst_96 {dimension_numbers = #tpu.dot_dimension_numbers<[1], [0], [0], [1], [0, 0, 1, 1], [], []>} : vector<8x8xf32>, vector<8x256xf32>, vector<8x256xf32> -> vector<8x256xf32>
    %154 = arith.addf %146, %153 : vector<8x256xf32>
    %155 = vector.extract_strided_slice %4 {offsets = [1, 0], sizes = [1, 256], strides = [1, 1]} : vector<9x256xf32> to vector<1x256xf32>
    %c16_i32_97 = arith.constant 16 : i32
    %156 = tpu.dynamic_rotate %143 by %c16_i32_97 dim 1 : vector<8x256xf32>, i32 -> vector<8x256xf32>
    %157 = vector.broadcast %155 : vector<1x256xf32> to vector<8x256xf32>
    %158 = arith.mulf %156, %157 : vector<8x256xf32>
    %c1_98 = arith.constant 1 : index
    %c0_99 = arith.constant 0 : index
    %c0_100 = arith.constant 0 : index
    %159 = vector.load %arg9[%c1_98, %c0_99, %c0_100] : memref<9x8x8xf32, #tpu.memory_space<vmem>>, vector<1x8x8xf32>
    %160 = vector.shape_cast %159 : vector<1x8x8xf32> to vector<8x8xf32>
    %cst_101 = arith.constant dense<0.000000e+00> : vector<8x256xf32>
    %161 = tpu.matmul %160, %158, %cst_101 {dimension_numbers = #tpu.dot_dimension_numbers<[1], [0], [0], [1], [0, 0, 1, 1], [], []>} : vector<8x8xf32>, vector<8x256xf32>, vector<8x256xf32> -> vector<8x256xf32>
    %162 = arith.addf %154, %161 : vector<8x256xf32>
    %163 = vector.extract_strided_slice %4 {offsets = [2, 0], sizes = [1, 256], strides = [1, 1]} : vector<9x256xf32> to vector<1x256xf32>
    %c15_i32_102 = arith.constant 15 : i32
    %164 = tpu.dynamic_rotate %143 by %c15_i32_102 dim 1 : vector<8x256xf32>, i32 -> vector<8x256xf32>
    %165 = vector.broadcast %163 : vector<1x256xf32> to vector<8x256xf32>
    %166 = arith.mulf %164, %165 : vector<8x256xf32>
    %c2_103 = arith.constant 2 : index
    %c0_104 = arith.constant 0 : index
    %c0_105 = arith.constant 0 : index
    %167 = vector.load %arg9[%c2_103, %c0_104, %c0_105] : memref<9x8x8xf32, #tpu.memory_space<vmem>>, vector<1x8x8xf32>
    %168 = vector.shape_cast %167 : vector<1x8x8xf32> to vector<8x8xf32>
    %cst_106 = arith.constant dense<0.000000e+00> : vector<8x256xf32>
    %169 = tpu.matmul %168, %166, %cst_106 {dimension_numbers = #tpu.dot_dimension_numbers<[1], [0], [0], [1], [0, 0, 1, 1], [], []>} : vector<8x8xf32>, vector<8x256xf32>, vector<8x256xf32> -> vector<8x256xf32>
    %170 = arith.addf %162, %169 : vector<8x256xf32>
    %171 = vector.extract_strided_slice %4 {offsets = [3, 0], sizes = [1, 256], strides = [1, 1]} : vector<9x256xf32> to vector<1x256xf32>
    %c1_i32_107 = arith.constant 1 : i32
    %172 = tpu.dynamic_rotate %143 by %c1_i32_107 dim 1 : vector<8x256xf32>, i32 -> vector<8x256xf32>
    %173 = vector.broadcast %171 : vector<1x256xf32> to vector<8x256xf32>
    %174 = arith.mulf %172, %173 : vector<8x256xf32>
    %c3_108 = arith.constant 3 : index
    %c0_109 = arith.constant 0 : index
    %c0_110 = arith.constant 0 : index
    %175 = vector.load %arg9[%c3_108, %c0_109, %c0_110] : memref<9x8x8xf32, #tpu.memory_space<vmem>>, vector<1x8x8xf32>
    %176 = vector.shape_cast %175 : vector<1x8x8xf32> to vector<8x8xf32>
    %cst_111 = arith.constant dense<0.000000e+00> : vector<8x256xf32>
    %177 = tpu.matmul %176, %174, %cst_111 {dimension_numbers = #tpu.dot_dimension_numbers<[1], [0], [0], [1], [0, 0, 1, 1], [], []>} : vector<8x8xf32>, vector<8x256xf32>, vector<8x256xf32> -> vector<8x256xf32>
    %178 = arith.addf %170, %177 : vector<8x256xf32>
    %c4_112 = arith.constant 4 : index
    %c0_113 = arith.constant 0 : index
    %c0_114 = arith.constant 0 : index
    %179 = vector.load %arg9[%c4_112, %c0_113, %c0_114] : memref<9x8x8xf32, #tpu.memory_space<vmem>>, vector<1x8x8xf32>
    %180 = vector.shape_cast %179 : vector<1x8x8xf32> to vector<8x8xf32>
    %cst_115 = arith.constant dense<0.000000e+00> : vector<8x256xf32>
    %181 = tpu.matmul %180, %143, %cst_115 {dimension_numbers = #tpu.dot_dimension_numbers<[1], [0], [0], [1], [0, 0, 1, 1], [], []>} : vector<8x8xf32>, vector<8x256xf32>, vector<8x256xf32> -> vector<8x256xf32>
    %182 = arith.addf %178, %181 : vector<8x256xf32>
    %183 = vector.extract_strided_slice %4 {offsets = [5, 0], sizes = [1, 256], strides = [1, 1]} : vector<9x256xf32> to vector<1x256xf32>
    %c255_i32_116 = arith.constant 255 : i32
    %184 = tpu.dynamic_rotate %143 by %c255_i32_116 dim 1 : vector<8x256xf32>, i32 -> vector<8x256xf32>
    %185 = vector.broadcast %183 : vector<1x256xf32> to vector<8x256xf32>
    %186 = arith.mulf %184, %185 : vector<8x256xf32>
    %c5_117 = arith.constant 5 : index
    %c0_118 = arith.constant 0 : index
    %c0_119 = arith.constant 0 : index
    %187 = vector.load %arg9[%c5_117, %c0_118, %c0_119] : memref<9x8x8xf32, #tpu.memory_space<vmem>>, vector<1x8x8xf32>
    %188 = vector.shape_cast %187 : vector<1x8x8xf32> to vector<8x8xf32>
    %cst_120 = arith.constant dense<0.000000e+00> : vector<8x256xf32>
    %189 = tpu.matmul %188, %186, %cst_120 {dimension_numbers = #tpu.dot_dimension_numbers<[1], [0], [0], [1], [0, 0, 1, 1], [], []>} : vector<8x8xf32>, vector<8x256xf32>, vector<8x256xf32> -> vector<8x256xf32>
    %190 = arith.addf %182, %189 : vector<8x256xf32>
    %191 = vector.extract_strided_slice %4 {offsets = [6, 0], sizes = [1, 256], strides = [1, 1]} : vector<9x256xf32> to vector<1x256xf32>
    %c241_i32_121 = arith.constant 241 : i32
    %192 = tpu.dynamic_rotate %143 by %c241_i32_121 dim 1 : vector<8x256xf32>, i32 -> vector<8x256xf32>
    %193 = vector.broadcast %191 : vector<1x256xf32> to vector<8x256xf32>
    %194 = arith.mulf %192, %193 : vector<8x256xf32>
    %c6_122 = arith.constant 6 : index
    %c0_123 = arith.constant 0 : index
    %c0_124 = arith.constant 0 : index
    %195 = vector.load %arg9[%c6_122, %c0_123, %c0_124] : memref<9x8x8xf32, #tpu.memory_space<vmem>>, vector<1x8x8xf32>
    %196 = vector.shape_cast %195 : vector<1x8x8xf32> to vector<8x8xf32>
    %cst_125 = arith.constant dense<0.000000e+00> : vector<8x256xf32>
    %197 = tpu.matmul %196, %194, %cst_125 {dimension_numbers = #tpu.dot_dimension_numbers<[1], [0], [0], [1], [0, 0, 1, 1], [], []>} : vector<8x8xf32>, vector<8x256xf32>, vector<8x256xf32> -> vector<8x256xf32>
    %198 = arith.addf %190, %197 : vector<8x256xf32>
    %199 = vector.extract_strided_slice %4 {offsets = [7, 0], sizes = [1, 256], strides = [1, 1]} : vector<9x256xf32> to vector<1x256xf32>
    %c240_i32_126 = arith.constant 240 : i32
    %200 = tpu.dynamic_rotate %143 by %c240_i32_126 dim 1 : vector<8x256xf32>, i32 -> vector<8x256xf32>
    %201 = vector.broadcast %199 : vector<1x256xf32> to vector<8x256xf32>
    %202 = arith.mulf %200, %201 : vector<8x256xf32>
    %c7_127 = arith.constant 7 : index
    %c0_128 = arith.constant 0 : index
    %c0_129 = arith.constant 0 : index
    %203 = vector.load %arg9[%c7_127, %c0_128, %c0_129] : memref<9x8x8xf32, #tpu.memory_space<vmem>>, vector<1x8x8xf32>
    %204 = vector.shape_cast %203 : vector<1x8x8xf32> to vector<8x8xf32>
    %cst_130 = arith.constant dense<0.000000e+00> : vector<8x256xf32>
    %205 = tpu.matmul %204, %202, %cst_130 {dimension_numbers = #tpu.dot_dimension_numbers<[1], [0], [0], [1], [0, 0, 1, 1], [], []>} : vector<8x8xf32>, vector<8x256xf32>, vector<8x256xf32> -> vector<8x256xf32>
    %206 = arith.addf %198, %205 : vector<8x256xf32>
    %207 = vector.extract_strided_slice %4 {offsets = [8, 0], sizes = [1, 256], strides = [1, 1]} : vector<9x256xf32> to vector<1x256xf32>
    %c239_i32_131 = arith.constant 239 : i32
    %208 = tpu.dynamic_rotate %143 by %c239_i32_131 dim 1 : vector<8x256xf32>, i32 -> vector<8x256xf32>
    %209 = vector.broadcast %207 : vector<1x256xf32> to vector<8x256xf32>
    %210 = arith.mulf %208, %209 : vector<8x256xf32>
    %c8_132 = arith.constant 8 : index
    %c0_133 = arith.constant 0 : index
    %c0_134 = arith.constant 0 : index
    %211 = vector.load %arg9[%c8_132, %c0_133, %c0_134] : memref<9x8x8xf32, #tpu.memory_space<vmem>>, vector<1x8x8xf32>
    %212 = vector.shape_cast %211 : vector<1x8x8xf32> to vector<8x8xf32>
    %cst_135 = arith.constant dense<0.000000e+00> : vector<8x256xf32>
    %213 = tpu.matmul %212, %210, %cst_135 {dimension_numbers = #tpu.dot_dimension_numbers<[1], [0], [0], [1], [0, 0, 1, 1], [], []>} : vector<8x8xf32>, vector<8x256xf32>, vector<8x256xf32> -> vector<8x256xf32>
    %214 = arith.addf %206, %213 : vector<8x256xf32>
    %215 = vector.broadcast %144 : vector<8x1xf32> to vector<8x256xf32>
    %216 = arith.mulf %214, %215 : vector<8x256xf32>
    %217 = vector.broadcast %145 : vector<8x1xf32> to vector<8x256xf32>
    %218 = arith.addf %216, %217 : vector<8x256xf32>
    %cst_136 = arith.constant 0.000000e+00 : f32
    %219 = vector.broadcast %cst_136 : f32 to vector<8x256xf32>
    %220 = arith.maximumf %218, %219 : vector<8x256xf32>
    %c0_137 = arith.constant 0 : index
    %c0_138 = arith.constant 0 : index
    %c0_139 = arith.constant 0 : index
    %221 = vector.load %arg12[%c0_137, %c0_138, %c0_139] : memref<1x8x256xf32, #tpu.memory_space<vmem>>, vector<1x8x256xf32>
    %222 = vector.shape_cast %221 : vector<1x8x256xf32> to vector<8x256xf32>
    %223 = vector.shape_cast %220 : vector<8x256xf32> to vector<1x8x256xf32>
    tpu.vector_store %arg12[%c0_137, %c0_138, %c0_139], %223 {strides = array<i32>} : memref<1x8x256xf32, #tpu.memory_space<vmem>>, vector<1x8x256xf32>,
    return
  }
  func.func @transform_0(%arg0: i32) -> (i32, i32, i32) {
    %c0_i32 = arith.constant 0 : i32
    %c0_i32_0 = arith.constant 0 : i32
    %c0_i32_1 = arith.constant 0 : i32
    return %arg0, %c0_i32, %c0_i32_0 : i32, i32, i32
  }
  func.func @transform_1(%arg0: i32) -> (i32, i32, i32) {
    %c0_i32 = arith.constant 0 : i32
    %c0_i32_0 = arith.constant 0 : i32
    %c0_i32_1 = arith.constant 0 : i32
    return %arg0, %c0_i32, %c0_i32_0 : i32, i32, i32
  }
  func.func @transform_2(%arg0: i32) -> (i32, i32) {
    %c0_i32 = arith.constant 0 : i32
    %c0_i32_0 = arith.constant 0 : i32
    %c0_i32_1 = arith.constant 0 : i32
    return %c0_i32, %c0_i32_0 : i32, i32
  }
  func.func @transform_3(%arg0: i32) -> (i32, i32) {
    %c0_i32 = arith.constant 0 : i32
    %c0_i32_0 = arith.constant 0 : i32
    %c0_i32_1 = arith.constant 0 : i32
    return %c0_i32, %c0_i32_0 : i32, i32
  }
  func.func @transform_4(%arg0: i32) -> (i32, i32, i32) {
    %c0_i32 = arith.constant 0 : i32
    %c0_i32_0 = arith.constant 0 : i32
    %c0_i32_1 = arith.constant 0 : i32
    %c0_i32_2 = arith.constant 0 : i32
    return %c0_i32, %c0_i32_0, %c0_i32_1 : i32, i32, i32
  }
  func.func @transform_5(%arg0: i32) -> (i32, i32, i32) {
    %c0_i32 = arith.constant 0 : i32
    %c0_i32_0 = arith.constant 0 : i32
    %c0_i32_1 = arith.constant 0 : i32
    %c0_i32_2 = arith.constant 0 : i32
    return %c0_i32, %c0_i32_0, %c0_i32_1 : i32, i32, i32
  }
  func.func @transform_6(%arg0: i32) -> (i32, i32) {
    %c0_i32 = arith.constant 0 : i32
    %c0_i32_0 = arith.constant 0 : i32
    %c0_i32_1 = arith.constant 0 : i32
    return %c0_i32, %c0_i32_0 : i32, i32
  }
  func.func @transform_7(%arg0: i32) -> (i32, i32) {
    %c0_i32 = arith.constant 0 : i32
    %c0_i32_0 = arith.constant 0 : i32
    %c0_i32_1 = arith.constant 0 : i32
    return %c0_i32, %c0_i32_0 : i32, i32
  }
  func.func @transform_8(%arg0: i32) -> (i32, i32, i32) {
    %c0_i32 = arith.constant 0 : i32
    %c0_i32_0 = arith.constant 0 : i32
    %c0_i32_1 = arith.constant 0 : i32
    %c0_i32_2 = arith.constant 0 : i32
    return %c0_i32, %c0_i32_0, %c0_i32_1 : i32, i32, i32
  }
  func.func @transform_9(%arg0: i32) -> (i32, i32) {
    %c0_i32 = arith.constant 0 : i32
    %c0_i32_0 = arith.constant 0 : i32
    %c0_i32_1 = arith.constant 0 : i32
    return %c0_i32, %c0_i32_0 : i32, i32
  }
  func.func @transform_10(%arg0: i32) -> (i32, i32) {
    %c0_i32 = arith.constant 0 : i32
    %c0_i32_0 = arith.constant 0 : i32
    %c0_i32_1 = arith.constant 0 : i32
    return %c0_i32, %c0_i32_0 : i32, i32
  }
  func.func @transform_11(%arg0: i32) -> (i32, i32, i32) {
    %c0_i32 = arith.constant 0 : i32
    %c0_i32_0 = arith.constant 0 : i32
    %c0_i32_1 = arith.constant 0 : i32
    return %arg0, %c0_i32, %c0_i32_0 : i32, i32, i32
  }
}

</mosaic_0001>

<llo_original>
// kernel: tpu_custom_call.1
$region0: #{tpu_custom_call.1}
  #allocation0 [shape = 'u32[]', space=smem, size = 0x4, offset = 0x4, fixed_abs, tag = 'smem constant byte address 0x4 - core index']
  #allocation1 [shape = 'u32[144,128]{1,0:T(1,128)}', space=vmem, size = 0x12000, scoped, tag = 'internal scratch']
  %s0 = inlined_call_operand.vmem [shape: f32[2,4,64], index: 0, kind: input, shape index: {}]
  %s1 = inlined_call_operand.vmem [shape: f32[2,4,256], index: 1, kind: input, shape index: {}]
  %s2 = inlined_call_operand.vmem [shape: f32[64,256], index: 2, kind: input, shape index: {}]
  %s3 = inlined_call_operand.vmem [shape: f32[9,256], index: 3, kind: input, shape index: {}]
  %s4 = inlined_call_operand.vmem [shape: f32[9,8,4], index: 4, kind: input, shape index: {}]
  %s5 = inlined_call_operand.vmem [shape: f32[9,8,4], index: 5, kind: input, shape index: {}]
  %s6 = inlined_call_operand.vmem [shape: f32[8,1], index: 6, kind: input, shape index: {}]
  %s7 = inlined_call_operand.vmem [shape: f32[8,1], index: 7, kind: input, shape index: {}]
  %s8 = inlined_call_operand.vmem [shape: f32[9,8,8], index: 8, kind: input, shape index: {}]
  %s9 = inlined_call_operand.vmem [shape: f32[8,1], index: 9, kind: input, shape index: {}]
  %s10 = inlined_call_operand.vmem [shape: f32[8,1], index: 10, kind: input, shape index: {}]
  %s11 = inlined_call_operand.hbm [shape: f32[2,8,256], index: 11, kind: output, shape index: {}]
  %s12 = sld [smem:[#allocation0]]
  $region77: #{tpu_custom_call.1} parent=0
    _
  %s14 = ssub.s32 1, %s12
  %s15 = scalar_select 0, %s14, %s12
  $region1: #{tpu_custom_call.1} parent=0
    #allocation2 [shape = 'u8[16384]{0}', space=vmem, size = 0x4000, scoped, tag = 'output window, operand 0']
    #allocation3 [shape = 's32[2]{0}', space=sflag, size = 0x8, scoped, tag = 'scoped memory for tpu_custom_call.1']
    %16 = vsyncpa [#allocation3], 0
    %s17 = scalar_lea.sflag [#allocation3], 1
    %18 = vsyncpa %s17, 0
    loop: start=0, step=1, limit=4
    $region2: #{tpu_custom_call.1} parent=1 // loop_pre_header
      _
    $region3: #{tpu_custom_call.1} parent=1 // loop_header
      %s20 = sphi 0, %s24
      %p21 = scmp.ge.s32.totalorder %s20, 4
      %s30 = sphi 0, %s32
      %s33 = sphi 0, %s30
      %s34 = sphi 0, %s33
      %s50 = sphi 0, %s34
      %s56 = sphi 0, %s58
      %s59 = sphi 0, %s56
      %s60 = sphi 0, %s59
      %s76 = sphi 0, %s60
      %s80 = sphi 0, %s80
      %s82 = sphi 0, %s80
      %s83 = sphi 0, %s82
      %s97 = sphi 0, %s83
      %s101 = sphi 0, %s101
      %s103 = sphi 0, %s101
      %s104 = sphi 0, %s103
      %s118 = sphi 0, %s104
      %s122 = sphi 0, %s122
      %s124 = sphi 0, %s122
      %s125 = sphi 0, %s124
      %s139 = sphi 0, %s125
      %s143 = sphi 0, %s143
      %s145 = sphi 0, %s143
      %s146 = sphi 0, %s145
      %s160 = sphi 0, %s146
      %s164 = sphi 0, %s164
      %s166 = sphi 0, %s164
      %s167 = sphi 0, %s166
      %s181 = sphi 0, %s167
      %s185 = sphi 0, %s185
      %s187 = sphi 0, %s185
      %s188 = sphi 0, %s187
      %s202 = sphi 0, %s188
      %s206 = sphi 0, %s206
      %s208 = sphi 0, %s206
      %s209 = sphi 0, %s208
      %s223 = sphi 0, %s209
      %s227 = sphi 0, %s227
      %s229 = sphi 0, %s227
      %s230 = sphi 0, %s229
      %s244 = sphi 0, %s230
      %s248 = sphi 0, %s248
      %s250 = sphi 0, %s248
      %s251 = sphi 0, %s250
      %s265 = sphi 0, %s251
      %s271 = sphi 0, %s273
      %s274 = sphi 0, %s271
      %s275 = sphi 0, %s274
      %s291 = sphi 0, %s275
    $region4: #{tpu_custom_call.1} parent=1 // loop_header_branch
      %23 = sbr.rel (%p21) target = $region8
    $region5: #{tpu_custom_call.1} parent=1 // loop_body
      %s25 = ssub.s32 %s20, 1
      %s26 = ssub.s32 %s20, 2
      %s27 = sadd.s32 %s20, 1
      %s28 = ssub.s32 %s20, %s27
      %p29 = scmp.eq.s32.totalorder %s28, 0
      %s31 = sadd.s32 %s30, 1
      %s32 = scalar_select %p29, %s30, %s31
      %p35 = pneg %p29
      %p36 = scmp.eq.s32.totalorder %s20, 1
      %p37 = por %p35, %p36
      %p38 = scmp.ne.s32.totalorder %s30, %s33
      %p39 = scmp.eq.s32.totalorder %s20, 0
      %p40 = por %p38, %p39
      %p41 = scmp.ne.s32.totalorder %s30, %s33
      %p42 = scmp.eq.s32.totalorder %s25, 1
      %p43 = por %p41, %p42
      %p44 = scmp.ne.s32.totalorder %s33, %s34
      %p45 = scmp.eq.s32.totalorder %s25, 0
      %p46 = por %p44, %p45
      %p47 = scmp.ne.s32.totalorder %s33, %s34
      %p48 = scmp.eq.s32.totalorder %s26, 1
      %p49 = por %p47, %p48
      %p51 = scmp.ne.s32.totalorder %s34, %s50
      %p52 = scmp.eq.s32.totalorder %s26, 0
      %p53 = por %p51, %p52
      %s54 = ssub.s32 %s20, %s27
      %p55 = scmp.eq.s32.totalorder %s54, 0
      %s57 = sadd.s32 %s56, 1
      %s58 = scalar_select %p55, %s56, %s57
      %p61 = pneg %p55
      %p62 = scmp.eq.s32.totalorder %s20, 1
      %p63 = por %p61, %p62
      %p64 = scmp.ne.s32.totalorder %s56, %s59
      %p65 = scmp.eq.s32.totalorder %s20, 0
      %p66 = por %p64, %p65
      %p67 = scmp.ne.s32.totalorder %s56, %s59
      %p68 = scmp.eq.s32.totalorder %s25, 1
      %p69 = por %p67, %p68
      %p70 = scmp.ne.s32.totalorder %s59, %s60
      %p71 = scmp.eq.s32.totalorder %s25, 0
      %p72 = por %p70, %p71
      %p73 = scmp.ne.s32.totalorder %s59, %s60
      %p74 = scmp.eq.s32.totalorder %s26, 1
      %p75 = por %p73, %p74
      %p77 = scmp.ne.s32.totalorder %s60, %s76
      %p78 = scmp.eq.s32.totalorder %s26, 0
      %p79 = por %p77, %p78
      %s81 = sadd.s32 %s80, 1
      %p84 = scmp.eq.s32.totalorder %s20, 1
      %p85 = scmp.ne.s32.totalorder %s80, %s82
      %p86 = scmp.eq.s32.totalorder %s20, 0
      %p87 = por %p85, %p86
      %p88 = scmp.ne.s32.totalorder %s80, %s82
      %p89 = scmp.eq.s32.totalorder %s25, 1
      %p90 = por %p88, %p89
      %p91 = scmp.ne.s32.totalorder %s82, %s83
      %p92 = scmp.eq.s32.totalorder %s25, 0
      %p93 = por %p91, %p92
      %p94 = scmp.ne.s32.totalorder %s82, %s83
      %p95 = scmp.eq.s32.totalorder %s26, 1
      %p96 = por %p94, %p95
      %p98 = scmp.ne.s32.totalorder %s83, %s97
      %p99 = scmp.eq.s32.totalorder %s26, 0
      %p100 = por %p98, %p99
      %s102 = sadd.s32 %s101, 1
      %p105 = scmp.eq.s32.totalorder %s20, 1
      %p106 = scmp.ne.s32.totalorder %s101, %s103
      %p107 = scmp.eq.s32.totalorder %s20, 0
      %p108 = por %p106, %p107
      %p109 = scmp.ne.s32.totalorder %s101, %s103
      %p110 = scmp.eq.s32.totalorder %s25, 1
      %p111 = por %p109, %p110
      %p112 = scmp.ne.s32.totalorder %s103, %s104
      %p113 = scmp.eq.s32.totalorder %s25, 0
      %p114 = por %p112, %p113
      %p115 = scmp.ne.s32.totalorder %s103, %s104
      %p116 = scmp.eq.s32.totalorder %s26, 1
      %p117 = por %p115, %p116
      %p119 = scmp.ne.s32.totalorder %s104, %s118
      %p120 = scmp.eq.s32.totalorder %s26, 0
      %p121 = por %p119, %p120
      %s123 = sadd.s32 %s122, 1
      %p126 = scmp.eq.s32.totalorder %s20, 1
      %p127 = scmp.ne.s32.totalorder %s122, %s124
      %p128 = scmp.eq.s32.totalorder %s20, 0
      %p129 = por %p127, %p128
      %p130 = scmp.ne.s32.totalorder %s122, %s124
      %p131 = scmp.eq.s32.totalorder %s25, 1
      %p132 = por %p130, %p131
      %p133 = scmp.ne.s32.totalorder %s124, %s125
      %p134 = scmp.eq.s32.totalorder %s25, 0
      %p135 = por %p133, %p134
      %p136 = scmp.ne.s32.totalorder %s124, %s125
      %p137 = scmp.eq.s32.totalorder %s26, 1
      %p138 = por %p136, %p137
      %p140 = scmp.ne.s32.totalorder %s125, %s139
      %p141 = scmp.eq.s32.totalorder %s26, 0
      %p142 = por %p140, %p141
      %s144 = sadd.s32 %s143, 1
      %p147 = scmp.eq.s32.totalorder %s20, 1
      %p148 = scmp.ne.s32.totalorder %s143, %s145
      %p149 = scmp.eq.s32.totalorder %s20, 0
      %p150 = por %p148, %p149
      %p151 = scmp.ne.s32.totalorder %s143, %s145
      %p152 = scmp.eq.s32.totalorder %s25, 1
      %p153 = por %p151, %p152
      %p154 = scmp.ne.s32.totalorder %s145, %s146
      %p155 = scmp.eq.s32.totalorder %s25, 0
      %p156 = por %p154, %p155
      %p157 = scmp.ne.s32.totalorder %s145, %s146
      %p158 = scmp.eq.s32.totalorder %s26, 1
      %p159 = por %p157, %p158
      %p161 = scmp.ne.s32.totalorder %s146, %s160
      %p162 = scmp.eq.s32.totalorder %s26, 0
      %p163 = por %p161, %p162
      %s165 = sadd.s32 %s164, 1
      %p168 = scmp.eq.s32.totalorder %s20, 1
      %p169 = scmp.ne.s32.totalorder %s164, %s166
      %p170 = scmp.eq.s32.totalorder %s20, 0
      %p171 = por %p169, %p170
      %p172 = scmp.ne.s32.totalorder %s164, %s166
      %p173 = scmp.eq.s32.totalorder %s25, 1
      %p174 = por %p172, %p173
      %p175 = scmp.ne.s32.totalorder %s166, %s167
      %p176 = scmp.eq.s32.totalorder %s25, 0
      %p177 = por %p175, %p176
      %p178 = scmp.ne.s32.totalorder %s166, %s167
      %p179 = scmp.eq.s32.totalorder %s26, 1
      %p180 = por %p178, %p179
      %p182 = scmp.ne.s32.totalorder %s167, %s181
      %p183 = scmp.eq.s32.totalorder %s26, 0
      %p184 = por %p182, %p183
      %s186 = sadd.s32 %s185, 1
      %p189 = scmp.eq.s32.totalorder %s20, 1
      %p190 = scmp.ne.s32.totalorder %s185, %s187
      %p191 = scmp.eq.s32.totalorder %s20, 0
      %p192 = por %p190, %p191
      %p193 = scmp.ne.s32.totalorder %s185, %s187
      %p194 = scmp.eq.s32.totalorder %s25, 1
      %p195 = por %p193, %p194
      %p196 = scmp.ne.s32.totalorder %s187, %s188
      %p197 = scmp.eq.s32.totalorder %s25, 0
      %p198 = por %p196, %p197
      %p199 = scmp.ne.s32.totalorder %s187, %s188
      %p200 = scmp.eq.s32.totalorder %s26, 1
      %p201 = por %p199, %p200
      %p203 = scmp.ne.s32.totalorder %s188, %s202
      %p204 = scmp.eq.s32.totalorder %s26, 0
      %p205 = por %p203, %p204
      %s207 = sadd.s32 %s206, 1
      %p210 = scmp.eq.s32.totalorder %s20, 1
      %p211 = scmp.ne.s32.totalorder %s206, %s208
      %p212 = scmp.eq.s32.totalorder %s20, 0
      %p213 = por %p211, %p212
      %p214 = scmp.ne.s32.totalorder %s206, %s208
      %p215 = scmp.eq.s32.totalorder %s25, 1
      %p216 = por %p214, %p215
      %p217 = scmp.ne.s32.totalorder %s208, %s209
      %p218 = scmp.eq.s32.totalorder %s25, 0
      %p219 = por %p217, %p218
      %p220 = scmp.ne.s32.totalorder %s208, %s209
      %p221 = scmp.eq.s32.totalorder %s26, 1
      %p222 = por %p220, %p221
      %p224 = scmp.ne.s32.totalorder %s209, %s223
      %p225 = scmp.eq.s32.totalorder %s26, 0
      %p226 = por %p224, %p225
      %s228 = sadd.s32 %s227, 1
      %p231 = scmp.eq.s32.totalorder %s20, 1
      %p232 = scmp.ne.s32.totalorder %s227, %s229
      %p233 = scmp.eq.s32.totalorder %s20, 0
      %p234 = por %p232, %p233
      %p235 = scmp.ne.s32.totalorder %s227, %s229
      %p236 = scmp.eq.s32.totalorder %s25, 1
      %p237 = por %p235, %p236
      %p238 = scmp.ne.s32.totalorder %s229, %s230
      %p239 = scmp.eq.s32.totalorder %s25, 0
      %p240 = por %p238, %p239
      %p241 = scmp.ne.s32.totalorder %s229, %s230
      %p242 = scmp.eq.s32.totalorder %s26, 1
      %p243 = por %p241, %p242
      %p245 = scmp.ne.s32.totalorder %s230, %s244
      %p246 = scmp.eq.s32.totalorder %s26, 0
      %p247 = por %p245, %p246
      %s249 = sadd.s32 %s248, 1
      %p252 = scmp.eq.s32.totalorder %s20, 1
      %p253 = scmp.ne.s32.totalorder %s248, %s250
      %p254 = scmp.eq.s32.totalorder %s20, 0
      %p255 = por %p253, %p254
      %p256 = scmp.ne.s32.totalorder %s248, %s250
      %p257 = scmp.eq.s32.totalorder %s25, 1
      %p258 = por %p256, %p257
      %p259 = scmp.ne.s32.totalorder %s250, %s251
      %p260 = scmp.eq.s32.totalorder %s25, 0
      %p261 = por %p259, %p260
      %p262 = scmp.ne.s32.totalorder %s250, %s251
      %p263 = scmp.eq.s32.totalorder %s26, 1
      %p264 = por %p262, %p263
      %p266 = scmp.ne.s32.totalorder %s251, %s265
      %p267 = scmp.eq.s32.totalorder %s26, 0
      %p268 = por %p266, %p267
      %s269 = ssub.s32 %s20, %s27
      %p270 = scmp.eq.s32.totalorder %s269, 0
      %s272 = sadd.s32 %s271, 1
      %s273 = scalar_select %p270, %s271, %s272
      %p276 = pneg %p270
      %p277 = scmp.eq.s32.totalorder %s20, 1
      %p278 = por %p276, %p277
      %p279 = scmp.ne.s32.totalorder %s271, %s274
      %p280 = scmp.eq.s32.totalorder %s20, 0
      %p281 = por %p279, %p280
      %p282 = scmp.ne.s32.totalorder %s271, %s274
      %p283 = scmp.eq.s32.totalorder %s25, 1
      %p284 = por %p282, %p283
      %p285 = scmp.ne.s32.totalorder %s274, %s275
      %p286 = scmp.eq.s32.totalorder %s25, 0
      %p287 = por %p285, %p286
      %p288 = scmp.ne.s32.totalorder %s274, %s275
      %p289 = scmp.eq.s32.totalorder %s26, 1
      %p290 = por %p288, %p289
      %p292 = scmp.ne.s32.totalorder %s275, %s291
      %p293 = scmp.eq.s32.totalorder %s26, 0
      %p294 = por %p292, %p293
      %p295 = scmp.le.s32.totalorder 1, %s20
      %p296 = scmp.lt.s32.totalorder %s20, 3
      %p297 = pnand %p295, %p296
      %p298 = pneg %p297
      // Predicated region
      $region9: #{tpu_custom_call.1} parent=5 // pred_check
        _
      $region10: #{tpu_custom_call.1} parent=5 // pred_check_branch
        %300 = sbr.rel (%p297) target = $region12
      $region11: #{tpu_custom_call.1} parent=5 // pred_region
        %s301 = ssub.s32 %s20, 1
        // Predicated region
        $region13: #{tpu_custom_call.1} parent=11 // pred_check
          %p302 = pneg %p93
        $region14: #{tpu_custom_call.1} parent=11 // pred_check_branch
          %304 = sbr.rel (%p302) target = $region16
        $region15: #{tpu_custom_call.1} parent=11 // pred_region
          _
        $region16: #{tpu_custom_call.1} parent=11 // pred_fallthru
          _
        // Predicated region
        $region17: #{tpu_custom_call.1} parent=11 // pred_check
          %p305 = pneg %p114
        $region18: #{tpu_custom_call.1} parent=11 // pred_check_branch
          %307 = sbr.rel (%p305) target = $region20
        $region19: #{tpu_custom_call.1} parent=11 // pred_region
          _
        $region20: #{tpu_custom_call.1} parent=11 // pred_fallthru
          _
        // Predicated region
        $region21: #{tpu_custom_call.1} parent=11 // pred_check
          %p308 = pneg %p135
        $region22: #{tpu_custom_call.1} parent=11 // pred_check_branch
          %310 = sbr.rel (%p308) target = $region24
        $region23: #{tpu_custom_call.1} parent=11 // pred_region
          _
        $region24: #{tpu_custom_call.1} parent=11 // pred_fallthru
          _
        // Predicated region
        $region25: #{tpu_custom_call.1} parent=11 // pred_check
          %p311 = pneg %p156
        $region26: #{tpu_custom_call.1} parent=11 // pred_check_branch
          %313 = sbr.rel (%p311) target = $region28
        $region27: #{tpu_custom_call.1} parent=11 // pred_region
          _
        $region28: #{tpu_custom_call.1} parent=11 // pred_fallthru
          _
        // Predicated region
        $region29: #{tpu_custom_call.1} parent=11 // pred_check
          %p314 = pneg %p177
        $region30: #{tpu_custom_call.1} parent=11 // pred_check_branch
          %316 = sbr.rel (%p314) target = $region32
        $region31: #{tpu_custom_call.1} parent=11 // pred_region
          _
        $region32: #{tpu_custom_call.1} parent=11 // pred_fallthru
          _
        // Predicated region
        $region33: #{tpu_custom_call.1} parent=11 // pred_check
          %p317 = pneg %p198
        $region34: #{tpu_custom_call.1} parent=11 // pred_check_branch
          %319 = sbr.rel (%p317) target = $region36
        $region35: #{tpu_custom_call.1} parent=11 // pred_region
          _
        $region36: #{tpu_custom_call.1} parent=11 // pred_fallthru
          _
        // Predicated region
        $region37: #{tpu_custom_call.1} parent=11 // pred_check
          %p320 = pneg %p219
        $region38: #{tpu_custom_call.1} parent=11 // pred_check_branch
          %322 = sbr.rel (%p320) target = $region40
        $region39: #{tpu_custom_call.1} parent=11 // pred_region
          _
        $region40: #{tpu_custom_call.1} parent=11 // pred_fallthru
          _
        // Predicated region
        $region41: #{tpu_custom_call.1} parent=11 // pred_check
          %p323 = pneg %p240
        $region42: #{tpu_custom_call.1} parent=11 // pred_check_branch
          %325 = sbr.rel (%p323) target = $region44
        $region43: #{tpu_custom_call.1} parent=11 // pred_region
          _
        $region44: #{tpu_custom_call.1} parent=11 // pred_fallthru
          _
        // Predicated region
        $region45: #{tpu_custom_call.1} parent=11 // pred_check
          %p326 = pneg %p261
        $region46: #{tpu_custom_call.1} parent=11 // pred_check_branch
          %328 = sbr.rel (%p326) target = $region48
        $region47: #{tpu_custom_call.1} parent=11 // pred_region
          _
        $region48: #{tpu_custom_call.1} parent=11 // pred_fallthru
          _
      $region12: #{tpu_custom_call.1} parent=5 // pred_fallthru
        _
      %p329 = scmp.lt.s32.totalorder %s20, 2
      // Predicated region
      $region49: #{tpu_custom_call.1} parent=5 // pred_check
        %p330 = pneg %p329
      $region50: #{tpu_custom_call.1} parent=5 // pred_check_branch
        %332 = sbr.rel (%p330) target = $region52
      $region51: #{tpu_custom_call.1} parent=5 // pred_region
        // Predicated region
        $region53: #{tpu_custom_call.1} parent=51 // pred_check
          %p333 = pneg %p40
        $region54: #{tpu_custom_call.1} parent=51 // pred_check_branch
          %335 = sbr.rel (%p333) target = $region56
        $region55: #{tpu_custom_call.1} parent=51 // pred_region
          %p336 = scmp.lt.s32.totalorder %s20, 1
          %s337 = scalar_select %p336, %s20, 1
          %s338 = smul.addr %s337, 4
          %s339 = scalar_lea.vmem %s0, %s338
        $region56: #{tpu_custom_call.1} parent=51 // pred_fallthru
          _
        // Predicated region
        $region57: #{tpu_custom_call.1} parent=51 // pred_check
          %p340 = pneg %p66
        $region58: #{tpu_custom_call.1} parent=51 // pred_check_branch
          %342 = sbr.rel (%p340) target = $region60
        $region59: #{tpu_custom_call.1} parent=51 // pred_region
          %p343 = scmp.lt.s32.totalorder %s20, 1
          %s344 = scalar_select %p343, %s20, 1
          %s345 = smul.addr %s344, 2
          %s346 = smul.addr %s345, 4
          %s347 = scalar_lea.vmem %s1, %s346
        $region60: #{tpu_custom_call.1} parent=51 // pred_fallthru
          _
      $region52: #{tpu_custom_call.1} parent=5 // pred_fallthru
        _
      %p348 = scmp.le.s32.totalorder 1, %s20
      %p349 = scmp.lt.s32.totalorder %s20, 3
      %p350 = pnand %p348, %p349
      %p351 = pneg %p350
      // Predicated region
      $region61: #{tpu_custom_call.1} parent=5 // pred_check
        _
      $region62: #{tpu_custom_call.1} parent=5 // pred_check_branch
        %353 = sbr.rel (%p350) target = $region64
      $region63: #{tpu_custom_call.1} parent=5 // pred_region
        %s354 = ssub.s32 %s20, 1
        %p355 = scmp.lt.s32.totalorder %s25, 1
        %s356 = scalar_select %p355, %s25, 1
        %s357 = smul.addr %s356, 4
        %s358 = scalar_lea.vmem %s0, %s357
        %p359 = pneg %p46
        %p360 = pneg %p43
        %p361 = scmp.lt.s32.totalorder %s25, 1
        %s362 = scalar_select %p361, %s25, 1
        %s363 = smul.addr %s362, 2
        %s364 = smul.addr %s363, 4
        %s365 = scalar_lea.vmem %s1, %s364
        %p366 = pneg %p72
        %p367 = pneg %p69
        %p368 = pneg %p93
        %p369 = pneg %p90
        %p370 = pneg %p114
        %p371 = pneg %p111
        %p372 = pneg %p135
        %p373 = pneg %p132
        %p374 = pneg %p156
        %p375 = pneg %p153
        %p376 = pneg %p177
        %p377 = pneg %p174
        %p378 = pneg %p198
        %p379 = pneg %p195
        %p380 = pneg %p219
        %p381 = pneg %p216
        %p382 = pneg %p240
        %p383 = pneg %p237
        %p384 = pneg %p261
        %p385 = pneg %p258
        %p386 = pneg %p287
        %p387 = pneg %p284
        %s388 = sand.u32 %s274, 1
        %s389 = scalar_lea.sflag [#allocation3], %s388
        %s390 = sand.u32 %s274, 1
        %s391 = smul.addr %s390, 16
        %s392 = scalar_lea.vmem [#allocation2], %s391
        %p393 = scmp.lt.s32.totalorder %s25, 1
        %s394 = scalar_select %p393, %s25, 1
        %s395 = smul.addr %s394, 4
        %s396 = scalar_lea.vmem %s0, %s395
        %p397 = scmp.lt.s32.totalorder %s25, 1
        %s398 = scalar_select %p397, %s25, 1
        %s399 = smul.addr %s398, 2
        %s400 = smul.addr %s399, 4
        %s401 = scalar_lea.vmem %s1, %s400
        %v402 = vld [vmem:[%s396] sm:$0xf]
        %v403 = vld [vmem:[%s2] sm:$0xff]
        %v404 = vld [vmem:[%s2 + $0x8] sm:$0xff]
        %v405 = vld [vmem:[%s2 + $0x10] sm:$0xff]
        %v406 = vld [vmem:[%s2 + $0x18] sm:$0xff]
        %v407 = vld [vmem:[%s2 + $0x20] sm:$0xff]
        %v408 = vld [vmem:[%s2 + $0x28] sm:$0xff]
        %v409 = vld [vmem:[%s2 + $0x30] sm:$0xff]
        %v410 = vld [vmem:[%s2 + $0x38] sm:$0xff]
        %v411 = vld [vmem:[%s2 + $0x40] sm:$0xff]
        %v412 = vld [vmem:[%s2 + $0x48] sm:$0xff]
        %v413 = vld [vmem:[%s2 + $0x50] sm:$0xff]
        %v414 = vld [vmem:[%s2 + $0x58] sm:$0xff]
        %v415 = vld [vmem:[%s2 + $0x60] sm:$0xff]
        %v416 = vld [vmem:[%s2 + $0x68] sm:$0xff]
        %v417 = vld [vmem:[%s2 + $0x70] sm:$0xff]
        %v418 = vld [vmem:[%s2 + $0x78] sm:$0xff]
        %vm419 = vcmask 523264
        %v421 = vsel %vm419, %v402, 0
        %423 = vmatprep.subr.mxu0 %v404
        %424 = vmatpush1.msra.mxu0 %v403
        %425 = vmatprep.subr.mxu0 %v406
        %426 = vmatpush1.msra.mxu0 %v405
        %427 = vmatprep.subr.mxu0 %v408
        %428 = vmatpush1.msra.mxu0 %v407
        %429 = vmatprep.subr.mxu0 %v410
        %430 = vmatpush1.msra.mxu0 %v409
        %431 = vmatprep.subr.mxu0 %v412
        %432 = vmatpush1.msra.mxu0 %v411
        %433 = vmatprep.subr.mxu0 %v414
        %434 = vmatpush1.msra.mxu0 %v413
        %435 = vmatprep.subr.mxu0 %v416
        %436 = vmatpush1.msra.mxu0 %v415
        %437 = vmatprep.subr.mxu0 %v418
        %438 = vmatpush1.msra.mxu0 %v417
        %439 = vmatprep.subr.mxu0 0.0
        %440 = vmatpush1.msra.mxu0 0.0
        %441 = vmatprep.subr.mxu0 0.0
        %442 = vmatpush1.msra.mxu0 0.0
        %443 = vmatprep.subr.mxu0 0.0
        %444 = vmatpush1.msra.mxu0 0.0
        %445 = vmatprep.subr.mxu0 0.0
        %446 = vmatpush1.msra.mxu0 0.0
        %447 = vmatprep.subr.mxu0 0.0
        %448 = vmatpush1.msra.mxu0 0.0
        %449 = vmatprep.subr.mxu0 0.0
        %450 = vmatpush1.msra.mxu0 0.0
        %451 = vmatprep.subr.mxu0 0.0
        %452 = vmatpush1.msra.mxu0 0.0
        %453 = vmatprep.subr.mxu0 0.0
        %454 = vmatpush1.msra.mxu0 0.0
        %455 = vmatprep.subr.mxu0 0.0
        %456 = vmatpush1.msra.mxu0 0.0
        %457 = vmatprep.subr.mxu0 0.0
        %458 = vmatpush1.msra.mxu0 0.0
        %459 = vmatprep.subr.mxu0 0.0
        %460 = vmatpush1.msra.mxu0 0.0
        %461 = vmatprep.subr.mxu0 0.0
        %462 = vmatpush1.msra.mxu0 0.0
        %463 = vmatprep.subr.mxu0 0.0
        %464 = vmatpush1.msra.mxu0 0.0
        %465 = vmatprep.subr.mxu0 0.0
        %466 = vmatpush1.msra.mxu0 0.0
        %467 = vmatprep.subr.mxu0 0.0
        %468 = vmatpush1.msra.mxu0 0.0
        %469 = vmatprep.subr.mxu0 0.0
        %470 = vmatpush1.msra.mxu0 0.0
        %471 = vmatprep.subr.mxu0 0.0
        %472 = vmatpush1.msra.mxu0 0.0
        %473 = vmatprep.subr.mxu0 0.0
        %474 = vmatpush1.msra.mxu0 0.0
        %475 = vmatprep.subr.mxu0 0.0
        %476 = vmatpush1.msra.mxu0 0.0
        %477 = vmatprep.subr.mxu0 0.0
        %478 = vmatpush1.msra.mxu0 0.0
        %479 = vmatprep.subr.mxu0 0.0
        %480 = vmatpush1.msra.mxu0 0.0
        %481 = vmatprep.subr.mxu0 0.0
        %482 = vmatpush1.msra.mxu0 0.0
        %483 = vmatprep.subr.mxu0 0.0
        %484 = vmatpush1.msra.mxu0 0.0
        %485 = vmatprep.subr.mxu0 0.0
        %486 = vmatpush1.msra.mxu0 0.0
        %487 = vmatprep.mubr.f32.mxu0 0.0
        %488 = vmatmul.mubr.f32.gmra.mrb[0].mxu0 %v421
        %v489 = vpop.f32.mrb[0].mxu0
        %v490 = vadd.f32 0.0, %v489
        %v491 = vpop.f32.mrb[0].mxu0
        %v492 = vadd.f32 0.0, %v491
        %493 = vdwg.mxu0
        %v494 = vld [vmem:[%s3] sm:$0xff]
        %v495 = vld [vmem:[%s3 + $0x8] sm:$0xff]
        %v496 = vld [vmem:[%s3 + $0x10] sm:$0x1]
        %v497 = vld [vmem:[%s3 + $0x18] sm:$0x1]
        %v498 = vld [vmem:[%s401] sm:$0xff]
        %v499 = vld [vmem:[%s6] sm:$0xff]
        %v500 = vld [vmem:[%s7] sm:$0xff]
        %v502 = vcombine.high %v498, %v498
        %504 = vrot.lane.b32.xlu0 %v498, 17
        %v505 = vpop.permute.xlu0 %504
        %506 = vrot.lane.b32.xlu0 %v502, 17
        %v507 = vpop.permute.xlu0 %506
        %v508 = vlaneseq
        %v509 = vand.u32 %v508, 127
        %vm510 = vcmp.lt.s32.totalorder %v509, 17
        %v511 = vsel %vm510, %v505, %v507
        %v512 = vsel %vm510, %v507, %v505
        %v513 = vlaneseq
        %v514 = vshrl.u32 %v513, 7
        %v515 = vsub.s32 0, %v514
        %v516 = vrot.slane %v494, %v515
        %v517 = vlaneseq
        %v518 = vshrl.u32 %v517, 7
        %v519 = vsub.s32 0, %v518
        %v520 = vrot.slane %v495, %v519
        %v521 = vmul.f32 %v512, %v516
        %v522 = vmul.f32 %v511, %v520
        %v523 = vld [vmem:[%s4] sm:$0xff]
        %524 = vrot.lane.b32.xlu0 %v490, 17
        %v525 = vpop.permute.xlu0 %524
        %526 = vrot.lane.b32.xlu0 %v492, 17
        %v527 = vpop.permute.xlu0 %526
        %v528 = vsel %vm510, %v525, %v527
        %v529 = vsel %vm510, %v527, %v525
        %v530 = vmul.f32 %v529, %v516
        %v531 = vmul.f32 %v528, %v520
        %v532 = vld [vmem:[%s5] sm:$0xff]
        %vm533 = vcmask 31744
        %v535 = vsel %vm533, %v532, 0
        %vm537 = vcmask 1043456
        %v539 = vsel %vm537, %v530, 0
        %v542 = vsel %vm537, %v531, 0
        %544 = vmatprep.subr.mxu0 %v542
        %545 = vmatpush1.msra.mxu0 %v539
        %546 = vmatprep.subr.mxu0 0.0
        %547 = vmatpush1.msra.mxu0 0.0
        %548 = vmatprep.subr.mxu0 0.0
        %549 = vmatpush1.msra.mxu0 0.0
        %550 = vmatprep.subr.mxu0 0.0
        %551 = vmatpush1.msra.mxu0 0.0
        %552 = vmatprep.subr.mxu0 0.0
        %553 = vmatpush1.msra.mxu0 0.0
        %554 = vmatprep.subr.mxu0 0.0
        %555 = vmatpush1.msra.mxu0 0.0
        %556 = vmatprep.subr.mxu0 0.0
        %557 = vmatpush1.msra.mxu0 0.0
        %558 = vmatprep.subr.mxu0 0.0
        %559 = vmatpush1.msra.mxu0 0.0
        %560 = vmatprep.subr.mxu0 0.0
        %561 = vmatpush1.msra.mxu0 0.0
        %562 = vmatprep.subr.mxu0 0.0
        %563 = vmatpush1.msra.mxu0 0.0
        %564 = vmatprep.subr.mxu0 0.0
        %565 = vmatpush1.msra.mxu0 0.0
        %566 = vmatprep.subr.mxu0 0.0
        %567 = vmatpush1.msra.mxu0 0.0
        %568 = vmatprep.subr.mxu0 0.0
        %569 = vmatpush1.msra.mxu0 0.0
        %570 = vmatprep.subr.mxu0 0.0
        %571 = vmatpush1.msra.mxu0 0.0
        %572 = vmatprep.subr.mxu0 0.0
        %573 = vmatpush1.msra.mxu0 0.0
        %574 = vmatprep.subr.mxu0 0.0
        %575 = vmatpush1.msra.mxu0 0.0
        %576 = vmatprep.subr.mxu0 0.0
        %577 = vmatpush1.msra.mxu0 0.0
        %578 = vmatprep.subr.mxu0 0.0
        %579 = vmatpush1.msra.mxu0 0.0
        %580 = vmatprep.subr.mxu0 0.0
        %581 = vmatpush1.msra.mxu0 0.0
        %582 = vmatprep.subr.mxu0 0.0
        %583 = vmatpush1.msra.mxu0 0.0
        %584 = vmatprep.subr.mxu0 0.0
        %585 = vmatpush1.msra.mxu0 0.0
        %586 = vmatprep.subr.mxu0 0.0
        %587 = vmatpush1.msra.mxu0 0.0
        %588 = vmatprep.subr.mxu0 0.0
        %589 = vmatpush1.msra.mxu0 0.0
        %590 = vmatprep.subr.mxu0 0.0
        %591 = vmatpush1.msra.mxu0 0.0
        %592 = vmatprep.subr.mxu0 0.0
        %593 = vmatpush1.msra.mxu0 0.0
        %594 = vmatprep.subr.mxu0 0.0
        %595 = vmatpush1.msra.mxu0 0.0
        %596 = vmatprep.subr.mxu0 0.0
        %597 = vmatpush1.msra.mxu0 0.0
        %598 = vmatprep.subr.mxu0 0.0
        %599 = vmatpush1.msra.mxu0 0.0
        %600 = vmatprep.subr.mxu0 0.0
        %601 = vmatpush1.msra.mxu0 0.0
        %602 = vmatprep.subr.mxu0 0.0
        %603 = vmatpush1.msra.mxu0 0.0
        %604 = vmatprep.subr.mxu0 0.0
        %605 = vmatpush1.msra.mxu0 0.0
        %606 = vmatprep.subr.mxu0 0.0
        %607 = vmatpush1.msra.mxu0 0.0
        %608 = vmatprep.mubr.f32.mxu0 0.0
        %609 = vmatmul.mubr.f32.gmra.mrb[0].mxu0 %v535
        %v610 = vpop.f32.mrb[0].mxu0
        %v611 = vadd.f32 0.0, %v610
        %v612 = vpop.f32.mrb[0].mxu0
        %v613 = vadd.f32 0.0, %v612
        %614 = vdwg.mxu0
        %v616 = vsel %vm533, %v523, 0
        %v619 = vsel %vm537, %v521, 0
        %v622 = vsel %vm537, %v522, 0
        %624 = vmatprep.subr.mxu0 %v622
        %625 = vmatpush1.msra.mxu0 %v619
        %626 = vmatprep.subr.mxu0 0.0
        %627 = vmatpush1.msra.mxu0 0.0
        %628 = vmatprep.subr.mxu0 0.0
        %629 = vmatpush1.msra.mxu0 0.0
        %630 = vmatprep.subr.mxu0 0.0
        %631 = vmatpush1.msra.mxu0 0.0
        %632 = vmatprep.subr.mxu0 0.0
        %633 = vmatpush1.msra.mxu0 0.0
        %634 = vmatprep.subr.mxu0 0.0
        %635 = vmatpush1.msra.mxu0 0.0
        %636 = vmatprep.subr.mxu0 0.0
        %637 = vmatpush1.msra.mxu0 0.0
        %638 = vmatprep.subr.mxu0 0.0
        %639 = vmatpush1.msra.mxu0 0.0
        %640 = vmatprep.subr.mxu0 0.0
        %641 = vmatpush1.msra.mxu0 0.0
        %642 = vmatprep.subr.mxu0 0.0
        %643 = vmatpush1.msra.mxu0 0.0
        %644 = vmatprep.subr.mxu0 0.0
        %645 = vmatpush1.msra.mxu0 0.0
        %646 = vmatprep.subr.mxu0 0.0
        %647 = vmatpush1.msra.mxu0 0.0
        %648 = vmatprep.subr.mxu0 0.0
        %649 = vmatpush1.msra.mxu0 0.0
        %650 = vmatprep.subr.mxu0 0.0
        %651 = vmatpush1.msra.mxu0 0.0
        %652 = vmatprep.subr.mxu0 0.0
        %653 = vmatpush1.msra.mxu0 0.0
        %654 = vmatprep.subr.mxu0 0.0
        %655 = vmatpush1.msra.mxu0 0.0
        %656 = vmatprep.subr.mxu0 0.0
        %657 = vmatpush1.msra.mxu0 0.0
        %658 = vmatprep.subr.mxu0 0.0
        %659 = vmatpush1.msra.mxu0 0.0
        %660 = vmatprep.subr.mxu0 0.0
        %661 = vmatpush1.msra.mxu0 0.0
        %662 = vmatprep.subr.mxu0 0.0
        %663 = vmatpush1.msra.mxu0 0.0
        %664 = vmatprep.subr.mxu0 0.0
        %665 = vmatpush1.msra.mxu0 0.0
        %666 = vmatprep.subr.mxu0 0.0
        %667 = vmatpush1.msra.mxu0 0.0
        %668 = vmatprep.subr.mxu0 0.0
        %669 = vmatpush1.msra.mxu0 0.0
        %670 = vmatprep.subr.mxu0 0.0
        %671 = vmatpush1.msra.mxu0 0.0
        %672 = vmatprep.subr.mxu0 0.0
        %673 = vmatpush1.msra.mxu0 0.0
        %674 = vmatprep.subr.mxu0 0.0
        %675 = vmatpush1.msra.mxu0 0.0
        %676 = vmatprep.subr.mxu0 0.0
        %677 = vmatpush1.msra.mxu0 0.0
        %678 = vmatprep.subr.mxu0 0.0
        %679 = vmatpush1.msra.mxu0 0.0
        %680 = vmatprep.subr.mxu0 0.0
        %681 = vmatpush1.msra.mxu0 0.0
        %682 = vmatprep.subr.mxu0 0.0
        %683 = vmatpush1.msra.mxu0 0.0
        %684 = vmatprep.subr.mxu0 0.0
        %685 = vmatpush1.msra.mxu0 0.0
        %686 = vmatprep.subr.mxu0 0.0
        %687 = vmatpush1.msra.mxu0 0.0
        %688 = vmatprep.mubr.f32.mxu0 0.0
        %689 = vmatmul.mubr.f32.gmra.mrb[0].mxu0 %v616
        %v690 = vpop.f32.mrb[0].mxu0
        %v691 = vadd.f32 %v611, %v690
        %v692 = vpop.f32.mrb[0].mxu0
        %v693 = vadd.f32 %v613, %v692
        %694 = vdwg.mxu0
        %695 = vrot.lane.b32.xlu0 %v498, 16
        %v696 = vpop.permute.xlu0 %695
        %697 = vrot.lane.b32.xlu0 %v502, 16
        %v698 = vpop.permute.xlu0 %697
        %vm699 = vcmp.lt.s32.totalorder %v509, 16
        %v700 = vsel %vm699, %v696, %v698
        %v701 = vsel %vm699, %v698, %v696
        %v702 = vlaneseq
        %v703 = vshrl.u32 %v702, 7
        %v704 = vsub.s32 1, %v703
        %v705 = vrot.slane %v494, %v704
        %v706 = vlaneseq
        %v707 = vshrl.u32 %v706, 7
        %v708 = vsub.s32 1, %v707
        %v709 = vrot.slane %v495, %v708
        %v710 = vmul.f32 %v701, %v705
        %v711 = vmul.f32 %v700, %v709
        %s712 = scalar_lea.vmem %s4, 8
        %v713 = vld [vmem:[%s712] sm:$0xff]
        %v715 = vsel %vm533, %v713, 0
        %v718 = vsel %vm537, %v710, 0
        %v721 = vsel %vm537, %v711, 0
        %723 = vmatprep.subr.mxu0 %v721
        %724 = vmatpush1.msra.mxu0 %v718
        %725 = vmatprep.subr.mxu0 0.0
        %726 = vmatpush1.msra.mxu0 0.0
        %727 = vmatprep.subr.mxu0 0.0
        %728 = vmatpush1.msra.mxu0 0.0
        %729 = vmatprep.subr.mxu0 0.0
        %730 = vmatpush1.msra.mxu0 0.0
        %731 = vmatprep.subr.mxu0 0.0
        %732 = vmatpush1.msra.mxu0 0.0
        %733 = vmatprep.subr.mxu0 0.0
        %734 = vmatpush1.msra.mxu0 0.0
        %735 = vmatprep.subr.mxu0 0.0
        %736 = vmatpush1.msra.mxu0 0.0
        %737 = vmatprep.subr.mxu0 0.0
        %738 = vmatpush1.msra.mxu0 0.0
        %739 = vmatprep.subr.mxu0 0.0
        %740 = vmatpush1.msra.mxu0 0.0
        %741 = vmatprep.subr.mxu0 0.0
        %742 = vmatpush1.msra.mxu0 0.0
        %743 = vmatprep.subr.mxu0 0.0
        %744 = vmatpush1.msra.mxu0 0.0
        %745 = vmatprep.subr.mxu0 0.0
        %746 = vmatpush1.msra.mxu0 0.0
        %747 = vmatprep.subr.mxu0 0.0
        %748 = vmatpush1.msra.mxu0 0.0
        %749 = vmatprep.subr.mxu0 0.0
        %750 = vmatpush1.msra.mxu0 0.0
        %751 = vmatprep.subr.mxu0 0.0
        %752 = vmatpush1.msra.mxu0 0.0
        %753 = vmatprep.subr.mxu0 0.0
        %754 = vmatpush1.msra.mxu0 0.0
        %755 = vmatprep.subr.mxu0 0.0
        %756 = vmatpush1.msra.mxu0 0.0
        %757 = vmatprep.subr.mxu0 0.0
        %758 = vmatpush1.msra.mxu0 0.0
        %759 = vmatprep.subr.mxu0 0.0
        %760 = vmatpush1.msra.mxu0 0.0
        %761 = vmatprep.subr.mxu0 0.0
        %762 = vmatpush1.msra.mxu0 0.0
        %763 = vmatprep.subr.mxu0 0.0
        %764 = vmatpush1.msra.mxu0 0.0
        %765 = vmatprep.subr.mxu0 0.0
        %766 = vmatpush1.msra.mxu0 0.0
        %767 = vmatprep.subr.mxu0 0.0
        %768 = vmatpush1.msra.mxu0 0.0
        %769 = vmatprep.subr.mxu0 0.0
        %770 = vmatpush1.msra.mxu0 0.0
        %771 = vmatprep.subr.mxu0 0.0
        %772 = vmatpush1.msra.mxu0 0.0
        %773 = vmatprep.subr.mxu0 0.0
        %774 = vmatpush1.msra.mxu0 0.0
        %775 = vmatprep.subr.mxu0 0.0
        %776 = vmatpush1.msra.mxu0 0.0
        %777 = vmatprep.subr.mxu0 0.0
        %778 = vmatpush1.msra.mxu0 0.0
        %779 = vmatprep.subr.mxu0 0.0
        %780 = vmatpush1.msra.mxu0 0.0
        %781 = vmatprep.subr.mxu0 0.0
        %782 = vmatpush1.msra.mxu0 0.0
        %783 = vmatprep.subr.mxu0 0.0
        %784 = vmatpush1.msra.mxu0 0.0
        %785 = vmatprep.subr.mxu0 0.0
        %786 = vmatpush1.msra.mxu0 0.0
        %787 = vmatprep.mubr.f32.mxu0 0.0
        %788 = vmatmul.mubr.f32.gmra.mrb[0].mxu0 %v715
        %v789 = vpop.f32.mrb[0].mxu0
        %v790 = vadd.f32 0.0, %v789
        %v791 = vpop.f32.mrb[0].mxu0
        %v792 = vadd.f32 0.0, %v791
        %793 = vdwg.mxu0
        %v794 = vadd.f32 %v691, %v790
        %v795 = vadd.f32 %v693, %v792
        %796 = vrot.lane.b32.xlu0 %v490, 16
        %v797 = vpop.permute.xlu0 %796
        %798 = vrot.lane.b32.xlu0 %v492, 16
        %v799 = vpop.permute.xlu0 %798
        %v800 = vsel %vm699, %v797, %v799
        %v801 = vsel %vm699, %v799, %v797
        %v802 = vmul.f32 %v801, %v705
        %v803 = vmul.f32 %v800, %v709
        %s804 = scalar_lea.vmem %s5, 8
        %v805 = vld [vmem:[%s804] sm:$0xff]
        %v807 = vsel %vm533, %v805, 0
        %v810 = vsel %vm537, %v802, 0
        %v813 = vsel %vm537, %v803, 0
        %815 = vmatprep.subr.mxu0 %v813
        %816 = vmatpush1.msra.mxu0 %v810
        %817 = vmatprep.subr.mxu0 0.0
        %818 = vmatpush1.msra.mxu0 0.0
        %819 = vmatprep.subr.mxu0 0.0
        %820 = vmatpush1.msra.mxu0 0.0
        %821 = vmatprep.subr.mxu0 0.0
        %822 = vmatpush1.msra.mxu0 0.0
        %823 = vmatprep.subr.mxu0 0.0
        %824 = vmatpush1.msra.mxu0 0.0
        %825 = vmatprep.subr.mxu0 0.0
        %826 = vmatpush1.msra.mxu0 0.0
        %827 = vmatprep.subr.mxu0 0.0
        %828 = vmatpush1.msra.mxu0 0.0
        %829 = vmatprep.subr.mxu0 0.0
        %830 = vmatpush1.msra.mxu0 0.0
        %831 = vmatprep.subr.mxu0 0.0
        %832 = vmatpush1.msra.mxu0 0.0
        %833 = vmatprep.subr.mxu0 0.0
        %834 = vmatpush1.msra.mxu0 0.0
        %835 = vmatprep.subr.mxu0 0.0
        %836 = vmatpush1.msra.mxu0 0.0
        %837 = vmatprep.subr.mxu0 0.0
        %838 = vmatpush1.msra.mxu0 0.0
        %839 = vmatprep.subr.mxu0 0.0
        %840 = vmatpush1.msra.mxu0 0.0
        %841 = vmatprep.subr.mxu0 0.0
        %842 = vmatpush1.msra.mxu0 0.0
        %843 = vmatprep.subr.mxu0 0.0
        %844 = vmatpush1.msra.mxu0 0.0
        %845 = vmatprep.subr.mxu0 0.0
        %846 = vmatpush1.msra.mxu0 0.0
        %847 = vmatprep.subr.mxu0 0.0
        %848 = vmatpush1.msra.mxu0 0.0
        %849 = vmatprep.subr.mxu0 0.0
        %850 = vmatpush1.msra.mxu0 0.0
        %851 = vmatprep.subr.mxu0 0.0
        %852 = vmatpush1.msra.mxu0 0.0
        %853 = vmatprep.subr.mxu0 0.0
        %854 = vmatpush1.msra.mxu0 0.0
        %855 = vmatprep.subr.mxu0 0.0
        %856 = vmatpush1.msra.mxu0 0.0
        %857 = vmatprep.subr.mxu0 0.0
        %858 = vmatpush1.msra.mxu0 0.0
        %859 = vmatprep.subr.mxu0 0.0
        %860 = vmatpush1.msra.mxu0 0.0
        %861 = vmatprep.subr.mxu0 0.0
        %862 = vmatpush1.msra.mxu0 0.0
        %863 = vmatprep.subr.mxu0 0.0
        %864 = vmatpush1.msra.mxu0 0.0
        %865 = vmatprep.subr.mxu0 0.0
        %866 = vmatpush1.msra.mxu0 0.0
        %867 = vmatprep.subr.mxu0 0.0
        %868 = vmatpush1.msra.mxu0 0.0
        %869 = vmatprep.subr.mxu0 0.0
        %870 = vmatpush1.msra.mxu0 0.0
        %871 = vmatprep.subr.mxu0 0.0
        %872 = vmatpush1.msra.mxu0 0.0
        %873 = vmatprep.subr.mxu0 0.0
        %874 = vmatpush1.msra.mxu0 0.0
        %875 = vmatprep.subr.mxu0 0.0
        %876 = vmatpush1.msra.mxu0 0.0
        %877 = vmatprep.subr.mxu0 0.0
        %878 = vmatpush1.msra.mxu0 0.0
        %879 = vmatprep.mubr.f32.mxu0 0.0
        %880 = vmatmul.mubr.f32.gmra.mrb[0].mxu0 %v807
        %v881 = vpop.f32.mrb[0].mxu0
        %v882 = vadd.f32 0.0, %v881
        %v883 = vpop.f32.mrb[0].mxu0
        %v884 = vadd.f32 0.0, %v883
        %885 = vdwg.mxu0
        %v886 = vadd.f32 %v794, %v882
        %v887 = vadd.f32 %v795, %v884
        %888 = vrot.lane.b32.xlu0 %v498, 15
        %v889 = vpop.permute.xlu0 %888
        %890 = vrot.lane.b32.xlu0 %v502, 15
        %v891 = vpop.permute.xlu0 %890
        %vm892 = vcmp.lt.s32.totalorder %v509, 15
        %v893 = vsel %vm892, %v889, %v891
        %v894 = vsel %vm892, %v891, %v889
        %v895 = vlaneseq
        %v896 = vshrl.u32 %v895, 7
        %v897 = vsub.s32 2, %v896
        %v898 = vrot.slane %v494, %v897
        %v899 = vlaneseq
        %v900 = vshrl.u32 %v899, 7
        %v901 = vsub.s32 2, %v900
        %v902 = vrot.slane %v495, %v901
        %v903 = vmul.f32 %v894, %v898
        %v904 = vmul.f32 %v893, %v902
        %s905 = scalar_lea.vmem %s4, 16
        %v906 = vld [vmem:[%s905] sm:$0xff]
        %v908 = vsel %vm533, %v906, 0
        %v911 = vsel %vm537, %v903, 0
        %v914 = vsel %vm537, %v904, 0
        %916 = vmatprep.subr.mxu0 %v914
        %917 = vmatpush1.msra.mxu0 %v911
        %918 = vmatprep.subr.mxu0 0.0
        %919 = vmatpush1.msra.mxu0 0.0
        %920 = vmatprep.subr.mxu0 0.0
        %921 = vmatpush1.msra.mxu0 0.0
        %922 = vmatprep.subr.mxu0 0.0
        %923 = vmatpush1.msra.mxu0 0.0
        %924 = vmatprep.subr.mxu0 0.0
        %925 = vmatpush1.msra.mxu0 0.0
        %926 = vmatprep.subr.mxu0 0.0
        %927 = vmatpush1.msra.mxu0 0.0
        %928 = vmatprep.subr.mxu0 0.0
        %929 = vmatpush1.msra.mxu0 0.0
        %930 = vmatprep.subr.mxu0 0.0
        %931 = vmatpush1.msra.mxu0 0.0
        %932 = vmatprep.subr.mxu0 0.0
        %933 = vmatpush1.msra.mxu0 0.0
        %934 = vmatprep.subr.mxu0 0.0
        %935 = vmatpush1.msra.mxu0 0.0
        %936 = vmatprep.subr.mxu0 0.0
        %937 = vmatpush1.msra.mxu0 0.0
        %938 = vmatprep.subr.mxu0 0.0
        %939 = vmatpush1.msra.mxu0 0.0
        %940 = vmatprep.subr.mxu0 0.0
        %941 = vmatpush1.msra.mxu0 0.0
        %942 = vmatprep.subr.mxu0 0.0
        %943 = vmatpush1.msra.mxu0 0.0
        %944 = vmatprep.subr.mxu0 0.0
        %945 = vmatpush1.msra.mxu0 0.0
        %946 = vmatprep.subr.mxu0 0.0
        %947 = vmatpush1.msra.mxu0 0.0
        %948 = vmatprep.subr.mxu0 0.0
        %949 = vmatpush1.msra.mxu0 0.0
        %950 = vmatprep.subr.mxu0 0.0
        %951 = vmatpush1.msra.mxu0 0.0
        %952 = vmatprep.subr.mxu0 0.0
        %953 = vmatpush1.msra.mxu0 0.0
        %954 = vmatprep.subr.mxu0 0.0
        %955 = vmatpush1.msra.mxu0 0.0
        %956 = vmatprep.subr.mxu0 0.0
        %957 = vmatpush1.msra.mxu0 0.0
        %958 = vmatprep.subr.mxu0 0.0
        %959 = vmatpush1.msra.mxu0 0.0
        %960 = vmatprep.subr.mxu0 0.0
        %961 = vmatpush1.msra.mxu0 0.0
        %962 = vmatprep.subr.mxu0 0.0
        %963 = vmatpush1.msra.mxu0 0.0
        %964 = vmatprep.subr.mxu0 0.0
        %965 = vmatpush1.msra.mxu0 0.0
        %966 = vmatprep.subr.mxu0 0.0
        %967 = vmatpush1.msra.mxu0 0.0
        %968 = vmatprep.subr.mxu0 0.0
        %969 = vmatpush1.msra.mxu0 0.0
        %970 = vmatprep.subr.mxu0 0.0
        %971 = vmatpush1.msra.mxu0 0.0
        %972 = vmatprep.subr.mxu0 0.0
        %973 = vmatpush1.msra.mxu0 0.0
        %974 = vmatprep.subr.mxu0 0.0
        %975 = vmatpush1.msra.mxu0 0.0
        %976 = vmatprep.subr.mxu0 0.0
        %977 = vmatpush1.msra.mxu0 0.0
        %978 = vmatprep.subr.mxu0 0.0
        %979 = vmatpush1.msra.mxu0 0.0
        %980 = vmatprep.mubr.f32.mxu0 0.0
        %981 = vmatmul.mubr.f32.gmra.mrb[0].mxu0 %v908
        %v982 = vpop.f32.mrb[0].mxu0
        %v983 = vadd.f32 0.0, %v982
        %v984 = vpop.f32.mrb[0].mxu0
        %v985 = vadd.f32 0.0, %v984
        %986 = vdwg.mxu0
        %v987 = vadd.f32 %v886, %v983
        %v988 = vadd.f32 %v887, %v985
        %989 = vrot.lane.b32.xlu0 %v490, 15
        %v990 = vpop.permute.xlu0 %989
        %991 = vrot.lane.b32.xlu0 %v492, 15
        %v992 = vpop.permute.xlu0 %991
        %v993 = vsel %vm892, %v990, %v992
        %v994 = vsel %vm892, %v992, %v990
        %v995 = vmul.f32 %v994, %v898
        %v996 = vmul.f32 %v993, %v902
        %s997 = scalar_lea.vmem %s5, 16
        %v998 = vld [vmem:[%s997] sm:$0xff]
        %v1000 = vsel %vm533, %v998, 0
        %v1003 = vsel %vm537, %v995, 0
        %v1006 = vsel %vm537, %v996, 0
        %1008 = vmatprep.subr.mxu0 %v1006
        %1009 = vmatpush1.msra.mxu0 %v1003
        %1010 = vmatprep.subr.mxu0 0.0
        %1011 = vmatpush1.msra.mxu0 0.0
        %1012 = vmatprep.subr.mxu0 0.0
        %1013 = vmatpush1.msra.mxu0 0.0
        %1014 = vmatprep.subr.mxu0 0.0
        %1015 = vmatpush1.msra.mxu0 0.0
        %1016 = vmatprep.subr.mxu0 0.0
        %1017 = vmatpush1.msra.mxu0 0.0
        %1018 = vmatprep.subr.mxu0 0.0
        %1019 = vmatpush1.msra.mxu0 0.0
        %1020 = vmatprep.subr.mxu0 0.0
        %1021 = vmatpush1.msra.mxu0 0.0
        %1022 = vmatprep.subr.mxu0 0.0
        %1023 = vmatpush1.msra.mxu0 0.0
        %1024 = vmatprep.subr.mxu0 0.0
        %1025 = vmatpush1.msra.mxu0 0.0
        %1026 = vmatprep.subr.mxu0 0.0
        %1027 = vmatpush1.msra.mxu0 0.0
        %1028 = vmatprep.subr.mxu0 0.0
        %1029 = vmatpush1.msra.mxu0 0.0
        %1030 = vmatprep.subr.mxu0 0.0
        %1031 = vmatpush1.msra.mxu0 0.0
        %1032 = vmatprep.subr.mxu0 0.0
        %1033 = vmatpush1.msra.mxu0 0.0
        %1034 = vmatprep.subr.mxu0 0.0
        %1035 = vmatpush1.msra.mxu0 0.0
        %1036 = vmatprep.subr.mxu0 0.0
        %1037 = vmatpush1.msra.mxu0 0.0
        %1038 = vmatprep.subr.mxu0 0.0
        %1039 = vmatpush1.msra.mxu0 0.0
        %1040 = vmatprep.subr.mxu0 0.0
        %1041 = vmatpush1.msra.mxu0 0.0
        %1042 = vmatprep.subr.mxu0 0.0
        %1043 = vmatpush1.msra.mxu0 0.0
        %1044 = vmatprep.subr.mxu0 0.0
        %1045 = vmatpush1.msra.mxu0 0.0
        %1046 = vmatprep.subr.mxu0 0.0
        %1047 = vmatpush1.msra.mxu0 0.0
        %1048 = vmatprep.subr.mxu0 0.0
        %1049 = vmatpush1.msra.mxu0 0.0
        %1050 = vmatprep.subr.mxu0 0.0
        %1051 = vmatpush1.msra.mxu0 0.0
        %1052 = vmatprep.subr.mxu0 0.0
        %1053 = vmatpush1.msra.mxu0 0.0
        %1054 = vmatprep.subr.mxu0 0.0
        %1055 = vmatpush1.msra.mxu0 0.0
        %1056 = vmatprep.subr.mxu0 0.0
        %1057 = vmatpush1.msra.mxu0 0.0
        %1058 = vmatprep.subr.mxu0 0.0
        %1059 = vmatpush1.msra.mxu0 0.0
        %1060 = vmatprep.subr.mxu0 0.0
        %1061 = vmatpush1.msra.mxu0 0.0
        %1062 = vmatprep.subr.mxu0 0.0
        %1063 = vmatpush1.msra.mxu0 0.0
        %1064 = vmatprep.subr.mxu0 0.0
        %1065 = vmatpush1.msra.mxu0 0.0
        %1066 = vmatprep.subr.mxu0 0.0
        %1067 = vmatpush1.msra.mxu0 0.0
        %1068 = vmatprep.subr.mxu0 0.0
        %1069 = vmatpush1.msra.mxu0 0.0
        %1070 = vmatprep.subr.mxu0 0.0
        %1071 = vmatpush1.msra.mxu0 0.0
        %1072 = vmatprep.mubr.f32.mxu0 0.0
        %1073 = vmatmul.mubr.f32.gmra.mrb[0].mxu0 %v1000
        %v1074 = vpop.f32.mrb[0].mxu0
        %v1075 = vadd.f32 0.0, %v1074
        %v1076 = vpop.f32.mrb[0].mxu0
        %v1077 = vadd.f32 0.0, %v1076
        %1078 = vdwg.mxu0
        %v1079 = vadd.f32 %v987, %v1075
        %v1080 = vadd.f32 %v988, %v1077
        %1081 = vrot.lane.b32.xlu0 %v498, 1
        %v1082 = vpop.permute.xlu0 %1081
        %1083 = vrot.lane.b32.xlu0 %v502, 1
        %v1084 = vpop.permute.xlu0 %1083
        %vm1085 = vcmp.lt.s32.totalorder %v509, 1
        %v1086 = vsel %vm1085, %v1082, %v1084
        %v1087 = vsel %vm1085, %v1084, %v1082
        %v1088 = vlaneseq
        %v1089 = vshrl.u32 %v1088, 7
        %v1090 = vsub.s32 3, %v1089
        %v1091 = vrot.slane %v494, %v1090
        %v1092 = vlaneseq
        %v1093 = vshrl.u32 %v1092, 7
        %v1094 = vsub.s32 3, %v1093
        %v1095 = vrot.slane %v495, %v1094
        %v1096 = vmul.f32 %v1087, %v1091
        %v1097 = vmul.f32 %v1086, %v1095
        %s1098 = scalar_lea.vmem %s4, 24
        %v1099 = vld [vmem:[%s1098] sm:$0xff]
        %v1101 = vsel %vm533, %v1099, 0
        %v1104 = vsel %vm537, %v1096, 0
        %v1107 = vsel %vm537, %v1097, 0
        %1109 = vmatprep.subr.mxu0 %v1107
        %1110 = vmatpush1.msra.mxu0 %v1104
        %1111 = vmatprep.subr.mxu0 0.0
        %1112 = vmatpush1.msra.mxu0 0.0
        %1113 = vmatprep.subr.mxu0 0.0
        %1114 = vmatpush1.msra.mxu0 0.0
        %1115 = vmatprep.subr.mxu0 0.0
        %1116 = vmatpush1.msra.mxu0 0.0
        %1117 = vmatprep.subr.mxu0 0.0
        %1118 = vmatpush1.msra.mxu0 0.0
        %1119 = vmatprep.subr.mxu0 0.0
        %1120 = vmatpush1.msra.mxu0 0.0
        %1121 = vmatprep.subr.mxu0 0.0
        %1122 = vmatpush1.msra.mxu0 0.0
        %1123 = vmatprep.subr.mxu0 0.0
        %1124 = vmatpush1.msra.mxu0 0.0
        %1125 = vmatprep.subr.mxu0 0.0
        %1126 = vmatpush1.msra.mxu0 0.0
        %1127 = vmatprep.subr.mxu0 0.0
        %1128 = vmatpush1.msra.mxu0 0.0
        %1129 = vmatprep.subr.mxu0 0.0
        %1130 = vmatpush1.msra.mxu0 0.0
        %1131 = vmatprep.subr.mxu0 0.0
        %1132 = vmatpush1.msra.mxu0 0.0
        %1133 = vmatprep.subr.mxu0 0.0
        %1134 = vmatpush1.msra.mxu0 0.0
        %1135 = vmatprep.subr.mxu0 0.0
        %1136 = vmatpush1.msra.mxu0 0.0
        %1137 = vmatprep.subr.mxu0 0.0
        %1138 = vmatpush1.msra.mxu0 0.0
        %1139 = vmatprep.subr.mxu0 0.0
        %1140 = vmatpush1.msra.mxu0 0.0
        %1141 = vmatprep.subr.mxu0 0.0
        %1142 = vmatpush1.msra.mxu0 0.0
        %1143 = vmatprep.subr.mxu0 0.0
        %1144 = vmatpush1.msra.mxu0 0.0
        %1145 = vmatprep.subr.mxu0 0.0
        %1146 = vmatpush1.msra.mxu0 0.0
        %1147 = vmatprep.subr.mxu0 0.0
        %1148 = vmatpush1.msra.mxu0 0.0
        %1149 = vmatprep.subr.mxu0 0.0
        %1150 = vmatpush1.msra.mxu0 0.0
        %1151 = vmatprep.subr.mxu0 0.0
        %1152 = vmatpush1.msra.mxu0 0.0
        %1153 = vmatprep.subr.mxu0 0.0
        %1154 = vmatpush1.msra.mxu0 0.0
        %1155 = vmatprep.subr.mxu0 0.0
        %1156 = vmatpush1.msra.mxu0 0.0
        %1157 = vmatprep.subr.mxu0 0.0
        %1158 = vmatpush1.msra.mxu0 0.0
        %1159 = vmatprep.subr.mxu0 0.0
        %1160 = vmatpush1.msra.mxu0 0.0
        %1161 = vmatprep.subr.mxu0 0.0
        %1162 = vmatpush1.msra.mxu0 0.0
        %1163 = vmatprep.subr.mxu0 0.0
        %1164 = vmatpush1.msra.mxu0 0.0
        %1165 = vmatprep.subr.mxu0 0.0
        %1166 = vmatpush1.msra.mxu0 0.0
        %1167 = vmatprep.subr.mxu0 0.0
        %1168 = vmatpush1.msra.mxu0 0.0
        %1169 = vmatprep.subr.mxu0 0.0
        %1170 = vmatpush1.msra.mxu0 0.0
        %1171 = vmatprep.subr.mxu0 0.0
        %1172 = vmatpush1.msra.mxu0 0.0
        %1173 = vmatprep.mubr.f32.mxu0 0.0
        %1174 = vmatmul.mubr.f32.gmra.mrb[0].mxu0 %v1101
        %v1175 = vpop.f32.mrb[0].mxu0
        %v1176 = vadd.f32 0.0, %v1175
        %v1177 = vpop.f32.mrb[0].mxu0
        %v1178 = vadd.f32 0.0, %v1177
        %1179 = vdwg.mxu0
        %v1180 = vadd.f32 %v1079, %v1176
        %v1181 = vadd.f32 %v1080, %v1178
        %1182 = vrot.lane.b32.xlu0 %v490, 1
        %v1183 = vpop.permute.xlu0 %1182
        %1184 = vrot.lane.b32.xlu0 %v492, 1
        %v1185 = vpop.permute.xlu0 %1184
        %v1186 = vsel %vm1085, %v1183, %v1185
        %v1187 = vsel %vm1085, %v1185, %v1183
        %v1188 = vmul.f32 %v1187, %v1091
        %v1189 = vmul.f32 %v1186, %v1095
        %s1190 = scalar_lea.vmem %s5, 24
        %v1191 = vld [vmem:[%s1190] sm:$0xff]
        %v1193 = vsel %vm533, %v1191, 0
        %v1196 = vsel %vm537, %v1188, 0
        %v1199 = vsel %vm537, %v1189, 0
        %1201 = vmatprep.subr.mxu0 %v1199
        %1202 = vmatpush1.msra.mxu0 %v1196
        %1203 = vmatprep.subr.mxu0 0.0
        %1204 = vmatpush1.msra.mxu0 0.0
        %1205 = vmatprep.subr.mxu0 0.0
        %1206 = vmatpush1.msra.mxu0 0.0
        %1207 = vmatprep.subr.mxu0 0.0
        %1208 = vmatpush1.msra.mxu0 0.0
        %1209 = vmatprep.subr.mxu0 0.0
        %1210 = vmatpush1.msra.mxu0 0.0
        %1211 = vmatprep.subr.mxu0 0.0
        %1212 = vmatpush1.msra.mxu0 0.0
        %1213 = vmatprep.subr.mxu0 0.0
        %1214 = vmatpush1.msra.mxu0 0.0
        %1215 = vmatprep.subr.mxu0 0.0
        %1216 = vmatpush1.msra.mxu0 0.0
        %1217 = vmatprep.subr.mxu0 0.0
        %1218 = vmatpush1.msra.mxu0 0.0
        %1219 = vmatprep.subr.mxu0 0.0
        %1220 = vmatpush1.msra.mxu0 0.0
        %1221 = vmatprep.subr.mxu0 0.0
        %1222 = vmatpush1.msra.mxu0 0.0
        %1223 = vmatprep.subr.mxu0 0.0
        %1224 = vmatpush1.msra.mxu0 0.0
        %1225 = vmatprep.subr.mxu0 0.0
        %1226 = vmatpush1.msra.mxu0 0.0
        %1227 = vmatprep.subr.mxu0 0.0
        %1228 = vmatpush1.msra.mxu0 0.0
        %1229 = vmatprep.subr.mxu0 0.0
        %1230 = vmatpush1.msra.mxu0 0.0
        %1231 = vmatprep.subr.mxu0 0.0
        %1232 = vmatpush1.msra.mxu0 0.0
        %1233 = vmatprep.subr.mxu0 0.0
        %1234 = vmatpush1.msra.mxu0 0.0
        %1235 = vmatprep.subr.mxu0 0.0
        %1236 = vmatpush1.msra.mxu0 0.0
        %1237 = vmatprep.subr.mxu0 0.0
        %1238 = vmatpush1.msra.mxu0 0.0
        %1239 = vmatprep.subr.mxu0 0.0
        %1240 = vmatpush1.msra.mxu0 0.0
        %1241 = vmatprep.subr.mxu0 0.0
        %1242 = vmatpush1.msra.mxu0 0.0
        %1243 = vmatprep.subr.mxu0 0.0
        %1244 = vmatpush1.msra.mxu0 0.0
        %1245 = vmatprep.subr.mxu0 0.0
        %1246 = vmatpush1.msra.mxu0 0.0
        %1247 = vmatprep.subr.mxu0 0.0
        %1248 = vmatpush1.msra.mxu0 0.0
        %1249 = vmatprep.subr.mxu0 0.0
        %1250 = vmatpush1.msra.mxu0 0.0
        %1251 = vmatprep.subr.mxu0 0.0
        %1252 = vmatpush1.msra.mxu0 0.0
        %1253 = vmatprep.subr.mxu0 0.0
        %1254 = vmatpush1.msra.mxu0 0.0
        %1255 = vmatprep.subr.mxu0 0.0
        %1256 = vmatpush1.msra.mxu0 0.0
        %1257 = vmatprep.subr.mxu0 0.0
        %1258 = vmatpush1.msra.mxu0 0.0
        %1259 = vmatprep.subr.mxu0 0.0
        %1260 = vmatpush1.msra.mxu0 0.0
        %1261 = vmatprep.subr.mxu0 0.0
        %1262 = vmatpush1.msra.mxu0 0.0
        %1263 = vmatprep.subr.mxu0 0.0
        %1264 = vmatpush1.msra.mxu0 0.0
        %1265 = vmatprep.mubr.f32.mxu0 0.0
        %1266 = vmatmul.mubr.f32.gmra.mrb[0].mxu0 %v1193
        %v1267 = vpop.f32.mrb[0].mxu0
        %v1268 = vadd.f32 0.0, %v1267
        %v1269 = vpop.f32.mrb[0].mxu0
        %v1270 = vadd.f32 0.0, %v1269
        %1271 = vdwg.mxu0
        %v1272 = vadd.f32 %v1180, %v1268
        %v1273 = vadd.f32 %v1181, %v1270
        %s1274 = scalar_lea.vmem %s4, 32
        %v1275 = vld [vmem:[%s1274] sm:$0xff]
        %v1277 = vsel %vm533, %v1275, 0
        %v1279 = vsel %vm537, %v498, 0
        %v1281 = vsel %vm537, %v502, 0
        %1283 = vmatprep.subr.mxu0 %v1281
        %1284 = vmatpush1.msra.mxu0 %v1279
        %1285 = vmatprep.subr.mxu0 0.0
        %1286 = vmatpush1.msra.mxu0 0.0
        %1287 = vmatprep.subr.mxu0 0.0
        %1288 = vmatpush1.msra.mxu0 0.0
        %1289 = vmatprep.subr.mxu0 0.0
        %1290 = vmatpush1.msra.mxu0 0.0
        %1291 = vmatprep.subr.mxu0 0.0
        %1292 = vmatpush1.msra.mxu0 0.0
        %1293 = vmatprep.subr.mxu0 0.0
        %1294 = vmatpush1.msra.mxu0 0.0
        %1295 = vmatprep.subr.mxu0 0.0
        %1296 = vmatpush1.msra.mxu0 0.0
        %1297 = vmatprep.subr.mxu0 0.0
        %1298 = vmatpush1.msra.mxu0 0.0
        %1299 = vmatprep.subr.mxu0 0.0
        %1300 = vmatpush1.msra.mxu0 0.0
        %1301 = vmatprep.subr.mxu0 0.0
        %1302 = vmatpush1.msra.mxu0 0.0
        %1303 = vmatprep.subr.mxu0 0.0
        %1304 = vmatpush1.msra.mxu0 0.0
        %1305 = vmatprep.subr.mxu0 0.0
        %1306 = vmatpush1.msra.mxu0 0.0
        %1307 = vmatprep.subr.mxu0 0.0
        %1308 = vmatpush1.msra.mxu0 0.0
        %1309 = vmatprep.subr.mxu0 0.0
        %1310 = vmatpush1.msra.mxu0 0.0
        %1311 = vmatprep.subr.mxu0 0.0
        %1312 = vmatpush1.msra.mxu0 0.0
        %1313 = vmatprep.subr.mxu0 0.0
        %1314 = vmatpush1.msra.mxu0 0.0
        %1315 = vmatprep.subr.mxu0 0.0
        %1316 = vmatpush1.msra.mxu0 0.0
        %1317 = vmatprep.subr.mxu0 0.0
        %1318 = vmatpush1.msra.mxu0 0.0
        %1319 = vmatprep.subr.mxu0 0.0
        %1320 = vmatpush1.msra.mxu0 0.0
        %1321 = vmatprep.subr.mxu0 0.0
        %1322 = vmatpush1.msra.mxu0 0.0
        %1323 = vmatprep.subr.mxu0 0.0
        %1324 = vmatpush1.msra.mxu0 0.0
        %1325 = vmatprep.subr.mxu0 0.0
        %1326 = vmatpush1.msra.mxu0 0.0
        %1327 = vmatprep.subr.mxu0 0.0
        %1328 = vmatpush1.msra.mxu0 0.0
        %1329 = vmatprep.subr.mxu0 0.0
        %1330 = vmatpush1.msra.mxu0 0.0
        %1331 = vmatprep.subr.mxu0 0.0
        %1332 = vmatpush1.msra.mxu0 0.0
        %1333 = vmatprep.subr.mxu0 0.0
        %1334 = vmatpush1.msra.mxu0 0.0
        %1335 = vmatprep.subr.mxu0 0.0
        %1336 = vmatpush1.msra.mxu0 0.0
        %1337 = vmatprep.subr.mxu0 0.0
        %1338 = vmatpush1.msra.mxu0 0.0
        %1339 = vmatprep.subr.mxu0 0.0
        %1340 = vmatpush1.msra.mxu0 0.0
        %1341 = vmatprep.subr.mxu0 0.0
        %1342 = vmatpush1.msra.mxu0 0.0
        %1343 = vmatprep.subr.mxu0 0.0
        %1344 = vmatpush1.msra.mxu0 0.0
        %1345 = vmatprep.subr.mxu0 0.0
        %1346 = vmatpush1.msra.mxu0 0.0
        %1347 = vmatprep.mubr.f32.mxu0 0.0
        %1348 = vmatmul.mubr.f32.gmra.mrb[0].mxu0 %v1277
        %v1349 = vpop.f32.mrb[0].mxu0
        %v1350 = vadd.f32 0.0, %v1349
        %v1351 = vpop.f32.mrb[0].mxu0
        %v1352 = vadd.f32 0.0, %v1351
        %1353 = vdwg.mxu0
        %v1354 = vadd.f32 %v1272, %v1350
        %v1355 = vadd.f32 %v1273, %v1352
        %s1356 = scalar_lea.vmem %s5, 32
        %v1357 = vld [vmem:[%s1356] sm:$0xff]
        %v1359 = vsel %vm533, %v1357, 0
        %v1362 = vsel %vm537, %v490, 0
        %v1365 = vsel %vm537, %v492, 0
        %1367 = vmatprep.subr.mxu0 %v1365
        %1368 = vmatpush1.msra.mxu0 %v1362
        %1369 = vmatprep.subr.mxu0 0.0
        %1370 = vmatpush1.msra.mxu0 0.0
        %1371 = vmatprep.subr.mxu0 0.0
        %1372 = vmatpush1.msra.mxu0 0.0
        %1373 = vmatprep.subr.mxu0 0.0
        %1374 = vmatpush1.msra.mxu0 0.0
        %1375 = vmatprep.subr.mxu0 0.0
        %1376 = vmatpush1.msra.mxu0 0.0
        %1377 = vmatprep.subr.mxu0 0.0
        %1378 = vmatpush1.msra.mxu0 0.0
        %1379 = vmatprep.subr.mxu0 0.0
        %1380 = vmatpush1.msra.mxu0 0.0
        %1381 = vmatprep.subr.mxu0 0.0
        %1382 = vmatpush1.msra.mxu0 0.0
        %1383 = vmatprep.subr.mxu0 0.0
        %1384 = vmatpush1.msra.mxu0 0.0
        %1385 = vmatprep.subr.mxu0 0.0
        %1386 = vmatpush1.msra.mxu0 0.0
        %1387 = vmatprep.subr.mxu0 0.0
        %1388 = vmatpush1.msra.mxu0 0.0
        %1389 = vmatprep.subr.mxu0 0.0
        %1390 = vmatpush1.msra.mxu0 0.0
        %1391 = vmatprep.subr.mxu0 0.0
        %1392 = vmatpush1.msra.mxu0 0.0
        %1393 = vmatprep.subr.mxu0 0.0
        %1394 = vmatpush1.msra.mxu0 0.0
        %1395 = vmatprep.subr.mxu0 0.0
        %1396 = vmatpush1.msra.mxu0 0.0
        %1397 = vmatprep.subr.mxu0 0.0
        %1398 = vmatpush1.msra.mxu0 0.0
        %1399 = vmatprep.subr.mxu0 0.0
        %1400 = vmatpush1.msra.mxu0 0.0
        %1401 = vmatprep.subr.mxu0 0.0
        %1402 = vmatpush1.msra.mxu0 0.0
        %1403 = vmatprep.subr.mxu0 0.0
        %1404 = vmatpush1.msra.mxu0 0.0
        %1405 = vmatprep.subr.mxu0 0.0
        %1406 = vmatpush1.msra.mxu0 0.0
        %1407 = vmatprep.subr.mxu0 0.0
        %1408 = vmatpush1.msra.mxu0 0.0
        %1409 = vmatprep.subr.mxu0 0.0
        %1410 = vmatpush1.msra.mxu0 0.0
        %1411 = vmatprep.subr.mxu0 0.0
        %1412 = vmatpush1.msra.mxu0 0.0
        %1413 = vmatprep.subr.mxu0 0.0
        %1414 = vmatpush1.msra.mxu0 0.0
        %1415 = vmatprep.subr.mxu0 0.0
        %1416 = vmatpush1.msra.mxu0 0.0
        %1417 = vmatprep.subr.mxu0 0.0
        %1418 = vmatpush1.msra.mxu0 0.0
        %1419 = vmatprep.subr.mxu0 0.0
        %1420 = vmatpush1.msra.mxu0 0.0
        %1421 = vmatprep.subr.mxu0 0.0
        %1422 = vmatpush1.msra.mxu0 0.0
        %1423 = vmatprep.subr.mxu0 0.0
        %1424 = vmatpush1.msra.mxu0 0.0
        %1425 = vmatprep.subr.mxu0 0.0
        %1426 = vmatpush1.msra.mxu0 0.0
        %1427 = vmatprep.subr.mxu0 0.0
        %1428 = vmatpush1.msra.mxu0 0.0
        %1429 = vmatprep.subr.mxu0 0.0
        %1430 = vmatpush1.msra.mxu0 0.0
        %1431 = vmatprep.mubr.f32.mxu0 0.0
        %1432 = vmatmul.mubr.f32.gmra.mrb[0].mxu0 %v1359
        %v1433 = vpop.f32.mrb[0].mxu0
        %v1434 = vadd.f32 0.0, %v1433
        %v1435 = vpop.f32.mrb[0].mxu0
        %v1436 = vadd.f32 0.0, %v1435
        %1437 = vdwg.mxu0
        %v1438 = vadd.f32 %v1354, %v1434
        %v1439 = vadd.f32 %v1355, %v1436
        %1440 = vrot.lane.b32.xlu0 %v498, 127
        %v1441 = vpop.permute.xlu0 %1440
        %1442 = vrot.lane.b32.xlu0 %v502, 127
        %v1443 = vpop.permute.xlu0 %1442
        %vm1444 = vcmp.lt.s32.totalorder %v509, 127
        %v1445 = vsel %vm1444, %v1441, %v1443
        %v1446 = vsel %vm1444, %v1443, %v1441
        %v1447 = vlaneseq
        %v1448 = vshrl.u32 %v1447, 7
        %v1449 = vsub.s32 5, %v1448
        %v1450 = vrot.slane %v494, %v1449
        %v1451 = vlaneseq
        %v1452 = vshrl.u32 %v1451, 7
        %v1453 = vsub.s32 5, %v1452
        %v1454 = vrot.slane %v495, %v1453
        %v1455 = vmul.f32 %v1445, %v1450
        %v1456 = vmul.f32 %v1446, %v1454
        %s1457 = scalar_lea.vmem %s4, 40
        %v1458 = vld [vmem:[%s1457] sm:$0xff]
        %v1460 = vsel %vm533, %v1458, 0
        %v1463 = vsel %vm537, %v1455, 0
        %v1466 = vsel %vm537, %v1456, 0
        %1468 = vmatprep.subr.mxu0 %v1466
        %1469 = vmatpush1.msra.mxu0 %v1463
        %1470 = vmatprep.subr.mxu0 0.0
        %1471 = vmatpush1.msra.mxu0 0.0
        %1472 = vmatprep.subr.mxu0 0.0
        %1473 = vmatpush1.msra.mxu0 0.0
        %1474 = vmatprep.subr.mxu0 0.0
        %1475 = vmatpush1.msra.mxu0 0.0
        %1476 = vmatprep.subr.mxu0 0.0
        %1477 = vmatpush1.msra.mxu0 0.0
        %1478 = vmatprep.subr.mxu0 0.0
        %1479 = vmatpush1.msra.mxu0 0.0
        %1480 = vmatprep.subr.mxu0 0.0
        %1481 = vmatpush1.msra.mxu0 0.0
        %1482 = vmatprep.subr.mxu0 0.0
        %1483 = vmatpush1.msra.mxu0 0.0
        %1484 = vmatprep.subr.mxu0 0.0
        %1485 = vmatpush1.msra.mxu0 0.0
        %1486 = vmatprep.subr.mxu0 0.0
        %1487 = vmatpush1.msra.mxu0 0.0
        %1488 = vmatprep.subr.mxu0 0.0
        %1489 = vmatpush1.msra.mxu0 0.0
        %1490 = vmatprep.subr.mxu0 0.0
        %1491 = vmatpush1.msra.mxu0 0.0
        %1492 = vmatprep.subr.mxu0 0.0
        %1493 = vmatpush1.msra.mxu0 0.0
        %1494 = vmatprep.subr.mxu0 0.0
        %1495 = vmatpush1.msra.mxu0 0.0
        %1496 = vmatprep.subr.mxu0 0.0
        %1497 = vmatpush1.msra.mxu0 0.0
        %1498 = vmatprep.subr.mxu0 0.0
        %1499 = vmatpush1.msra.mxu0 0.0
        %1500 = vmatprep.subr.mxu0 0.0
        %1501 = vmatpush1.msra.mxu0 0.0
        %1502 = vmatprep.subr.mxu0 0.0
        %1503 = vmatpush1.msra.mxu0 0.0
        %1504 = vmatprep.subr.mxu0 0.0
        %1505 = vmatpush1.msra.mxu0 0.0
        %1506 = vmatprep.subr.mxu0 0.0
        %1507 = vmatpush1.msra.mxu0 0.0
        %1508 = vmatprep.subr.mxu0 0.0
        %1509 = vmatpush1.msra.mxu0 0.0
        %1510 = vmatprep.subr.mxu0 0.0
        %1511 = vmatpush1.msra.mxu0 0.0
        %1512 = vmatprep.subr.mxu0 0.0
        %1513 = vmatpush1.msra.mxu0 0.0
        %1514 = vmatprep.subr.mxu0 0.0
        %1515 = vmatpush1.msra.mxu0 0.0
        %1516 = vmatprep.subr.mxu0 0.0
        %1517 = vmatpush1.msra.mxu0 0.0
        %1518 = vmatprep.subr.mxu0 0.0
        %1519 = vmatpush1.msra.mxu0 0.0
        %1520 = vmatprep.subr.mxu0 0.0
        %1521 = vmatpush1.msra.mxu0 0.0
        %1522 = vmatprep.subr.mxu0 0.0
        %1523 = vmatpush1.msra.mxu0 0.0
        %1524 = vmatprep.subr.mxu0 0.0
        %1525 = vmatpush1.msra.mxu0 0.0
        %1526 = vmatprep.subr.mxu0 0.0
        %1527 = vmatpush1.msra.mxu0 0.0
        %1528 = vmatprep.subr.mxu0 0.0
        %1529 = vmatpush1.msra.mxu0 0.0
        %1530 = vmatprep.subr.mxu0 0.0
        %1531 = vmatpush1.msra.mxu0 0.0
        %1532 = vmatprep.mubr.f32.mxu0 0.0
        %1533 = vmatmul.mubr.f32.gmra.mrb[0].mxu0 %v1460
        %v1534 = vpop.f32.mrb[0].mxu0
        %v1535 = vadd.f32 0.0, %v1534
        %v1536 = vpop.f32.mrb[0].mxu0
        %v1537 = vadd.f32 0.0, %v1536
        %1538 = vdwg.mxu0
        %v1539 = vadd.f32 %v1438, %v1535
        %v1540 = vadd.f32 %v1439, %v1537
        %1541 = vrot.lane.b32.xlu0 %v490, 127
        %v1542 = vpop.permute.xlu0 %1541
        %1543 = vrot.lane.b32.xlu0 %v492, 127
        %v1544 = vpop.permute.xlu0 %1543
        %v1545 = vsel %vm1444, %v1542, %v1544
        %v1546 = vsel %vm1444, %v1544, %v1542
        %v1547 = vmul.f32 %v1545, %v1450
        %v1548 = vmul.f32 %v1546, %v1454
        %s1549 = scalar_lea.vmem %s5, 40
        %v1550 = vld [vmem:[%s1549] sm:$0xff]
        %v1552 = vsel %vm533, %v1550, 0
        %v1555 = vsel %vm537, %v1547, 0
        %v1558 = vsel %vm537, %v1548, 0
        %1560 = vmatprep.subr.mxu0 %v1558
        %1561 = vmatpush1.msra.mxu0 %v1555
        %1562 = vmatprep.subr.mxu0 0.0
        %1563 = vmatpush1.msra.mxu0 0.0
        %1564 = vmatprep.subr.mxu0 0.0
        %1565 = vmatpush1.msra.mxu0 0.0
        %1566 = vmatprep.subr.mxu0 0.0
        %1567 = vmatpush1.msra.mxu0 0.0
        %1568 = vmatprep.subr.mxu0 0.0
        %1569 = vmatpush1.msra.mxu0 0.0
        %1570 = vmatprep.subr.mxu0 0.0
        %1571 = vmatpush1.msra.mxu0 0.0
        %1572 = vmatprep.subr.mxu0 0.0
        %1573 = vmatpush1.msra.mxu0 0.0
        %1574 = vmatprep.subr.mxu0 0.0
        %1575 = vmatpush1.msra.mxu0 0.0
        %1576 = vmatprep.subr.mxu0 0.0
        %1577 = vmatpush1.msra.mxu0 0.0
        %1578 = vmatprep.subr.mxu0 0.0
        %1579 = vmatpush1.msra.mxu0 0.0
        %1580 = vmatprep.subr.mxu0 0.0
        %1581 = vmatpush1.msra.mxu0 0.0
        %1582 = vmatprep.subr.mxu0 0.0
        %1583 = vmatpush1.msra.mxu0 0.0
        %1584 = vmatprep.subr.mxu0 0.0
        %1585 = vmatpush1.msra.mxu0 0.0
        %1586 = vmatprep.subr.mxu0 0.0
        %1587 = vmatpush1.msra.mxu0 0.0
        %1588 = vmatprep.subr.mxu0 0.0
        %1589 = vmatpush1.msra.mxu0 0.0
        %1590 = vmatprep.subr.mxu0 0.0
        %1591 = vmatpush1.msra.mxu0 0.0
        %1592 = vmatprep.subr.mxu0 0.0
        %1593 = vmatpush1.msra.mxu0 0.0
        %1594 = vmatprep.subr.mxu0 0.0
        %1595 = vmatpush1.msra.mxu0 0.0
        %1596 = vmatprep.subr.mxu0 0.0
        %1597 = vmatpush1.msra.mxu0 0.0
        %1598 = vmatprep.subr.mxu0 0.0
        %1599 = vmatpush1.msra.mxu0 0.0
        %1600 = vmatprep.subr.mxu0 0.0
        %1601 = vmatpush1.msra.mxu0 0.0
        %1602 = vmatprep.subr.mxu0 0.0
        %1603 = vmatpush1.msra.mxu0 0.0
        %1604 = vmatprep.subr.mxu0 0.0
        %1605 = vmatpush1.msra.mxu0 0.0
        %1606 = vmatprep.subr.mxu0 0.0
        %1607 = vmatpush1.msra.mxu0 0.0
        %1608 = vmatprep.subr.mxu0 0.0
        %1609 = vmatpush1.msra.mxu0 0.0
        %1610 = vmatprep.subr.mxu0 0.0
        %1611 = vmatpush1.msra.mxu0 0.0
        %1612 = vmatprep.subr.mxu0 0.0
        %1613 = vmatpush1.msra.mxu0 0.0
        %1614 = vmatprep.subr.mxu0 0.0
        %1615 = vmatpush1.msra.mxu0 0.0
        %1616 = vmatprep.subr.mxu0 0.0
        %1617 = vmatpush1.msra.mxu0 0.0
        %1618 = vmatprep.subr.mxu0 0.0
        %1619 = vmatpush1.msra.mxu0 0.0
        %1620 = vmatprep.subr.mxu0 0.0
        %1621 = vmatpush1.msra.mxu0 0.0
        %1622 = vmatprep.subr.mxu0 0.0
        %1623 = vmatpush1.msra.mxu0 0.0
        %1624 = vmatprep.mubr.f32.mxu0 0.0
        %1625 = vmatmul.mubr.f32.gmra.mrb[0].mxu0 %v1552
        %v1626 = vpop.f32.mrb[0].mxu0
        %v1627 = vadd.f32 0.0, %v1626
        %v1628 = vpop.f32.mrb[0].mxu0
        %v1629 = vadd.f32 0.0, %v1628
        %1630 = vdwg.mxu0
        %v1631 = vadd.f32 %v1539, %v1627
        %v1632 = vadd.f32 %v1540, %v1629
        %1633 = vrot.lane.b32.xlu0 %v498, 113
        %v1634 = vpop.permute.xlu0 %1633
        %1635 = vrot.lane.b32.xlu0 %v502, 113
        %v1636 = vpop.permute.xlu0 %1635
        %vm1637 = vcmp.lt.s32.totalorder %v509, 113
        %v1638 = vsel %vm1637, %v1634, %v1636
        %v1639 = vsel %vm1637, %v1636, %v1634
        %v1640 = vlaneseq
        %v1641 = vshrl.u32 %v1640, 7
        %v1642 = vsub.s32 6, %v1641
        %v1643 = vrot.slane %v494, %v1642
        %v1644 = vlaneseq
        %v1645 = vshrl.u32 %v1644, 7
        %v1646 = vsub.s32 6, %v1645
        %v1647 = vrot.slane %v495, %v1646
        %v1648 = vmul.f32 %v1638, %v1643
        %v1649 = vmul.f32 %v1639, %v1647
        %s1650 = scalar_lea.vmem %s4, 48
        %v1651 = vld [vmem:[%s1650] sm:$0xff]
        %v1653 = vsel %vm533, %v1651, 0
        %v1656 = vsel %vm537, %v1648, 0
        %v1659 = vsel %vm537, %v1649, 0
        %1661 = vmatprep.subr.mxu0 %v1659
        %1662 = vmatpush1.msra.mxu0 %v1656
        %1663 = vmatprep.subr.mxu0 0.0
        %1664 = vmatpush1.msra.mxu0 0.0
        %1665 = vmatprep.subr.mxu0 0.0
        %1666 = vmatpush1.msra.mxu0 0.0
        %1667 = vmatprep.subr.mxu0 0.0
        %1668 = vmatpush1.msra.mxu0 0.0
        %1669 = vmatprep.subr.mxu0 0.0
        %1670 = vmatpush1.msra.mxu0 0.0
        %1671 = vmatprep.subr.mxu0 0.0
        %1672 = vmatpush1.msra.mxu0 0.0
        %1673 = vmatprep.subr.mxu0 0.0
        %1674 = vmatpush1.msra.mxu0 0.0
        %1675 = vmatprep.subr.mxu0 0.0
        %1676 = vmatpush1.msra.mxu0 0.0
        %1677 = vmatprep.subr.mxu0 0.0
        %1678 = vmatpush1.msra.mxu0 0.0
        %1679 = vmatprep.subr.mxu0 0.0
        %1680 = vmatpush1.msra.mxu0 0.0
        %1681 = vmatprep.subr.mxu0 0.0
        %1682 = vmatpush1.msra.mxu0 0.0
        %1683 = vmatprep.subr.mxu0 0.0
        %1684 = vmatpush1.msra.mxu0 0.0
        %1685 = vmatprep.subr.mxu0 0.0
        %1686 = vmatpush1.msra.mxu0 0.0
        %1687 = vmatprep.subr.mxu0 0.0
        %1688 = vmatpush1.msra.mxu0 0.0
        %1689 = vmatprep.subr.mxu0 0.0
        %1690 = vmatpush1.msra.mxu0 0.0
        %1691 = vmatprep.subr.mxu0 0.0
        %1692 = vmatpush1.msra.mxu0 0.0
        %1693 = vmatprep.subr.mxu0 0.0
        %1694 = vmatpush1.msra.mxu0 0.0
        %1695 = vmatprep.subr.mxu0 0.0
        %1696 = vmatpush1.msra.mxu0 0.0
        %1697 = vmatprep.subr.mxu0 0.0
        %1698 = vmatpush1.msra.mxu0 0.0
        %1699 = vmatprep.subr.mxu0 0.0
        %1700 = vmatpush1.msra.mxu0 0.0
        %1701 = vmatprep.subr.mxu0 0.0
        %1702 = vmatpush1.msra.mxu0 0.0
        %1703 = vmatprep.subr.mxu0 0.0
        %1704 = vmatpush1.msra.mxu0 0.0
        %1705 = vmatprep.subr.mxu0 0.0
        %1706 = vmatpush1.msra.mxu0 0.0
        %1707 = vmatprep.subr.mxu0 0.0
        %1708 = vmatpush1.msra.mxu0 0.0
        %1709 = vmatprep.subr.mxu0 0.0
        %1710 = vmatpush1.msra.mxu0 0.0
        %1711 = vmatprep.subr.mxu0 0.0
        %1712 = vmatpush1.msra.mxu0 0.0
        %1713 = vmatprep.subr.mxu0 0.0
        %1714 = vmatpush1.msra.mxu0 0.0
        %1715 = vmatprep.subr.mxu0 0.0
        %1716 = vmatpush1.msra.mxu0 0.0
        %1717 = vmatprep.subr.mxu0 0.0
        %1718 = vmatpush1.msra.mxu0 0.0
        %1719 = vmatprep.subr.mxu0 0.0
        %1720 = vmatpush1.msra.mxu0 0.0
        %1721 = vmatprep.subr.mxu0 0.0
        %1722 = vmatpush1.msra.mxu0 0.0
        %1723 = vmatprep.subr.mxu0 0.0
        %1724 = vmatpush1.msra.mxu0 0.0
        %1725 = vmatprep.mubr.f32.mxu0 0.0
        %1726 = vmatmul.mubr.f32.gmra.mrb[0].mxu0 %v1653
        %v1727 = vpop.f32.mrb[0].mxu0
        %v1728 = vadd.f32 0.0, %v1727
        %v1729 = vpop.f32.mrb[0].mxu0
        %v1730 = vadd.f32 0.0, %v1729
        %1731 = vdwg.mxu0
        %v1732 = vadd.f32 %v1631, %v1728
        %v1733 = vadd.f32 %v1632, %v1730
        %1734 = vrot.lane.b32.xlu0 %v490, 113
        %v1735 = vpop.permute.xlu0 %1734
        %1736 = vrot.lane.b32.xlu0 %v492, 113
        %v1737 = vpop.permute.xlu0 %1736
        %v1738 = vsel %vm1637, %v1735, %v1737
        %v1739 = vsel %vm1637, %v1737, %v1735
        %v1740 = vmul.f32 %v1738, %v1643
        %v1741 = vmul.f32 %v1739, %v1647
        %s1742 = scalar_lea.vmem %s5, 48
        %v1743 = vld [vmem:[%s1742] sm:$0xff]
        %v1745 = vsel %vm533, %v1743, 0
        %v1748 = vsel %vm537, %v1740, 0
        %v1751 = vsel %vm537, %v1741, 0
        %1753 = vmatprep.subr.mxu0 %v1751
        %1754 = vmatpush1.msra.mxu0 %v1748
        %1755 = vmatprep.subr.mxu0 0.0
        %1756 = vmatpush1.msra.mxu0 0.0
        %1757 = vmatprep.subr.mxu0 0.0
        %1758 = vmatpush1.msra.mxu0 0.0
        %1759 = vmatprep.subr.mxu0 0.0
        %1760 = vmatpush1.msra.mxu0 0.0
        %1761 = vmatprep.subr.mxu0 0.0
        %1762 = vmatpush1.msra.mxu0 0.0
        %1763 = vmatprep.subr.mxu0 0.0
        %1764 = vmatpush1.msra.mxu0 0.0
        %1765 = vmatprep.subr.mxu0 0.0
        %1766 = vmatpush1.msra.mxu0 0.0
        %1767 = vmatprep.subr.mxu0 0.0
        %1768 = vmatpush1.msra.mxu0 0.0
        %1769 = vmatprep.subr.mxu0 0.0
        %1770 = vmatpush1.msra.mxu0 0.0
        %1771 = vmatprep.subr.mxu0 0.0
        %1772 = vmatpush1.msra.mxu0 0.0
        %1773 = vmatprep.subr.mxu0 0.0
        %1774 = vmatpush1.msra.mxu0 0.0
        %1775 = vmatprep.subr.mxu0 0.0
        %1776 = vmatpush1.msra.mxu0 0.0
        %1777 = vmatprep.subr.mxu0 0.0
        %1778 = vmatpush1.msra.mxu0 0.0
        %1779 = vmatprep.subr.mxu0 0.0
        %1780 = vmatpush1.msra.mxu0 0.0
        %1781 = vmatprep.subr.mxu0 0.0
        %1782 = vmatpush1.msra.mxu0 0.0
        %1783 = vmatprep.subr.mxu0 0.0
        %1784 = vmatpush1.msra.mxu0 0.0
        %1785 = vmatprep.subr.mxu0 0.0
        %1786 = vmatpush1.msra.mxu0 0.0
        %1787 = vmatprep.subr.mxu0 0.0
        %1788 = vmatpush1.msra.mxu0 0.0
        %1789 = vmatprep.subr.mxu0 0.0
        %1790 = vmatpush1.msra.mxu0 0.0
        %1791 = vmatprep.subr.mxu0 0.0
        %1792 = vmatpush1.msra.mxu0 0.0
        %1793 = vmatprep.subr.mxu0 0.0
        %1794 = vmatpush1.msra.mxu0 0.0
        %1795 = vmatprep.subr.mxu0 0.0
        %1796 = vmatpush1.msra.mxu0 0.0
        %1797 = vmatprep.subr.mxu0 0.0
        %1798 = vmatpush1.msra.mxu0 0.0
        %1799 = vmatprep.subr.mxu0 0.0
        %1800 = vmatpush1.msra.mxu0 0.0
        %1801 = vmatprep.subr.mxu0 0.0
        %1802 = vmatpush1.msra.mxu0 0.0
        %1803 = vmatprep.subr.mxu0 0.0
        %1804 = vmatpush1.msra.mxu0 0.0
        %1805 = vmatprep.subr.mxu0 0.0
        %1806 = vmatpush1.msra.mxu0 0.0
        %1807 = vmatprep.subr.mxu0 0.0
        %1808 = vmatpush1.msra.mxu0 0.0
        %1809 = vmatprep.subr.mxu0 0.0
        %1810 = vmatpush1.msra.mxu0 0.0
        %1811 = vmatprep.subr.mxu0 0.0
        %1812 = vmatpush1.msra.mxu0 0.0
        %1813 = vmatprep.subr.mxu0 0.0
        %1814 = vmatpush1.msra.mxu0 0.0
        %1815 = vmatprep.subr.mxu0 0.0
        %1816 = vmatpush1.msra.mxu0 0.0
        %1817 = vmatprep.mubr.f32.mxu0 0.0
        %1818 = vmatmul.mubr.f32.gmra.mrb[0].mxu0 %v1745
        %v1819 = vpop.f32.mrb[0].mxu0
        %v1820 = vadd.f32 0.0, %v1819
        %v1821 = vpop.f32.mrb[0].mxu0
        %v1822 = vadd.f32 0.0, %v1821
        %1823 = vdwg.mxu0
        %v1824 = vadd.f32 %v1732, %v1820
        %v1825 = vadd.f32 %v1733, %v1822
        %1826 = vrot.lane.b32.xlu0 %v498, 112
        %v1827 = vpop.permute.xlu0 %1826
        %1828 = vrot.lane.b32.xlu0 %v502, 112
        %v1829 = vpop.permute.xlu0 %1828
        %vm1830 = vcmp.lt.s32.totalorder %v509, 112
        %v1831 = vsel %vm1830, %v1827, %v1829
        %v1832 = vsel %vm1830, %v1829, %v1827
        %v1833 = vlaneseq
        %v1834 = vshrl.u32 %v1833, 7
        %v1835 = vsub.s32 7, %v1834
        %v1836 = vrot.slane %v494, %v1835
        %v1837 = vlaneseq
        %v1838 = vshrl.u32 %v1837, 7
        %v1839 = vsub.s32 7, %v1838
        %v1840 = vrot.slane %v495, %v1839
        %v1841 = vmul.f32 %v1831, %v1836
        %v1842 = vmul.f32 %v1832, %v1840
        %s1843 = scalar_lea.vmem %s4, 56
        %v1844 = vld [vmem:[%s1843] sm:$0xff]
        %v1846 = vsel %vm533, %v1844, 0
        %v1849 = vsel %vm537, %v1841, 0
        %v1852 = vsel %vm537, %v1842, 0
        %1854 = vmatprep.subr.mxu0 %v1852
        %1855 = vmatpush1.msra.mxu0 %v1849
        %1856 = vmatprep.subr.mxu0 0.0
        %1857 = vmatpush1.msra.mxu0 0.0
        %1858 = vmatprep.subr.mxu0 0.0
        %1859 = vmatpush1.msra.mxu0 0.0
        %1860 = vmatprep.subr.mxu0 0.0
        %1861 = vmatpush1.msra.mxu0 0.0
        %1862 = vmatprep.subr.mxu0 0.0
        %1863 = vmatpush1.msra.mxu0 0.0
        %1864 = vmatprep.subr.mxu0 0.0
        %1865 = vmatpush1.msra.mxu0 0.0
        %1866 = vmatprep.subr.mxu0 0.0
        %1867 = vmatpush1.msra.mxu0 0.0
        %1868 = vmatprep.subr.mxu0 0.0
        %1869 = vmatpush1.msra.mxu0 0.0
        %1870 = vmatprep.subr.mxu0 0.0
        %1871 = vmatpush1.msra.mxu0 0.0
        %1872 = vmatprep.subr.mxu0 0.0
        %1873 = vmatpush1.msra.mxu0 0.0
        %1874 = vmatprep.subr.mxu0 0.0
        %1875 = vmatpush1.msra.mxu0 0.0
        %1876 = vmatprep.subr.mxu0 0.0
        %1877 = vmatpush1.msra.mxu0 0.0
        %1878 = vmatprep.subr.mxu0 0.0
        %1879 = vmatpush1.msra.mxu0 0.0
        %1880 = vmatprep.subr.mxu0 0.0
        %1881 = vmatpush1.msra.mxu0 0.0
        %1882 = vmatprep.subr.mxu0 0.0
        %1883 = vmatpush1.msra.mxu0 0.0
        %1884 = vmatprep.subr.mxu0 0.0
        %1885 = vmatpush1.msra.mxu0 0.0
        %1886 = vmatprep.subr.mxu0 0.0
        %1887 = vmatpush1.msra.mxu0 0.0
        %1888 = vmatprep.subr.mxu0 0.0
        %1889 = vmatpush1.msra.mxu0 0.0
        %1890 = vmatprep.subr.mxu0 0.0
        %1891 = vmatpush1.msra.mxu0 0.0
        %1892 = vmatprep.subr.mxu0 0.0
        %1893 = vmatpush1.msra.mxu0 0.0
        %1894 = vmatprep.subr.mxu0 0.0
        %1895 = vmatpush1.msra.mxu0 0.0
        %1896 = vmatprep.subr.mxu0 0.0
        %1897 = vmatpush1.msra.mxu0 0.0
        %1898 = vmatprep.subr.mxu0 0.0
        %1899 = vmatpush1.msra.mxu0 0.0
        %1900 = vmatprep.subr.mxu0 0.0
        %1901 = vmatpush1.msra.mxu0 0.0
        %1902 = vmatprep.subr.mxu0 0.0
        %1903 = vmatpush1.msra.mxu0 0.0
        %1904 = vmatprep.subr.mxu0 0.0
        %1905 = vmatpush1.msra.mxu0 0.0
        %1906 = vmatprep.subr.mxu0 0.0
        %1907 = vmatpush1.msra.mxu0 0.0
        %1908 = vmatprep.subr.mxu0 0.0
        %1909 = vmatpush1.msra.mxu0 0.0
        %1910 = vmatprep.subr.mxu0 0.0
        %1911 = vmatpush1.msra.mxu0 0.0
        %1912 = vmatprep.subr.mxu0 0.0
        %1913 = vmatpush1.msra.mxu0 0.0
        %1914 = vmatprep.subr.mxu0 0.0
        %1915 = vmatpush1.msra.mxu0 0.0
        %1916 = vmatprep.subr.mxu0 0.0
        %1917 = vmatpush1.msra.mxu0 0.0
        %1918 = vmatprep.mubr.f32.mxu0 0.0
        %1919 = vmatmul.mubr.f32.gmra.mrb[0].mxu0 %v1846
        %v1920 = vpop.f32.mrb[0].mxu0
        %v1921 = vadd.f32 0.0, %v1920
        %v1922 = vpop.f32.mrb[0].mxu0
        %v1923 = vadd.f32 0.0, %v1922
        %1924 = vdwg.mxu0
        %v1925 = vadd.f32 %v1824, %v1921
        %v1926 = vadd.f32 %v1825, %v1923
        %1927 = vrot.lane.b32.xlu0 %v490, 112
        %v1928 = vpop.permute.xlu0 %1927
        %1929 = vrot.lane.b32.xlu0 %v492, 112
        %v1930 = vpop.permute.xlu0 %1929
        %v1931 = vsel %vm1830, %v1928, %v1930
        %v1932 = vsel %vm1830, %v1930, %v1928
        %v1933 = vmul.f32 %v1931, %v1836
        %v1934 = vmul.f32 %v1932, %v1840
        %s1935 = scalar_lea.vmem %s5, 56
        %v1936 = vld [vmem:[%s1935] sm:$0xff]
        %v1938 = vsel %vm533, %v1936, 0
        %v1941 = vsel %vm537, %v1933, 0
        %v1944 = vsel %vm537, %v1934, 0
        %1946 = vmatprep.subr.mxu0 %v1944
        %1947 = vmatpush1.msra.mxu0 %v1941
        %1948 = vmatprep.subr.mxu0 0.0
        %1949 = vmatpush1.msra.mxu0 0.0
        %1950 = vmatprep.subr.mxu0 0.0
        %1951 = vmatpush1.msra.mxu0 0.0
        %1952 = vmatprep.subr.mxu0 0.0
        %1953 = vmatpush1.msra.mxu0 0.0
        %1954 = vmatprep.subr.mxu0 0.0
        %1955 = vmatpush1.msra.mxu0 0.0
        %1956 = vmatprep.subr.mxu0 0.0
        %1957 = vmatpush1.msra.mxu0 0.0
        %1958 = vmatprep.subr.mxu0 0.0
        %1959 = vmatpush1.msra.mxu0 0.0
        %1960 = vmatprep.subr.mxu0 0.0
        %1961 = vmatpush1.msra.mxu0 0.0
        %1962 = vmatprep.subr.mxu0 0.0
        %1963 = vmatpush1.msra.mxu0 0.0
        %1964 = vmatprep.subr.mxu0 0.0
        %1965 = vmatpush1.msra.mxu0 0.0
        %1966 = vmatprep.subr.mxu0 0.0
        %1967 = vmatpush1.msra.mxu0 0.0
        %1968 = vmatprep.subr.mxu0 0.0
        %1969 = vmatpush1.msra.mxu0 0.0
        %1970 = vmatprep.subr.mxu0 0.0
        %1971 = vmatpush1.msra.mxu0 0.0
        %1972 = vmatprep.subr.mxu0 0.0
        %1973 = vmatpush1.msra.mxu0 0.0
        %1974 = vmatprep.subr.mxu0 0.0
        %1975 = vmatpush1.msra.mxu0 0.0
        %1976 = vmatprep.subr.mxu0 0.0
        %1977 = vmatpush1.msra.mxu0 0.0
        %1978 = vmatprep.subr.mxu0 0.0
        %1979 = vmatpush1.msra.mxu0 0.0
        %1980 = vmatprep.subr.mxu0 0.0
        %1981 = vmatpush1.msra.mxu0 0.0
        %1982 = vmatprep.subr.mxu0 0.0
        %1983 = vmatpush1.msra.mxu0 0.0
        %1984 = vmatprep.subr.mxu0 0.0
        %1985 = vmatpush1.msra.mxu0 0.0
        %1986 = vmatprep.subr.mxu0 0.0
        %1987 = vmatpush1.msra.mxu0 0.0
        %1988 = vmatprep.subr.mxu0 0.0
        %1989 = vmatpush1.msra.mxu0 0.0
        %1990 = vmatprep.subr.mxu0 0.0
        %1991 = vmatpush1.msra.mxu0 0.0
        %1992 = vmatprep.subr.mxu0 0.0
        %1993 = vmatpush1.msra.mxu0 0.0
        %1994 = vmatprep.subr.mxu0 0.0
        %1995 = vmatpush1.msra.mxu0 0.0
        %1996 = vmatprep.subr.mxu0 0.0
        %1997 = vmatpush1.msra.mxu0 0.0
        %1998 = vmatprep.subr.mxu0 0.0
        %1999 = vmatpush1.msra.mxu0 0.0
        %2000 = vmatprep.subr.mxu0 0.0
        %2001 = vmatpush1.msra.mxu0 0.0
        %2002 = vmatprep.subr.mxu0 0.0
        %2003 = vmatpush1.msra.mxu0 0.0
        %2004 = vmatprep.subr.mxu0 0.0
        %2005 = vmatpush1.msra.mxu0 0.0
        %2006 = vmatprep.subr.mxu0 0.0
        %2007 = vmatpush1.msra.mxu0 0.0
        %2008 = vmatprep.subr.mxu0 0.0
        %2009 = vmatpush1.msra.mxu0 0.0
        %2010 = vmatprep.mubr.f32.mxu0 0.0
        %2011 = vmatmul.mubr.f32.gmra.mrb[0].mxu0 %v1938
        %v2012 = vpop.f32.mrb[0].mxu0
        %v2013 = vadd.f32 0.0, %v2012
        %v2014 = vpop.f32.mrb[0].mxu0
        %v2015 = vadd.f32 0.0, %v2014
        %2016 = vdwg.mxu0
        %v2017 = vadd.f32 %v1925, %v2013
        %v2018 = vadd.f32 %v1926, %v2015
        %2019 = vrot.lane.b32.xlu0 %v498, 111
        %v2020 = vpop.permute.xlu0 %2019
        %2021 = vrot.lane.b32.xlu0 %v502, 111
        %v2022 = vpop.permute.xlu0 %2021
        %vm2023 = vcmp.lt.s32.totalorder %v509, 111
        %v2024 = vsel %vm2023, %v2020, %v2022
        %v2025 = vsel %vm2023, %v2022, %v2020
        %v2026 = vlaneseq
        %v2027 = vshrl.u32 %v2026, 7
        %v2028 = vsub.s32 0, %v2027
        %v2029 = vrot.slane %v496, %v2028
        %v2030 = vlaneseq
        %v2031 = vshrl.u32 %v2030, 7
        %v2032 = vsub.s32 0, %v2031
        %v2033 = vrot.slane %v497, %v2032
        %v2034 = vmul.f32 %v2024, %v2029
        %v2035 = vmul.f32 %v2025, %v2033
        %s2036 = scalar_lea.vmem %s4, 64
        %v2037 = vld [vmem:[%s2036] sm:$0xff]
        %v2039 = vsel %vm533, %v2037, 0
        %v2042 = vsel %vm537, %v2034, 0
        %v2045 = vsel %vm537, %v2035, 0
        %2047 = vmatprep.subr.mxu0 %v2045
        %2048 = vmatpush1.msra.mxu0 %v2042
        %2049 = vmatprep.subr.mxu0 0.0
        %2050 = vmatpush1.msra.mxu0 0.0
        %2051 = vmatprep.subr.mxu0 0.0
        %2052 = vmatpush1.msra.mxu0 0.0
        %2053 = vmatprep.subr.mxu0 0.0
        %2054 = vmatpush1.msra.mxu0 0.0
        %2055 = vmatprep.subr.mxu0 0.0
        %2056 = vmatpush1.msra.mxu0 0.0
        %2057 = vmatprep.subr.mxu0 0.0
        %2058 = vmatpush1.msra.mxu0 0.0
        %2059 = vmatprep.subr.mxu0 0.0
        %2060 = vmatpush1.msra.mxu0 0.0
        %2061 = vmatprep.subr.mxu0 0.0
        %2062 = vmatpush1.msra.mxu0 0.0
        %2063 = vmatprep.subr.mxu0 0.0
        %2064 = vmatpush1.msra.mxu0 0.0
        %2065 = vmatprep.subr.mxu0 0.0
        %2066 = vmatpush1.msra.mxu0 0.0
        %2067 = vmatprep.subr.mxu0 0.0
        %2068 = vmatpush1.msra.mxu0 0.0
        %2069 = vmatprep.subr.mxu0 0.0
        %2070 = vmatpush1.msra.mxu0 0.0
        %2071 = vmatprep.subr.mxu0 0.0
        %2072 = vmatpush1.msra.mxu0 0.0
        %2073 = vmatprep.subr.mxu0 0.0
        %2074 = vmatpush1.msra.mxu0 0.0
        %2075 = vmatprep.subr.mxu0 0.0
        %2076 = vmatpush1.msra.mxu0 0.0
        %2077 = vmatprep.subr.mxu0 0.0
        %2078 = vmatpush1.msra.mxu0 0.0
        %2079 = vmatprep.subr.mxu0 0.0
        %2080 = vmatpush1.msra.mxu0 0.0
        %2081 = vmatprep.subr.mxu0 0.0
        %2082 = vmatpush1.msra.mxu0 0.0
        %2083 = vmatprep.subr.mxu0 0.0
        %2084 = vmatpush1.msra.mxu0 0.0
        %2085 = vmatprep.subr.mxu0 0.0
        %2086 = vmatpush1.msra.mxu0 0.0
        %2087 = vmatprep.subr.mxu0 0.0
        %2088 = vmatpush1.msra.mxu0 0.0
        %2089 = vmatprep.subr.mxu0 0.0
        %2090 = vmatpush1.msra.mxu0 0.0
        %2091 = vmatprep.subr.mxu0 0.0
        %2092 = vmatpush1.msra.mxu0 0.0
        %2093 = vmatprep.subr.mxu0 0.0
        %2094 = vmatpush1.msra.mxu0 0.0
        %2095 = vmatprep.subr.mxu0 0.0
        %2096 = vmatpush1.msra.mxu0 0.0
        %2097 = vmatprep.subr.mxu0 0.0
        %2098 = vmatpush1.msra.mxu0 0.0
        %2099 = vmatprep.subr.mxu0 0.0
        %2100 = vmatpush1.msra.mxu0 0.0
        %2101 = vmatprep.subr.mxu0 0.0
        %2102 = vmatpush1.msra.mxu0 0.0
        %2103 = vmatprep.subr.mxu0 0.0
        %2104 = vmatpush1.msra.mxu0 0.0
        %2105 = vmatprep.subr.mxu0 0.0
        %2106 = vmatpush1.msra.mxu0 0.0
        %2107 = vmatprep.subr.mxu0 0.0
        %2108 = vmatpush1.msra.mxu0 0.0
        %2109 = vmatprep.subr.mxu0 0.0
        %2110 = vmatpush1.msra.mxu0 0.0
        %2111 = vmatprep.mubr.f32.mxu0 0.0
        %2112 = vmatmul.mubr.f32.gmra.mrb[0].mxu0 %v2039
        %v2113 = vpop.f32.mrb[0].mxu0
        %v2114 = vadd.f32 0.0, %v2113
        %v2115 = vpop.f32.mrb[0].mxu0
        %v2116 = vadd.f32 0.0, %v2115
        %2117 = vdwg.mxu0
        %v2118 = vadd.f32 %v2017, %v2114
        %v2119 = vadd.f32 %v2018, %v2116
        %2120 = vrot.lane.b32.xlu0 %v490, 111
        %v2121 = vpop.permute.xlu0 %2120
        %2122 = vrot.lane.b32.xlu0 %v492, 111
        %v2123 = vpop.permute.xlu0 %2122
        %v2124 = vsel %vm2023, %v2121, %v2123
        %v2125 = vsel %vm2023, %v2123, %v2121
        %v2126 = vmul.f32 %v2124, %v2029
        %v2127 = vmul.f32 %v2125, %v2033
        %s2128 = scalar_lea.vmem %s5, 64
        %v2129 = vld [vmem:[%s2128] sm:$0xff]
        %v2131 = vsel %vm533, %v2129, 0
        %v2134 = vsel %vm537, %v2126, 0
        %v2137 = vsel %vm537, %v2127, 0
        %2139 = vmatprep.subr.mxu0 %v2137
        %2140 = vmatpush1.msra.mxu0 %v2134
        %2141 = vmatprep.subr.mxu0 0.0
        %2142 = vmatpush1.msra.mxu0 0.0
        %2143 = vmatprep.subr.mxu0 0.0
        %2144 = vmatpush1.msra.mxu0 0.0
        %2145 = vmatprep.subr.mxu0 0.0
        %2146 = vmatpush1.msra.mxu0 0.0
        %2147 = vmatprep.subr.mxu0 0.0
        %2148 = vmatpush1.msra.mxu0 0.0
        %2149 = vmatprep.subr.mxu0 0.0
        %2150 = vmatpush1.msra.mxu0 0.0
        %2151 = vmatprep.subr.mxu0 0.0
        %2152 = vmatpush1.msra.mxu0 0.0
        %2153 = vmatprep.subr.mxu0 0.0
        %2154 = vmatpush1.msra.mxu0 0.0
        %2155 = vmatprep.subr.mxu0 0.0
        %2156 = vmatpush1.msra.mxu0 0.0
        %2157 = vmatprep.subr.mxu0 0.0
        %2158 = vmatpush1.msra.mxu0 0.0
        %2159 = vmatprep.subr.mxu0 0.0
        %2160 = vmatpush1.msra.mxu0 0.0
        %2161 = vmatprep.subr.mxu0 0.0
        %2162 = vmatpush1.msra.mxu0 0.0
        %2163 = vmatprep.subr.mxu0 0.0
        %2164 = vmatpush1.msra.mxu0 0.0
        %2165 = vmatprep.subr.mxu0 0.0
        %2166 = vmatpush1.msra.mxu0 0.0
        %2167 = vmatprep.subr.mxu0 0.0
        %2168 = vmatpush1.msra.mxu0 0.0
        %2169 = vmatprep.subr.mxu0 0.0
        %2170 = vmatpush1.msra.mxu0 0.0
        %2171 = vmatprep.subr.mxu0 0.0
        %2172 = vmatpush1.msra.mxu0 0.0
        %2173 = vmatprep.subr.mxu0 0.0
        %2174 = vmatpush1.msra.mxu0 0.0
        %2175 = vmatprep.subr.mxu0 0.0
        %2176 = vmatpush1.msra.mxu0 0.0
        %2177 = vmatprep.subr.mxu0 0.0
        %2178 = vmatpush1.msra.mxu0 0.0
        %2179 = vmatprep.subr.mxu0 0.0
        %2180 = vmatpush1.msra.mxu0 0.0
        %2181 = vmatprep.subr.mxu0 0.0
        %2182 = vmatpush1.msra.mxu0 0.0
        %2183 = vmatprep.subr.mxu0 0.0
        %2184 = vmatpush1.msra.mxu0 0.0
        %2185 = vmatprep.subr.mxu0 0.0
        %2186 = vmatpush1.msra.mxu0 0.0
        %2187 = vmatprep.subr.mxu0 0.0
        %2188 = vmatpush1.msra.mxu0 0.0
        %2189 = vmatprep.subr.mxu0 0.0
        %2190 = vmatpush1.msra.mxu0 0.0
        %2191 = vmatprep.subr.mxu0 0.0
        %2192 = vmatpush1.msra.mxu0 0.0
        %2193 = vmatprep.subr.mxu0 0.0
        %2194 = vmatpush1.msra.mxu0 0.0
        %2195 = vmatprep.subr.mxu0 0.0
        %2196 = vmatpush1.msra.mxu0 0.0
        %2197 = vmatprep.subr.mxu0 0.0
        %2198 = vmatpush1.msra.mxu0 0.0
        %2199 = vmatprep.subr.mxu0 0.0
        %2200 = vmatpush1.msra.mxu0 0.0
        %2201 = vmatprep.subr.mxu0 0.0
        %2202 = vmatpush1.msra.mxu0 0.0
        %2203 = vmatprep.mubr.f32.mxu0 0.0
        %2204 = vmatmul.mubr.f32.gmra.mrb[0].mxu0 %v2131
        %v2205 = vpop.f32.mrb[0].mxu0
        %v2206 = vadd.f32 0.0, %v2205
        %v2207 = vpop.f32.mrb[0].mxu0
        %v2208 = vadd.f32 0.0, %v2207
        %2209 = vdwg.mxu0
        %v2210 = vadd.f32 %v2118, %v2206
        %v2211 = vadd.f32 %v2119, %v2208
        %2213 = vset.pattern.permute.xlu0 0
        %2214 = vperm.xlu0 %2213, %v499
        %v2215 = vpop.permute.xlu0 %2214
        %v2217 = vmul.f32 %v2210, %v2215
        %v2218 = vmul.f32 %v2211, %v2215
        %2220 = vset.pattern.permute.xlu0 0
        %2221 = vperm.xlu0 %2220, %v500
        %v2222 = vpop.permute.xlu0 %2221
        %v2224 = vadd.f32 %v2217, %v2222
        %v2225 = vadd.f32 %v2218, %v2222
        %v2226 = vmax.f32 %v2224, 0.0
        %v2227 = vmax.f32 %v2225, 0.0
        %v2228 = vld [vmem:[%s9] sm:$0xff]
        %v2229 = vld [vmem:[%s10] sm:$0xff]
        %2230 = vrot.lane.b32.xlu0 %v2226, 17
        %v2231 = vpop.permute.xlu0 %2230
        %2232 = vrot.lane.b32.xlu0 %v2227, 17
        %v2233 = vpop.permute.xlu0 %2232
        %v2234 = vsel %vm510, %v2231, %v2233
        %v2235 = vsel %vm510, %v2233, %v2231
        %v2236 = vmul.f32 %v2235, %v516
        %v2237 = vmul.f32 %v2234, %v520
        %v2238 = vld [vmem:[%s8] sm:$0xff]
        %2239 = vrot.lane.b32.xlu0 %v2226, 16
        %v2240 = vpop.permute.xlu0 %2239
        %2241 = vrot.lane.b32.xlu0 %v2227, 16
        %v2242 = vpop.permute.xlu0 %2241
        %v2243 = vsel %vm699, %v2240, %v2242
        %v2244 = vsel %vm699, %v2242, %v2240
        %v2245 = vmul.f32 %v2244, %v705
        %v2246 = vmul.f32 %v2243, %v709
        %s2247 = scalar_lea.vmem %s8, 8
        %v2248 = vld [vmem:[%s2247] sm:$0xff]
        %vm2249 = vcmask 64512
        %v2251 = vsel %vm2249, %v2248, 0
        %2253 = vmatprep.subr.mxu0 %v2246
        %2254 = vmatpush1.msra.mxu0 %v2245
        %2255 = vmatprep.subr.mxu0 0.0
        %2256 = vmatpush1.msra.mxu0 0.0
        %2257 = vmatprep.subr.mxu0 0.0
        %2258 = vmatpush1.msra.mxu0 0.0
        %2259 = vmatprep.subr.mxu0 0.0
        %2260 = vmatpush1.msra.mxu0 0.0
        %2261 = vmatprep.subr.mxu0 0.0
        %2262 = vmatpush1.msra.mxu0 0.0
        %2263 = vmatprep.subr.mxu0 0.0
        %2264 = vmatpush1.msra.mxu0 0.0
        %2265 = vmatprep.subr.mxu0 0.0
        %2266 = vmatpush1.msra.mxu0 0.0
        %2267 = vmatprep.subr.mxu0 0.0
        %2268 = vmatpush1.msra.mxu0 0.0
        %2269 = vmatprep.subr.mxu0 0.0
        %2270 = vmatpush1.msra.mxu0 0.0
        %2271 = vmatprep.subr.mxu0 0.0
        %2272 = vmatpush1.msra.mxu0 0.0
        %2273 = vmatprep.subr.mxu0 0.0
        %2274 = vmatpush1.msra.mxu0 0.0
        %2275 = vmatprep.subr.mxu0 0.0
        %2276 = vmatpush1.msra.mxu0 0.0
        %2277 = vmatprep.subr.mxu0 0.0
        %2278 = vmatpush1.msra.mxu0 0.0
        %2279 = vmatprep.subr.mxu0 0.0
        %2280 = vmatpush1.msra.mxu0 0.0
        %2281 = vmatprep.subr.mxu0 0.0
        %2282 = vmatpush1.msra.mxu0 0.0
        %2283 = vmatprep.subr.mxu0 0.0
        %2284 = vmatpush1.msra.mxu0 0.0
        %2285 = vmatprep.subr.mxu0 0.0
        %2286 = vmatpush1.msra.mxu0 0.0
        %2287 = vmatprep.subr.mxu0 0.0
        %2288 = vmatpush1.msra.mxu0 0.0
        %2289 = vmatprep.subr.mxu0 0.0
        %2290 = vmatpush1.msra.mxu0 0.0
        %2291 = vmatprep.subr.mxu0 0.0
        %2292 = vmatpush1.msra.mxu0 0.0
        %2293 = vmatprep.subr.mxu0 0.0
        %2294 = vmatpush1.msra.mxu0 0.0
        %2295 = vmatprep.subr.mxu0 0.0
        %2296 = vmatpush1.msra.mxu0 0.0
        %2297 = vmatprep.subr.mxu0 0.0
        %2298 = vmatpush1.msra.mxu0 0.0
        %2299 = vmatprep.subr.mxu0 0.0
        %2300 = vmatpush1.msra.mxu0 0.0
        %2301 = vmatprep.subr.mxu0 0.0
        %2302 = vmatpush1.msra.mxu0 0.0
        %2303 = vmatprep.subr.mxu0 0.0
        %2304 = vmatpush1.msra.mxu0 0.0
        %2305 = vmatprep.subr.mxu0 0.0
        %2306 = vmatpush1.msra.mxu0 0.0
        %2307 = vmatprep.subr.mxu0 0.0
        %2308 = vmatpush1.msra.mxu0 0.0
        %2309 = vmatprep.subr.mxu0 0.0
        %2310 = vmatpush1.msra.mxu0 0.0
        %2311 = vmatprep.subr.mxu0 0.0
        %2312 = vmatpush1.msra.mxu0 0.0
        %2313 = vmatprep.subr.mxu0 0.0
        %2314 = vmatpush1.msra.mxu0 0.0
        %2315 = vmatprep.subr.mxu0 0.0
        %2316 = vmatpush1.msra.mxu0 0.0
        %2317 = vmatprep.mubr.f32.mxu0 0.0
        %2318 = vmatmul.mubr.f32.gmra.mrb[0].mxu0 %v2251
        %v2319 = vpop.f32.mrb[0].mxu0
        %v2320 = vadd.f32 0.0, %v2319
        %v2321 = vpop.f32.mrb[0].mxu0
        %v2322 = vadd.f32 0.0, %v2321
        %2323 = vdwg.mxu0
        %v2325 = vsel %vm2249, %v2238, 0
        %2327 = vmatprep.subr.mxu0 %v2237
        %2328 = vmatpush1.msra.mxu0 %v2236
        %2329 = vmatprep.subr.mxu0 0.0
        %2330 = vmatpush1.msra.mxu0 0.0
        %2331 = vmatprep.subr.mxu0 0.0
        %2332 = vmatpush1.msra.mxu0 0.0
        %2333 = vmatprep.subr.mxu0 0.0
        %2334 = vmatpush1.msra.mxu0 0.0
        %2335 = vmatprep.subr.mxu0 0.0
        %2336 = vmatpush1.msra.mxu0 0.0
        %2337 = vmatprep.subr.mxu0 0.0
        %2338 = vmatpush1.msra.mxu0 0.0
        %2339 = vmatprep.subr.mxu0 0.0
        %2340 = vmatpush1.msra.mxu0 0.0
        %2341 = vmatprep.subr.mxu0 0.0
        %2342 = vmatpush1.msra.mxu0 0.0
        %2343 = vmatprep.subr.mxu0 0.0
        %2344 = vmatpush1.msra.mxu0 0.0
        %2345 = vmatprep.subr.mxu0 0.0
        %2346 = vmatpush1.msra.mxu0 0.0
        %2347 = vmatprep.subr.mxu0 0.0
        %2348 = vmatpush1.msra.mxu0 0.0
        %2349 = vmatprep.subr.mxu0 0.0
        %2350 = vmatpush1.msra.mxu0 0.0
        %2351 = vmatprep.subr.mxu0 0.0
        %2352 = vmatpush1.msra.mxu0 0.0
        %2353 = vmatprep.subr.mxu0 0.0
        %2354 = vmatpush1.msra.mxu0 0.0
        %2355 = vmatprep.subr.mxu0 0.0
        %2356 = vmatpush1.msra.mxu0 0.0
        %2357 = vmatprep.subr.mxu0 0.0
        %2358 = vmatpush1.msra.mxu0 0.0
        %2359 = vmatprep.subr.mxu0 0.0
        %2360 = vmatpush1.msra.mxu0 0.0
        %2361 = vmatprep.subr.mxu0 0.0
        %2362 = vmatpush1.msra.mxu0 0.0
        %2363 = vmatprep.subr.mxu0 0.0
        %2364 = vmatpush1.msra.mxu0 0.0
        %2365 = vmatprep.subr.mxu0 0.0
        %2366 = vmatpush1.msra.mxu0 0.0
        %2367 = vmatprep.subr.mxu0 0.0
        %2368 = vmatpush1.msra.mxu0 0.0
        %2369 = vmatprep.subr.mxu0 0.0
        %2370 = vmatpush1.msra.mxu0 0.0
        %2371 = vmatprep.subr.mxu0 0.0
        %2372 = vmatpush1.msra.mxu0 0.0
        %2373 = vmatprep.subr.mxu0 0.0
        %2374 = vmatpush1.msra.mxu0 0.0
        %2375 = vmatprep.subr.mxu0 0.0
        %2376 = vmatpush1.msra.mxu0 0.0
        %2377 = vmatprep.subr.mxu0 0.0
        %2378 = vmatpush1.msra.mxu0 0.0
        %2379 = vmatprep.subr.mxu0 0.0
        %2380 = vmatpush1.msra.mxu0 0.0
        %2381 = vmatprep.subr.mxu0 0.0
        %2382 = vmatpush1.msra.mxu0 0.0
        %2383 = vmatprep.subr.mxu0 0.0
        %2384 = vmatpush1.msra.mxu0 0.0
        %2385 = vmatprep.subr.mxu0 0.0
        %2386 = vmatpush1.msra.mxu0 0.0
        %2387 = vmatprep.subr.mxu0 0.0
        %2388 = vmatpush1.msra.mxu0 0.0
        %2389 = vmatprep.subr.mxu0 0.0
        %2390 = vmatpush1.msra.mxu0 0.0
        %2391 = vmatprep.mubr.f32.mxu0 0.0
        %2392 = vmatmul.mubr.f32.gmra.mrb[0].mxu0 %v2325
        %v2393 = vpop.f32.mrb[0].mxu0
        %v2394 = vadd.f32 %v2320, %v2393
        %v2395 = vpop.f32.mrb[0].mxu0
        %v2396 = vadd.f32 %v2322, %v2395
        %2397 = vdwg.mxu0
        %2398 = vrot.lane.b32.xlu0 %v2226, 15
        %v2399 = vpop.permute.xlu0 %2398
        %2400 = vrot.lane.b32.xlu0 %v2227, 15
        %v2401 = vpop.permute.xlu0 %2400
        %v2402 = vsel %vm892, %v2399, %v2401
        %v2403 = vsel %vm892, %v2401, %v2399
        %v2404 = vmul.f32 %v2403, %v898
        %v2405 = vmul.f32 %v2402, %v902
        %s2406 = scalar_lea.vmem %s8, 16
        %v2407 = vld [vmem:[%s2406] sm:$0xff]
        %v2409 = vsel %vm2249, %v2407, 0
        %2411 = vmatprep.subr.mxu0 %v2405
        %2412 = vmatpush1.msra.mxu0 %v2404
        %2413 = vmatprep.subr.mxu0 0.0
        %2414 = vmatpush1.msra.mxu0 0.0
        %2415 = vmatprep.subr.mxu0 0.0
        %2416 = vmatpush1.msra.mxu0 0.0
        %2417 = vmatprep.subr.mxu0 0.0
        %2418 = vmatpush1.msra.mxu0 0.0
        %2419 = vmatprep.subr.mxu0 0.0
        %2420 = vmatpush1.msra.mxu0 0.0
        %2421 = vmatprep.subr.mxu0 0.0
        %2422 = vmatpush1.msra.mxu0 0.0
        %2423 = vmatprep.subr.mxu0 0.0
        %2424 = vmatpush1.msra.mxu0 0.0
        %2425 = vmatprep.subr.mxu0 0.0
        %2426 = vmatpush1.msra.mxu0 0.0
        %2427 = vmatprep.subr.mxu0 0.0
        %2428 = vmatpush1.msra.mxu0 0.0
        %2429 = vmatprep.subr.mxu0 0.0
        %2430 = vmatpush1.msra.mxu0 0.0
        %2431 = vmatprep.subr.mxu0 0.0
        %2432 = vmatpush1.msra.mxu0 0.0
        %2433 = vmatprep.subr.mxu0 0.0
        %2434 = vmatpush1.msra.mxu0 0.0
        %2435 = vmatprep.subr.mxu0 0.0
        %2436 = vmatpush1.msra.mxu0 0.0
        %2437 = vmatprep.subr.mxu0 0.0
        %2438 = vmatpush1.msra.mxu0 0.0
        %2439 = vmatprep.subr.mxu0 0.0
        %2440 = vmatpush1.msra.mxu0 0.0
        %2441 = vmatprep.subr.mxu0 0.0
        %2442 = vmatpush1.msra.mxu0 0.0
        %2443 = vmatprep.subr.mxu0 0.0
        %2444 = vmatpush1.msra.mxu0 0.0
        %2445 = vmatprep.subr.mxu0 0.0
        %2446 = vmatpush1.msra.mxu0 0.0
        %2447 = vmatprep.subr.mxu0 0.0
        %2448 = vmatpush1.msra.mxu0 0.0
        %2449 = vmatprep.subr.mxu0 0.0
        %2450 = vmatpush1.msra.mxu0 0.0
        %2451 = vmatprep.subr.mxu0 0.0
        %2452 = vmatpush1.msra.mxu0 0.0
        %2453 = vmatprep.subr.mxu0 0.0
        %2454 = vmatpush1.msra.mxu0 0.0
        %2455 = vmatprep.subr.mxu0 0.0
        %2456 = vmatpush1.msra.mxu0 0.0
        %2457 = vmatprep.subr.mxu0 0.0
        %2458 = vmatpush1.msra.mxu0 0.0
        %2459 = vmatprep.subr.mxu0 0.0
        %2460 = vmatpush1.msra.mxu0 0.0
        %2461 = vmatprep.subr.mxu0 0.0
        %2462 = vmatpush1.msra.mxu0 0.0
        %2463 = vmatprep.subr.mxu0 0.0
        %2464 = vmatpush1.msra.mxu0 0.0
        %2465 = vmatprep.subr.mxu0 0.0
        %2466 = vmatpush1.msra.mxu0 0.0
        %2467 = vmatprep.subr.mxu0 0.0
        %2468 = vmatpush1.msra.mxu0 0.0
        %2469 = vmatprep.subr.mxu0 0.0
        %2470 = vmatpush1.msra.mxu0 0.0
        %2471 = vmatprep.subr.mxu0 0.0
        %2472 = vmatpush1.msra.mxu0 0.0
        %2473 = vmatprep.subr.mxu0 0.0
        %2474 = vmatpush1.msra.mxu0 0.0
        %2475 = vmatprep.mubr.f32.mxu0 0.0
        %2476 = vmatmul.mubr.f32.gmra.mrb[0].mxu0 %v2409
        %v2477 = vpop.f32.mrb[0].mxu0
        %v2478 = vadd.f32 0.0, %v2477
        %v2479 = vpop.f32.mrb[0].mxu0
        %v2480 = vadd.f32 0.0, %v2479
        %2481 = vdwg.mxu0
        %v2482 = vadd.f32 %v2394, %v2478
        %v2483 = vadd.f32 %v2396, %v2480
        %2484 = vrot.lane.b32.xlu0 %v2226, 1
        %v2485 = vpop.permute.xlu0 %2484
        %2486 = vrot.lane.b32.xlu0 %v2227, 1
        %v2487 = vpop.permute.xlu0 %2486
        %v2488 = vsel %vm1085, %v2485, %v2487
        %v2489 = vsel %vm1085, %v2487, %v2485
        %v2490 = vmul.f32 %v2489, %v1091
        %v2491 = vmul.f32 %v2488, %v1095
        %s2492 = scalar_lea.vmem %s8, 24
        %v2493 = vld [vmem:[%s2492] sm:$0xff]
        %v2495 = vsel %vm2249, %v2493, 0
        %2497 = vmatprep.subr.mxu0 %v2491
        %2498 = vmatpush1.msra.mxu0 %v2490
        %2499 = vmatprep.subr.mxu0 0.0
        %2500 = vmatpush1.msra.mxu0 0.0
        %2501 = vmatprep.subr.mxu0 0.0
        %2502 = vmatpush1.msra.mxu0 0.0
        %2503 = vmatprep.subr.mxu0 0.0
        %2504 = vmatpush1.msra.mxu0 0.0
        %2505 = vmatprep.subr.mxu0 0.0
        %2506 = vmatpush1.msra.mxu0 0.0
        %2507 = vmatprep.subr.mxu0 0.0
        %2508 = vmatpush1.msra.mxu0 0.0
        %2509 = vmatprep.subr.mxu0 0.0
        %2510 = vmatpush1.msra.mxu0 0.0
        %2511 = vmatprep.subr.mxu0 0.0
        %2512 = vmatpush1.msra.mxu0 0.0
        %2513 = vmatprep.subr.mxu0 0.0
        %2514 = vmatpush1.msra.mxu0 0.0
        %2515 = vmatprep.subr.mxu0 0.0
        %2516 = vmatpush1.msra.mxu0 0.0
        %2517 = vmatprep.subr.mxu0 0.0
        %2518 = vmatpush1.msra.mxu0 0.0
        %2519 = vmatprep.subr.mxu0 0.0
        %2520 = vmatpush1.msra.mxu0 0.0
        %2521 = vmatprep.subr.mxu0 0.0
        %2522 = vmatpush1.msra.mxu0 0.0
        %2523 = vmatprep.subr.mxu0 0.0
        %2524 = vmatpush1.msra.mxu0 0.0
        %2525 = vmatprep.subr.mxu0 0.0
        %2526 = vmatpush1.msra.mxu0 0.0
        %2527 = vmatprep.subr.mxu0 0.0
        %2528 = vmatpush1.msra.mxu0 0.0
        %2529 = vmatprep.subr.mxu0 0.0
        %2530 = vmatpush1.msra.mxu0 0.0
        %2531 = vmatprep.subr.mxu0 0.0
        %2532 = vmatpush1.msra.mxu0 0.0
        %2533 = vmatprep.subr.mxu0 0.0
        %2534 = vmatpush1.msra.mxu0 0.0
        %2535 = vmatprep.subr.mxu0 0.0
        %2536 = vmatpush1.msra.mxu0 0.0
        %2537 = vmatprep.subr.mxu0 0.0
        %2538 = vmatpush1.msra.mxu0 0.0
        %2539 = vmatprep.subr.mxu0 0.0
        %2540 = vmatpush1.msra.mxu0 0.0
        %2541 = vmatprep.subr.mxu0 0.0
        %2542 = vmatpush1.msra.mxu0 0.0
        %2543 = vmatprep.subr.mxu0 0.0
        %2544 = vmatpush1.msra.mxu0 0.0
        %2545 = vmatprep.subr.mxu0 0.0
        %2546 = vmatpush1.msra.mxu0 0.0
        %2547 = vmatprep.subr.mxu0 0.0
        %2548 = vmatpush1.msra.mxu0 0.0
        %2549 = vmatprep.subr.mxu0 0.0
        %2550 = vmatpush1.msra.mxu0 0.0
        %2551 = vmatprep.subr.mxu0 0.0
        %2552 = vmatpush1.msra.mxu0 0.0
        %2553 = vmatprep.subr.mxu0 0.0
        %2554 = vmatpush1.msra.mxu0 0.0
        %2555 = vmatprep.subr.mxu0 0.0
        %2556 = vmatpush1.msra.mxu0 0.0
        %2557 = vmatprep.subr.mxu0 0.0
        %2558 = vmatpush1.msra.mxu0 0.0
        %2559 = vmatprep.subr.mxu0 0.0
        %2560 = vmatpush1.msra.mxu0 0.0
        %2561 = vmatprep.mubr.f32.mxu0 0.0
        %2562 = vmatmul.mubr.f32.gmra.mrb[0].mxu0 %v2495
        %v2563 = vpop.f32.mrb[0].mxu0
        %v2564 = vadd.f32 0.0, %v2563
        %v2565 = vpop.f32.mrb[0].mxu0
        %v2566 = vadd.f32 0.0, %v2565
        %2567 = vdwg.mxu0
        %v2568 = vadd.f32 %v2482, %v2564
        %v2569 = vadd.f32 %v2483, %v2566
        %s2570 = scalar_lea.vmem %s8, 32
        %v2571 = vld [vmem:[%s2570] sm:$0xff]
        %v2573 = vsel %vm2249, %v2571, 0
        %2575 = vmatprep.subr.mxu0 %v2227
        %2576 = vmatpush1.msra.mxu0 %v2226
        %2577 = vmatprep.subr.mxu0 0.0
        %2578 = vmatpush1.msra.mxu0 0.0
        %2579 = vmatprep.subr.mxu0 0.0
        %2580 = vmatpush1.msra.mxu0 0.0
        %2581 = vmatprep.subr.mxu0 0.0
        %2582 = vmatpush1.msra.mxu0 0.0
        %2583 = vmatprep.subr.mxu0 0.0
        %2584 = vmatpush1.msra.mxu0 0.0
        %2585 = vmatprep.subr.mxu0 0.0
        %2586 = vmatpush1.msra.mxu0 0.0
        %2587 = vmatprep.subr.mxu0 0.0
        %2588 = vmatpush1.msra.mxu0 0.0
        %2589 = vmatprep.subr.mxu0 0.0
        %2590 = vmatpush1.msra.mxu0 0.0
        %2591 = vmatprep.subr.mxu0 0.0
        %2592 = vmatpush1.msra.mxu0 0.0
        %2593 = vmatprep.subr.mxu0 0.0
        %2594 = vmatpush1.msra.mxu0 0.0
        %2595 = vmatprep.subr.mxu0 0.0
        %2596 = vmatpush1.msra.mxu0 0.0
        %2597 = vmatprep.subr.mxu0 0.0
        %2598 = vmatpush1.msra.mxu0 0.0
        %2599 = vmatprep.subr.mxu0 0.0
        %2600 = vmatpush1.msra.mxu0 0.0
        %2601 = vmatprep.subr.mxu0 0.0
        %2602 = vmatpush1.msra.mxu0 0.0
        %2603 = vmatprep.subr.mxu0 0.0
        %2604 = vmatpush1.msra.mxu0 0.0
        %2605 = vmatprep.subr.mxu0 0.0
        %2606 = vmatpush1.msra.mxu0 0.0
        %2607 = vmatprep.subr.mxu0 0.0
        %2608 = vmatpush1.msra.mxu0 0.0
        %2609 = vmatprep.subr.mxu0 0.0
        %2610 = vmatpush1.msra.mxu0 0.0
        %2611 = vmatprep.subr.mxu0 0.0
        %2612 = vmatpush1.msra.mxu0 0.0
        %2613 = vmatprep.subr.mxu0 0.0
        %2614 = vmatpush1.msra.mxu0 0.0
        %2615 = vmatprep.subr.mxu0 0.0
        %2616 = vmatpush1.msra.mxu0 0.0
        %2617 = vmatprep.subr.mxu0 0.0
        %2618 = vmatpush1.msra.mxu0 0.0
        %2619 = vmatprep.subr.mxu0 0.0
        %2620 = vmatpush1.msra.mxu0 0.0
        %2621 = vmatprep.subr.mxu0 0.0
        %2622 = vmatpush1.msra.mxu0 0.0
        %2623 = vmatprep.subr.mxu0 0.0
        %2624 = vmatpush1.msra.mxu0 0.0
        %2625 = vmatprep.subr.mxu0 0.0
        %2626 = vmatpush1.msra.mxu0 0.0
        %2627 = vmatprep.subr.mxu0 0.0
        %2628 = vmatpush1.msra.mxu0 0.0
        %2629 = vmatprep.subr.mxu0 0.0
        %2630 = vmatpush1.msra.mxu0 0.0
        %2631 = vmatprep.subr.mxu0 0.0
        %2632 = vmatpush1.msra.mxu0 0.0
        %2633 = vmatprep.subr.mxu0 0.0
        %2634 = vmatpush1.msra.mxu0 0.0
        %2635 = vmatprep.subr.mxu0 0.0
        %2636 = vmatpush1.msra.mxu0 0.0
        %2637 = vmatprep.subr.mxu0 0.0
        %2638 = vmatpush1.msra.mxu0 0.0
        %2639 = vmatprep.mubr.f32.mxu0 0.0
        %2640 = vmatmul.mubr.f32.gmra.mrb[0].mxu0 %v2573
        %v2641 = vpop.f32.mrb[0].mxu0
        %v2642 = vadd.f32 0.0, %v2641
        %v2643 = vpop.f32.mrb[0].mxu0
        %v2644 = vadd.f32 0.0, %v2643
        %2645 = vdwg.mxu0
        %v2646 = vadd.f32 %v2568, %v2642
        %v2647 = vadd.f32 %v2569, %v2644
        %2648 = vrot.lane.b32.xlu0 %v2226, 127
        %v2649 = vpop.permute.xlu0 %2648
        %2650 = vrot.lane.b32.xlu0 %v2227, 127
        %v2651 = vpop.permute.xlu0 %2650
        %v2652 = vsel %vm1444, %v2649, %v2651
        %v2653 = vsel %vm1444, %v2651, %v2649
        %v2654 = vmul.f32 %v2652, %v1450
        %v2655 = vmul.f32 %v2653, %v1454
        %s2656 = scalar_lea.vmem %s8, 40
        %v2657 = vld [vmem:[%s2656] sm:$0xff]
        %v2659 = vsel %vm2249, %v2657, 0
        %2661 = vmatprep.subr.mxu0 %v2655
        %2662 = vmatpush1.msra.mxu0 %v2654
        %2663 = vmatprep.subr.mxu0 0.0
        %2664 = vmatpush1.msra.mxu0 0.0
        %2665 = vmatprep.subr.mxu0 0.0
        %2666 = vmatpush1.msra.mxu0 0.0
        %2667 = vmatprep.subr.mxu0 0.0
        %2668 = vmatpush1.msra.mxu0 0.0
        %2669 = vmatprep.subr.mxu0 0.0
        %2670 = vmatpush1.msra.mxu0 0.0
        %2671 = vmatprep.subr.mxu0 0.0
        %2672 = vmatpush1.msra.mxu0 0.0
        %2673 = vmatprep.subr.mxu0 0.0
        %2674 = vmatpush1.msra.mxu0 0.0
        %2675 = vmatprep.subr.mxu0 0.0
        %2676 = vmatpush1.msra.mxu0 0.0
        %2677 = vmatprep.subr.mxu0 0.0
        %2678 = vmatpush1.msra.mxu0 0.0
        %2679 = vmatprep.subr.mxu0 0.0
        %2680 = vmatpush1.msra.mxu0 0.0
        %2681 = vmatprep.subr.mxu0 0.0
        %2682 = vmatpush1.msra.mxu0 0.0
        %2683 = vmatprep.subr.mxu0 0.0
        %2684 = vmatpush1.msra.mxu0 0.0
        %2685 = vmatprep.subr.mxu0 0.0
        %2686 = vmatpush1.msra.mxu0 0.0
        %2687 = vmatprep.subr.mxu0 0.0
        %2688 = vmatpush1.msra.mxu0 0.0
        %2689 = vmatprep.subr.mxu0 0.0
        %2690 = vmatpush1.msra.mxu0 0.0
        %2691 = vmatprep.subr.mxu0 0.0
        %2692 = vmatpush1.msra.mxu0 0.0
        %2693 = vmatprep.subr.mxu0 0.0
        %2694 = vmatpush1.msra.mxu0 0.0
        %2695 = vmatprep.subr.mxu0 0.0
        %2696 = vmatpush1.msra.mxu0 0.0
        %2697 = vmatprep.subr.mxu0 0.0
        %2698 = vmatpush1.msra.mxu0 0.0
        %2699 = vmatprep.subr.mxu0 0.0
        %2700 = vmatpush1.msra.mxu0 0.0
        %2701 = vmatprep.subr.mxu0 0.0
        %2702 = vmatpush1.msra.mxu0 0.0
        %2703 = vmatprep.subr.mxu0 0.0
        %2704 = vmatpush1.msra.mxu0 0.0
        %2705 = vmatprep.subr.mxu0 0.0
        %2706 = vmatpush1.msra.mxu0 0.0
        %2707 = vmatprep.subr.mxu0 0.0
        %2708 = vmatpush1.msra.mxu0 0.0
        %2709 = vmatprep.subr.mxu0 0.0
        %2710 = vmatpush1.msra.mxu0 0.0
        %2711 = vmatprep.subr.mxu0 0.0
        %2712 = vmatpush1.msra.mxu0 0.0
        %2713 = vmatprep.subr.mxu0 0.0
        %2714 = vmatpush1.msra.mxu0 0.0
        %2715 = vmatprep.subr.mxu0 0.0
        %2716 = vmatpush1.msra.mxu0 0.0
        %2717 = vmatprep.subr.mxu0 0.0
        %2718 = vmatpush1.msra.mxu0 0.0
        %2719 = vmatprep.subr.mxu0 0.0
        %2720 = vmatpush1.msra.mxu0 0.0
        %2721 = vmatprep.subr.mxu0 0.0
        %2722 = vmatpush1.msra.mxu0 0.0
        %2723 = vmatprep.subr.mxu0 0.0
        %2724 = vmatpush1.msra.mxu0 0.0
        %2725 = vmatprep.mubr.f32.mxu0 0.0
        %2726 = vmatmul.mubr.f32.gmra.mrb[0].mxu0 %v2659
        %v2727 = vpop.f32.mrb[0].mxu0
        %v2728 = vadd.f32 0.0, %v2727
        %v2729 = vpop.f32.mrb[0].mxu0
        %v2730 = vadd.f32 0.0, %v2729
        %2731 = vdwg.mxu0
        %v2732 = vadd.f32 %v2646, %v2728
        %v2733 = vadd.f32 %v2647, %v2730
        %2734 = vrot.lane.b32.xlu0 %v2226, 113
        %v2735 = vpop.permute.xlu0 %2734
        %2736 = vrot.lane.b32.xlu0 %v2227, 113
        %v2737 = vpop.permute.xlu0 %2736
        %v2738 = vsel %vm1637, %v2735, %v2737
        %v2739 = vsel %vm1637, %v2737, %v2735
        %v2740 = vmul.f32 %v2738, %v1643
        %v2741 = vmul.f32 %v2739, %v1647
        %s2742 = scalar_lea.vmem %s8, 48
        %v2743 = vld [vmem:[%s2742] sm:$0xff]
        %v2745 = vsel %vm2249, %v2743, 0
        %2747 = vmatprep.subr.mxu0 %v2741
        %2748 = vmatpush1.msra.mxu0 %v2740
        %2749 = vmatprep.subr.mxu0 0.0
        %2750 = vmatpush1.msra.mxu0 0.0
        %2751 = vmatprep.subr.mxu0 0.0
        %2752 = vmatpush1.msra.mxu0 0.0
        %2753 = vmatprep.subr.mxu0 0.0
        %2754 = vmatpush1.msra.mxu0 0.0
        %2755 = vmatprep.subr.mxu0 0.0
        %2756 = vmatpush1.msra.mxu0 0.0
        %2757 = vmatprep.subr.mxu0 0.0
        %2758 = vmatpush1.msra.mxu0 0.0
        %2759 = vmatprep.subr.mxu0 0.0
        %2760 = vmatpush1.msra.mxu0 0.0
        %2761 = vmatprep.subr.mxu0 0.0
        %2762 = vmatpush1.msra.mxu0 0.0
        %2763 = vmatprep.subr.mxu0 0.0
        %2764 = vmatpush1.msra.mxu0 0.0
        %2765 = vmatprep.subr.mxu0 0.0
        %2766 = vmatpush1.msra.mxu0 0.0
        %2767 = vmatprep.subr.mxu0 0.0
        %2768 = vmatpush1.msra.mxu0 0.0
        %2769 = vmatprep.subr.mxu0 0.0
        %2770 = vmatpush1.msra.mxu0 0.0
        %2771 = vmatprep.subr.mxu0 0.0
        %2772 = vmatpush1.msra.mxu0 0.0
        %2773 = vmatprep.subr.mxu0 0.0
        %2774 = vmatpush1.msra.mxu0 0.0
        %2775 = vmatprep.subr.mxu0 0.0
        %2776 = vmatpush1.msra.mxu0 0.0
        %2777 = vmatprep.subr.mxu0 0.0
        %2778 = vmatpush1.msra.mxu0 0.0
        %2779 = vmatprep.subr.mxu0 0.0
        %2780 = vmatpush1.msra.mxu0 0.0
        %2781 = vmatprep.subr.mxu0 0.0
        %2782 = vmatpush1.msra.mxu0 0.0
        %2783 = vmatprep.subr.mxu0 0.0
        %2784 = vmatpush1.msra.mxu0 0.0
        %2785 = vmatprep.subr.mxu0 0.0
        %2786 = vmatpush1.msra.mxu0 0.0
        %2787 = vmatprep.subr.mxu0 0.0
        %2788 = vmatpush1.msra.mxu0 0.0
        %2789 = vmatprep.subr.mxu0 0.0
        %2790 = vmatpush1.msra.mxu0 0.0
        %2791 = vmatprep.subr.mxu0 0.0
        %2792 = vmatpush1.msra.mxu0 0.0
        %2793 = vmatprep.subr.mxu0 0.0
        %2794 = vmatpush1.msra.mxu0 0.0
        %2795 = vmatprep.subr.mxu0 0.0
        %2796 = vmatpush1.msra.mxu0 0.0
        %2797 = vmatprep.subr.mxu0 0.0
        %2798 = vmatpush1.msra.mxu0 0.0
        %2799 = vmatprep.subr.mxu0 0.0
        %2800 = vmatpush1.msra.mxu0 0.0
        %2801 = vmatprep.subr.mxu0 0.0
        %2802 = vmatpush1.msra.mxu0 0.0
        %2803 = vmatprep.subr.mxu0 0.0
        %2804 = vmatpush1.msra.mxu0 0.0
        %2805 = vmatprep.subr.mxu0 0.0
        %2806 = vmatpush1.msra.mxu0 0.0
        %2807 = vmatprep.subr.mxu0 0.0
        %2808 = vmatpush1.msra.mxu0 0.0
        %2809 = vmatprep.subr.mxu0 0.0
        %2810 = vmatpush1.msra.mxu0 0.0
        %2811 = vmatprep.mubr.f32.mxu0 0.0
        %2812 = vmatmul.mubr.f32.gmra.mrb[0].mxu0 %v2745
        %v2813 = vpop.f32.mrb[0].mxu0
        %v2814 = vadd.f32 0.0, %v2813
        %v2815 = vpop.f32.mrb[0].mxu0
        %v2816 = vadd.f32 0.0, %v2815
        %2817 = vdwg.mxu0
        %v2818 = vadd.f32 %v2732, %v2814
        %v2819 = vadd.f32 %v2733, %v2816
        %2820 = vrot.lane.b32.xlu0 %v2226, 112
        %v2821 = vpop.permute.xlu0 %2820
        %2822 = vrot.lane.b32.xlu0 %v2227, 112
        %v2823 = vpop.permute.xlu0 %2822
        %v2824 = vsel %vm1830, %v2821, %v2823
        %v2825 = vsel %vm1830, %v2823, %v2821
        %v2826 = vmul.f32 %v2824, %v1836
        %v2827 = vmul.f32 %v2825, %v1840
        %s2828 = scalar_lea.vmem %s8, 56
        %v2829 = vld [vmem:[%s2828] sm:$0xff]
        %v2831 = vsel %vm2249, %v2829, 0
        %2833 = vmatprep.subr.mxu0 %v2827
        %2834 = vmatpush1.msra.mxu0 %v2826
        %2835 = vmatprep.subr.mxu0 0.0
        %2836 = vmatpush1.msra.mxu0 0.0
        %2837 = vmatprep.subr.mxu0 0.0
        %2838 = vmatpush1.msra.mxu0 0.0
        %2839 = vmatprep.subr.mxu0 0.0
        %2840 = vmatpush1.msra.mxu0 0.0
        %2841 = vmatprep.subr.mxu0 0.0
        %2842 = vmatpush1.msra.mxu0 0.0
        %2843 = vmatprep.subr.mxu0 0.0
        %2844 = vmatpush1.msra.mxu0 0.0
        %2845 = vmatprep.subr.mxu0 0.0
        %2846 = vmatpush1.msra.mxu0 0.0
        %2847 = vmatprep.subr.mxu0 0.0
        %2848 = vmatpush1.msra.mxu0 0.0
        %2849 = vmatprep.subr.mxu0 0.0
        %2850 = vmatpush1.msra.mxu0 0.0
        %2851 = vmatprep.subr.mxu0 0.0
        %2852 = vmatpush1.msra.mxu0 0.0
        %2853 = vmatprep.subr.mxu0 0.0
        %2854 = vmatpush1.msra.mxu0 0.0
        %2855 = vmatprep.subr.mxu0 0.0
        %2856 = vmatpush1.msra.mxu0 0.0
        %2857 = vmatprep.subr.mxu0 0.0
        %2858 = vmatpush1.msra.mxu0 0.0
        %2859 = vmatprep.subr.mxu0 0.0
        %2860 = vmatpush1.msra.mxu0 0.0
        %2861 = vmatprep.subr.mxu0 0.0
        %2862 = vmatpush1.msra.mxu0 0.0
        %2863 = vmatprep.subr.mxu0 0.0
        %2864 = vmatpush1.msra.mxu0 0.0
        %2865 = vmatprep.subr.mxu0 0.0
        %2866 = vmatpush1.msra.mxu0 0.0
        %2867 = vmatprep.subr.mxu0 0.0
        %2868 = vmatpush1.msra.mxu0 0.0
        %2869 = vmatprep.subr.mxu0 0.0
        %2870 = vmatpush1.msra.mxu0 0.0
        %2871 = vmatprep.subr.mxu0 0.0
        %2872 = vmatpush1.msra.mxu0 0.0
        %2873 = vmatprep.subr.mxu0 0.0
        %2874 = vmatpush1.msra.mxu0 0.0
        %2875 = vmatprep.subr.mxu0 0.0
        %2876 = vmatpush1.msra.mxu0 0.0
        %2877 = vmatprep.subr.mxu0 0.0
        %2878 = vmatpush1.msra.mxu0 0.0
        %2879 = vmatprep.subr.mxu0 0.0
        %2880 = vmatpush1.msra.mxu0 0.0
        %2881 = vmatprep.subr.mxu0 0.0
        %2882 = vmatpush1.msra.mxu0 0.0
        %2883 = vmatprep.subr.mxu0 0.0
        %2884 = vmatpush1.msra.mxu0 0.0
        %2885 = vmatprep.subr.mxu0 0.0
        %2886 = vmatpush1.msra.mxu0 0.0
        %2887 = vmatprep.subr.mxu0 0.0
        %2888 = vmatpush1.msra.mxu0 0.0
        %2889 = vmatprep.subr.mxu0 0.0
        %2890 = vmatpush1.msra.mxu0 0.0
        %2891 = vmatprep.subr.mxu0 0.0
        %2892 = vmatpush1.msra.mxu0 0.0
        %2893 = vmatprep.subr.mxu0 0.0
        %2894 = vmatpush1.msra.mxu0 0.0
        %2895 = vmatprep.subr.mxu0 0.0
        %2896 = vmatpush1.msra.mxu0 0.0
        %2897 = vmatprep.mubr.f32.mxu0 0.0
        %2898 = vmatmul.mubr.f32.gmra.mrb[0].mxu0 %v2831
        %v2899 = vpop.f32.mrb[0].mxu0
        %v2900 = vadd.f32 0.0, %v2899
        %v2901 = vpop.f32.mrb[0].mxu0
        %v2902 = vadd.f32 0.0, %v2901
        %2903 = vdwg.mxu0
        %v2904 = vadd.f32 %v2818, %v2900
        %v2905 = vadd.f32 %v2819, %v2902
        %2906 = vrot.lane.b32.xlu0 %v2226, 111
        %v2907 = vpop.permute.xlu0 %2906
        %2908 = vrot.lane.b32.xlu0 %v2227, 111
        %v2909 = vpop.permute.xlu0 %2908
        %v2910 = vsel %vm2023, %v2907, %v2909
        %v2911 = vsel %vm2023, %v2909, %v2907
        %v2912 = vmul.f32 %v2910, %v2029
        %v2913 = vmul.f32 %v2911, %v2033
        %s2914 = scalar_lea.vmem %s8, 64
        %v2915 = vld [vmem:[%s2914] sm:$0xff]
        %v2917 = vsel %vm2249, %v2915, 0
        %2919 = vmatprep.subr.mxu0 %v2913
        %2920 = vmatpush1.msra.mxu0 %v2912
        %2921 = vmatprep.subr.mxu0 0.0
        %2922 = vmatpush1.msra.mxu0 0.0
        %2923 = vmatprep.subr.mxu0 0.0
        %2924 = vmatpush1.msra.mxu0 0.0
        %2925 = vmatprep.subr.mxu0 0.0
        %2926 = vmatpush1.msra.mxu0 0.0
        %2927 = vmatprep.subr.mxu0 0.0
        %2928 = vmatpush1.msra.mxu0 0.0
        %2929 = vmatprep.subr.mxu0 0.0
        %2930 = vmatpush1.msra.mxu0 0.0
        %2931 = vmatprep.subr.mxu0 0.0
        %2932 = vmatpush1.msra.mxu0 0.0
        %2933 = vmatprep.subr.mxu0 0.0
        %2934 = vmatpush1.msra.mxu0 0.0
        %2935 = vmatprep.subr.mxu0 0.0
        %2936 = vmatpush1.msra.mxu0 0.0
        %2937 = vmatprep.subr.mxu0 0.0
        %2938 = vmatpush1.msra.mxu0 0.0
        %2939 = vmatprep.subr.mxu0 0.0
        %2940 = vmatpush1.msra.mxu0 0.0
        %2941 = vmatprep.subr.mxu0 0.0
        %2942 = vmatpush1.msra.mxu0 0.0
        %2943 = vmatprep.subr.mxu0 0.0
        %2944 = vmatpush1.msra.mxu0 0.0
        %2945 = vmatprep.subr.mxu0 0.0
        %2946 = vmatpush1.msra.mxu0 0.0
        %2947 = vmatprep.subr.mxu0 0.0
        %2948 = vmatpush1.msra.mxu0 0.0
        %2949 = vmatprep.subr.mxu0 0.0
        %2950 = vmatpush1.msra.mxu0 0.0
        %2951 = vmatprep.subr.mxu0 0.0
        %2952 = vmatpush1.msra.mxu0 0.0
        %2953 = vmatprep.subr.mxu0 0.0
        %2954 = vmatpush1.msra.mxu0 0.0
        %2955 = vmatprep.subr.mxu0 0.0
        %2956 = vmatpush1.msra.mxu0 0.0
        %2957 = vmatprep.subr.mxu0 0.0
        %2958 = vmatpush1.msra.mxu0 0.0
        %2959 = vmatprep.subr.mxu0 0.0
        %2960 = vmatpush1.msra.mxu0 0.0
        %2961 = vmatprep.subr.mxu0 0.0
        %2962 = vmatpush1.msra.mxu0 0.0
        %2963 = vmatprep.subr.mxu0 0.0
        %2964 = vmatpush1.msra.mxu0 0.0
        %2965 = vmatprep.subr.mxu0 0.0
        %2966 = vmatpush1.msra.mxu0 0.0
        %2967 = vmatprep.subr.mxu0 0.0
        %2968 = vmatpush1.msra.mxu0 0.0
        %2969 = vmatprep.subr.mxu0 0.0
        %2970 = vmatpush1.msra.mxu0 0.0
        %2971 = vmatprep.subr.mxu0 0.0
        %2972 = vmatpush1.msra.mxu0 0.0
        %2973 = vmatprep.subr.mxu0 0.0
        %2974 = vmatpush1.msra.mxu0 0.0
        %2975 = vmatprep.subr.mxu0 0.0
        %2976 = vmatpush1.msra.mxu0 0.0
        %2977 = vmatprep.subr.mxu0 0.0
        %2978 = vmatpush1.msra.mxu0 0.0
        %2979 = vmatprep.subr.mxu0 0.0
        %2980 = vmatpush1.msra.mxu0 0.0
        %2981 = vmatprep.subr.mxu0 0.0
        %2982 = vmatpush1.msra.mxu0 0.0
        %2983 = vmatprep.mubr.f32.mxu0 0.0
        %2984 = vmatmul.mubr.f32.gmra.mrb[0].mxu0 %v2917
        %v2985 = vpop.f32.mrb[0].mxu0
        %v2986 = vadd.f32 0.0, %v2985
        %v2987 = vpop.f32.mrb[0].mxu0
        %v2988 = vadd.f32 0.0, %v2987
        %2989 = vdwg.mxu0
        %v2990 = vadd.f32 %v2904, %v2986
        %v2991 = vadd.f32 %v2905, %v2988
        %2993 = vset.pattern.permute.xlu0 0
        %2994 = vperm.xlu0 %2993, %v2228
        %v2995 = vpop.permute.xlu0 %2994
        %v2997 = vmul.f32 %v2990, %v2995
        %v2998 = vmul.f32 %v2991, %v2995
        %3000 = vset.pattern.permute.xlu0 0
        %3001 = vperm.xlu0 %3000, %v2229
        %v3002 = vpop.permute.xlu0 %3001
        %v3004 = vadd.f32 %v2997, %v3002
        %v3005 = vadd.f32 %v2998, %v3002
        %v3006 = vmax.f32 %v3004, 0.0
        %v3007 = vmax.f32 %v3005, 0.0
        %3008 = vst [vmem:[%s392] sm:$0xff] %v3006
        %3009 = vst [vmem:[%s392 + $0x8] sm:$0xff] %v3007
        %s3010 = sand.u32 %s274, 1
        %s3011 = scalar_lea.sflag [#allocation3], %s3010
        %s3012 = sand.u32 %s274, 1
        %s3013 = smul.addr %s3012, 16
        %s3014 = scalar_lea.vmem [#allocation2], %s3013
        // Predicated region
        $region65: #{tpu_custom_call.1} parent=63 // pred_check
          %p3015 = pneg %p284
        $region66: #{tpu_custom_call.1} parent=63 // pred_check_branch
          %3017 = sbr.rel (%p3015) target = $region68
        $region67: #{tpu_custom_call.1} parent=63 // pred_region
          %s3019 = ssub.s32 256, 256
          %3020 = vsyncadd %s3011, %s3019
          %s3021 = smul.addr %s25, 2
          %s3022 = smul.addr %s3021, 128
          %s3023 = scalar_lea.hbm %s11, %s3022
          %s3025 = sshll.u32 %s3014, 4
          %s3026 = int_to_ptr.vmem [resolvable:$true] %s3025
          %3028 = dma.vmem_to_hbm [thread:$0]  %s3026, 256, %s3023, %s3011
        $region68: #{tpu_custom_call.1} parent=63 // pred_fallthru
          _
      $region64: #{tpu_custom_call.1} parent=5 // pred_fallthru
        _
      %p3029 = scmp.le.s32.totalorder 2, %s20
      // Predicated region
      $region69: #{tpu_custom_call.1} parent=5 // pred_check
        %p3030 = pneg %p3029
      $region70: #{tpu_custom_call.1} parent=5 // pred_check_branch
        %3032 = sbr.rel (%p3030) target = $region72
      $region71: #{tpu_custom_call.1} parent=5 // pred_region
        %s3033 = ssub.s32 %s20, 2
        // Predicated region
        $region73: #{tpu_custom_call.1} parent=71 // pred_check
          %p3034 = pneg %p290
        $region74: #{tpu_custom_call.1} parent=71 // pred_check_branch
          %3036 = sbr.rel (%p3034) target = $region76
        $region75: #{tpu_custom_call.1} parent=71 // pred_region
          %s3037 = sand.u32 %s275, 1
          %s3038 = scalar_lea.sflag [#allocation3], %s3037
          %s3039 = sand.u32 %s275, 1
          %s3040 = smul.addr %s3039, 16
          %s3041 = scalar_lea.vmem [#allocation2], %s3040
          %3042 = dma.done %s3038, 256
        $region76: #{tpu_custom_call.1} parent=71 // pred_fallthru
          _
      $region72: #{tpu_custom_call.1} parent=5 // pred_fallthru
        _
    $region6: #{tpu_custom_call.1} parent=1 // loop_footer
      %s24 = sadd.s32 1, %s20
    $region7: #{tpu_custom_call.1} parent=1 // loop_footer_branch
      %19 = sbr.rel target = $region3
    $region8: #{tpu_custom_call.1} parent=1 // loop_exit
      _
    %3043 = vsyncpa [#allocation3], 1
    %s3044 = scalar_lea.sflag [#allocation3], 1
    %3045 = vsyncpa %s3044, 1

// kernel: tpu_custom_call.1
$region0: #{tpu_custom_call.1}
  #allocation0 [shape = 'u32[]', space=smem, size = 0x4, offset = 0x4, fixed_abs, tag = 'smem constant byte address 0x4 - core index']
  #allocation1 [shape = 'u32[144,128]{1,0:T(1,128)}', space=vmem, size = 0x12000, scoped, tag = 'internal scratch']
  %s0 = inlined_call_operand.vmem [shape: f32[2,4,64], index: 0, kind: input, shape index: {}]
  %s1 = inlined_call_operand.vmem [shape: f32[2,4,256], index: 1, kind: input, shape index: {}]
  %s2 = inlined_call_operand.vmem [shape: f32[64,256], index: 2, kind: input, shape index: {}]
  %s3 = inlined_call_operand.vmem [shape: f32[9,256], index: 3, kind: input, shape index: {}]
  %s4 = inlined_call_operand.vmem [shape: f32[9,8,4], index: 4, kind: input, shape index: {}]
  %s5 = inlined_call_operand.vmem [shape: f32[9,8,4], index: 5, kind: input, shape index: {}]
  %s6 = inlined_call_operand.vmem [shape: f32[8,1], index: 6, kind: input, shape index: {}]
  %s7 = inlined_call_operand.vmem [shape: f32[8,1], index: 7, kind: input, shape index: {}]
  %s8 = inlined_call_operand.vmem [shape: f32[9,8,8], index: 8, kind: input, shape index: {}]
  %s9 = inlined_call_operand.vmem [shape: f32[8,1], index: 9, kind: input, shape index: {}]
  %s10 = inlined_call_operand.vmem [shape: f32[8,1], index: 10, kind: input, shape index: {}]
  %s11 = inlined_call_operand.hbm [shape: f32[2,8,256], index: 11, kind: output, shape index: {}]
  %s12 = sld [smem:[#allocation0]]
  $region77: #{tpu_custom_call.1} parent=0
    _
  %s14 = ssub.s32 1, %s12
  %s15 = scalar_select 0, %s14, %s12
  $region1: #{tpu_custom_call.1} parent=0
    #allocation2 [shape = 'u8[16384]{0}', space=vmem, size = 0x4000, scoped, tag = 'output window, operand 0']
    #allocation3 [shape = 's32[2]{0}', space=sflag, size = 0x8, scoped, tag = 'scoped memory for tpu_custom_call.1']
    %16 = vsyncpa [#allocation3], 0
    %s17 = scalar_lea.sflag [#allocation3], 1
    %18 = vsyncpa %s17, 0
    loop: start=0, step=1, limit=4
    $region2: #{tpu_custom_call.1} parent=1 // loop_pre_header
      _
    $region3: #{tpu_custom_call.1} parent=1 // loop_header
      %s20 = sphi 0, %s24
      %p21 = scmp.ge.s32.totalorder %s20, 4
      %s30 = sphi 0, %s32
      %s33 = sphi 0, %s30
      %s34 = sphi 0, %s33
      %s50 = sphi 0, %s34
      %s56 = sphi 0, %s58
      %s59 = sphi 0, %s56
      %s60 = sphi 0, %s59
      %s76 = sphi 0, %s60
      %s80 = sphi 0, %s80
      %s82 = sphi 0, %s80
      %s83 = sphi 0, %s82
      %s97 = sphi 0, %s83
      %s101 = sphi 0, %s101
      %s103 = sphi 0, %s101
      %s104 = sphi 0, %s103
      %s118 = sphi 0, %s104
      %s122 = sphi 0, %s122
      %s124 = sphi 0, %s122
      %s125 = sphi 0, %s124
      %s139 = sphi 0, %s125
      %s143 = sphi 0, %s143
      %s145 = sphi 0, %s143
      %s146 = sphi 0, %s145
      %s160 = sphi 0, %s146
      %s164 = sphi 0, %s164
      %s166 = sphi 0, %s164
      %s167 = sphi 0, %s166
      %s181 = sphi 0, %s167
      %s185 = sphi 0, %s185
      %s187 = sphi 0, %s185
      %s188 = sphi 0, %s187
      %s202 = sphi 0, %s188
      %s206 = sphi 0, %s206
      %s208 = sphi 0, %s206
      %s209 = sphi 0, %s208
      %s223 = sphi 0, %s209
      %s227 = sphi 0, %s227
      %s229 = sphi 0, %s227
      %s230 = sphi 0, %s229
      %s244 = sphi 0, %s230
      %s248 = sphi 0, %s248
      %s250 = sphi 0, %s248
      %s251 = sphi 0, %s250
      %s265 = sphi 0, %s251
      %s271 = sphi 0, %s273
      %s274 = sphi 0, %s271
      %s275 = sphi 0, %s274
      %s291 = sphi 0, %s275
    $region4: #{tpu_custom_call.1} parent=1 // loop_header_branch
      %23 = sbr.rel (%p21) target = $region8
    $region5: #{tpu_custom_call.1} parent=1 // loop_body
      %s25 = ssub.s32 %s20, 1
      %s26 = ssub.s32 %s20, 2
      %s27 = sadd.s32 %s20, 1
      %s28 = ssub.s32 %s20, %s27
      %p29 = scmp.eq.s32.totalorder %s28, 0
      %s31 = sadd.s32 %s30, 1
      %s32 = scalar_select %p29, %s30, %s31
      %p35 = pneg %p29
      %p36 = scmp.eq.s32.totalorder %s20, 1
      %p37 = por %p35, %p36
      %p38 = scmp.ne.s32.totalorder %s30, %s33
      %p39 = scmp.eq.s32.totalorder %s20, 0
      %p40 = por %p38, %p39
      %p41 = scmp.ne.s32.totalorder %s30, %s33
      %p42 = scmp.eq.s32.totalorder %s25, 1
      %p43 = por %p41, %p42
      %p44 = scmp.ne.s32.totalorder %s33, %s34
      %p45 = scmp.eq.s32.totalorder %s25, 0
      %p46 = por %p44, %p45
      %p47 = scmp.ne.s32.totalorder %s33, %s34
      %p48 = scmp.eq.s32.totalorder %s26, 1
      %p49 = por %p47, %p48
      %p51 = scmp.ne.s32.totalorder %s34, %s50
      %p52 = scmp.eq.s32.totalorder %s26, 0
      %p53 = por %p51, %p52
      %s54 = ssub.s32 %s20, %s27
      %p55 = scmp.eq.s32.totalorder %s54, 0
      %s57 = sadd.s32 %s56, 1
      %s58 = scalar_select %p55, %s56, %s57
      %p61 = pneg %p55
      %p62 = scmp.eq.s32.totalorder %s20, 1
      %p63 = por %p61, %p62
      %p64 = scmp.ne.s32.totalorder %s56, %s59
      %p65 = scmp.eq.s32.totalorder %s20, 0
      %p66 = por %p64, %p65
      %p67 = scmp.ne.s32.totalorder %s56, %s59
      %p68 = scmp.eq.s32.totalorder %s25, 1
      %p69 = por %p67, %p68
      %p70 = scmp.ne.s32.totalorder %s59, %s60
      %p71 = scmp.eq.s32.totalorder %s25, 0
      %p72 = por %p70, %p71
      %p73 = scmp.ne.s32.totalorder %s59, %s60
      %p74 = scmp.eq.s32.totalorder %s26, 1
      %p75 = por %p73, %p74
      %p77 = scmp.ne.s32.totalorder %s60, %s76
      %p78 = scmp.eq.s32.totalorder %s26, 0
      %p79 = por %p77, %p78
      %s81 = sadd.s32 %s80, 1
      %p84 = scmp.eq.s32.totalorder %s20, 1
      %p85 = scmp.ne.s32.totalorder %s80, %s82
      %p86 = scmp.eq.s32.totalorder %s20, 0
      %p87 = por %p85, %p86
      %p88 = scmp.ne.s32.totalorder %s80, %s82
      %p89 = scmp.eq.s32.totalorder %s25, 1
      %p90 = por %p88, %p89
      %p91 = scmp.ne.s32.totalorder %s82, %s83
      %p92 = scmp.eq.s32.totalorder %s25, 0
      %p93 = por %p91, %p92
      %p94 = scmp.ne.s32.totalorder %s82, %s83
      %p95 = scmp.eq.s32.totalorder %s26, 1
      %p96 = por %p94, %p95
      %p98 = scmp.ne.s32.totalorder %s83, %s97
      %p99 = scmp.eq.s32.totalorder %s26, 0
      %p100 = por %p98, %p99
      %s102 = sadd.s32 %s101, 1
      %p105 = scmp.eq.s32.totalorder %s20, 1
      %p106 = scmp.ne.s32.totalorder %s101, %s103
      %p107 = scmp.eq.s32.totalorder %s20, 0
      %p108 = por %p106, %p107
      %p109 = scmp.ne.s32.totalorder %s101, %s103
      %p110 = scmp.eq.s32.totalorder %s25, 1
      %p111 = por %p109, %p110
      %p112 = scmp.ne.s32.totalorder %s103, %s104
      %p113 = scmp.eq.s32.totalorder %s25, 0
      %p114 = por %p112, %p113
      %p115 = scmp.ne.s32.totalorder %s103, %s104
      %p116 = scmp.eq.s32.totalorder %s26, 1
      %p117 = por %p115, %p116
      %p119 = scmp.ne.s32.totalorder %s104, %s118
      %p120 = scmp.eq.s32.totalorder %s26, 0
      %p121 = por %p119, %p120
      %s123 = sadd.s32 %s122, 1
      %p126 = scmp.eq.s32.totalorder %s20, 1
      %p127 = scmp.ne.s32.totalorder %s122, %s124
      %p128 = scmp.eq.s32.totalorder %s20, 0
      %p129 = por %p127, %p128
      %p130 = scmp.ne.s32.totalorder %s122, %s124
      %p131 = scmp.eq.s32.totalorder %s25, 1
      %p132 = por %p130, %p131
      %p133 = scmp.ne.s32.totalorder %s124, %s125
      %p134 = scmp.eq.s32.totalorder %s25, 0
      %p135 = por %p133, %p134
      %p136 = scmp.ne.s32.totalorder %s124, %s125
      %p137 = scmp.eq.s32.totalorder %s26, 1
      %p138 = por %p136, %p137
      %p140 = scmp.ne.s32.totalorder %s125, %s139
      %p141 = scmp.eq.s32.totalorder %s26, 0
      %p142 = por %p140, %p141
      %s144 = sadd.s32 %s143, 1
      %p147 = scmp.eq.s32.totalorder %s20, 1
      %p148 = scmp.ne.s32.totalorder %s143, %s145
      %p149 = scmp.eq.s32.totalorder %s20, 0
      %p150 = por %p148, %p149
      %p151 = scmp.ne.s32.totalorder %s143, %s145
      %p152 = scmp.eq.s32.totalorder %s25, 1
      %p153 = por %p151, %p152
      %p154 = scmp.ne.s32.totalorder %s145, %s146
      %p155 = scmp.eq.s32.totalorder %s25, 0
      %p156 = por %p154, %p155
      %p157 = scmp.ne.s32.totalorder %s145, %s146
      %p158 = scmp.eq.s32.totalorder %s26, 1
      %p159 = por %p157, %p158
      %p161 = scmp.ne.s32.totalorder %s146, %s160
      %p162 = scmp.eq.s32.totalorder %s26, 0
      %p163 = por %p161, %p162
      %s165 = sadd.s32 %s164, 1
      %p168 = scmp.eq.s32.totalorder %s20, 1
      %p169 = scmp.ne.s32.totalorder %s164, %s166
      %p170 = scmp.eq.s32.totalorder %s20, 0
      %p171 = por %p169, %p170
      %p172 = scmp.ne.s32.totalorder %s164, %s166
      %p173 = scmp.eq.s32.totalorder %s25, 1
      %p174 = por %p172, %p173
      %p175 = scmp.ne.s32.totalorder %s166, %s167
      %p176 = scmp.eq.s32.totalorder %s25, 0
      %p177 = por %p175, %p176
      %p178 = scmp.ne.s32.totalorder %s166, %s167
      %p179 = scmp.eq.s32.totalorder %s26, 1
      %p180 = por %p178, %p179
      %p182 = scmp.ne.s32.totalorder %s167, %s181
      %p183 = scmp.eq.s32.totalorder %s26, 0
      %p184 = por %p182, %p183
      %s186 = sadd.s32 %s185, 1
      %p189 = scmp.eq.s32.totalorder %s20, 1
      %p190 = scmp.ne.s32.totalorder %s185, %s187
      %p191 = scmp.eq.s32.totalorder %s20, 0
      %p192 = por %p190, %p191
      %p193 = scmp.ne.s32.totalorder %s185, %s187
      %p194 = scmp.eq.s32.totalorder %s25, 1
      %p195 = por %p193, %p194
      %p196 = scmp.ne.s32.totalorder %s187, %s188
      %p197 = scmp.eq.s32.totalorder %s25, 0
      %p198 = por %p196, %p197
      %p199 = scmp.ne.s32.totalorder %s187, %s188
      %p200 = scmp.eq.s32.totalorder %s26, 1
      %p201 = por %p199, %p200
      %p203 = scmp.ne.s32.totalorder %s188, %s202
      %p204 = scmp.eq.s32.totalorder %s26, 0
      %p205 = por %p203, %p204
      %s207 = sadd.s32 %s206, 1
      %p210 = scmp.eq.s32.totalorder %s20, 1
      %p211 = scmp.ne.s32.totalorder %s206, %s208
      %p212 = scmp.eq.s32.totalorder %s20, 0
      %p213 = por %p211, %p212
      %p214 = scmp.ne.s32.totalorder %s206, %s208
      %p215 = scmp.eq.s32.totalorder %s25, 1
      %p216 = por %p214, %p215
      %p217 = scmp.ne.s32.totalorder %s208, %s209
      %p218 = scmp.eq.s32.totalorder %s25, 0
      %p219 = por %p217, %p218
      %p220 = scmp.ne.s32.totalorder %s208, %s209
      %p221 = scmp.eq.s32.totalorder %s26, 1
      %p222 = por %p220, %p221
      %p224 = scmp.ne.s32.totalorder %s209, %s223
      %p225 = scmp.eq.s32.totalorder %s26, 0
      %p226 = por %p224, %p225
      %s228 = sadd.s32 %s227, 1
      %p231 = scmp.eq.s32.totalorder %s20, 1
      %p232 = scmp.ne.s32.totalorder %s227, %s229
      %p233 = scmp.eq.s32.totalorder %s20, 0
      %p234 = por %p232, %p233
      %p235 = scmp.ne.s32.totalorder %s227, %s229
      %p236 = scmp.eq.s32.totalorder %s25, 1
      %p237 = por %p235, %p236
      %p238 = scmp.ne.s32.totalorder %s229, %s230
      %p239 = scmp.eq.s32.totalorder %s25, 0
      %p240 = por %p238, %p239
      %p241 = scmp.ne.s32.totalorder %s229, %s230
      %p242 = scmp.eq.s32.totalorder %s26, 1
      %p243 = por %p241, %p242
      %p245 = scmp.ne.s32.totalorder %s230, %s244
      %p246 = scmp.eq.s32.totalorder %s26, 0
      %p247 = por %p245, %p246
      %s249 = sadd.s32 %s248, 1
      %p252 = scmp.eq.s32.totalorder %s20, 1
      %p253 = scmp.ne.s32.totalorder %s248, %s250
      %p254 = scmp.eq.s32.totalorder %s20, 0
      %p255 = por %p253, %p254
      %p256 = scmp.ne.s32.totalorder %s248, %s250
      %p257 = scmp.eq.s32.totalorder %s25, 1
      %p258 = por %p256, %p257
      %p259 = scmp.ne.s32.totalorder %s250, %s251
      %p260 = scmp.eq.s32.totalorder %s25, 0
      %p261 = por %p259, %p260
      %p262 = scmp.ne.s32.totalorder %s250, %s251
      %p263 = scmp.eq.s32.totalorder %s26, 1
      %p264 = por %p262, %p263
      %p266 = scmp.ne.s32.totalorder %s251, %s265
      %p267 = scmp.eq.s32.totalorder %s26, 0
      %p268 = por %p266, %p267
      %s269 = ssub.s32 %s20, %s27
      %p270 = scmp.eq.s32.totalorder %s269, 0
      %s272 = sadd.s32 %s271, 1
      %s273 = scalar_select %p270, %s271, %s272
      %p276 = pneg %p270
      %p277 = scmp.eq.s32.totalorder %s20, 1
      %p278 = por %p276, %p277
      %p279 = scmp.ne.s32.totalorder %s271, %s274
      %p280 = scmp.eq.s32.totalorder %s20, 0
      %p281 = por %p279, %p280
      %p282 = scmp.ne.s32.totalorder %s271, %s274
      %p283 = scmp.eq.s32.totalorder %s25, 1
      %p284 = por %p282, %p283
      %p285 = scmp.ne.s32.totalorder %s274, %s275
      %p286 = scmp.eq.s32.totalorder %s25, 0
      %p287 = por %p285, %p286
      %p288 = scmp.ne.s32.totalorder %s274, %s275
      %p289 = scmp.eq.s32.totalorder %s26, 1
      %p290 = por %p288, %p289
      %p292 = scmp.ne.s32.totalorder %s275, %s291
      %p293 = scmp.eq.s32.totalorder %s26, 0
      %p294 = por %p292, %p293
      %p295 = scmp.le.s32.totalorder 1, %s20
      %p296 = scmp.lt.s32.totalorder %s20, 3
      %p297 = pnand %p295, %p296
      %p298 = pneg %p297
      // Predicated region
      $region9: #{tpu_custom_call.1} parent=5 // pred_check
        _
      $region10: #{tpu_custom_call.1} parent=5 // pred_check_branch
        %300 = sbr.rel (%p297) target = $region12
      $region11: #{tpu_custom_call.1} parent=5 // pred_region
        %s301 = ssub.s32 %s20, 1
        // Predicated region
        $region13: #{tpu_custom_call.1} parent=11 // pred_check
          %p302 = pneg %p93
        $region14: #{tpu_custom_call.1} parent=11 // pred_check_branch
          %304 = sbr.rel (%p302) target = $region16
        $region15: #{tpu_custom_call.1} parent=11 // pred_region
          _
        $region16: #{tpu_custom_call.1} parent=11 // pred_fallthru
          _
        // Predicated region
        $region17: #{tpu_custom_call.1} parent=11 // pred_check
          %p305 = pneg %p114
        $region18: #{tpu_custom_call.1} parent=11 // pred_check_branch
          %307 = sbr.rel (%p305) target = $region20
        $region19: #{tpu_custom_call.1} parent=11 // pred_region
          _
        $region20: #{tpu_custom_call.1} parent=11 // pred_fallthru
          _
        // Predicated region
        $region21: #{tpu_custom_call.1} parent=11 // pred_check
          %p308 = pneg %p135
        $region22: #{tpu_custom_call.1} parent=11 // pred_check_branch
          %310 = sbr.rel (%p308) target = $region24
        $region23: #{tpu_custom_call.1} parent=11 // pred_region
          _
        $region24: #{tpu_custom_call.1} parent=11 // pred_fallthru
          _
        // Predicated region
        $region25: #{tpu_custom_call.1} parent=11 // pred_check
          %p311 = pneg %p156
        $region26: #{tpu_custom_call.1} parent=11 // pred_check_branch
          %313 = sbr.rel (%p311) target = $region28
        $region27: #{tpu_custom_call.1} parent=11 // pred_region
          _
        $region28: #{tpu_custom_call.1} parent=11 // pred_fallthru
          _
        // Predicated region
        $region29: #{tpu_custom_call.1} parent=11 // pred_check
          %p314 = pneg %p177
        $region30: #{tpu_custom_call.1} parent=11 // pred_check_branch
          %316 = sbr.rel (%p314) target = $region32
        $region31: #{tpu_custom_call.1} parent=11 // pred_region
          _
        $region32: #{tpu_custom_call.1} parent=11 // pred_fallthru
          _
        // Predicated region
        $region33: #{tpu_custom_call.1} parent=11 // pred_check
          %p317 = pneg %p198
        $region34: #{tpu_custom_call.1} parent=11 // pred_check_branch
          %319 = sbr.rel (%p317) target = $region36
        $region35: #{tpu_custom_call.1} parent=11 // pred_region
          _
        $region36: #{tpu_custom_call.1} parent=11 // pred_fallthru
          _
        // Predicated region
        $region37: #{tpu_custom_call.1} parent=11 // pred_check
          %p320 = pneg %p219
        $region38: #{tpu_custom_call.1} parent=11 // pred_check_branch
          %322 = sbr.rel (%p320) target = $region40
        $region39: #{tpu_custom_call.1} parent=11 // pred_region
          _
        $region40: #{tpu_custom_call.1} parent=11 // pred_fallthru
          _
        // Predicated region
        $region41: #{tpu_custom_call.1} parent=11 // pred_check
          %p323 = pneg %p240
        $region42: #{tpu_custom_call.1} parent=11 // pred_check_branch
          %325 = sbr.rel (%p323) target = $region44
        $region43: #{tpu_custom_call.1} parent=11 // pred_region
          _
        $region44: #{tpu_custom_call.1} parent=11 // pred_fallthru
          _
        // Predicated region
        $region45: #{tpu_custom_call.1} parent=11 // pred_check
          %p326 = pneg %p261
        $region46: #{tpu_custom_call.1} parent=11 // pred_check_branch
          %328 = sbr.rel (%p326) target = $region48
        $region47: #{tpu_custom_call.1} parent=11 // pred_region
          _
        $region48: #{tpu_custom_call.1} parent=11 // pred_fallthru
          _
      $region12: #{tpu_custom_call.1} parent=5 // pred_fallthru
        _
      %p329 = scmp.lt.s32.totalorder %s20, 2
      // Predicated region
      $region49: #{tpu_custom_call.1} parent=5 // pred_check
        %p330 = pneg %p329
      $region50: #{tpu_custom_call.1} parent=5 // pred_check_branch
        %332 = sbr.rel (%p330) target = $region52
      $region51: #{tpu_custom_call.1} parent=5 // pred_region
        // Predicated region
        $region53: #{tpu_custom_call.1} parent=51 // pred_check
          %p333 = pneg %p40
        $region54: #{tpu_custom_call.1} parent=51 // pred_check_branch
          %335 = sbr.rel (%p333) target = $region56
        $region55: #{tpu_custom_call.1} parent=51 // pred_region
          %p336 = scmp.lt.s32.totalorder %s20, 1
          %s337 = scalar_select %p336, %s20, 1
          %s338 = smul.addr %s337, 4
          %s339 = scalar_lea.vmem %s0, %s338
        $region56: #{tpu_custom_call.1} parent=51 // pred_fallthru
          _
        // Predicated region
        $region57: #{tpu_custom_call.1} parent=51 // pred_check
          %p340 = pneg %p66
        $region58: #{tpu_custom_call.1} parent=51 // pred_check_branch
          %342 = sbr.rel (%p340) target = $region60
        $region59: #{tpu_custom_call.1} parent=51 // pred_region
          %p343 = scmp.lt.s32.totalorder %s20, 1
          %s344 = scalar_select %p343, %s20, 1
          %s345 = smul.addr %s344, 2
          %s346 = smul.addr %s345, 4
          %s347 = scalar_lea.vmem %s1, %s346
        $region60: #{tpu_custom_call.1} parent=51 // pred_fallthru
          _
      $region52: #{tpu_custom_call.1} parent=5 // pred_fallthru
        _
      %p348 = scmp.le.s32.totalorder 1, %s20
      %p349 = scmp.lt.s32.totalorder %s20, 3
      %p350 = pnand %p348, %p349
      %p351 = pneg %p350
      // Predicated region
      $region61: #{tpu_custom_call.1} parent=5 // pred_check
        _
      $region62: #{tpu_custom_call.1} parent=5 // pred_check_branch
        %353 = sbr.rel (%p350) target = $region64
      $region63: #{tpu_custom_call.1} parent=5 // pred_region
        %s354 = ssub.s32 %s20, 1
        %p355 = scmp.lt.s32.totalorder %s25, 1
        %s356 = scalar_select %p355, %s25, 1
        %s357 = smul.addr %s356, 4
        %s358 = scalar_lea.vmem %s0, %s357
        %p359 = pneg %p46
        %p360 = pneg %p43
        %p361 = scmp.lt.s32.totalorder %s25, 1
        %s362 = scalar_select %p361, %s25, 1
        %s363 = smul.addr %s362, 2
        %s364 = smul.addr %s363, 4
        %s365 = scalar_lea.vmem %s1, %s364
        %p366 = pneg %p72
        %p367 = pneg %p69
        %p368 = pneg %p93
        %p369 = pneg %p90
        %p370 = pneg %p114
        %p371 = pneg %p111
        %p372 = pneg %p135
        %p373 = pneg %p132
        %p374 = pneg %p156
        %p375 = pneg %p153
        %p376 = pneg %p177
        %p377 = pneg %p174
        %p378 = pneg %p198
        %p379 = pneg %p195
        %p380 = pneg %p219
        %p381 = pneg %p216
        %p382 = pneg %p240
        %p383 = pneg %p237
        %p384 = pneg %p261
        %p385 = pneg %p258
        %p386 = pneg %p287
        %p387 = pneg %p284
        %s388 = sand.u32 %s274, 1
        %s389 = scalar_lea.sflag [#allocation3], %s388
        %s390 = sand.u32 %s274, 1
        %s391 = smul.addr %s390, 16
        %s392 = scalar_lea.vmem [#allocation2], %s391
        %p393 = scmp.lt.s32.totalorder %s25, 1
        %s394 = scalar_select %p393, %s25, 1
        %s395 = smul.addr %s394, 4
        %s396 = scalar_lea.vmem %s0, %s395
        %p397 = scmp.lt.s32.totalorder %s25, 1
        %s398 = scalar_select %p397, %s25, 1
        %s399 = smul.addr %s398, 2
        %s400 = smul.addr %s399, 4
        %s401 = scalar_lea.vmem %s1, %s400
        %v402 = vld [vmem:[%s396] sm:$0xf]
        %v403 = vld [vmem:[%s2] sm:$0xff]
        %v404 = vld [vmem:[%s2 + $0x8] sm:$0xff]
        %v405 = vld [vmem:[%s2 + $0x10] sm:$0xff]
        %v406 = vld [vmem:[%s2 + $0x18] sm:$0xff]
        %v407 = vld [vmem:[%s2 + $0x20] sm:$0xff]
        %v408 = vld [vmem:[%s2 + $0x28] sm:$0xff]
        %v409 = vld [vmem:[%s2 + $0x30] sm:$0xff]
        %v410 = vld [vmem:[%s2 + $0x38] sm:$0xff]
        %v411 = vld [vmem:[%s2 + $0x40] sm:$0xff]
        %v412 = vld [vmem:[%s2 + $0x48] sm:$0xff]
        %v413 = vld [vmem:[%s2 + $0x50] sm:$0xff]
        %v414 = vld [vmem:[%s2 + $0x58] sm:$0xff]
        %v415 = vld [vmem:[%s2 + $0x60] sm:$0xff]
        %v416 = vld [vmem:[%s2 + $0x68] sm:$0xff]
        %v417 = vld [vmem:[%s2 + $0x70] sm:$0xff]
        %v418 = vld [vmem:[%s2 + $0x78] sm:$0xff]
        %vm419 = vcmask 523264
        %v421 = vsel %vm419, %v402, 0
        %423 = vmatprep.subr.mxu0 %v404
        %424 = vmatpush1.msra.mxu0 %v403
        %425 = vmatprep.subr.mxu0 %v406
        %426 = vmatpush1.msra.mxu0 %v405
        %427 = vmatprep.subr.mxu0 %v408
        %428 = vmatpush1.msra.mxu0 %v407
        %429 = vmatprep.subr.mxu0 %v410
        %430 = vmatpush1.msra.mxu0 %v409
        %431 = vmatprep.subr.mxu0 %v412
        %432 = vmatpush1.msra.mxu0 %v411
        %433 = vmatprep.subr.mxu0 %v414
        %434 = vmatpush1.msra.mxu0 %v413
        %435 = vmatprep.subr.mxu0 %v416
        %436 = vmatpush1.msra.mxu0 %v415
        %437 = vmatprep.subr.mxu0 %v418
        %438 = vmatpush1.msra.mxu0 %v417
        %439 = vmatprep.subr.mxu0 0.0
        %440 = vmatpush1.msra.mxu0 0.0
        %441 = vmatprep.subr.mxu0 0.0
        %442 = vmatpush1.msra.mxu0 0.0
        %443 = vmatprep.subr.mxu0 0.0
        %444 = vmatpush1.msra.mxu0 0.0
        %445 = vmatprep.subr.mxu0 0.0
        %446 = vmatpush1.msra.mxu0 0.0
        %447 = vmatprep.subr.mxu0 0.0
        %448 = vmatpush1.msra.mxu0 0.0
        %449 = vmatprep.subr.mxu0 0.0
        %450 = vmatpush1.msra.mxu0 0.0
        %451 = vmatprep.subr.mxu0 0.0
        %452 = vmatpush1.msra.mxu0 0.0
        %453 = vmatprep.subr.mxu0 0.0
        %454 = vmatpush1.msra.mxu0 0.0
        %455 = vmatprep.subr.mxu0 0.0
        %456 = vmatpush1.msra.mxu0 0.0
        %457 = vmatprep.subr.mxu0 0.0
        %458 = vmatpush1.msra.mxu0 0.0
        %459 = vmatprep.subr.mxu0 0.0
        %460 = vmatpush1.msra.mxu0 0.0
        %461 = vmatprep.subr.mxu0 0.0
        %462 = vmatpush1.msra.mxu0 0.0
        %463 = vmatprep.subr.mxu0 0.0
        %464 = vmatpush1.msra.mxu0 0.0
        %465 = vmatprep.subr.mxu0 0.0
        %466 = vmatpush1.msra.mxu0 0.0
        %467 = vmatprep.subr.mxu0 0.0
        %468 = vmatpush1.msra.mxu0 0.0
        %469 = vmatprep.subr.mxu0 0.0
        %470 = vmatpush1.msra.mxu0 0.0
        %471 = vmatprep.subr.mxu0 0.0
        %472 = vmatpush1.msra.mxu0 0.0
        %473 = vmatprep.subr.mxu0 0.0
        %474 = vmatpush1.msra.mxu0 0.0
        %475 = vmatprep.subr.mxu0 0.0
        %476 = vmatpush1.msra.mxu0 0.0
        %477 = vmatprep.subr.mxu0 0.0
        %478 = vmatpush1.msra.mxu0 0.0
        %479 = vmatprep.subr.mxu0 0.0
        %480 = vmatpush1.msra.mxu0 0.0
        %481 = vmatprep.subr.mxu0 0.0
        %482 = vmatpush1.msra.mxu0 0.0
        %483 = vmatprep.subr.mxu0 0.0
        %484 = vmatpush1.msra.mxu0 0.0
        %485 = vmatprep.subr.mxu0 0.0
        %486 = vmatpush1.msra.mxu0 0.0
        %487 = vmatprep.mubr.f32.mxu0 0.0
        %488 = vmatmul.mubr.f32.gmra.mrb[0].mxu0 %v421
        %v489 = vpop.f32.mrb[0].mxu0
        %v490 = vadd.f32 0.0, %v489
        %v491 = vpop.f32.mrb[0].mxu0
        %v492 = vadd.f32 0.0, %v491
        %493 = vdwg.mxu0
        %v494 = vld [vmem:[%s3] sm:$0xff]
        %v495 = vld [vmem:[%s3 + $0x8] sm:$0xff]
        %v496 = vld [vmem:[%s3 + $0x10] sm:$0x1]
        %v497 = vld [vmem:[%s3 + $0x18] sm:$0x1]
        %v498 = vld [vmem:[%s401] sm:$0xff]
        %v499 = vld [vmem:[%s6] sm:$0xff]
        %v500 = vld [vmem:[%s7] sm:$0xff]
        %v502 = vcombine.high %v498, %v498
        %504 = vrot.lane.b32.xlu0 %v498, 17
        %v505 = vpop.permute.xlu0 %504
        %506 = vrot.lane.b32.xlu0 %v502, 17
        %v507 = vpop.permute.xlu0 %506
        %v508 = vlaneseq
        %v509 = vand.u32 %v508, 127
        %vm510 = vcmp.lt.s32.totalorder %v509, 17
        %v511 = vsel %vm510, %v505, %v507
        %v512 = vsel %vm510, %v507, %v505
        %v513 = vlaneseq
        %v514 = vshrl.u32 %v513, 7
        %v515 = vsub.s32 0, %v514
        %v516 = vrot.slane %v494, %v515
        %v517 = vlaneseq
        %v518 = vshrl.u32 %v517, 7
        %v519 = vsub.s32 0, %v518
        %v520 = vrot.slane %v495, %v519
        %v521 = vmul.f32 %v512, %v516
        %v522 = vmul.f32 %v511, %v520
        %v523 = vld [vmem:[%s4] sm:$0xff]
        %524 = vrot.lane.b32.xlu0 %v490, 17
        %v525 = vpop.permute.xlu0 %524
        %526 = vrot.lane.b32.xlu0 %v492, 17
        %v527 = vpop.permute.xlu0 %526
        %v528 = vsel %vm510, %v525, %v527
        %v529 = vsel %vm510, %v527, %v525
        %v530 = vmul.f32 %v529, %v516
        %v531 = vmul.f32 %v528, %v520
        %v532 = vld [vmem:[%s5] sm:$0xff]
        %vm533 = vcmask 31744
        %v535 = vsel %vm533, %v532, 0
        %vm537 = vcmask 1043456
        %v539 = vsel %vm537, %v530, 0
        %v542 = vsel %vm537, %v531, 0
        %544 = vmatprep.subr.mxu0 %v542
        %545 = vmatpush1.msra.mxu0 %v539
        %546 = vmatprep.subr.mxu0 0.0
        %547 = vmatpush1.msra.mxu0 0.0
        %548 = vmatprep.subr.mxu0 0.0
        %549 = vmatpush1.msra.mxu0 0.0
        %550 = vmatprep.subr.mxu0 0.0
        %551 = vmatpush1.msra.mxu0 0.0
        %552 = vmatprep.subr.mxu0 0.0
        %553 = vmatpush1.msra.mxu0 0.0
        %554 = vmatprep.subr.mxu0 0.0
        %555 = vmatpush1.msra.mxu0 0.0
        %556 = vmatprep.subr.mxu0 0.0
        %557 = vmatpush1.msra.mxu0 0.0
        %558 = vmatprep.subr.mxu0 0.0
        %559 = vmatpush1.msra.mxu0 0.0
        %560 = vmatprep.subr.mxu0 0.0
        %561 = vmatpush1.msra.mxu0 0.0
        %562 = vmatprep.subr.mxu0 0.0
        %563 = vmatpush1.msra.mxu0 0.0
        %564 = vmatprep.subr.mxu0 0.0
        %565 = vmatpush1.msra.mxu0 0.0
        %566 = vmatprep.subr.mxu0 0.0
        %567 = vmatpush1.msra.mxu0 0.0
        %568 = vmatprep.subr.mxu0 0.0
        %569 = vmatpush1.msra.mxu0 0.0
        %570 = vmatprep.subr.mxu0 0.0
        %571 = vmatpush1.msra.mxu0 0.0
        %572 = vmatprep.subr.mxu0 0.0
        %573 = vmatpush1.msra.mxu0 0.0
        %574 = vmatprep.subr.mxu0 0.0
        %575 = vmatpush1.msra.mxu0 0.0
        %576 = vmatprep.subr.mxu0 0.0
        %577 = vmatpush1.msra.mxu0 0.0
        %578 = vmatprep.subr.mxu0 0.0
        %579 = vmatpush1.msra.mxu0 0.0
        %580 = vmatprep.subr.mxu0 0.0
        %581 = vmatpush1.msra.mxu0 0.0
        %582 = vmatprep.subr.mxu0 0.0
        %583 = vmatpush1.msra.mxu0 0.0
        %584 = vmatprep.subr.mxu0 0.0
        %585 = vmatpush1.msra.mxu0 0.0
        %586 = vmatprep.subr.mxu0 0.0
        %587 = vmatpush1.msra.mxu0 0.0
        %588 = vmatprep.subr.mxu0 0.0
        %589 = vmatpush1.msra.mxu0 0.0
        %590 = vmatprep.subr.mxu0 0.0
        %591 = vmatpush1.msra.mxu0 0.0
        %592 = vmatprep.subr.mxu0 0.0
        %593 = vmatpush1.msra.mxu0 0.0
        %594 = vmatprep.subr.mxu0 0.0
        %595 = vmatpush1.msra.mxu0 0.0
        %596 = vmatprep.subr.mxu0 0.0
        %597 = vmatpush1.msra.mxu0 0.0
        %598 = vmatprep.subr.mxu0 0.0
        %599 = vmatpush1.msra.mxu0 0.0
        %600 = vmatprep.subr.mxu0 0.0
        %601 = vmatpush1.msra.mxu0 0.0
        %602 = vmatprep.subr.mxu0 0.0
        %603 = vmatpush1.msra.mxu0 0.0
        %604 = vmatprep.subr.mxu0 0.0
        %605 = vmatpush1.msra.mxu0 0.0
        %606 = vmatprep.subr.mxu0 0.0
        %607 = vmatpush1.msra.mxu0 0.0
        %608 = vmatprep.mubr.f32.mxu0 0.0
        %609 = vmatmul.mubr.f32.gmra.mrb[0].mxu0 %v535
        %v610 = vpop.f32.mrb[0].mxu0
        %v611 = vadd.f32 0.0, %v610
        %v612 = vpop.f32.mrb[0].mxu0
        %v613 = vadd.f32 0.0, %v612
        %614 = vdwg.mxu0
        %v616 = vsel %vm533, %v523, 0
        %v619 = vsel %vm537, %v521, 0
        %v622 = vsel %vm537, %v522, 0
        %624 = vmatprep.subr.mxu0 %v622
        %625 = vmatpush1.msra.mxu0 %v619
        %626 = vmatprep.subr.mxu0 0.0
        %627 = vmatpush1.msra.mxu0 0.0
        %628 = vmatprep.subr.mxu0 0.0
        %629 = vmatpush1.msra.mxu0 0.0
        %630 = vmatprep.subr.mxu0 0.0
        %631 = vmatpush1.msra.mxu0 0.0
        %632 = vmatprep.subr.mxu0 0.0
        %633 = vmatpush1.msra.mxu0 0.0
        %634 = vmatprep.subr.mxu0 0.0
        %635 = vmatpush1.msra.mxu0 0.0
        %636 = vmatprep.subr.mxu0 0.0
        %637 = vmatpush1.msra.mxu0 0.0
        %638 = vmatprep.subr.mxu0 0.0
        %639 = vmatpush1.msra.mxu0 0.0
        %640 = vmatprep.subr.mxu0 0.0
        %641 = vmatpush1.msra.mxu0 0.0
        %642 = vmatprep.subr.mxu0 0.0
        %643 = vmatpush1.msra.mxu0 0.0
        %644 = vmatprep.subr.mxu0 0.0
        %645 = vmatpush1.msra.mxu0 0.0
        %646 = vmatprep.subr.mxu0 0.0
        %647 = vmatpush1.msra.mxu0 0.0
        %648 = vmatprep.subr.mxu0 0.0
        %649 = vmatpush1.msra.mxu0 0.0
        %650 = vmatprep.subr.mxu0 0.0
        %651 = vmatpush1.msra.mxu0 0.0
        %652 = vmatprep.subr.mxu0 0.0
        %653 = vmatpush1.msra.mxu0 0.0
        %654 = vmatprep.subr.mxu0 0.0
        %655 = vmatpush1.msra.mxu0 0.0
        %656 = vmatprep.subr.mxu0 0.0
        %657 = vmatpush1.msra.mxu0 0.0
        %658 = vmatprep.subr.mxu0 0.0
        %659 = vmatpush1.msra.mxu0 0.0
        %660 = vmatprep.subr.mxu0 0.0
        %661 = vmatpush1.msra.mxu0 0.0
        %662 = vmatprep.subr.mxu0 0.0
        %663 = vmatpush1.msra.mxu0 0.0
        %664 = vmatprep.subr.mxu0 0.0
        %665 = vmatpush1.msra.mxu0 0.0
        %666 = vmatprep.subr.mxu0 0.0
        %667 = vmatpush1.msra.mxu0 0.0
        %668 = vmatprep.subr.mxu0 0.0
        %669 = vmatpush1.msra.mxu0 0.0
        %670 = vmatprep.subr.mxu0 0.0
        %671 = vmatpush1.msra.mxu0 0.0
        %672 = vmatprep.subr.mxu0 0.0
        %673 = vmatpush1.msra.mxu0 0.0
        %674 = vmatprep.subr.mxu0 0.0
        %675 = vmatpush1.msra.mxu0 0.0
        %676 = vmatprep.subr.mxu0 0.0
        %677 = vmatpush1.msra.mxu0 0.0
        %678 = vmatprep.subr.mxu0 0.0
        %679 = vmatpush1.msra.mxu0 0.0
        %680 = vmatprep.subr.mxu0 0.0
        %681 = vmatpush1.msra.mxu0 0.0
        %682 = vmatprep.subr.mxu0 0.0
        %683 = vmatpush1.msra.mxu0 0.0
        %684 = vmatprep.subr.mxu0 0.0
        %685 = vmatpush1.msra.mxu0 0.0
        %686 = vmatprep.subr.mxu0 0.0
        %687 = vmatpush1.msra.mxu0 0.0
        %688 = vmatprep.mubr.f32.mxu0 0.0
        %689 = vmatmul.mubr.f32.gmra.mrb[0].mxu0 %v616
        %v690 = vpop.f32.mrb[0].mxu0
        %v691 = vadd.f32 %v611, %v690
        %v692 = vpop.f32.mrb[0].mxu0
        %v693 = vadd.f32 %v613, %v692
        %694 = vdwg.mxu0
        %695 = vrot.lane.b32.xlu0 %v498, 16
        %v696 = vpop.permute.xlu0 %695
        %697 = vrot.lane.b32.xlu0 %v502, 16
        %v698 = vpop.permute.xlu0 %697
        %vm699 = vcmp.lt.s32.totalorder %v509, 16
        %v700 = vsel %vm699, %v696, %v698
        %v701 = vsel %vm699, %v698, %v696
        %v702 = vlaneseq
        %v703 = vshrl.u32 %v702, 7
        %v704 = vsub.s32 1, %v703
        %v705 = vrot.slane %v494, %v704
        %v706 = vlaneseq
        %v707 = vshrl.u32 %v706, 7
        %v708 = vsub.s32 1, %v707
        %v709 = vrot.slane %v495, %v708
        %v710 = vmul.f32 %v701, %v705
        %v711 = vmul.f32 %v700, %v709
        %s712 = scalar_lea.vmem %s4, 8
        %v713 = vld [vmem:[%s712] sm:$0xff]
        %v715 = vsel %vm533, %v713, 0
        %v718 = vsel %vm537, %v710, 0
        %v721 = vsel %vm537, %v711, 0
        %723 = vmatprep.subr.mxu0 %v721
        %724 = vmatpush1.msra.mxu0 %v718
        %725 = vmatprep.subr.mxu0 0.0
        %726 = vmatpush1.msra.mxu0 0.0
        %727 = vmatprep.subr.mxu0 0.0
        %728 = vmatpush1.msra.mxu0 0.0
        %729 = vmatprep.subr.mxu0 0.0
        %730 = vmatpush1.msra.mxu0 0.0
        %731 = vmatprep.subr.mxu0 0.0
        %732 = vmatpush1.msra.mxu0 0.0
        %733 = vmatprep.subr.mxu0 0.0
        %734 = vmatpush1.msra.mxu0 0.0
        %735 = vmatprep.subr.mxu0 0.0
        %736 = vmatpush1.msra.mxu0 0.0
        %737 = vmatprep.subr.mxu0 0.0
        %738 = vmatpush1.msra.mxu0 0.0
        %739 = vmatprep.subr.mxu0 0.0
        %740 = vmatpush1.msra.mxu0 0.0
        %741 = vmatprep.subr.mxu0 0.0
        %742 = vmatpush1.msra.mxu0 0.0
        %743 = vmatprep.subr.mxu0 0.0
        %744 = vmatpush1.msra.mxu0 0.0
        %745 = vmatprep.subr.mxu0 0.0
        %746 = vmatpush1.msra.mxu0 0.0
        %747 = vmatprep.subr.mxu0 0.0
        %748 = vmatpush1.msra.mxu0 0.0
        %749 = vmatprep.subr.mxu0 0.0
        %750 = vmatpush1.msra.mxu0 0.0
        %751 = vmatprep.subr.mxu0 0.0
        %752 = vmatpush1.msra.mxu0 0.0
        %753 = vmatprep.subr.mxu0 0.0
        %754 = vmatpush1.msra.mxu0 0.0
        %755 = vmatprep.subr.mxu0 0.0
        %756 = vmatpush1.msra.mxu0 0.0
        %757 = vmatprep.subr.mxu0 0.0
        %758 = vmatpush1.msra.mxu0 0.0
        %759 = vmatprep.subr.mxu0 0.0
        %760 = vmatpush1.msra.mxu0 0.0
        %761 = vmatprep.subr.mxu0 0.0
        %762 = vmatpush1.msra.mxu0 0.0
        %763 = vmatprep.subr.mxu0 0.0
        %764 = vmatpush1.msra.mxu0 0.0
        %765 = vmatprep.subr.mxu0 0.0
        %766 = vmatpush1.msra.mxu0 0.0
        %767 = vmatprep.subr.mxu0 0.0
        %768 = vmatpush1.msra.mxu0 0.0
        %769 = vmatprep.subr.mxu0 0.0
        %770 = vmatpush1.msra.mxu0 0.0
        %771 = vmatprep.subr.mxu0 0.0
        %772 = vmatpush1.msra.mxu0 0.0
        %773 = vmatprep.subr.mxu0 0.0
        %774 = vmatpush1.msra.mxu0 0.0
        %775 = vmatprep.subr.mxu0 0.0
        %776 = vmatpush1.msra.mxu0 0.0
        %777 = vmatprep.subr.mxu0 0.0
        %778 = vmatpush1.msra.mxu0 0.0
        %779 = vmatprep.subr.mxu0 0.0
        %780 = vmatpush1.msra.mxu0 0.0
        %781 = vmatprep.subr.mxu0 0.0
        %782 = vmatpush1.msra.mxu0 0.0
        %783 = vmatprep.subr.mxu0 0.0
        %784 = vmatpush1.msra.mxu0 0.0
        %785 = vmatprep.subr.mxu0 0.0
        %786 = vmatpush1.msra.mxu0 0.0
        %787 = vmatprep.mubr.f32.mxu0 0.0
        %788 = vmatmul.mubr.f32.gmra.mrb[0].mxu0 %v715
        %v789 = vpop.f32.mrb[0].mxu0
        %v790 = vadd.f32 0.0, %v789
        %v791 = vpop.f32.mrb[0].mxu0
        %v792 = vadd.f32 0.0, %v791
        %793 = vdwg.mxu0
        %v794 = vadd.f32 %v691, %v790
        %v795 = vadd.f32 %v693, %v792
        %796 = vrot.lane.b32.xlu0 %v490, 16
        %v797 = vpop.permute.xlu0 %796
        %798 = vrot.lane.b32.xlu0 %v492, 16
        %v799 = vpop.permute.xlu0 %798
        %v800 = vsel %vm699, %v797, %v799
        %v801 = vsel %vm699, %v799, %v797
        %v802 = vmul.f32 %v801, %v705
        %v803 = vmul.f32 %v800, %v709
        %s804 = scalar_lea.vmem %s5, 8
        %v805 = vld [vmem:[%s804] sm:$0xff]
        %v807 = vsel %vm533, %v805, 0
        %v810 = vsel %vm537, %v802, 0
        %v813 = vsel %vm537, %v803, 0
        %815 = vmatprep.subr.mxu0 %v813
        %816 = vmatpush1.msra.mxu0 %v810
        %817 = vmatprep.subr.mxu0 0.0
        %818 = vmatpush1.msra.mxu0 0.0
        %819 = vmatprep.subr.mxu0 0.0
        %820 = vmatpush1.msra.mxu0 0.0
        %821 = vmatprep.subr.mxu0 0.0
        %822 = vmatpush1.msra.mxu0 0.0
        %823 = vmatprep.subr.mxu0 0.0
        %824 = vmatpush1.msra.mxu0 0.0
        %825 = vmatprep.subr.mxu0 0.0
        %826 = vmatpush1.msra.mxu0 0.0
        %827 = vmatprep.subr.mxu0 0.0
        %828 = vmatpush1.msra.mxu0 0.0
        %829 = vmatprep.subr.mxu0 0.0
        %830 = vmatpush1.msra.mxu0 0.0
        %831 = vmatprep.subr.mxu0 0.0
        %832 = vmatpush1.msra.mxu0 0.0
        %833 = vmatprep.subr.mxu0 0.0
        %834 = vmatpush1.msra.mxu0 0.0
        %835 = vmatprep.subr.mxu0 0.0
        %836 = vmatpush1.msra.mxu0 0.0
        %837 = vmatprep.subr.mxu0 0.0
        %838 = vmatpush1.msra.mxu0 0.0
        %839 = vmatprep.subr.mxu0 0.0
        %840 = vmatpush1.msra.mxu0 0.0
        %841 = vmatprep.subr.mxu0 0.0
        %842 = vmatpush1.msra.mxu0 0.0
        %843 = vmatprep.subr.mxu0 0.0
        %844 = vmatpush1.msra.mxu0 0.0
        %845 = vmatprep.subr.mxu0 0.0
        %846 = vmatpush1.msra.mxu0 0.0
        %847 = vmatprep.subr.mxu0 0.0
        %848 = vmatpush1.msra.mxu0 0.0
        %849 = vmatprep.subr.mxu0 0.0
        %850 = vmatpush1.msra.mxu0 0.0
        %851 = vmatprep.subr.mxu0 0.0
        %852 = vmatpush1.msra.mxu0 0.0
        %853 = vmatprep.subr.mxu0 0.0
        %854 = vmatpush1.msra.mxu0 0.0
        %855 = vmatprep.subr.mxu0 0.0
        %856 = vmatpush1.msra.mxu0 0.0
        %857 = vmatprep.subr.mxu0 0.0
        %858 = vmatpush1.msra.mxu0 0.0
        %859 = vmatprep.subr.mxu0 0.0
        %860 = vmatpush1.msra.mxu0 0.0
        %861 = vmatprep.subr.mxu0 0.0
        %862 = vmatpush1.msra.mxu0 0.0
        %863 = vmatprep.subr.mxu0 0.0
        %864 = vmatpush1.msra.mxu0 0.0
        %865 = vmatprep.subr.mxu0 0.0
        %866 = vmatpush1.msra.mxu0 0.0
        %867 = vmatprep.subr.mxu0 0.0
        %868 = vmatpush1.msra.mxu0 0.0
        %869 = vmatprep.subr.mxu0 0.0
        %870 = vmatpush1.msra.mxu0 0.0
        %871 = vmatprep.subr.mxu0 0.0
        %872 = vmatpush1.msra.mxu0 0.0
        %873 = vmatprep.subr.mxu0 0.0
        %874 = vmatpush1.msra.mxu0 0.0
        %875 = vmatprep.subr.mxu0 0.0
        %876 = vmatpush1.msra.mxu0 0.0
        %877 = vmatprep.subr.mxu0 0.0
        %878 = vmatpush1.msra.mxu0 0.0
        %879 = vmatprep.mubr.f32.mxu0 0.0
        %880 = vmatmul.mubr.f32.gmra.mrb[0].mxu0 %v807
        %v881 = vpop.f32.mrb[0].mxu0
        %v882 = vadd.f32 0.0, %v881
        %v883 = vpop.f32.mrb[0].mxu0
        %v884 = vadd.f32 0.0, %v883
        %885 = vdwg.mxu0
        %v886 = vadd.f32 %v794, %v882
        %v887 = vadd.f32 %v795, %v884
        %888 = vrot.lane.b32.xlu0 %v498, 15
        %v889 = vpop.permute.xlu0 %888
        %890 = vrot.lane.b32.xlu0 %v502, 15
        %v891 = vpop.permute.xlu0 %890
        %vm892 = vcmp.lt.s32.totalorder %v509, 15
        %v893 = vsel %vm892, %v889, %v891
        %v894 = vsel %vm892, %v891, %v889
        %v895 = vlaneseq
        %v896 = vshrl.u32 %v895, 7
        %v897 = vsub.s32 2, %v896
        %v898 = vrot.slane %v494, %v897
        %v899 = vlaneseq
        %v900 = vshrl.u32 %v899, 7
        %v901 = vsub.s32 2, %v900
        %v902 = vrot.slane %v495, %v901
        %v903 = vmul.f32 %v894, %v898
        %v904 = vmul.f32 %v893, %v902
        %s905 = scalar_lea.vmem %s4, 16
        %v906 = vld [vmem:[%s905] sm:$0xff]
        %v908 = vsel %vm533, %v906, 0
        %v911 = vsel %vm537, %v903, 0
        %v914 = vsel %vm537, %v904, 0
        %916 = vmatprep.subr.mxu0 %v914
        %917 = vmatpush1.msra.mxu0 %v911
        %918 = vmatprep.subr.mxu0 0.0
        %919 = vmatpush1.msra.mxu0 0.0
        %920 = vmatprep.subr.mxu0 0.0
        %921 = vmatpush1.msra.mxu0 0.0
        %922 = vmatprep.subr.mxu0 0.0
        %923 = vmatpush1.msra.mxu0 0.0
        %924 = vmatprep.subr.mxu0 0.0
        %925 = vmatpush1.msra.mxu0 0.0
        %926 = vmatprep.subr.mxu0 0.0
        %927 = vmatpush1.msra.mxu0 0.0
        %928 = vmatprep.subr.mxu0 0.0
        %929 = vmatpush1.msra.mxu0 0.0
        %930 = vmatprep.subr.mxu0 0.0
        %931 = vmatpush1.msra.mxu0 0.0
        %932 = vmatprep.subr.mxu0 0.0
        %933 = vmatpush1.msra.mxu0 0.0
        %934 = vmatprep.subr.mxu0 0.0
        %935 = vmatpush1.msra.mxu0 0.0
        %936 = vmatprep.subr.mxu0 0.0
        %937 = vmatpush1.msra.mxu0 0.0
        %938 = vmatprep.subr.mxu0 0.0
        %939 = vmatpush1.msra.mxu0 0.0
        %940 = vmatprep.subr.mxu0 0.0
        %941 = vmatpush1.msra.mxu0 0.0
        %942 = vmatprep.subr.mxu0 0.0
        %943 = vmatpush1.msra.mxu0 0.0
        %944 = vmatprep.subr.mxu0 0.0
        %945 = vmatpush1.msra.mxu0 0.0
        %946 = vmatprep.subr.mxu0 0.0
        %947 = vmatpush1.msra.mxu0 0.0
        %948 = vmatprep.subr.mxu0 0.0
        %949 = vmatpush1.msra.mxu0 0.0
        %950 = vmatprep.subr.mxu0 0.0
        %951 = vmatpush1.msra.mxu0 0.0
        %952 = vmatprep.subr.mxu0 0.0
        %953 = vmatpush1.msra.mxu0 0.0
        %954 = vmatprep.subr.mxu0 0.0
        %955 = vmatpush1.msra.mxu0 0.0
        %956 = vmatprep.subr.mxu0 0.0
        %957 = vmatpush1.msra.mxu0 0.0
        %958 = vmatprep.subr.mxu0 0.0
        %959 = vmatpush1.msra.mxu0 0.0
        %960 = vmatprep.subr.mxu0 0.0
        %961 = vmatpush1.msra.mxu0 0.0
        %962 = vmatprep.subr.mxu0 0.0
        %963 = vmatpush1.msra.mxu0 0.0
        %964 = vmatprep.subr.mxu0 0.0
        %965 = vmatpush1.msra.mxu0 0.0
        %966 = vmatprep.subr.mxu0 0.0
        %967 = vmatpush1.msra.mxu0 0.0
        %968 = vmatprep.subr.mxu0 0.0
        %969 = vmatpush1.msra.mxu0 0.0
        %970 = vmatprep.subr.mxu0 0.0
        %971 = vmatpush1.msra.mxu0 0.0
        %972 = vmatprep.subr.mxu0 0.0
        %973 = vmatpush1.msra.mxu0 0.0
        %974 = vmatprep.subr.mxu0 0.0
        %975 = vmatpush1.msra.mxu0 0.0
        %976 = vmatprep.subr.mxu0 0.0
        %977 = vmatpush1.msra.mxu0 0.0
        %978 = vmatprep.subr.mxu0 0.0
        %979 = vmatpush1.msra.mxu0 0.0
        %980 = vmatprep.mubr.f32.mxu0 0.0
        %981 = vmatmul.mubr.f32.gmra.mrb[0].mxu0 %v908
        %v982 = vpop.f32.mrb[0].mxu0
        %v983 = vadd.f32 0.0, %v982
        %v984 = vpop.f32.mrb[0].mxu0
        %v985 = vadd.f32 0.0, %v984
        %986 = vdwg.mxu0
        %v987 = vadd.f32 %v886, %v983
        %v988 = vadd.f32 %v887, %v985
        %989 = vrot.lane.b32.xlu0 %v490, 15
        %v990 = vpop.permute.xlu0 %989
        %991 = vrot.lane.b32.xlu0 %v492, 15
        %v992 = vpop.permute.xlu0 %991
        %v993 = vsel %vm892, %v990, %v992
        %v994 = vsel %vm892, %v992, %v990
        %v995 = vmul.f32 %v994, %v898
        %v996 = vmul.f32 %v993, %v902
        %s997 = scalar_lea.vmem %s5, 16
        %v998 = vld [vmem:[%s997] sm:$0xff]
        %v1000 = vsel %vm533, %v998, 0
        %v1003 = vsel %vm537, %v995, 0
        %v1006 = vsel %vm537, %v996, 0
        %1008 = vmatprep.subr.mxu0 %v1006
        %1009 = vmatpush1.msra.mxu0 %v1003
        %1010 = vmatprep.subr.mxu0 0.0
        %1011 = vmatpush1.msra.mxu0 0.0
        %1012 = vmatprep.subr.mxu0 0.0
        %1013 = vmatpush1.msra.mxu0 0.0
        %1014 = vmatprep.subr.mxu0 0.0
        %1015 = vmatpush1.msra.mxu0 0.0
        %1016 = vmatprep.subr.mxu0 0.0
        %1017 = vmatpush1.msra.mxu0 0.0
        %1018 = vmatprep.subr.mxu0 0.0
        %1019 = vmatpush1.msra.mxu0 0.0
        %1020 = vmatprep.subr.mxu0 0.0
        %1021 = vmatpush1.msra.mxu0 0.0
        %1022 = vmatprep.subr.mxu0 0.0
        %1023 = vmatpush1.msra.mxu0 0.0
        %1024 = vmatprep.subr.mxu0 0.0
        %1025 = vmatpush1.msra.mxu0 0.0
        %1026 = vmatprep.subr.mxu0 0.0
        %1027 = vmatpush1.msra.mxu0 0.0
        %1028 = vmatprep.subr.mxu0 0.0
        %1029 = vmatpush1.msra.mxu0 0.0
        %1030 = vmatprep.subr.mxu0 0.0
        %1031 = vmatpush1.msra.mxu0 0.0
        %1032 = vmatprep.subr.mxu0 0.0
        %1033 = vmatpush1.msra.mxu0 0.0
        %1034 = vmatprep.subr.mxu0 0.0
        %1035 = vmatpush1.msra.mxu0 0.0
        %1036 = vmatprep.subr.mxu0 0.0
        %1037 = vmatpush1.msra.mxu0 0.0
        %1038 = vmatprep.subr.mxu0 0.0
        %1039 = vmatpush1.msra.mxu0 0.0
        %1040 = vmatprep.subr.mxu0 0.0
        %1041 = vmatpush1.msra.mxu0 0.0
        %1042 = vmatprep.subr.mxu0 0.0
        %1043 = vmatpush1.msra.mxu0 0.0
        %1044 = vmatprep.subr.mxu0 0.0
        %1045 = vmatpush1.msra.mxu0 0.0
        %1046 = vmatprep.subr.mxu0 0.0
        %1047 = vmatpush1.msra.mxu0 0.0
        %1048 = vmatprep.subr.mxu0 0.0
        %1049 = vmatpush1.msra.mxu0 0.0
        %1050 = vmatprep.subr.mxu0 0.0
        %1051 = vmatpush1.msra.mxu0 0.0
        %1052 = vmatprep.subr.mxu0 0.0
        %1053 = vmatpush1.msra.mxu0 0.0
        %1054 = vmatprep.subr.mxu0 0.0
        %1055 = vmatpush1.msra.mxu0 0.0
        %1056 = vmatprep.subr.mxu0 0.0
        %1057 = vmatpush1.msra.mxu0 0.0
        %1058 = vmatprep.subr.mxu0 0.0
        %1059 = vmatpush1.msra.mxu0 0.0
        %1060 = vmatprep.subr.mxu0 0.0
        %1061 = vmatpush1.msra.mxu0 0.0
        %1062 = vmatprep.subr.mxu0 0.0
        %1063 = vmatpush1.msra.mxu0 0.0
        %1064 = vmatprep.subr.mxu0 0.0
        %1065 = vmatpush1.msra.mxu0 0.0
        %1066 = vmatprep.subr.mxu0 0.0
        %1067 = vmatpush1.msra.mxu0 0.0
        %1068 = vmatprep.subr.mxu0 0.0
        %1069 = vmatpush1.msra.mxu0 0.0
        %1070 = vmatprep.subr.mxu0 0.0
        %1071 = vmatpush1.msra.mxu0 0.0
        %1072 = vmatprep.mubr.f32.mxu0 0.0
        %1073 = vmatmul.mubr.f32.gmra.mrb[0].mxu0 %v1000
        %v1074 = vpop.f32.mrb[0].mxu0
        %v1075 = vadd.f32 0.0, %v1074
        %v1076 = vpop.f32.mrb[0].mxu0
        %v1077 = vadd.f32 0.0, %v1076
        %1078 = vdwg.mxu0
        %v1079 = vadd.f32 %v987, %v1075
        %v1080 = vadd.f32 %v988, %v1077
        %1081 = vrot.lane.b32.xlu0 %v498, 1
        %v1082 = vpop.permute.xlu0 %1081
        %1083 = vrot.lane.b32.xlu0 %v502, 1
        %v1084 = vpop.permute.xlu0 %1083
        %vm1085 = vcmp.lt.s32.totalorder %v509, 1
        %v1086 = vsel %vm1085, %v1082, %v1084
        %v1087 = vsel %vm1085, %v1084, %v1082
        %v1088 = vlaneseq
        %v1089 = vshrl.u32 %v1088, 7
        %v1090 = vsub.s32 3, %v1089
        %v1091 = vrot.slane %v494, %v1090
        %v1092 = vlaneseq
        %v1093 = vshrl.u32 %v1092, 7
        %v1094 = vsub.s32 3, %v1093
        %v1095 = vrot.slane %v495, %v1094
        %v1096 = vmul.f32 %v1087, %v1091
        %v1097 = vmul.f32 %v1086, %v1095
        %s1098 = scalar_lea.vmem %s4, 24
        %v1099 = vld [vmem:[%s1098] sm:$0xff]
        %v1101 = vsel %vm533, %v1099, 0
        %v1104 = vsel %vm537, %v1096, 0
        %v1107 = vsel %vm537, %v1097, 0
        %1109 = vmatprep.subr.mxu0 %v1107
        %1110 = vmatpush1.msra.mxu0 %v1104
        %1111 = vmatprep.subr.mxu0 0.0
        %1112 = vmatpush1.msra.mxu0 0.0
        %1113 = vmatprep.subr.mxu0 0.0
        %1114 = vmatpush1.msra.mxu0 0.0
        %1115 = vmatprep.subr.mxu0 0.0
        %1116 = vmatpush1.msra.mxu0 0.0
        %1117 = vmatprep.subr.mxu0 0.0
        %1118 = vmatpush1.msra.mxu0 0.0
        %1119 = vmatprep.subr.mxu0 0.0
        %1120 = vmatpush1.msra.mxu0 0.0
        %1121 = vmatprep.subr.mxu0 0.0
        %1122 = vmatpush1.msra.mxu0 0.0
        %1123 = vmatprep.subr.mxu0 0.0
        %1124 = vmatpush1.msra.mxu0 0.0
        %1125 = vmatprep.subr.mxu0 0.0
        %1126 = vmatpush1.msra.mxu0 0.0
        %1127 = vmatprep.subr.mxu0 0.0
        %1128 = vmatpush1.msra.mxu0 0.0
        %1129 = vmatprep.subr.mxu0 0.0
        %1130 = vmatpush1.msra.mxu0 0.0
        %1131 = vmatprep.subr.mxu0 0.0
        %1132 = vmatpush1.msra.mxu0 0.0
        %1133 = vmatprep.subr.mxu0 0.0
        %1134 = vmatpush1.msra.mxu0 0.0
        %1135 = vmatprep.subr.mxu0 0.0
        %1136 = vmatpush1.msra.mxu0 0.0
        %1137 = vmatprep.subr.mxu0 0.0
        %1138 = vmatpush1.msra.mxu0 0.0
        %1139 = vmatprep.subr.mxu0 0.0
        %1140 = vmatpush1.msra.mxu0 0.0
        %1141 = vmatprep.subr.mxu0 0.0
        %1142 = vmatpush1.msra.mxu0 0.0
        %1143 = vmatprep.subr.mxu0 0.0
        %1144 = vmatpush1.msra.mxu0 0.0
        %1145 = vmatprep.subr.mxu0 0.0
        %1146 = vmatpush1.msra.mxu0 0.0
        %1147 = vmatprep.subr.mxu0 0.0
        %1148 = vmatpush1.msra.mxu0 0.0
        %1149 = vmatprep.subr.mxu0 0.0
        %1150 = vmatpush1.msra.mxu0 0.0
        %1151 = vmatprep.subr.mxu0 0.0
        %1152 = vmatpush1.msra.mxu0 0.0
        %1153 = vmatprep.subr.mxu0 0.0
        %1154 = vmatpush1.msra.mxu0 0.0
        %1155 = vmatprep.subr.mxu0 0.0
        %1156 = vmatpush1.msra.mxu0 0.0
        %1157 = vmatprep.subr.mxu0 0.0
        %1158 = vmatpush1.msra.mxu0 0.0
        %1159 = vmatprep.subr.mxu0 0.0
        %1160 = vmatpush1.msra.mxu0 0.0
        %1161 = vmatprep.subr.mxu0 0.0
        %1162 = vmatpush1.msra.mxu0 0.0
        %1163 = vmatprep.subr.mxu0 0.0
        %1164 = vmatpush1.msra.mxu0 0.0
        %1165 = vmatprep.subr.mxu0 0.0
        %1166 = vmatpush1.msra.mxu0 0.0
        %1167 = vmatprep.subr.mxu0 0.0
        %1168 = vmatpush1.msra.mxu0 0.0
        %1169 = vmatprep.subr.mxu0 0.0
        %1170 = vmatpush1.msra.mxu0 0.0
        %1171 = vmatprep.subr.mxu0 0.0
        %1172 = vmatpush1.msra.mxu0 0.0
        %1173 = vmatprep.mubr.f32.mxu0 0.0
        %1174 = vmatmul.mubr.f32.gmra.mrb[0].mxu0 %v1101
        %v1175 = vpop.f32.mrb[0].mxu0
        %v1176 = vadd.f32 0.0, %v1175
        %v1177 = vpop.f32.mrb[0].mxu0
        %v1178 = vadd.f32 0.0, %v1177
        %1179 = vdwg.mxu0
        %v1180 = vadd.f32 %v1079, %v1176
        %v1181 = vadd.f32 %v1080, %v1178
        %1182 = vrot.lane.b32.xlu0 %v490, 1
        %v1183 = vpop.permute.xlu0 %1182
        %1184 = vrot.lane.b32.xlu0 %v492, 1
        %v1185 = vpop.permute.xlu0 %1184
        %v1186 = vsel %vm1085, %v1183, %v1185
        %v1187 = vsel %vm1085, %v1185, %v1183
        %v1188 = vmul.f32 %v1187, %v1091
        %v1189 = vmul.f32 %v1186, %v1095
        %s1190 = scalar_lea.vmem %s5, 24
        %v1191 = vld [vmem:[%s1190] sm:$0xff]
        %v1193 = vsel %vm533, %v1191, 0
        %v1196 = vsel %vm537, %v1188, 0
        %v1199 = vsel %vm537, %v1189, 0
        %1201 = vmatprep.subr.mxu0 %v1199
        %1202 = vmatpush1.msra.mxu0 %v1196
        %1203 = vmatprep.subr.mxu0 0.0
        %1204 = vmatpush1.msra.mxu0 0.0
        %1205 = vmatprep.subr.mxu0 0.0
        %1206 = vmatpush1.msra.mxu0 0.0
        %1207 = vmatprep.subr.mxu0 0.0
        %1208 = vmatpush1.msra.mxu0 0.0
        %1209 = vmatprep.subr.mxu0 0.0
        %1210 = vmatpush1.msra.mxu0 0.0
        %1211 = vmatprep.subr.mxu0 0.0
        %1212 = vmatpush1.msra.mxu0 0.0
        %1213 = vmatprep.subr.mxu0 0.0
        %1214 = vmatpush1.msra.mxu0 0.0
        %1215 = vmatprep.subr.mxu0 0.0
        %1216 = vmatpush1.msra.mxu0 0.0
        %1217 = vmatprep.subr.mxu0 0.0
        %1218 = vmatpush1.msra.mxu0 0.0
        %1219 = vmatprep.subr.mxu0 0.0
        %1220 = vmatpush1.msra.mxu0 0.0
        %1221 = vmatprep.subr.mxu0 0.0
        %1222 = vmatpush1.msra.mxu0 0.0
        %1223 = vmatprep.subr.mxu0 0.0
        %1224 = vmatpush1.msra.mxu0 0.0
        %1225 = vmatprep.subr.mxu0 0.0
        %1226 = vmatpush1.msra.mxu0 0.0
        %1227 = vmatprep.subr.mxu0 0.0
        %1228 = vmatpush1.msra.mxu0 0.0
        %1229 = vmatprep.subr.mxu0 0.0
        %1230 = vmatpush1.msra.mxu0 0.0
        %1231 = vmatprep.subr.mxu0 0.0
        %1232 = vmatpush1.msra.mxu0 0.0
        %1233 = vmatprep.subr.mxu0 0.0
        %1234 = vmatpush1.msra.mxu0 0.0
        %1235 = vmatprep.subr.mxu0 0.0
        %1236 = vmatpush1.msra.mxu0 0.0
        %1237 = vmatprep.subr.mxu0 0.0
        %1238 = vmatpush1.msra.mxu0 0.0
        %1239 = vmatprep.subr.mxu0 0.0
        %1240 = vmatpush1.msra.mxu0 0.0
        %1241 = vmatprep.subr.mxu0 0.0
        %1242 = vmatpush1.msra.mxu0 0.0
        %1243 = vmatprep.subr.mxu0 0.0
        %1244 = vmatpush1.msra.mxu0 0.0
        %1245 = vmatprep.subr.mxu0 0.0
        %1246 = vmatpush1.msra.mxu0 0.0
        %1247 = vmatprep.subr.mxu0 0.0
        %1248 = vmatpush1.msra.mxu0 0.0
        %1249 = vmatprep.subr.mxu0 0.0
        %1250 = vmatpush1.msra.mxu0 0.0
        %1251 = vmatprep.subr.mxu0 0.0
        %1252 = vmatpush1.msra.mxu0 0.0
        %1253 = vmatprep.subr.mxu0 0.0
        %1254 = vmatpush1.msra.mxu0 0.0
        %1255 = vmatprep.subr.mxu0 0.0
        %1256 = vmatpush1.msra.mxu0 0.0
        %1257 = vmatprep.subr.mxu0 0.0
        %1258 = vmatpush1.msra.mxu0 0.0
        %1259 = vmatprep.subr.mxu0 0.0
        %1260 = vmatpush1.msra.mxu0 0.0
        %1261 = vmatprep.subr.mxu0 0.0
        %1262 = vmatpush1.msra.mxu0 0.0
        %1263 = vmatprep.subr.mxu0 0.0
        %1264 = vmatpush1.msra.mxu0 0.0
        %1265 = vmatprep.mubr.f32.mxu0 0.0
        %1266 = vmatmul.mubr.f32.gmra.mrb[0].mxu0 %v1193
        %v1267 = vpop.f32.mrb[0].mxu0
        %v1268 = vadd.f32 0.0, %v1267
        %v1269 = vpop.f32.mrb[0].mxu0
        %v1270 = vadd.f32 0.0, %v1269
        %1271 = vdwg.mxu0
        %v1272 = vadd.f32 %v1180, %v1268
        %v1273 = vadd.f32 %v1181, %v1270
        %s1274 = scalar_lea.vmem %s4, 32
        %v1275 = vld [vmem:[%s1274] sm:$0xff]
        %v1277 = vsel %vm533, %v1275, 0
        %v1279 = vsel %vm537, %v498, 0
        %v1281 = vsel %vm537, %v502, 0
        %1283 = vmatprep.subr.mxu0 %v1281
        %1284 = vmatpush1.msra.mxu0 %v1279
        %1285 = vmatprep.subr.mxu0 0.0
        %1286 = vmatpush1.msra.mxu0 0.0
        %1287 = vmatprep.subr.mxu0 0.0
        %1288 = vmatpush1.msra.mxu0 0.0
        %1289 = vmatprep.subr.mxu0 0.0
        %1290 = vmatpush1.msra.mxu0 0.0
        %1291 = vmatprep.subr.mxu0 0.0
        %1292 = vmatpush1.msra.mxu0 0.0
        %1293 = vmatprep.subr.mxu0 0.0
        %1294 = vmatpush1.msra.mxu0 0.0
        %1295 = vmatprep.subr.mxu0 0.0
        %1296 = vmatpush1.msra.mxu0 0.0
        %1297 = vmatprep.subr.mxu0 0.0
        %1298 = vmatpush1.msra.mxu0 0.0
        %1299 = vmatprep.subr.mxu0 0.0
        %1300 = vmatpush1.msra.mxu0 0.0
        %1301 = vmatprep.subr.mxu0 0.0
        %1302 = vmatpush1.msra.mxu0 0.0
        %1303 = vmatprep.subr.mxu0 0.0
        %1304 = vmatpush1.msra.mxu0 0.0
        %1305 = vmatprep.subr.mxu0 0.0
        %1306 = vmatpush1.msra.mxu0 0.0
        %1307 = vmatprep.subr.mxu0 0.0
        %1308 = vmatpush1.msra.mxu0 0.0
        %1309 = vmatprep.subr.mxu0 0.0
        %1310 = vmatpush1.msra.mxu0 0.0
        %1311 = vmatprep.subr.mxu0 0.0
        %1312 = vmatpush1.msra.mxu0 0.0
        %1313 = vmatprep.subr.mxu0 0.0
        %1314 = vmatpush1.msra.mxu0 0.0
        %1315 = vmatprep.subr.mxu0 0.0
        %1316 = vmatpush1.msra.mxu0 0.0
        %1317 = vmatprep.subr.mxu0 0.0
        %1318 = vmatpush1.msra.mxu0 0.0
        %1319 = vmatprep.subr.mxu0 0.0
        %1320 = vmatpush1.msra.mxu0 0.0
        %1321 = vmatprep.subr.mxu0 0.0
        %1322 = vmatpush1.msra.mxu0 0.0
        %1323 = vmatprep.subr.mxu0 0.0
        %1324 = vmatpush1.msra.mxu0 0.0
        %1325 = vmatprep.subr.mxu0 0.0
        %1326 = vmatpush1.msra.mxu0 0.0
        %1327 = vmatprep.subr.mxu0 0.0
        %1328 = vmatpush1.msra.mxu0 0.0
        %1329 = vmatprep.subr.mxu0 0.0
        %1330 = vmatpush1.msra.mxu0 0.0
        %1331 = vmatprep.subr.mxu0 0.0
        %1332 = vmatpush1.msra.mxu0 0.0
        %1333 = vmatprep.subr.mxu0 0.0
        %1334 = vmatpush1.msra.mxu0 0.0
        %1335 = vmatprep.subr.mxu0 0.0
        %1336 = vmatpush1.msra.mxu0 0.0
        %1337 = vmatprep.subr.mxu0 0.0
        %1338 = vmatpush1.msra.mxu0 0.0
        %1339 = vmatprep.subr.mxu0 0.0
        %1340 = vmatpush1.msra.mxu0 0.0
        %1341 = vmatprep.subr.mxu0 0.0
        %1342 = vmatpush1.msra.mxu0 0.0
        %1343 = vmatprep.subr.mxu0 0.0
        %1344 = vmatpush1.msra.mxu0 0.0
        %1345 = vmatprep.subr.mxu0 0.0
        %1346 = vmatpush1.msra.mxu0 0.0
        %1347 = vmatprep.mubr.f32.mxu0 0.0
        %1348 = vmatmul.mubr.f32.gmra.mrb[0].mxu0 %v1277
        %v1349 = vpop.f32.mrb[0].mxu0
        %v1350 = vadd.f32 0.0, %v1349
        %v1351 = vpop.f32.mrb[0].mxu0
        %v1352 = vadd.f32 0.0, %v1351
        %1353 = vdwg.mxu0
        %v1354 = vadd.f32 %v1272, %v1350
        %v1355 = vadd.f32 %v1273, %v1352
        %s1356 = scalar_lea.vmem %s5, 32
        %v1357 = vld [vmem:[%s1356] sm:$0xff]
        %v1359 = vsel %vm533, %v1357, 0
        %v1362 = vsel %vm537, %v490, 0
        %v1365 = vsel %vm537, %v492, 0
        %1367 = vmatprep.subr.mxu0 %v1365
        %1368 = vmatpush1.msra.mxu0 %v1362
        %1369 = vmatprep.subr.mxu0 0.0
        %1370 = vmatpush1.msra.mxu0 0.0
        %1371 = vmatprep.subr.mxu0 0.0
        %1372 = vmatpush1.msra.mxu0 0.0
        %1373 = vmatprep.subr.mxu0 0.0
        %1374 = vmatpush1.msra.mxu0 0.0
        %1375 = vmatprep.subr.mxu0 0.0
        %1376 = vmatpush1.msra.mxu0 0.0
        %1377 = vmatprep.subr.mxu0 0.0
        %1378 = vmatpush1.msra.mxu0 0.0
        %1379 = vmatprep.subr.mxu0 0.0
        %1380 = vmatpush1.msra.mxu0 0.0
        %1381 = vmatprep.subr.mxu0 0.0
        %1382 = vmatpush1.msra.mxu0 0.0
        %1383 = vmatprep.subr.mxu0 0.0
        %1384 = vmatpush1.msra.mxu0 0.0
        %1385 = vmatprep.subr.mxu0 0.0
        %1386 = vmatpush1.msra.mxu0 0.0
        %1387 = vmatprep.subr.mxu0 0.0
        %1388 = vmatpush1.msra.mxu0 0.0
        %1389 = vmatprep.subr.mxu0 0.0
        %1390 = vmatpush1.msra.mxu0 0.0
        %1391 = vmatprep.subr.mxu0 0.0
        %1392 = vmatpush1.msra.mxu0 0.0
        %1393 = vmatprep.subr.mxu0 0.0
        %1394 = vmatpush1.msra.mxu0 0.0
        %1395 = vmatprep.subr.mxu0 0.0
        %1396 = vmatpush1.msra.mxu0 0.0
        %1397 = vmatprep.subr.mxu0 0.0
        %1398 = vmatpush1.msra.mxu0 0.0
        %1399 = vmatprep.subr.mxu0 0.0
        %1400 = vmatpush1.msra.mxu0 0.0
        %1401 = vmatprep.subr.mxu0 0.0
        %1402 = vmatpush1.msra.mxu0 0.0
        %1403 = vmatprep.subr.mxu0 0.0
        %1404 = vmatpush1.msra.mxu0 0.0
        %1405 = vmatprep.subr.mxu0 0.0
        %1406 = vmatpush1.msra.mxu0 0.0
        %1407 = vmatprep.subr.mxu0 0.0
        %1408 = vmatpush1.msra.mxu0 0.0
        %1409 = vmatprep.subr.mxu0 0.0
        %1410 = vmatpush1.msra.mxu0 0.0
        %1411 = vmatprep.subr.mxu0 0.0
        %1412 = vmatpush1.msra.mxu0 0.0
        %1413 = vmatprep.subr.mxu0 0.0
        %1414 = vmatpush1.msra.mxu0 0.0
        %1415 = vmatprep.subr.mxu0 0.0
        %1416 = vmatpush1.msra.mxu0 0.0
        %1417 = vmatprep.subr.mxu0 0.0
        %1418 = vmatpush1.msra.mxu0 0.0
        %1419 = vmatprep.subr.mxu0 0.0
        %1420 = vmatpush1.msra.mxu0 0.0
        %1421 = vmatprep.subr.mxu0 0.0
        %1422 = vmatpush1.msra.mxu0 0.0
        %1423 = vmatprep.subr.mxu0 0.0
        %1424 = vmatpush1.msra.mxu0 0.0
        %1425 = vmatprep.subr.mxu0 0.0
        %1426 = vmatpush1.msra.mxu0 0.0
        %1427 = vmatprep.subr.mxu0 0.0
        %1428 = vmatpush1.msra.mxu0 0.0
        %1429 = vmatprep.subr.mxu0 0.0
        %1430 = vmatpush1.msra.mxu0 0.0
        %1431 = vmatprep.mubr.f32.mxu0 0.0
        %1432 = vmatmul.mubr.f32.gmra.mrb[0].mxu0 %v1359
        %v1433 = vpop.f32.mrb[0].mxu0
        %v1434 = vadd.f32 0.0, %v1433
        %v1435 = vpop.f32.mrb[0].mxu0
        %v1436 = vadd.f32 0.0, %v1435
        %1437 = vdwg.mxu0
        %v1438 = vadd.f32 %v1354, %v1434
        %v1439 = vadd.f32 %v1355, %v1436
        %1440 = vrot.lane.b32.xlu0 %v498, 127
        %v1441 = vpop.permute.xlu0 %1440
        %1442 = vrot.lane.b32.xlu0 %v502, 127
        %v1443 = vpop.permute.xlu0 %1442
        %vm1444 = vcmp.lt.s32.totalorder %v509, 127
        %v1445 = vsel %vm1444, %v1441, %v1443
        %v1446 = vsel %vm1444, %v1443, %v1441
        %v1447 = vlaneseq
        %v1448 = vshrl.u32 %v1447, 7
        %v1449 = vsub.s32 5, %v1448
        %v1450 = vrot.slane %v494, %v1449
        %v1451 = vlaneseq
        %v1452 = vshrl.u32 %v1451, 7
        %v1453 = vsub.s32 5, %v1452
        %v1454 = vrot.slane %v495, %v1453
        %v1455 = vmul.f32 %v1445, %v1450
        %v1456 = vmul.f32 %v1446, %v1454
        %s1457 = scalar_lea.vmem %s4, 40
        %v1458 = vld [vmem:[%s1457] sm:$0xff]
        %v1460 = vsel %vm533, %v1458, 0
        %v1463 = vsel %vm537, %v1455, 0
        %v1466 = vsel %vm537, %v1456, 0
        %1468 = vmatprep.subr.mxu0 %v1466
        %1469 = vmatpush1.msra.mxu0 %v1463
        %1470 = vmatprep.subr.mxu0 0.0
        %1471 = vmatpush1.msra.mxu0 0.0
        %1472 = vmatprep.subr.mxu0 0.0
        %1473 = vmatpush1.msra.mxu0 0.0
        %1474 = vmatprep.subr.mxu0 0.0
        %1475 = vmatpush1.msra.mxu0 0.0
        %1476 = vmatprep.subr.mxu0 0.0
        %1477 = vmatpush1.msra.mxu0 0.0
        %1478 = vmatprep.subr.mxu0 0.0
        %1479 = vmatpush1.msra.mxu0 0.0
        %1480 = vmatprep.subr.mxu0 0.0
        %1481 = vmatpush1.msra.mxu0 0.0
        %1482 = vmatprep.subr.mxu0 0.0
        %1483 = vmatpush1.msra.mxu0 0.0
        %1484 = vmatprep.subr.mxu0 0.0
        %1485 = vmatpush1.msra.mxu0 0.0
        %1486 = vmatprep.subr.mxu0 0.0
        %1487 = vmatpush1.msra.mxu0 0.0
        %1488 = vmatprep.subr.mxu0 0.0
        %1489 = vmatpush1.msra.mxu0 0.0
        %1490 = vmatprep.subr.mxu0 0.0
        %1491 = vmatpush1.msra.mxu0 0.0
        %1492 = vmatprep.subr.mxu0 0.0
        %1493 = vmatpush1.msra.mxu0 0.0
        %1494 = vmatprep.subr.mxu0 0.0
        %1495 = vmatpush1.msra.mxu0 0.0
        %1496 = vmatprep.subr.mxu0 0.0
        %1497 = vmatpush1.msra.mxu0 0.0
        %1498 = vmatprep.subr.mxu0 0.0
        %1499 = vmatpush1.msra.mxu0 0.0
        %1500 = vmatprep.subr.mxu0 0.0
        %1501 = vmatpush1.msra.mxu0 0.0
        %1502 = vmatprep.subr.mxu0 0.0
        %1503 = vmatpush1.msra.mxu0 0.0
        %1504 = vmatprep.subr.mxu0 0.0
        %1505 = vmatpush1.msra.mxu0 0.0
        %1506 = vmatprep.subr.mxu0 0.0
        %1507 = vmatpush1.msra.mxu0 0.0
        %1508 = vmatprep.subr.mxu0 0.0
        %1509 = vmatpush1.msra.mxu0 0.0
        %1510 = vmatprep.subr.mxu0 0.0
        %1511 = vmatpush1.msra.mxu0 0.0
        %1512 = vmatprep.subr.mxu0 0.0
        %1513 = vmatpush1.msra.mxu0 0.0
        %1514 = vmatprep.subr.mxu0 0.0
        %1515 = vmatpush1.msra.mxu0 0.0
        %1516 = vmatprep.subr.mxu0 0.0
        %1517 = vmatpush1.msra.mxu0 0.0
        %1518 = vmatprep.subr.mxu0 0.0
        %1519 = vmatpush1.msra.mxu0 0.0
        %1520 = vmatprep.subr.mxu0 0.0
        %1521 = vmatpush1.msra.mxu0 0.0
        %1522 = vmatprep.subr.mxu0 0.0
        %1523 = vmatpush1.msra.mxu0 0.0
        %1524 = vmatprep.subr.mxu0 0.0
        %1525 = vmatpush1.msra.mxu0 0.0
        %1526 = vmatprep.subr.mxu0 0.0
        %1527 = vmatpush1.msra.mxu0 0.0
        %1528 = vmatprep.subr.mxu0 0.0
        %1529 = vmatpush1.msra.mxu0 0.0
        %1530 = vmatprep.subr.mxu0 0.0
        %1531 = vmatpush1.msra.mxu0 0.0
        %1532 = vmatprep.mubr.f32.mxu0 0.0
        %1533 = vmatmul.mubr.f32.gmra.mrb[0].mxu0 %v1460
        %v1534 = vpop.f32.mrb[0].mxu0
        %v1535 = vadd.f32 0.0, %v1534
        %v1536 = vpop.f32.mrb[0].mxu0
        %v1537 = vadd.f32 0.0, %v1536
        %1538 = vdwg.mxu0
        %v1539 = vadd.f32 %v1438, %v1535
        %v1540 = vadd.f32 %v1439, %v1537
        %1541 = vrot.lane.b32.xlu0 %v490, 127
        %v1542 = vpop.permute.xlu0 %1541
        %1543 = vrot.lane.b32.xlu0 %v492, 127
        %v1544 = vpop.permute.xlu0 %1543
        %v1545 = vsel %vm1444, %v1542, %v1544
        %v1546 = vsel %vm1444, %v1544, %v1542
        %v1547 = vmul.f32 %v1545, %v1450
        %v1548 = vmul.f32 %v1546, %v1454
        %s1549 = scalar_lea.vmem %s5, 40
        %v1550 = vld [vmem:[%s1549] sm:$0xff]
        %v1552 = vsel %vm533, %v1550, 0
        %v1555 = vsel %vm537, %v1547, 0
        %v1558 = vsel %vm537, %v1548, 0
        %1560 = vmatprep.subr.mxu0 %v1558
        %1561 = vmatpush1.msra.mxu0 %v1555
        %1562 = vmatprep.subr.mxu0 0.0
        %1563 = vmatpush1.msra.mxu0 0.0
        %1564 = vmatprep.subr.mxu0 0.0
        %1565 = vmatpush1.msra.mxu0 0.0
        %1566 = vmatprep.subr.mxu0 0.0
        %1567 = vmatpush1.msra.mxu0 0.0
        %1568 = vmatprep.subr.mxu0 0.0
        %1569 = vmatpush1.msra.mxu0 0.0
        %1570 = vmatprep.subr.mxu0 0.0
        %1571 = vmatpush1.msra.mxu0 0.0
        %1572 = vmatprep.subr.mxu0 0.0
        %1573 = vmatpush1.msra.mxu0 0.0
        %1574 = vmatprep.subr.mxu0 0.0
        %1575 = vmatpush1.msra.mxu0 0.0
        %1576 = vmatprep.subr.mxu0 0.0
        %1577 = vmatpush1.msra.mxu0 0.0
        %1578 = vmatprep.subr.mxu0 0.0
        %1579 = vmatpush1.msra.mxu0 0.0
        %1580 = vmatprep.subr.mxu0 0.0
        %1581 = vmatpush1.msra.mxu0 0.0
        %1582 = vmatprep.subr.mxu0 0.0
        %1583 = vmatpush1.msra.mxu0 0.0
        %1584 = vmatprep.subr.mxu0 0.0
        %1585 = vmatpush1.msra.mxu0 0.0
        %1586 = vmatprep.subr.mxu0 0.0
        %1587 = vmatpush1.msra.mxu0 0.0
        %1588 = vmatprep.subr.mxu0 0.0
        %1589 = vmatpush1.msra.mxu0 0.0
        %1590 = vmatprep.subr.mxu0 0.0
        %1591 = vmatpush1.msra.mxu0 0.0
        %1592 = vmatprep.subr.mxu0 0.0
        %1593 = vmatpush1.msra.mxu0 0.0
        %1594 = vmatprep.subr.mxu0 0.0
        %1595 = vmatpush1.msra.mxu0 0.0
        %1596 = vmatprep.subr.mxu0 0.0
        %1597 = vmatpush1.msra.mxu0 0.0
        %1598 = vmatprep.subr.mxu0 0.0
        %1599 = vmatpush1.msra.mxu0 0.0
        %1600 = vmatprep.subr.mxu0 0.0
        %1601 = vmatpush1.msra.mxu0 0.0
        %1602 = vmatprep.subr.mxu0 0.0
        %1603 = vmatpush1.msra.mxu0 0.0
        %1604 = vmatprep.subr.mxu0 0.0
        %1605 = vmatpush1.msra.mxu0 0.0
        %1606 = vmatprep.subr.mxu0 0.0
        %1607 = vmatpush1.msra.mxu0 0.0
        %1608 = vmatprep.subr.mxu0 0.0
        %1609 = vmatpush1.msra.mxu0 0.0
        %1610 = vmatprep.subr.mxu0 0.0
        %1611 = vmatpush1.msra.mxu0 0.0
        %1612 = vmatprep.subr.mxu0 0.0
        %1613 = vmatpush1.msra.mxu0 0.0
        %1614 = vmatprep.subr.mxu0 0.0
        %1615 = vmatpush1.msra.mxu0 0.0
        %1616 = vmatprep.subr.mxu0 0.0
        %1617 = vmatpush1.msra.mxu0 0.0
        %1618 = vmatprep.subr.mxu0 0.0
        %1619 = vmatpush1.msra.mxu0 0.0
        %1620 = vmatprep.subr.mxu0 0.0
        %1621 = vmatpush1.msra.mxu0 0.0
        %1622 = vmatprep.subr.mxu0 0.0
        %1623 = vmatpush1.msra.mxu0 0.0
        %1624 = vmatprep.mubr.f32.mxu0 0.0
        %1625 = vmatmul.mubr.f32.gmra.mrb[0].mxu0 %v1552
        %v1626 = vpop.f32.mrb[0].mxu0
        %v1627 = vadd.f32 0.0, %v1626
        %v1628 = vpop.f32.mrb[0].mxu0
        %v1629 = vadd.f32 0.0, %v1628
        %1630 = vdwg.mxu0
        %v1631 = vadd.f32 %v1539, %v1627
        %v1632 = vadd.f32 %v1540, %v1629
        %1633 = vrot.lane.b32.xlu0 %v498, 113
        %v1634 = vpop.permute.xlu0 %1633
        %1635 = vrot.lane.b32.xlu0 %v502, 113
        %v1636 = vpop.permute.xlu0 %1635
        %vm1637 = vcmp.lt.s32.totalorder %v509, 113
        %v1638 = vsel %vm1637, %v1634, %v1636
        %v1639 = vsel %vm1637, %v1636, %v1634
        %v1640 = vlaneseq
        %v1641 = vshrl.u32 %v1640, 7
        %v1642 = vsub.s32 6, %v1641
        %v1643 = vrot.slane %v494, %v1642
        %v1644 = vlaneseq
        %v1645 = vshrl.u32 %v1644, 7
        %v1646 = vsub.s32 6, %v1645
        %v1647 = vrot.slane %v495, %v1646
        %v1648 = vmul.f32 %v1638, %v1643
        %v1649 = vmul.f32 %v1639, %v1647
        %s1650 = scalar_lea.vmem %s4, 48
        %v1651 = vld [vmem:[%s1650] sm:$0xff]
        %v1653 = vsel %vm533, %v1651, 0
        %v1656 = vsel %vm537, %v1648, 0
        %v1659 = vsel %vm537, %v1649, 0
        %1661 = vmatprep.subr.mxu0 %v1659
        %1662 = vmatpush1.msra.mxu0 %v1656
        %1663 = vmatprep.subr.mxu0 0.0
        %1664 = vmatpush1.msra.mxu0 0.0
        %1665 = vmatprep.subr.mxu0 0.0
        %1666 = vmatpush1.msra.mxu0 0.0
        %1667 = vmatprep.subr.mxu0 0.0
        %1668 = vmatpush1.msra.mxu0 0.0
        %1669 = vmatprep.subr.mxu0 0.0
        %1670 = vmatpush1.msra.mxu0 0.0
        %1671 = vmatprep.subr.mxu0 0.0
        %1672 = vmatpush1.msra.mxu0 0.0
        %1673 = vmatprep.subr.mxu0 0.0
        %1674 = vmatpush1.msra.mxu0 0.0
        %1675 = vmatprep.subr.mxu0 0.0
        %1676 = vmatpush1.msra.mxu0 0.0
        %1677 = vmatprep.subr.mxu0 0.0
        %1678 = vmatpush1.msra.mxu0 0.0
        %1679 = vmatprep.subr.mxu0 0.0
        %1680 = vmatpush1.msra.mxu0 0.0
        %1681 = vmatprep.subr.mxu0 0.0
        %1682 = vmatpush1.msra.mxu0 0.0
        %1683 = vmatprep.subr.mxu0 0.0
        %1684 = vmatpush1.msra.mxu0 0.0
        %1685 = vmatprep.subr.mxu0 0.0
        %1686 = vmatpush1.msra.mxu0 0.0
        %1687 = vmatprep.subr.mxu0 0.0
        %1688 = vmatpush1.msra.mxu0 0.0
        %1689 = vmatprep.subr.mxu0 0.0
        %1690 = vmatpush1.msra.mxu0 0.0
        %1691 = vmatprep.subr.mxu0 0.0
        %1692 = vmatpush1.msra.mxu0 0.0
        %1693 = vmatprep.subr.mxu0 0.0
        %1694 = vmatpush1.msra.mxu0 0.0
        %1695 = vmatprep.subr.mxu0 0.0
        %1696 = vmatpush1.msra.mxu0 0.0
        %1697 = vmatprep.subr.mxu0 0.0
        %1698 = vmatpush1.msra.mxu0 0.0
        %1699 = vmatprep.subr.mxu0 0.0
        %1700 = vmatpush1.msra.mxu0 0.0
        %1701 = vmatprep.subr.mxu0 0.0
        %1702 = vmatpush1.msra.mxu0 0.0
        %1703 = vmatprep.subr.mxu0 0.0
        %1704 = vmatpush1.msra.mxu0 0.0
        %1705 = vmatprep.subr.mxu0 0.0
        %1706 = vmatpush1.msra.mxu0 0.0
        %1707 = vmatprep.subr.mxu0 0.0
        %1708 = vmatpush1.msra.mxu0 0.0
        %1709 = vmatprep.subr.mxu0 0.0
        %1710 = vmatpush1.msra.mxu0 0.0
        %1711 = vmatprep.subr.mxu0 0.0
        %1712 = vmatpush1.msra.mxu0 0.0
        %1713 = vmatprep.subr.mxu0 0.0
        %1714 = vmatpush1.msra.mxu0 0.0
        %1715 = vmatprep.subr.mxu0 0.0
        %1716 = vmatpush1.msra.mxu0 0.0
        %1717 = vmatprep.subr.mxu0 0.0
        %1718 = vmatpush1.msra.mxu0 0.0
        %1719 = vmatprep.subr.mxu0 0.0
        %1720 = vmatpush1.msra.mxu0 0.0
        %1721 = vmatprep.subr.mxu0 0.0
        %1722 = vmatpush1.msra.mxu0 0.0
        %1723 = vmatprep.subr.mxu0 0.0
        %1724 = vmatpush1.msra.mxu0 0.0
        %1725 = vmatprep.mubr.f32.mxu0 0.0
        %1726 = vmatmul.mubr.f32.gmra.mrb[0].mxu0 %v1653
        %v1727 = vpop.f32.mrb[0].mxu0
        %v1728 = vadd.f32 0.0, %v1727
        %v1729 = vpop.f32.mrb[0].mxu0
        %v1730 = vadd.f32 0.0, %v1729
        %1731 = vdwg.mxu0
        %v1732 = vadd.f32 %v1631, %v1728
        %v1733 = vadd.f32 %v1632, %v1730
        %1734 = vrot.lane.b32.xlu0 %v490, 113
        %v1735 = vpop.permute.xlu0 %1734
        %1736 = vrot.lane.b32.xlu0 %v492, 113
        %v1737 = vpop.permute.xlu0 %1736
        %v1738 = vsel %vm1637, %v1735, %v1737
        %v1739 = vsel %vm1637, %v1737, %v1735
        %v1740 = vmul.f32 %v1738, %v1643
        %v1741 = vmul.f32 %v1739, %v1647
        %s1742 = scalar_lea.vmem %s5, 48
        %v1743 = vld [vmem:[%s1742] sm:$0xff]
        %v1745 = vsel %vm533, %v1743, 0
        %v1748 = vsel %vm537, %v1740, 0
        %v1751 = vsel %vm537, %v1741, 0
        %1753 = vmatprep.subr.mxu0 %v1751
        %1754 = vmatpush1.msra.mxu0 %v1748
        %1755 = vmatprep.subr.mxu0 0.0
        %1756 = vmatpush1.msra.mxu0 0.0
        %1757 = vmatprep.subr.mxu0 0.0
        %1758 = vmatpush1.msra.mxu0 0.0
        %1759 = vmatprep.subr.mxu0 0.0
        %1760 = vmatpush1.msra.mxu0 0.0
        %1761 = vmatprep.subr.mxu0 0.0
        %1762 = vmatpush1.msra.mxu0 0.0
        %1763 = vmatprep.subr.mxu0 0.0
        %1764 = vmatpush1.msra.mxu0 0.0
        %1765 = vmatprep.subr.mxu0 0.0
        %1766 = vmatpush1.msra.mxu0 0.0
        %1767 = vmatprep.subr.mxu0 0.0
        %1768 = vmatpush1.msra.mxu0 0.0
        %1769 = vmatprep.subr.mxu0 0.0
        %1770 = vmatpush1.msra.mxu0 0.0
        %1771 = vmatprep.subr.mxu0 0.0
        %1772 = vmatpush1.msra.mxu0 0.0
        %1773 = vmatprep.subr.mxu0 0.0
        %1774 = vmatpush1.msra.mxu0 0.0
        %1775 = vmatprep.subr.mxu0 0.0
        %1776 = vmatpush1.msra.mxu0 0.0
        %1777 = vmatprep.subr.mxu0 0.0
        %1778 = vmatpush1.msra.mxu0 0.0
        %1779 = vmatprep.subr.mxu0 0.0
        %1780 = vmatpush1.msra.mxu0 0.0
        %1781 = vmatprep.subr.mxu0 0.0
        %1782 = vmatpush1.msra.mxu0 0.0
        %1783 = vmatprep.subr.mxu0 0.0
        %1784 = vmatpush1.msra.mxu0 0.0
        %1785 = vmatprep.subr.mxu0 0.0
        %1786 = vmatpush1.msra.mxu0 0.0
        %1787 = vmatprep.subr.mxu0 0.0
        %1788 = vmatpush1.msra.mxu0 0.0
        %1789 = vmatprep.subr.mxu0 0.0
        %1790 = vmatpush1.msra.mxu0 0.0
        %1791 = vmatprep.subr.mxu0 0.0
        %1792 = vmatpush1.msra.mxu0 0.0
        %1793 = vmatprep.subr.mxu0 0.0
        %1794 = vmatpush1.msra.mxu0 0.0
        %1795 = vmatprep.subr.mxu0 0.0
        %1796 = vmatpush1.msra.mxu0 0.0
        %1797 = vmatprep.subr.mxu0 0.0
        %1798 = vmatpush1.msra.mxu0 0.0
        %1799 = vmatprep.subr.mxu0 0.0
        %1800 = vmatpush1.msra.mxu0 0.0
        %1801 = vmatprep.subr.mxu0 0.0
        %1802 = vmatpush1.msra.mxu0 0.0
        %1803 = vmatprep.subr.mxu0 0.0
        %1804 = vmatpush1.msra.mxu0 0.0
        %1805 = vmatprep.subr.mxu0 0.0
        %1806 = vmatpush1.msra.mxu0 0.0
        %1807 = vmatprep.subr.mxu0 0.0
        %1808 = vmatpush1.msra.mxu0 0.0
        %1809 = vmatprep.subr.mxu0 0.0
        %1810 = vmatpush1.msra.mxu0 0.0
        %1811 = vmatprep.subr.mxu0 0.0
        %1812 = vmatpush1.msra.mxu0 0.0
        %1813 = vmatprep.subr.mxu0 0.0
        %1814 = vmatpush1.msra.mxu0 0.0
        %1815 = vmatprep.subr.mxu0 0.0
        %1816 = vmatpush1.msra.mxu0 0.0
        %1817 = vmatprep.mubr.f32.mxu0 0.0
        %1818 = vmatmul.mubr.f32.gmra.mrb[0].mxu0 %v1745
        %v1819 = vpop.f32.mrb[0].mxu0
        %v1820 = vadd.f32 0.0, %v1819
        %v1821 = vpop.f32.mrb[0].mxu0
        %v1822 = vadd.f32 0.0, %v1821
        %1823 = vdwg.mxu0
        %v1824 = vadd.f32 %v1732, %v1820
        %v1825 = vadd.f32 %v1733, %v1822
        %1826 = vrot.lane.b32.xlu0 %v498, 112
        %v1827 = vpop.permute.xlu0 %1826
        %1828 = vrot.lane.b32.xlu0 %v502, 112
        %v1829 = vpop.permute.xlu0 %1828
        %vm1830 = vcmp.lt.s32.totalorder %v509, 112
        %v1831 = vsel %vm1830, %v1827, %v1829
        %v1832 = vsel %vm1830, %v1829, %v1827
        %v1833 = vlaneseq
        %v1834 = vshrl.u32 %v1833, 7
        %v1835 = vsub.s32 7, %v1834
        %v1836 = vrot.slane %v494, %v1835
        %v1837 = vlaneseq
        %v1838 = vshrl.u32 %v1837, 7
        %v1839 = vsub.s32 7, %v1838
        %v1840 = vrot.slane %v495, %v1839
        %v1841 = vmul.f32 %v1831, %v1836
        %v1842 = vmul.f32 %v1832, %v1840
        %s1843 = scalar_lea.vmem %s4, 56
        %v1844 = vld [vmem:[%s1843] sm:$0xff]
        %v1846 = vsel %vm533, %v1844, 0
        %v1849 = vsel %vm537, %v1841, 0
        %v1852 = vsel %vm537, %v1842, 0
        %1854 = vmatprep.subr.mxu0 %v1852
        %1855 = vmatpush1.msra.mxu0 %v1849
        %1856 = vmatprep.subr.mxu0 0.0
        %1857 = vmatpush1.msra.mxu0 0.0
        %1858 = vmatprep.subr.mxu0 0.0
        %1859 = vmatpush1.msra.mxu0 0.0
        %1860 = vmatprep.subr.mxu0 0.0
        %1861 = vmatpush1.msra.mxu0 0.0
        %1862 = vmatprep.subr.mxu0 0.0
        %1863 = vmatpush1.msra.mxu0 0.0
        %1864 = vmatprep.subr.mxu0 0.0
        %1865 = vmatpush1.msra.mxu0 0.0
        %1866 = vmatprep.subr.mxu0 0.0
        %1867 = vmatpush1.msra.mxu0 0.0
        %1868 = vmatprep.subr.mxu0 0.0
        %1869 = vmatpush1.msra.mxu0 0.0
        %1870 = vmatprep.subr.mxu0 0.0
        %1871 = vmatpush1.msra.mxu0 0.0
        %1872 = vmatprep.subr.mxu0 0.0
        %1873 = vmatpush1.msra.mxu0 0.0
        %1874 = vmatprep.subr.mxu0 0.0
        %1875 = vmatpush1.msra.mxu0 0.0
        %1876 = vmatprep.subr.mxu0 0.0
        %1877 = vmatpush1.msra.mxu0 0.0
        %1878 = vmatprep.subr.mxu0 0.0
        %1879 = vmatpush1.msra.mxu0 0.0
        %1880 = vmatprep.subr.mxu0 0.0
        %1881 = vmatpush1.msra.mxu0 0.0
        %1882 = vmatprep.subr.mxu0 0.0
        %1883 = vmatpush1.msra.mxu0 0.0
        %1884 = vmatprep.subr.mxu0 0.0
        %1885 = vmatpush1.msra.mxu0 0.0
        %1886 = vmatprep.subr.mxu0 0.0
        %1887 = vmatpush1.msra.mxu0 0.0
        %1888 = vmatprep.subr.mxu0 0.0
        %1889 = vmatpush1.msra.mxu0 0.0
        %1890 = vmatprep.subr.mxu0 0.0
        %1891 = vmatpush1.msra.mxu0 0.0
        %1892 = vmatprep.subr.mxu0 0.0
        %1893 = vmatpush1.msra.mxu0 0.0
        %1894 = vmatprep.subr.mxu0 0.0
        %1895 = vmatpush1.msra.mxu0 0.0
        %1896 = vmatprep.subr.mxu0 0.0
        %1897 = vmatpush1.msra.mxu0 0.0
        %1898 = vmatprep.subr.mxu0 0.0
        %1899 = vmatpush1.msra.mxu0 0.0
        %1900 = vmatprep.subr.mxu0 0.0
        %1901 = vmatpush1.msra.mxu0 0.0
        %1902 = vmatprep.subr.mxu0 0.0
        %1903 = vmatpush1.msra.mxu0 0.0
        %1904 = vmatprep.subr.mxu0 0.0
        %1905 = vmatpush1.msra.mxu0 0.0
        %1906 = vmatprep.subr.mxu0 0.0
        %1907 = vmatpush1.msra.mxu0 0.0
        %1908 = vmatprep.subr.mxu0 0.0
        %1909 = vmatpush1.msra.mxu0 0.0
        %1910 = vmatprep.subr.mxu0 0.0
        %1911 = vmatpush1.msra.mxu0 0.0
        %1912 = vmatprep.subr.mxu0 0.0
        %1913 = vmatpush1.msra.mxu0 0.0
        %1914 = vmatprep.subr.mxu0 0.0
        %1915 = vmatpush1.msra.mxu0 0.0
        %1916 = vmatprep.subr.mxu0 0.0
        %1917 = vmatpush1.msra.mxu0 0.0
        %1918 = vmatprep.mubr.f32.mxu0 0.0
        %1919 = vmatmul.mubr.f32.gmra.mrb[0].mxu0 %v1846
        %v1920 = vpop.f32.mrb[0].mxu0
        %v1921 = vadd.f32 0.0, %v1920
        %v1922 = vpop.f32.mrb[0].mxu0
        %v1923 = vadd.f32 0.0, %v1922
        %1924 = vdwg.mxu0
        %v1925 = vadd.f32 %v1824, %v1921
        %v1926 = vadd.f32 %v1825, %v1923
        %1927 = vrot.lane.b32.xlu0 %v490, 112
        %v1928 = vpop.permute.xlu0 %1927
        %1929 = vrot.lane.b32.xlu0 %v492, 112
        %v1930 = vpop.permute.xlu0 %1929
        %v1931 = vsel %vm1830, %v1928, %v1930
        %v1932 = vsel %vm1830, %v1930, %v1928
        %v1933 = vmul.f32 %v1931, %v1836
        %v1934 = vmul.f32 %v1932, %v1840
        %s1935 = scalar_lea.vmem %s5, 56
        %v1936 = vld [vmem:[%s1935] sm:$0xff]
        %v1938 = vsel %vm533, %v1936, 0
        %v1941 = vsel %vm537, %v1933, 0
        %v1944 = vsel %vm537, %v1934, 0
        %1946 = vmatprep.subr.mxu0 %v1944
        %1947 = vmatpush1.msra.mxu0 %v1941
        %1948 = vmatprep.subr.mxu0 0.0
        %1949 = vmatpush1.msra.mxu0 0.0
        %1950 = vmatprep.subr.mxu0 0.0
        %1951 = vmatpush1.msra.mxu0 0.0
        %1952 = vmatprep.subr.mxu0 0.0
        %1953 = vmatpush1.msra.mxu0 0.0
        %1954 = vmatprep.subr.mxu0 0.0
        %1955 = vmatpush1.msra.mxu0 0.0
        %1956 = vmatprep.subr.mxu0 0.0
        %1957 = vmatpush1.msra.mxu0 0.0
        %1958 = vmatprep.subr.mxu0 0.0
        %1959 = vmatpush1.msra.mxu0 0.0
        %1960 = vmatprep.subr.mxu0 0.0
        %1961 = vmatpush1.msra.mxu0 0.0
        %1962 = vmatprep.subr.mxu0 0.0
        %1963 = vmatpush1.msra.mxu0 0.0
        %1964 = vmatprep.subr.mxu0 0.0
        %1965 = vmatpush1.msra.mxu0 0.0
        %1966 = vmatprep.subr.mxu0 0.0
        %1967 = vmatpush1.msra.mxu0 0.0
        %1968 = vmatprep.subr.mxu0 0.0
        %1969 = vmatpush1.msra.mxu0 0.0
        %1970 = vmatprep.subr.mxu0 0.0
        %1971 = vmatpush1.msra.mxu0 0.0
        %1972 = vmatprep.subr.mxu0 0.0
        %1973 = vmatpush1.msra.mxu0 0.0
        %1974 = vmatprep.subr.mxu0 0.0
        %1975 = vmatpush1.msra.mxu0 0.0
        %1976 = vmatprep.subr.mxu0 0.0
        %1977 = vmatpush1.msra.mxu0 0.0
        %1978 = vmatprep.subr.mxu0 0.0
        %1979 = vmatpush1.msra.mxu0 0.0
        %1980 = vmatprep.subr.mxu0 0.0
        %1981 = vmatpush1.msra.mxu0 0.0
        %1982 = vmatprep.subr.mxu0 0.0
        %1983 = vmatpush1.msra.mxu0 0.0
        %1984 = vmatprep.subr.mxu0 0.0
        %1985 = vmatpush1.msra.mxu0 0.0
        %1986 = vmatprep.subr.mxu0 0.0
        %1987 = vmatpush1.msra.mxu0 0.0
        %1988 = vmatprep.subr.mxu0 0.0
        %1989 = vmatpush1.msra.mxu0 0.0
        %1990 = vmatprep.subr.mxu0 0.0
        %1991 = vmatpush1.msra.mxu0 0.0
        %1992 = vmatprep.subr.mxu0 0.0
        %1993 = vmatpush1.msra.mxu0 0.0
        %1994 = vmatprep.subr.mxu0 0.0
        %1995 = vmatpush1.msra.mxu0 0.0
        %1996 = vmatprep.subr.mxu0 0.0
        %1997 = vmatpush1.msra.mxu0 0.0
        %1998 = vmatprep.subr.mxu0 0.0
        %1999 = vmatpush1.msra.mxu0 0.0
        %2000 = vmatprep.subr.mxu0 0.0
        %2001 = vmatpush1.msra.mxu0 0.0
        %2002 = vmatprep.subr.mxu0 0.0
        %2003 = vmatpush1.msra.mxu0 0.0
        %2004 = vmatprep.subr.mxu0 0.0
        %2005 = vmatpush1.msra.mxu0 0.0
        %2006 = vmatprep.subr.mxu0 0.0
        %2007 = vmatpush1.msra.mxu0 0.0
        %2008 = vmatprep.subr.mxu0 0.0
        %2009 = vmatpush1.msra.mxu0 0.0
        %2010 = vmatprep.mubr.f32.mxu0 0.0
        %2011 = vmatmul.mubr.f32.gmra.mrb[0].mxu0 %v1938
        %v2012 = vpop.f32.mrb[0].mxu0
        %v2013 = vadd.f32 0.0, %v2012
        %v2014 = vpop.f32.mrb[0].mxu0
        %v2015 = vadd.f32 0.0, %v2014
        %2016 = vdwg.mxu0
        %v2017 = vadd.f32 %v1925, %v2013
        %v2018 = vadd.f32 %v1926, %v2015
        %2019 = vrot.lane.b32.xlu0 %v498, 111
        %v2020 = vpop.permute.xlu0 %2019
        %2021 = vrot.lane.b32.xlu0 %v502, 111
        %v2022 = vpop.permute.xlu0 %2021
        %vm2023 = vcmp.lt.s32.totalorder %v509, 111
        %v2024 = vsel %vm2023, %v2020, %v2022
        %v2025 = vsel %vm2023, %v2022, %v2020
        %v2026 = vlaneseq
        %v2027 = vshrl.u32 %v2026, 7
        %v2028 = vsub.s32 0, %v2027
        %v2029 = vrot.slane %v496, %v2028
        %v2030 = vlaneseq
        %v2031 = vshrl.u32 %v2030, 7
        %v2032 = vsub.s32 0, %v2031
        %v2033 = vrot.slane %v497, %v2032
        %v2034 = vmul.f32 %v2024, %v2029
        %v2035 = vmul.f32 %v2025, %v2033
        %s2036 = scalar_lea.vmem %s4, 64
        %v2037 = vld [vmem:[%s2036] sm:$0xff]
        %v2039 = vsel %vm533, %v2037, 0
        %v2042 = vsel %vm537, %v2034, 0
        %v2045 = vsel %vm537, %v2035, 0
        %2047 = vmatprep.subr.mxu0 %v2045
        %2048 = vmatpush1.msra.mxu0 %v2042
        %2049 = vmatprep.subr.mxu0 0.0
        %2050 = vmatpush1.msra.mxu0 0.0
        %2051 = vmatprep.subr.mxu0 0.0
        %2052 = vmatpush1.msra.mxu0 0.0
        %2053 = vmatprep.subr.mxu0 0.0
        %2054 = vmatpush1.msra.mxu0 0.0
        %2055 = vmatprep.subr.mxu0 0.0
        %2056 = vmatpush1.msra.mxu0 0.0
        %2057 = vmatprep.subr.mxu0 0.0
        %2058 = vmatpush1.msra.mxu0 0.0
        %2059 = vmatprep.subr.mxu0 0.0
        %2060 = vmatpush1.msra.mxu0 0.0
        %2061 = vmatprep.subr.mxu0 0.0
        %2062 = vmatpush1.msra.mxu0 0.0
        %2063 = vmatprep.subr.mxu0 0.0
        %2064 = vmatpush1.msra.mxu0 0.0
        %2065 = vmatprep.subr.mxu0 0.0
        %2066 = vmatpush1.msra.mxu0 0.0
        %2067 = vmatprep.subr.mxu0 0.0
        %2068 = vmatpush1.msra.mxu0 0.0
        %2069 = vmatprep.subr.mxu0 0.0
        %2070 = vmatpush1.msra.mxu0 0.0
        %2071 = vmatprep.subr.mxu0 0.0
        %2072 = vmatpush1.msra.mxu0 0.0
        %2073 = vmatprep.subr.mxu0 0.0
        %2074 = vmatpush1.msra.mxu0 0.0
        %2075 = vmatprep.subr.mxu0 0.0
        %2076 = vmatpush1.msra.mxu0 0.0
        %2077 = vmatprep.subr.mxu0 0.0
        %2078 = vmatpush1.msra.mxu0 0.0
        %2079 = vmatprep.subr.mxu0 0.0
        %2080 = vmatpush1.msra.mxu0 0.0
        %2081 = vmatprep.subr.mxu0 0.0
        %2082 = vmatpush1.msra.mxu0 0.0
        %2083 = vmatprep.subr.mxu0 0.0
        %2084 = vmatpush1.msra.mxu0 0.0
        %2085 = vmatprep.subr.mxu0 0.0
        %2086 = vmatpush1.msra.mxu0 0.0
        %2087 = vmatprep.subr.mxu0 0.0
        %2088 = vmatpush1.msra.mxu0 0.0
        %2089 = vmatprep.subr.mxu0 0.0
        %2090 = vmatpush1.msra.mxu0 0.0
        %2091 = vmatprep.subr.mxu0 0.0
        %2092 = vmatpush1.msra.mxu0 0.0
        %2093 = vmatprep.subr.mxu0 0.0
        %2094 = vmatpush1.msra.mxu0 0.0
        %2095 = vmatprep.subr.mxu0 0.0
        %2096 = vmatpush1.msra.mxu0 0.0
        %2097 = vmatprep.subr.mxu0 0.0
        %2098 = vmatpush1.msra.mxu0 0.0
        %2099 = vmatprep.subr.mxu0 0.0
        %2100 = vmatpush1.msra.mxu0 0.0
        %2101 = vmatprep.subr.mxu0 0.0
        %2102 = vmatpush1.msra.mxu0 0.0
        %2103 = vmatprep.subr.mxu0 0.0
        %2104 = vmatpush1.msra.mxu0 0.0
        %2105 = vmatprep.subr.mxu0 0.0
        %2106 = vmatpush1.msra.mxu0 0.0
        %2107 = vmatprep.subr.mxu0 0.0
        %2108 = vmatpush1.msra.mxu0 0.0
        %2109 = vmatprep.subr.mxu0 0.0
        %2110 = vmatpush1.msra.mxu0 0.0
        %2111 = vmatprep.mubr.f32.mxu0 0.0
        %2112 = vmatmul.mubr.f32.gmra.mrb[0].mxu0 %v2039
        %v2113 = vpop.f32.mrb[0].mxu0
        %v2114 = vadd.f32 0.0, %v2113
        %v2115 = vpop.f32.mrb[0].mxu0
        %v2116 = vadd.f32 0.0, %v2115
        %2117 = vdwg.mxu0
        %v2118 = vadd.f32 %v2017, %v2114
        %v2119 = vadd.f32 %v2018, %v2116
        %2120 = vrot.lane.b32.xlu0 %v490, 111
        %v2121 = vpop.permute.xlu0 %2120
        %2122 = vrot.lane.b32.xlu0 %v492, 111
        %v2123 = vpop.permute.xlu0 %2122
        %v2124 = vsel %vm2023, %v2121, %v2123
        %v2125 = vsel %vm2023, %v2123, %v2121
        %v2126 = vmul.f32 %v2124, %v2029
        %v2127 = vmul.f32 %v2125, %v2033
        %s2128 = scalar_lea.vmem %s5, 64
        %v2129 = vld [vmem:[%s2128] sm:$0xff]
        %v2131 = vsel %vm533, %v2129, 0
        %v2134 = vsel %vm537, %v2126, 0
        %v2137 = vsel %vm537, %v2127, 0
        %2139 = vmatprep.subr.mxu0 %v2137
        %2140 = vmatpush1.msra.mxu0 %v2134
        %2141 = vmatprep.subr.mxu0 0.0
        %2142 = vmatpush1.msra.mxu0 0.0
        %2143 = vmatprep.subr.mxu0 0.0
        %2144 = vmatpush1.msra.mxu0 0.0
        %2145 = vmatprep.subr.mxu0 0.0
        %2146 = vmatpush1.msra.mxu0 0.0
        %2147 = vmatprep.subr.mxu0 0.0
        %2148 = vmatpush1.msra.mxu0 0.0
        %2149 = vmatprep.subr.mxu0 0.0
        %2150 = vmatpush1.msra.mxu0 0.0
        %2151 = vmatprep.subr.mxu0 0.0
        %2152 = vmatpush1.msra.mxu0 0.0
        %2153 = vmatprep.subr.mxu0 0.0
        %2154 = vmatpush1.msra.mxu0 0.0
        %2155 = vmatprep.subr.mxu0 0.0
        %2156 = vmatpush1.msra.mxu0 0.0
        %2157 = vmatprep.subr.mxu0 0.0
        %2158 = vmatpush1.msra.mxu0 0.0
        %2159 = vmatprep.subr.mxu0 0.0
        %2160 = vmatpush1.msra.mxu0 0.0
        %2161 = vmatprep.subr.mxu0 0.0
        %2162 = vmatpush1.msra.mxu0 0.0
        %2163 = vmatprep.subr.mxu0 0.0
        %2164 = vmatpush1.msra.mxu0 0.0
        %2165 = vmatprep.subr.mxu0 0.0
        %2166 = vmatpush1.msra.mxu0 0.0
        %2167 = vmatprep.subr.mxu0 0.0
        %2168 = vmatpush1.msra.mxu0 0.0
        %2169 = vmatprep.subr.mxu0 0.0
        %2170 = vmatpush1.msra.mxu0 0.0
        %2171 = vmatprep.subr.mxu0 0.0
        %2172 = vmatpush1.msra.mxu0 0.0
        %2173 = vmatprep.subr.mxu0 0.0
        %2174 = vmatpush1.msra.mxu0 0.0
        %2175 = vmatprep.subr.mxu0 0.0
        %2176 = vmatpush1.msra.mxu0 0.0
        %2177 = vmatprep.subr.mxu0 0.0
        %2178 = vmatpush1.msra.mxu0 0.0
        %2179 = vmatprep.subr.mxu0 0.0
        %2180 = vmatpush1.msra.mxu0 0.0
        %2181 = vmatprep.subr.mxu0 0.0
        %2182 = vmatpush1.msra.mxu0 0.0
        %2183 = vmatprep.subr.mxu0 0.0
        %2184 = vmatpush1.msra.mxu0 0.0
        %2185 = vmatprep.subr.mxu0 0.0
        %2186 = vmatpush1.msra.mxu0 0.0
        %2187 = vmatprep.subr.mxu0 0.0
        %2188 = vmatpush1.msra.mxu0 0.0
        %2189 = vmatprep.subr.mxu0 0.0
        %2190 = vmatpush1.msra.mxu0 0.0
        %2191 = vmatprep.subr.mxu0 0.0
        %2192 = vmatpush1.msra.mxu0 0.0
        %2193 = vmatprep.subr.mxu0 0.0
        %2194 = vmatpush1.msra.mxu0 0.0
        %2195 = vmatprep.subr.mxu0 0.0
        %2196 = vmatpush1.msra.mxu0 0.0
        %2197 = vmatprep.subr.mxu0 0.0
        %2198 = vmatpush1.msra.mxu0 0.0
        %2199 = vmatprep.subr.mxu0 0.0
        %2200 = vmatpush1.msra.mxu0 0.0
        %2201 = vmatprep.subr.mxu0 0.0
        %2202 = vmatpush1.msra.mxu0 0.0
        %2203 = vmatprep.mubr.f32.mxu0 0.0
        %2204 = vmatmul.mubr.f32.gmra.mrb[0].mxu0 %v2131
        %v2205 = vpop.f32.mrb[0].mxu0
        %v2206 = vadd.f32 0.0, %v2205
        %v2207 = vpop.f32.mrb[0].mxu0
        %v2208 = vadd.f32 0.0, %v2207
        %2209 = vdwg.mxu0
        %v2210 = vadd.f32 %v2118, %v2206
        %v2211 = vadd.f32 %v2119, %v2208
        %2213 = vset.pattern.permute.xlu0 0
        %2214 = vperm.xlu0 %2213, %v499
        %v2215 = vpop.permute.xlu0 %2214
        %v2217 = vmul.f32 %v2210, %v2215
        %v2218 = vmul.f32 %v2211, %v2215
        %2220 = vset.pattern.permute.xlu0 0
        %2221 = vperm.xlu0 %2220, %v500
        %v2222 = vpop.permute.xlu0 %2221
        %v2224 = vadd.f32 %v2217, %v2222
        %v2225 = vadd.f32 %v2218, %v2222
        %v2226 = vmax.f32 %v2224, 0.0
        %v2227 = vmax.f32 %v2225, 0.0
        %v2228 = vld [vmem:[%s9] sm:$0xff]
        %v2229 = vld [vmem:[%s10] sm:$0xff]
        %2230 = vrot.lane.b32.xlu0 %v2226, 17
        %v2231 = vpop.permute.xlu0 %2230
        %2232 = vrot.lane.b32.xlu0 %v2227, 17
        %v2233 = vpop.permute.xlu0 %2232
        %v2234 = vsel %vm510, %v2231, %v2233
        %v2235 = vsel %vm510, %v2233, %v2231
        %v2236 = vmul.f32 %v2235, %v516
        %v2237 = vmul.f32 %v2234, %v520
        %v2238 = vld [vmem:[%s8] sm:$0xff]
        %2239 = vrot.lane.b32.xlu0 %v2226, 16
        %v2240 = vpop.permute.xlu0 %2239
        %2241 = vrot.lane.b32.xlu0 %v2227, 16
        %v2242 = vpop.permute.xlu0 %2241
        %v2243 = vsel %vm699, %v2240, %v2242
        %v2244 = vsel %vm699, %v2242, %v2240
        %v2245 = vmul.f32 %v2244, %v705
        %v2246 = vmul.f32 %v2243, %v709
        %s2247 = scalar_lea.vmem %s8, 8
        %v2248 = vld [vmem:[%s2247] sm:$0xff]
        %vm2249 = vcmask 64512
        %v2251 = vsel %vm2249, %v2248, 0
        %2253 = vmatprep.subr.mxu0 %v2246
        %2254 = vmatpush1.msra.mxu0 %v2245
        %2255 = vmatprep.subr.mxu0 0.0
        %2256 = vmatpush1.msra.mxu0 0.0
        %2257 = vmatprep.subr.mxu0 0.0
        %2258 = vmatpush1.msra.mxu0 0.0
        %2259 = vmatprep.subr.mxu0 0.0
        %2260 = vmatpush1.msra.mxu0 0.0
        %2261 = vmatprep.subr.mxu0 0.0
        %2262 = vmatpush1.msra.mxu0 0.0
        %2263 = vmatprep.subr.mxu0 0.0
        %2264 = vmatpush1.msra.mxu0 0.0
        %2265 = vmatprep.subr.mxu0 0.0
        %2266 = vmatpush1.msra.mxu0 0.0
        %2267 = vmatprep.subr.mxu0 0.0
        %2268 = vmatpush1.msra.mxu0 0.0
        %2269 = vmatprep.subr.mxu0 0.0
        %2270 = vmatpush1.msra.mxu0 0.0
        %2271 = vmatprep.subr.mxu0 0.0
        %2272 = vmatpush1.msra.mxu0 0.0
        %2273 = vmatprep.subr.mxu0 0.0
        %2274 = vmatpush1.msra.mxu0 0.0
        %2275 = vmatprep.subr.mxu0 0.0
        %2276 = vmatpush1.msra.mxu0 0.0
        %2277 = vmatprep.subr.mxu0 0.0
        %2278 = vmatpush1.msra.mxu0 0.0
        %2279 = vmatprep.subr.mxu0 0.0
        %2280 = vmatpush1.msra.mxu0 0.0
        %2281 = vmatprep.subr.mxu0 0.0
        %2282 = vmatpush1.msra.mxu0 0.0
        %2283 = vmatprep.subr.mxu0 0.0
        %2284 = vmatpush1.msra.mxu0 0.0
        %2285 = vmatprep.subr.mxu0 0.0
        %2286 = vmatpush1.msra.mxu0 0.0
        %2287 = vmatprep.subr.mxu0 0.0
        %2288 = vmatpush1.msra.mxu0 0.0
        %2289 = vmatprep.subr.mxu0 0.0
        %2290 = vmatpush1.msra.mxu0 0.0
        %2291 = vmatprep.subr.mxu0 0.0
        %2292 = vmatpush1.msra.mxu0 0.0
        %2293 = vmatprep.subr.mxu0 0.0
        %2294 = vmatpush1.msra.mxu0 0.0
        %2295 = vmatprep.subr.mxu0 0.0
        %2296 = vmatpush1.msra.mxu0 0.0
        %2297 = vmatprep.subr.mxu0 0.0
        %2298 = vmatpush1.msra.mxu0 0.0
        %2299 = vmatprep.subr.mxu0 0.0
        %2300 = vmatpush1.msra.mxu0 0.0
        %2301 = vmatprep.subr.mxu0 0.0
        %2302 = vmatpush1.msra.mxu0 0.0
        %2303 = vmatprep.subr.mxu0 0.0
        %2304 = vmatpush1.msra.mxu0 0.0
        %2305 = vmatprep.subr.mxu0 0.0
        %2306 = vmatpush1.msra.mxu0 0.0
        %2307 = vmatprep.subr.mxu0 0.0
        %2308 = vmatpush1.msra.mxu0 0.0
        %2309 = vmatprep.subr.mxu0 0.0
        %2310 = vmatpush1.msra.mxu0 0.0
        %2311 = vmatprep.subr.mxu0 0.0
        %2312 = vmatpush1.msra.mxu0 0.0
        %2313 = vmatprep.subr.mxu0 0.0
        %2314 = vmatpush1.msra.mxu0 0.0
        %2315 = vmatprep.subr.mxu0 0.0
        %2316 = vmatpush1.msra.mxu0 0.0
        %2317 = vmatprep.mubr.f32.mxu0 0.0
        %2318 = vmatmul.mubr.f32.gmra.mrb[0].mxu0 %v2251
        %v2319 = vpop.f32.mrb[0].mxu0
        %v2320 = vadd.f32 0.0, %v2319
        %v2321 = vpop.f32.mrb[0].mxu0
        %v2322 = vadd.f32 0.0, %v2321
        %2323 = vdwg.mxu0
        %v2325 = vsel %vm2249, %v2238, 0
        %2327 = vmatprep.subr.mxu0 %v2237
        %2328 = vmatpush1.msra.mxu0 %v2236
        %2329 = vmatprep.subr.mxu0 0.0
        %2330 = vmatpush1.msra.mxu0 0.0
        %2331 = vmatprep.subr.mxu0 0.0
        %2332 = vmatpush1.msra.mxu0 0.0
        %2333 = vmatprep.subr.mxu0 0.0
        %2334 = vmatpush1.msra.mxu0 0.0
        %2335 = vmatprep.subr.mxu0 0.0
        %2336 = vmatpush1.msra.mxu0 0.0
        %2337 = vmatprep.subr.mxu0 0.0
        %2338 = vmatpush1.msra.mxu0 0.0
        %2339 = vmatprep.subr.mxu0 0.0
        %2340 = vmatpush1.msra.mxu0 0.0
        %2341 = vmatprep.subr.mxu0 0.0
        %2342 = vmatpush1.msra.mxu0 0.0
        %2343 = vmatprep.subr.mxu0 0.0
        %2344 = vmatpush1.msra.mxu0 0.0
        %2345 = vmatprep.subr.mxu0 0.0
        %2346 = vmatpush1.msra.mxu0 0.0
        %2347 = vmatprep.subr.mxu0 0.0
        %2348 = vmatpush1.msra.mxu0 0.0
        %2349 = vmatprep.subr.mxu0 0.0
        %2350 = vmatpush1.msra.mxu0 0.0
        %2351 = vmatprep.subr.mxu0 0.0
        %2352 = vmatpush1.msra.mxu0 0.0
        %2353 = vmatprep.subr.mxu0 0.0
        %2354 = vmatpush1.msra.mxu0 0.0
        %2355 = vmatprep.subr.mxu0 0.0
        %2356 = vmatpush1.msra.mxu0 0.0
        %2357 = vmatprep.subr.mxu0 0.0
        %2358 = vmatpush1.msra.mxu0 0.0
        %2359 = vmatprep.subr.mxu0 0.0
        %2360 = vmatpush1.msra.mxu0 0.0
        %2361 = vmatprep.subr.mxu0 0.0
        %2362 = vmatpush1.msra.mxu0 0.0
        %2363 = vmatprep.subr.mxu0 0.0
        %2364 = vmatpush1.msra.mxu0 0.0
        %2365 = vmatprep.subr.mxu0 0.0
        %2366 = vmatpush1.msra.mxu0 0.0
        %2367 = vmatprep.subr.mxu0 0.0
        %2368 = vmatpush1.msra.mxu0 0.0
        %2369 = vmatprep.subr.mxu0 0.0
        %2370 = vmatpush1.msra.mxu0 0.0
        %2371 = vmatprep.subr.mxu0 0.0
        %2372 = vmatpush1.msra.mxu0 0.0
        %2373 = vmatprep.subr.mxu0 0.0
        %2374 = vmatpush1.msra.mxu0 0.0
        %2375 = vmatprep.subr.mxu0 0.0
        %2376 = vmatpush1.msra.mxu0 0.0
        %2377 = vmatprep.subr.mxu0 0.0
        %2378 = vmatpush1.msra.mxu0 0.0
        %2379 = vmatprep.subr.mxu0 0.0
        %2380 = vmatpush1.msra.mxu0 0.0
        %2381 = vmatprep.subr.mxu0 0.0
        %2382 = vmatpush1.msra.mxu0 0.0
        %2383 = vmatprep.subr.mxu0 0.0
        %2384 = vmatpush1.msra.mxu0 0.0
        %2385 = vmatprep.subr.mxu0 0.0
        %2386 = vmatpush1.msra.mxu0 0.0
        %2387 = vmatprep.subr.mxu0 0.0
        %2388 = vmatpush1.msra.mxu0 0.0
        %2389 = vmatprep.subr.mxu0 0.0
        %2390 = vmatpush1.msra.mxu0 0.0
        %2391 = vmatprep.mubr.f32.mxu0 0.0
        %2392 = vmatmul.mubr.f32.gmra.mrb[0].mxu0 %v2325
        %v2393 = vpop.f32.mrb[0].mxu0
        %v2394 = vadd.f32 %v2320, %v2393
        %v2395 = vpop.f32.mrb[0].mxu0
        %v2396 = vadd.f32 %v2322, %v2395
        %2397 = vdwg.mxu0
        %2398 = vrot.lane.b32.xlu0 %v2226, 15
        %v2399 = vpop.permute.xlu0 %2398
        %2400 = vrot.lane.b32.xlu0 %v2227, 15
        %v2401 = vpop.permute.xlu0 %2400
        %v2402 = vsel %vm892, %v2399, %v2401
        %v2403 = vsel %vm892, %v2401, %v2399
        %v2404 = vmul.f32 %v2403, %v898
        %v2405 = vmul.f32 %v2402, %v902
        %s2406 = scalar_lea.vmem %s8, 16
        %v2407 = vld [vmem:[%s2406] sm:$0xff]
        %v2409 = vsel %vm2249, %v2407, 0
        %2411 = vmatprep.subr.mxu0 %v2405
        %2412 = vmatpush1.msra.mxu0 %v2404
        %2413 = vmatprep.subr.mxu0 0.0
        %2414 = vmatpush1.msra.mxu0 0.0
        %2415 = vmatprep.subr.mxu0 0.0
        %2416 = vmatpush1.msra.mxu0 0.0
        %2417 = vmatprep.subr.mxu0 0.0
        %2418 = vmatpush1.msra.mxu0 0.0
        %2419 = vmatprep.subr.mxu0 0.0
        %2420 = vmatpush1.msra.mxu0 0.0
        %2421 = vmatprep.subr.mxu0 0.0
        %2422 = vmatpush1.msra.mxu0 0.0
        %2423 = vmatprep.subr.mxu0 0.0
        %2424 = vmatpush1.msra.mxu0 0.0
        %2425 = vmatprep.subr.mxu0 0.0
        %2426 = vmatpush1.msra.mxu0 0.0
        %2427 = vmatprep.subr.mxu0 0.0
        %2428 = vmatpush1.msra.mxu0 0.0
        %2429 = vmatprep.subr.mxu0 0.0
        %2430 = vmatpush1.msra.mxu0 0.0
        %2431 = vmatprep.subr.mxu0 0.0
        %2432 = vmatpush1.msra.mxu0 0.0
        %2433 = vmatprep.subr.mxu0 0.0
        %2434 = vmatpush1.msra.mxu0 0.0
        %2435 = vmatprep.subr.mxu0 0.0
        %2436 = vmatpush1.msra.mxu0 0.0
        %2437 = vmatprep.subr.mxu0 0.0
        %2438 = vmatpush1.msra.mxu0 0.0
        %2439 = vmatprep.subr.mxu0 0.0
        %2440 = vmatpush1.msra.mxu0 0.0
        %2441 = vmatprep.subr.mxu0 0.0
        %2442 = vmatpush1.msra.mxu0 0.0
        %2443 = vmatprep.subr.mxu0 0.0
        %2444 = vmatpush1.msra.mxu0 0.0
        %2445 = vmatprep.subr.mxu0 0.0
        %2446 = vmatpush1.msra.mxu0 0.0
        %2447 = vmatprep.subr.mxu0 0.0
        %2448 = vmatpush1.msra.mxu0 0.0
        %2449 = vmatprep.subr.mxu0 0.0
        %2450 = vmatpush1.msra.mxu0 0.0
        %2451 = vmatprep.subr.mxu0 0.0
        %2452 = vmatpush1.msra.mxu0 0.0
        %2453 = vmatprep.subr.mxu0 0.0
        %2454 = vmatpush1.msra.mxu0 0.0
        %2455 = vmatprep.subr.mxu0 0.0
        %2456 = vmatpush1.msra.mxu0 0.0
        %2457 = vmatprep.subr.mxu0 0.0
        %2458 = vmatpush1.msra.mxu0 0.0
        %2459 = vmatprep.subr.mxu0 0.0
        %2460 = vmatpush1.msra.mxu0 0.0
        %2461 = vmatprep.subr.mxu0 0.0
        %2462 = vmatpush1.msra.mxu0 0.0
        %2463 = vmatprep.subr.mxu0 0.0
        %2464 = vmatpush1.msra.mxu0 0.0
        %2465 = vmatprep.subr.mxu0 0.0
        %2466 = vmatpush1.msra.mxu0 0.0
        %2467 = vmatprep.subr.mxu0 0.0
        %2468 = vmatpush1.msra.mxu0 0.0
        %2469 = vmatprep.subr.mxu0 0.0
        %2470 = vmatpush1.msra.mxu0 0.0
        %2471 = vmatprep.subr.mxu0 0.0
        %2472 = vmatpush1.msra.mxu0 0.0
        %2473 = vmatprep.subr.mxu0 0.0
        %2474 = vmatpush1.msra.mxu0 0.0
        %2475 = vmatprep.mubr.f32.mxu0 0.0
        %2476 = vmatmul.mubr.f32.gmra.mrb[0].mxu0 %v2409
        %v2477 = vpop.f32.mrb[0].mxu0
        %v2478 = vadd.f32 0.0, %v2477
        %v2479 = vpop.f32.mrb[0].mxu0
        %v2480 = vadd.f32 0.0, %v2479
        %2481 = vdwg.mxu0
        %v2482 = vadd.f32 %v2394, %v2478
        %v2483 = vadd.f32 %v2396, %v2480
        %2484 = vrot.lane.b32.xlu0 %v2226, 1
        %v2485 = vpop.permute.xlu0 %2484
        %2486 = vrot.lane.b32.xlu0 %v2227, 1
        %v2487 = vpop.permute.xlu0 %2486
        %v2488 = vsel %vm1085, %v2485, %v2487
        %v2489 = vsel %vm1085, %v2487, %v2485
        %v2490 = vmul.f32 %v2489, %v1091
        %v2491 = vmul.f32 %v2488, %v1095
        %s2492 = scalar_lea.vmem %s8, 24
        %v2493 = vld [vmem:[%s2492] sm:$0xff]
        %v2495 = vsel %vm2249, %v2493, 0
        %2497 = vmatprep.subr.mxu0 %v2491
        %2498 = vmatpush1.msra.mxu0 %v2490
        %2499 = vmatprep.subr.mxu0 0.0
        %2500 = vmatpush1.msra.mxu0 0.0
        %2501 = vmatprep.subr.mxu0 0.0
        %2502 = vmatpush1.msra.mxu0 0.0
        %2503 = vmatprep.subr.mxu0 0.0
        %2504 = vmatpush1.msra.mxu0 0.0
        %2505 = vmatprep.subr.mxu0 0.0
        %2506 = vmatpush1.msra.mxu0 0.0
        %2507 = vmatprep.subr.mxu0 0.0
        %2508 = vmatpush1.msra.mxu0 0.0
        %2509 = vmatprep.subr.mxu0 0.0
        %2510 = vmatpush1.msra.mxu0 0.0
        %2511 = vmatprep.subr.mxu0 0.0
        %2512 = vmatpush1.msra.mxu0 0.0
        %2513 = vmatprep.subr.mxu0 0.0
        %2514 = vmatpush1.msra.mxu0 0.0
        %2515 = vmatprep.subr.mxu0 0.0
        %2516 = vmatpush1.msra.mxu0 0.0
        %2517 = vmatprep.subr.mxu0 0.0
        %2518 = vmatpush1.msra.mxu0 0.0
        %2519 = vmatprep.subr.mxu0 0.0
        %2520 = vmatpush1.msra.mxu0 0.0
        %2521 = vmatprep.subr.mxu0 0.0
        %2522 = vmatpush1.msra.mxu0 0.0
        %2523 = vmatprep.subr.mxu0 0.0
        %2524 = vmatpush1.msra.mxu0 0.0
        %2525 = vmatprep.subr.mxu0 0.0
        %2526 = vmatpush1.msra.mxu0 0.0
        %2527 = vmatprep.subr.mxu0 0.0
        %2528 = vmatpush1.msra.mxu0 0.0
        %2529 = vmatprep.subr.mxu0 0.0
        %2530 = vmatpush1.msra.mxu0 0.0
        %2531 = vmatprep.subr.mxu0 0.0
        %2532 = vmatpush1.msra.mxu0 0.0
        %2533 = vmatprep.subr.mxu0 0.0
        %2534 = vmatpush1.msra.mxu0 0.0
        %2535 = vmatprep.subr.mxu0 0.0
        %2536 = vmatpush1.msra.mxu0 0.0
        %2537 = vmatprep.subr.mxu0 0.0
        %2538 = vmatpush1.msra.mxu0 0.0
        %2539 = vmatprep.subr.mxu0 0.0
        %2540 = vmatpush1.msra.mxu0 0.0
        %2541 = vmatprep.subr.mxu0 0.0
        %2542 = vmatpush1.msra.mxu0 0.0
        %2543 = vmatprep.subr.mxu0 0.0
        %2544 = vmatpush1.msra.mxu0 0.0
        %2545 = vmatprep.subr.mxu0 0.0
        %2546 = vmatpush1.msra.mxu0 0.0
        %2547 = vmatprep.subr.mxu0 0.0
        %2548 = vmatpush1.msra.mxu0 0.0
        %2549 = vmatprep.subr.mxu0 0.0
        %2550 = vmatpush1.msra.mxu0 0.0
        %2551 = vmatprep.subr.mxu0 0.0
        %2552 = vmatpush1.msra.mxu0 0.0
        %2553 = vmatprep.subr.mxu0 0.0
        %2554 = vmatpush1.msra.mxu0 0.0
        %2555 = vmatprep.subr.mxu0 0.0
        %2556 = vmatpush1.msra.mxu0 0.0
        %2557 = vmatprep.subr.mxu0 0.0
        %2558 = vmatpush1.msra.mxu0 0.0
        %2559 = vmatprep.subr.mxu0 0.0
        %2560 = vmatpush1.msra.mxu0 0.0
        %2561 = vmatprep.mubr.f32.mxu0 0.0
        %2562 = vmatmul.mubr.f32.gmra.mrb[0].mxu0 %v2495
        %v2563 = vpop.f32.mrb[0].mxu0
        %v2564 = vadd.f32 0.0, %v2563
        %v2565 = vpop.f32.mrb[0].mxu0
        %v2566 = vadd.f32 0.0, %v2565
        %2567 = vdwg.mxu0
        %v2568 = vadd.f32 %v2482, %v2564
        %v2569 = vadd.f32 %v2483, %v2566
        %s2570 = scalar_lea.vmem %s8, 32
        %v2571 = vld [vmem:[%s2570] sm:$0xff]
        %v2573 = vsel %vm2249, %v2571, 0
        %2575 = vmatprep.subr.mxu0 %v2227
        %2576 = vmatpush1.msra.mxu0 %v2226
        %2577 = vmatprep.subr.mxu0 0.0
        %2578 = vmatpush1.msra.mxu0 0.0
        %2579 = vmatprep.subr.mxu0 0.0
        %2580 = vmatpush1.msra.mxu0 0.0
        %2581 = vmatprep.subr.mxu0 0.0
        %2582 = vmatpush1.msra.mxu0 0.0
        %2583 = vmatprep.subr.mxu0 0.0
        %2584 = vmatpush1.msra.mxu0 0.0
        %2585 = vmatprep.subr.mxu0 0.0
        %2586 = vmatpush1.msra.mxu0 0.0
        %2587 = vmatprep.subr.mxu0 0.0
        %2588 = vmatpush1.msra.mxu0 0.0
        %2589 = vmatprep.subr.mxu0 0.0
        %2590 = vmatpush1.msra.mxu0 0.0
        %2591 = vmatprep.subr.mxu0 0.0
        %2592 = vmatpush1.msra.mxu0 0.0
        %2593 = vmatprep.subr.mxu0 0.0
        %2594 = vmatpush1.msra.mxu0 0.0
        %2595 = vmatprep.subr.mxu0 0.0
        %2596 = vmatpush1.msra.mxu0 0.0
        %2597 = vmatprep.subr.mxu0 0.0
        %2598 = vmatpush1.msra.mxu0 0.0
        %2599 = vmatprep.subr.mxu0 0.0
        %2600 = vmatpush1.msra.mxu0 0.0
        %2601 = vmatprep.subr.mxu0 0.0
        %2602 = vmatpush1.msra.mxu0 0.0
        %2603 = vmatprep.subr.mxu0 0.0
        %2604 = vmatpush1.msra.mxu0 0.0
        %2605 = vmatprep.subr.mxu0 0.0
        %2606 = vmatpush1.msra.mxu0 0.0
        %2607 = vmatprep.subr.mxu0 0.0
        %2608 = vmatpush1.msra.mxu0 0.0
        %2609 = vmatprep.subr.mxu0 0.0
        %2610 = vmatpush1.msra.mxu0 0.0
        %2611 = vmatprep.subr.mxu0 0.0
        %2612 = vmatpush1.msra.mxu0 0.0
        %2613 = vmatprep.subr.mxu0 0.0
        %2614 = vmatpush1.msra.mxu0 0.0
        %2615 = vmatprep.subr.mxu0 0.0
        %2616 = vmatpush1.msra.mxu0 0.0
        %2617 = vmatprep.subr.mxu0 0.0
        %2618 = vmatpush1.msra.mxu0 0.0
        %2619 = vmatprep.subr.mxu0 0.0
        %2620 = vmatpush1.msra.mxu0 0.0
        %2621 = vmatprep.subr.mxu0 0.0
        %2622 = vmatpush1.msra.mxu0 0.0
        %2623 = vmatprep.subr.mxu0 0.0
        %2624 = vmatpush1.msra.mxu0 0.0
        %2625 = vmatprep.subr.mxu0 0.0
        %2626 = vmatpush1.msra.mxu0 0.0
        %2627 = vmatprep.subr.mxu0 0.0
        %2628 = vmatpush1.msra.mxu0 0.0
        %2629 = vmatprep.subr.mxu0 0.0
        %2630 = vmatpush1.msra.mxu0 0.0
        %2631 = vmatprep.subr.mxu0 0.0
        %2632 = vmatpush1.msra.mxu0 0.0
        %2633 = vmatprep.subr.mxu0 0.0
        %2634 = vmatpush1.msra.mxu0 0.0
        %2635 = vmatprep.subr.mxu0 0.0
        %2636 = vmatpush1.msra.mxu0 0.0
        %2637 = vmatprep.subr.mxu0 0.0
        %2638 = vmatpush1.msra.mxu0 0.0
        %2639 = vmatprep.mubr.f32.mxu0 0.0
        %2640 = vmatmul.mubr.f32.gmra.mrb[0].mxu0 %v2573
        %v2641 = vpop.f32.mrb[0].mxu0
        %v2642 = vadd.f32 0.0, %v2641
        %v2643 = vpop.f32.mrb[0].mxu0
        %v2644 = vadd.f32 0.0, %v2643
        %2645 = vdwg.mxu0
        %v2646 = vadd.f32 %v2568, %v2642
        %v2647 = vadd.f32 %v2569, %v2644
        %2648 = vrot.lane.b32.xlu0 %v2226, 127
        %v2649 = vpop.permute.xlu0 %2648
        %2650 = vrot.lane.b32.xlu0 %v2227, 127
        %v2651 = vpop.permute.xlu0 %2650
        %v2652 = vsel %vm1444, %v2649, %v2651
        %v2653 = vsel %vm1444, %v2651, %v2649
        %v2654 = vmul.f32 %v2652, %v1450
        %v2655 = vmul.f32 %v2653, %v1454
        %s2656 = scalar_lea.vmem %s8, 40
        %v2657 = vld [vmem:[%s2656] sm:$0xff]
        %v2659 = vsel %vm2249, %v2657, 0
        %2661 = vmatprep.subr.mxu0 %v2655
        %2662 = vmatpush1.msra.mxu0 %v2654
        %2663 = vmatprep.subr.mxu0 0.0
        %2664 = vmatpush1.msra.mxu0 0.0
        %2665 = vmatprep.subr.mxu0 0.0
        %2666 = vmatpush1.msra.mxu0 0.0
        %2667 = vmatprep.subr.mxu0 0.0
        %2668 = vmatpush1.msra.mxu0 0.0
        %2669 = vmatprep.subr.mxu0 0.0
        %2670 = vmatpush1.msra.mxu0 0.0
        %2671 = vmatprep.subr.mxu0 0.0
        %2672 = vmatpush1.msra.mxu0 0.0
        %2673 = vmatprep.subr.mxu0 0.0
        %2674 = vmatpush1.msra.mxu0 0.0
        %2675 = vmatprep.subr.mxu0 0.0
        %2676 = vmatpush1.msra.mxu0 0.0
        %2677 = vmatprep.subr.mxu0 0.0
        %2678 = vmatpush1.msra.mxu0 0.0
        %2679 = vmatprep.subr.mxu0 0.0
        %2680 = vmatpush1.msra.mxu0 0.0
        %2681 = vmatprep.subr.mxu0 0.0
        %2682 = vmatpush1.msra.mxu0 0.0
        %2683 = vmatprep.subr.mxu0 0.0
        %2684 = vmatpush1.msra.mxu0 0.0
        %2685 = vmatprep.subr.mxu0 0.0
        %2686 = vmatpush1.msra.mxu0 0.0
        %2687 = vmatprep.subr.mxu0 0.0
        %2688 = vmatpush1.msra.mxu0 0.0
        %2689 = vmatprep.subr.mxu0 0.0
        %2690 = vmatpush1.msra.mxu0 0.0
        %2691 = vmatprep.subr.mxu0 0.0
        %2692 = vmatpush1.msra.mxu0 0.0
        %2693 = vmatprep.subr.mxu0 0.0
        %2694 = vmatpush1.msra.mxu0 0.0
        %2695 = vmatprep.subr.mxu0 0.0
        %2696 = vmatpush1.msra.mxu0 0.0
        %2697 = vmatprep.subr.mxu0 0.0
        %2698 = vmatpush1.msra.mxu0 0.0
        %2699 = vmatprep.subr.mxu0 0.0
        %2700 = vmatpush1.msra.mxu0 0.0
        %2701 = vmatprep.subr.mxu0 0.0
        %2702 = vmatpush1.msra.mxu0 0.0
        %2703 = vmatprep.subr.mxu0 0.0
        %2704 = vmatpush1.msra.mxu0 0.0
        %2705 = vmatprep.subr.mxu0 0.0
        %2706 = vmatpush1.msra.mxu0 0.0
        %2707 = vmatprep.subr.mxu0 0.0
        %2708 = vmatpush1.msra.mxu0 0.0
        %2709 = vmatprep.subr.mxu0 0.0
        %2710 = vmatpush1.msra.mxu0 0.0
        %2711 = vmatprep.subr.mxu0 0.0
        %2712 = vmatpush1.msra.mxu0 0.0
        %2713 = vmatprep.subr.mxu0 0.0
        %2714 = vmatpush1.msra.mxu0 0.0
        %2715 = vmatprep.subr.mxu0 0.0
        %2716 = vmatpush1.msra.mxu0 0.0
        %2717 = vmatprep.subr.mxu0 0.0
        %2718 = vmatpush1.msra.mxu0 0.0
        %2719 = vmatprep.subr.mxu0 0.0
        %2720 = vmatpush1.msra.mxu0 0.0
        %2721 = vmatprep.subr.mxu0 0.0
        %2722 = vmatpush1.msra.mxu0 0.0
        %2723 = vmatprep.subr.mxu0 0.0
        %2724 = vmatpush1.msra.mxu0 0.0
        %2725 = vmatprep.mubr.f32.mxu0 0.0
        %2726 = vmatmul.mubr.f32.gmra.mrb[0].mxu0 %v2659
        %v2727 = vpop.f32.mrb[0].mxu0
        %v2728 = vadd.f32 0.0, %v2727
        %v2729 = vpop.f32.mrb[0].mxu0
        %v2730 = vadd.f32 0.0, %v2729
        %2731 = vdwg.mxu0
        %v2732 = vadd.f32 %v2646, %v2728
        %v2733 = vadd.f32 %v2647, %v2730
        %2734 = vrot.lane.b32.xlu0 %v2226, 113
        %v2735 = vpop.permute.xlu0 %2734
        %2736 = vrot.lane.b32.xlu0 %v2227, 113
        %v2737 = vpop.permute.xlu0 %2736
        %v2738 = vsel %vm1637, %v2735, %v2737
        %v2739 = vsel %vm1637, %v2737, %v2735
        %v2740 = vmul.f32 %v2738, %v1643
        %v2741 = vmul.f32 %v2739, %v1647
        %s2742 = scalar_lea.vmem %s8, 48
        %v2743 = vld [vmem:[%s2742] sm:$0xff]
        %v2745 = vsel %vm2249, %v2743, 0
        %2747 = vmatprep.subr.mxu0 %v2741
        %2748 = vmatpush1.msra.mxu0 %v2740
        %2749 = vmatprep.subr.mxu0 0.0
        %2750 = vmatpush1.msra.mxu0 0.0
        %2751 = vmatprep.subr.mxu0 0.0
        %2752 = vmatpush1.msra.mxu0 0.0
        %2753 = vmatprep.subr.mxu0 0.0
        %2754 = vmatpush1.msra.mxu0 0.0
        %2755 = vmatprep.subr.mxu0 0.0
        %2756 = vmatpush1.msra.mxu0 0.0
        %2757 = vmatprep.subr.mxu0 0.0
        %2758 = vmatpush1.msra.mxu0 0.0
        %2759 = vmatprep.subr.mxu0 0.0
        %2760 = vmatpush1.msra.mxu0 0.0
        %2761 = vmatprep.subr.mxu0 0.0
        %2762 = vmatpush1.msra.mxu0 0.0
        %2763 = vmatprep.subr.mxu0 0.0
        %2764 = vmatpush1.msra.mxu0 0.0
        %2765 = vmatprep.subr.mxu0 0.0
        %2766 = vmatpush1.msra.mxu0 0.0
        %2767 = vmatprep.subr.mxu0 0.0
        %2768 = vmatpush1.msra.mxu0 0.0
        %2769 = vmatprep.subr.mxu0 0.0
        %2770 = vmatpush1.msra.mxu0 0.0
        %2771 = vmatprep.subr.mxu0 0.0
        %2772 = vmatpush1.msra.mxu0 0.0
        %2773 = vmatprep.subr.mxu0 0.0
        %2774 = vmatpush1.msra.mxu0 0.0
        %2775 = vmatprep.subr.mxu0 0.0
        %2776 = vmatpush1.msra.mxu0 0.0
        %2777 = vmatprep.subr.mxu0 0.0
        %2778 = vmatpush1.msra.mxu0 0.0
        %2779 = vmatprep.subr.mxu0 0.0
        %2780 = vmatpush1.msra.mxu0 0.0
        %2781 = vmatprep.subr.mxu0 0.0
        %2782 = vmatpush1.msra.mxu0 0.0
        %2783 = vmatprep.subr.mxu0 0.0
        %2784 = vmatpush1.msra.mxu0 0.0
        %2785 = vmatprep.subr.mxu0 0.0
        %2786 = vmatpush1.msra.mxu0 0.0
        %2787 = vmatprep.subr.mxu0 0.0
        %2788 = vmatpush1.msra.mxu0 0.0
        %2789 = vmatprep.subr.mxu0 0.0
        %2790 = vmatpush1.msra.mxu0 0.0
        %2791 = vmatprep.subr.mxu0 0.0
        %2792 = vmatpush1.msra.mxu0 0.0
        %2793 = vmatprep.subr.mxu0 0.0
        %2794 = vmatpush1.msra.mxu0 0.0
        %2795 = vmatprep.subr.mxu0 0.0
        %2796 = vmatpush1.msra.mxu0 0.0
        %2797 = vmatprep.subr.mxu0 0.0
        %2798 = vmatpush1.msra.mxu0 0.0
        %2799 = vmatprep.subr.mxu0 0.0
        %2800 = vmatpush1.msra.mxu0 0.0
        %2801 = vmatprep.subr.mxu0 0.0
        %2802 = vmatpush1.msra.mxu0 0.0
        %2803 = vmatprep.subr.mxu0 0.0
        %2804 = vmatpush1.msra.mxu0 0.0
        %2805 = vmatprep.subr.mxu0 0.0
        %2806 = vmatpush1.msra.mxu0 0.0
        %2807 = vmatprep.subr.mxu0 0.0
        %2808 = vmatpush1.msra.mxu0 0.0
        %2809 = vmatprep.subr.mxu0 0.0
        %2810 = vmatpush1.msra.mxu0 0.0
        %2811 = vmatprep.mubr.f32.mxu0 0.0
        %2812 = vmatmul.mubr.f32.gmra.mrb[0].mxu0 %v2745
        %v2813 = vpop.f32.mrb[0].mxu0
        %v2814 = vadd.f32 0.0, %v2813
        %v2815 = vpop.f32.mrb[0].mxu0
        %v2816 = vadd.f32 0.0, %v2815
        %2817 = vdwg.mxu0
        %v2818 = vadd.f32 %v2732, %v2814
        %v2819 = vadd.f32 %v2733, %v2816
        %2820 = vrot.lane.b32.xlu0 %v2226, 112
        %v2821 = vpop.permute.xlu0 %2820
        %2822 = vrot.lane.b32.xlu0 %v2227, 112
        %v2823 = vpop.permute.xlu0 %2822
        %v2824 = vsel %vm1830, %v2821, %v2823
        %v2825 = vsel %vm1830, %v2823, %v2821
        %v2826 = vmul.f32 %v2824, %v1836
        %v2827 = vmul.f32 %v2825, %v1840
        %s2828 = scalar_lea.vmem %s8, 56
        %v2829 = vld [vmem:[%s2828] sm:$0xff]
        %v2831 = vsel %vm2249, %v2829, 0
        %2833 = vmatprep.subr.mxu0 %v2827
        %2834 = vmatpush1.msra.mxu0 %v2826
        %2835 = vmatprep.subr.mxu0 0.0
        %2836 = vmatpush1.msra.mxu0 0.0
        %2837 = vmatprep.subr.mxu0 0.0
        %2838 = vmatpush1.msra.mxu0 0.0
        %2839 = vmatprep.subr.mxu0 0.0
        %2840 = vmatpush1.msra.mxu0 0.0
        %2841 = vmatprep.subr.mxu0 0.0
        %2842 = vmatpush1.msra.mxu0 0.0
        %2843 = vmatprep.subr.mxu0 0.0
        %2844 = vmatpush1.msra.mxu0 0.0
        %2845 = vmatprep.subr.mxu0 0.0
        %2846 = vmatpush1.msra.mxu0 0.0
        %2847 = vmatprep.subr.mxu0 0.0
        %2848 = vmatpush1.msra.mxu0 0.0
        %2849 = vmatprep.subr.mxu0 0.0
        %2850 = vmatpush1.msra.mxu0 0.0
        %2851 = vmatprep.subr.mxu0 0.0
        %2852 = vmatpush1.msra.mxu0 0.0
        %2853 = vmatprep.subr.mxu0 0.0
        %2854 = vmatpush1.msra.mxu0 0.0
        %2855 = vmatprep.subr.mxu0 0.0
        %2856 = vmatpush1.msra.mxu0 0.0
        %2857 = vmatprep.subr.mxu0 0.0
        %2858 = vmatpush1.msra.mxu0 0.0
        %2859 = vmatprep.subr.mxu0 0.0
        %2860 = vmatpush1.msra.mxu0 0.0
        %2861 = vmatprep.subr.mxu0 0.0
        %2862 = vmatpush1.msra.mxu0 0.0
        %2863 = vmatprep.subr.mxu0 0.0
        %2864 = vmatpush1.msra.mxu0 0.0
        %2865 = vmatprep.subr.mxu0 0.0
        %2866 = vmatpush1.msra.mxu0 0.0
        %2867 = vmatprep.subr.mxu0 0.0
        %2868 = vmatpush1.msra.mxu0 0.0
        %2869 = vmatprep.subr.mxu0 0.0
        %2870 = vmatpush1.msra.mxu0 0.0
        %2871 = vmatprep.subr.mxu0 0.0
        %2872 = vmatpush1.msra.mxu0 0.0
        %2873 = vmatprep.subr.mxu0 0.0
        %2874 = vmatpush1.msra.mxu0 0.0
        %2875 = vmatprep.subr.mxu0 0.0
        %2876 = vmatpush1.msra.mxu0 0.0
        %2877 = vmatprep.subr.mxu0 0.0
        %2878 = vmatpush1.msra.mxu0 0.0
        %2879 = vmatprep.subr.mxu0 0.0
        %2880 = vmatpush1.msra.mxu0 0.0
        %2881 = vmatprep.subr.mxu0 0.0
        %2882 = vmatpush1.msra.mxu0 0.0
        %2883 = vmatprep.subr.mxu0 0.0
        %2884 = vmatpush1.msra.mxu0 0.0
        %2885 = vmatprep.subr.mxu0 0.0
        %2886 = vmatpush1.msra.mxu0 0.0
        %2887 = vmatprep.subr.mxu0 0.0
        %2888 = vmatpush1.msra.mxu0 0.0
        %2889 = vmatprep.subr.mxu0 0.0
        %2890 = vmatpush1.msra.mxu0 0.0
        %2891 = vmatprep.subr.mxu0 0.0
        %2892 = vmatpush1.msra.mxu0 0.0
        %2893 = vmatprep.subr.mxu0 0.0
        %2894 = vmatpush1.msra.mxu0 0.0
        %2895 = vmatprep.subr.mxu0 0.0
        %2896 = vmatpush1.msra.mxu0 0.0
        %2897 = vmatprep.mubr.f32.mxu0 0.0
        %2898 = vmatmul.mubr.f32.gmra.mrb[0].mxu0 %v2831
        %v2899 = vpop.f32.mrb[0].mxu0
        %v2900 = vadd.f32 0.0, %v2899
        %v2901 = vpop.f32.mrb[0].mxu0
        %v2902 = vadd.f32 0.0, %v2901
        %2903 = vdwg.mxu0
        %v2904 = vadd.f32 %v2818, %v2900
        %v2905 = vadd.f32 %v2819, %v2902
        %2906 = vrot.lane.b32.xlu0 %v2226, 111
        %v2907 = vpop.permute.xlu0 %2906
        %2908 = vrot.lane.b32.xlu0 %v2227, 111
        %v2909 = vpop.permute.xlu0 %2908
        %v2910 = vsel %vm2023, %v2907, %v2909
        %v2911 = vsel %vm2023, %v2909, %v2907
        %v2912 = vmul.f32 %v2910, %v2029
        %v2913 = vmul.f32 %v2911, %v2033
        %s2914 = scalar_lea.vmem %s8, 64
        %v2915 = vld [vmem:[%s2914] sm:$0xff]
        %v2917 = vsel %vm2249, %v2915, 0
        %2919 = vmatprep.subr.mxu0 %v2913
        %2920 = vmatpush1.msra.mxu0 %v2912
        %2921 = vmatprep.subr.mxu0 0.0
        %2922 = vmatpush1.msra.mxu0 0.0
        %2923 = vmatprep.subr.mxu0 0.0
        %2924 = vmatpush1.msra.mxu0 0.0
        %2925 = vmatprep.subr.mxu0 0.0
        %2926 = vmatpush1.msra.mxu0 0.0
        %2927 = vmatprep.subr.mxu0 0.0
        %2928 = vmatpush1.msra.mxu0 0.0
        %2929 = vmatprep.subr.mxu0 0.0
        %2930 = vmatpush1.msra.mxu0 0.0
        %2931 = vmatprep.subr.mxu0 0.0
        %2932 = vmatpush1.msra.mxu0 0.0
        %2933 = vmatprep.subr.mxu0 0.0
        %2934 = vmatpush1.msra.mxu0 0.0
        %2935 = vmatprep.subr.mxu0 0.0
        %2936 = vmatpush1.msra.mxu0 0.0
        %2937 = vmatprep.subr.mxu0 0.0
        %2938 = vmatpush1.msra.mxu0 0.0
        %2939 = vmatprep.subr.mxu0 0.0
        %2940 = vmatpush1.msra.mxu0 0.0
        %2941 = vmatprep.subr.mxu0 0.0
        %2942 = vmatpush1.msra.mxu0 0.0
        %2943 = vmatprep.subr.mxu0 0.0
        %2944 = vmatpush1.msra.mxu0 0.0
        %2945 = vmatprep.subr.mxu0 0.0
        %2946 = vmatpush1.msra.mxu0 0.0
        %2947 = vmatprep.subr.mxu0 0.0
        %2948 = vmatpush1.msra.mxu0 0.0
        %2949 = vmatprep.subr.mxu0 0.0
        %2950 = vmatpush1.msra.mxu0 0.0
        %2951 = vmatprep.subr.mxu0 0.0
        %2952 = vmatpush1.msra.mxu0 0.0
        %2953 = vmatprep.subr.mxu0 0.0
        %2954 = vmatpush1.msra.mxu0 0.0
        %2955 = vmatprep.subr.mxu0 0.0
        %2956 = vmatpush1.msra.mxu0 0.0
        %2957 = vmatprep.subr.mxu0 0.0
        %2958 = vmatpush1.msra.mxu0 0.0
        %2959 = vmatprep.subr.mxu0 0.0
        %2960 = vmatpush1.msra.mxu0 0.0
        %2961 = vmatprep.subr.mxu0 0.0
        %2962 = vmatpush1.msra.mxu0 0.0
        %2963 = vmatprep.subr.mxu0 0.0
        %2964 = vmatpush1.msra.mxu0 0.0
        %2965 = vmatprep.subr.mxu0 0.0
        %2966 = vmatpush1.msra.mxu0 0.0
        %2967 = vmatprep.subr.mxu0 0.0
        %2968 = vmatpush1.msra.mxu0 0.0
        %2969 = vmatprep.subr.mxu0 0.0
        %2970 = vmatpush1.msra.mxu0 0.0
        %2971 = vmatprep.subr.mxu0 0.0
        %2972 = vmatpush1.msra.mxu0 0.0
        %2973 = vmatprep.subr.mxu0 0.0
        %2974 = vmatpush1.msra.mxu0 0.0
        %2975 = vmatprep.subr.mxu0 0.0
        %2976 = vmatpush1.msra.mxu0 0.0
        %2977 = vmatprep.subr.mxu0 0.0
        %2978 = vmatpush1.msra.mxu0 0.0
        %2979 = vmatprep.subr.mxu0 0.0
        %2980 = vmatpush1.msra.mxu0 0.0
        %2981 = vmatprep.subr.mxu0 0.0
        %2982 = vmatpush1.msra.mxu0 0.0
        %2983 = vmatprep.mubr.f32.mxu0 0.0
        %2984 = vmatmul.mubr.f32.gmra.mrb[0].mxu0 %v2917
        %v2985 = vpop.f32.mrb[0].mxu0
        %v2986 = vadd.f32 0.0, %v2985
        %v2987 = vpop.f32.mrb[0].mxu0
        %v2988 = vadd.f32 0.0, %v2987
        %2989 = vdwg.mxu0
        %v2990 = vadd.f32 %v2904, %v2986
        %v2991 = vadd.f32 %v2905, %v2988
        %2993 = vset.pattern.permute.xlu0 0
        %2994 = vperm.xlu0 %2993, %v2228
        %v2995 = vpop.permute.xlu0 %2994
        %v2997 = vmul.f32 %v2990, %v2995
        %v2998 = vmul.f32 %v2991, %v2995
        %3000 = vset.pattern.permute.xlu0 0
        %3001 = vperm.xlu0 %3000, %v2229
        %v3002 = vpop.permute.xlu0 %3001
        %v3004 = vadd.f32 %v2997, %v3002
        %v3005 = vadd.f32 %v2998, %v3002
        %v3006 = vmax.f32 %v3004, 0.0
        %v3007 = vmax.f32 %v3005, 0.0
        %3008 = vst [vmem:[%s392] sm:$0xff] %v3006
        %3009 = vst [vmem:[%s392 + $0x8] sm:$0xff] %v3007
        %s3010 = sand.u32 %s274, 1
        %s3011 = scalar_lea.sflag [#allocation3], %s3010
        %s3012 = sand.u32 %s274, 1
        %s3013 = smul.addr %s3012, 16
        %s3014 = scalar_lea.vmem [#allocation2], %s3013
        // Predicated region
        $region65: #{tpu_custom_call.1} parent=63 // pred_check
          %p3015 = pneg %p284
        $region66: #{tpu_custom_call.1} parent=63 // pred_check_branch
          %3017 = sbr.rel (%p3015) target = $region68
        $region67: #{tpu_custom_call.1} parent=63 // pred_region
          %s3019 = ssub.s32 256, 256
          %3020 = vsyncadd %s3011, %s3019
          %s3021 = smul.addr %s25, 2
          %s3022 = smul.addr %s3021, 128
          %s3023 = scalar_lea.hbm %s11, %s3022
          %s3025 = sshll.u32 %s3014, 4
          %s3026 = int_to_ptr.vmem [resolvable:$true] %s3025
          %3028 = dma.vmem_to_hbm [thread:$0]  %s3026, 256, %s3023, %s3011
        $region68: #{tpu_custom_call.1} parent=63 // pred_fallthru
          _
      $region64: #{tpu_custom_call.1} parent=5 // pred_fallthru
        _
      %p3029 = scmp.le.s32.totalorder 2, %s20
      // Predicated region
      $region69: #{tpu_custom_call.1} parent=5 // pred_check
        %p3030 = pneg %p3029
      $region70: #{tpu_custom_call.1} parent=5 // pred_check_branch
        %3032 = sbr.rel (%p3030) target = $region72
      $region71: #{tpu_custom_call.1} parent=5 // pred_region
        %s3033 = ssub.s32 %s20, 2
        // Predicated region
        $region73: #{tpu_custom_call.1} parent=71 // pred_check
          %p3034 = pneg %p290
        $region74: #{tpu_custom_call.1} parent=71 // pred_check_branch
          %3036 = sbr.rel (%p3034) target = $region76
        $region75: #{tpu_custom_call.1} parent=71 // pred_region
          %s3037 = sand.u32 %s275, 1
          %s3038 = scalar_lea.sflag [#allocation3], %s3037
          %s3039 = sand.u32 %s275, 1
          %s3040 = smul.addr %s3039, 16
          %s3041 = scalar_lea.vmem [#allocation2], %s3040
          %3042 = dma.done %s3038, 256
        $region76: #{tpu_custom_call.1} parent=71 // pred_fallthru
          _
      $region72: #{tpu_custom_call.1} parent=5 // pred_fallthru
        _
    $region6: #{tpu_custom_call.1} parent=1 // loop_footer
      %s24 = sadd.s32 1, %s20
    $region7: #{tpu_custom_call.1} parent=1 // loop_footer_branch
      %19 = sbr.rel target = $region3
    $region8: #{tpu_custom_call.1} parent=1 // loop_exit
      _
    %3043 = vsyncpa [#allocation3], 1
    %s3044 = scalar_lea.sflag [#allocation3], 1
    %3045 = vsyncpa %s3044, 1

</llo_original>
